<compile_context>
chip_gen: v6e
topology: v6e:2x2x1
jax: 0.10.0
libtpu: 0.0.40
codegen_flags: <defaults>
</compile_context>

<pallas_src>
import functools

import jax
import jax.numpy as jnp
from jax import lax
from jax.experimental import pallas as pl
from jax.experimental.pallas import tpu as pltpu

ENDTIME = 5.0               # `endtime` in the reference script
N_STEPS = 100               # self.N
T_FINAL = N_STEPS * 0.05    # self.T = 5.0
DIM = 64                    # ODEfunc_mlp feature dimension (ConcatFC(64, 64))
PACK = 2                    # batch rows packed per 128-lane row
PACKED_DIM = PACK * DIM     # 128
NSUB = 4                    # independent RK4 chains interleaved per tile
ROW_MULT = 8 * NSUB         # 32: block_rows granularity (8 sublanes per chain)


def _round_up(n, m):
    return ((n + m - 1) // m) * m


def _make_kernel(block_rows, dt):
    dt = float(dt)
    c_third = dt / 3.0
    c_eighth = dt * 0.125
    sub_rows = block_rows // NSUB

    def kernel(x_ref, wt_ref, b_ref, o_ref):
        """Integrate dy/dt = sin(y @ Wneg + bneg) over the fixed time grid.

        x_ref  : VMEM (block_rows, 128) -- lane-packed initial state
        wt_ref : VMEM (128, 128)        -- block-diagonal -W^T
        b_ref  : VMEM (1, 128)          -- tiled -bias
        o_ref  : VMEM (block_rows, 128) -- lane-packed state at t = T
        """
        wt = wt_ref[...]
        # Hoist the bias broadcast out of the loop (JAX does not CSE it).
        # sub_rows is small (8-32), so this is only 1-4 vregs.
        b_full = jnp.broadcast_to(b_ref[...], (sub_rows, PACKED_DIM))

        def f(y):
            # ODEfunc_mlp.forward with the negation pre-folded into wt / b.
            # HIGHEST precision: keeps f32 parity with the PyTorch reference;
            # the MXU is nowhere near the binding slot here.
            return jnp.sin(
                jnp.dot(y, wt,
                        preferred_element_type=jnp.float32,
                        precision=jax.lax.Precision.HIGHEST)
                + b_full)

        def rk4(y):
            # torchdiffeq fixed-step 'rk4' = rk4_alt_step_func (3/8 rule)
            k1 = f(y)
            k2 = f(y + c_third * k1)
            k3 = f(y + dt * (k2 - (1.0 / 3.0) * k1))
            k4 = f(y + dt * (k1 - k2 + k3))
            return y + c_eighth * (k1 + 3.0 * (k2 + k3) + k4)

        ys = tuple(
            x_ref[pl.ds(s * sub_rows, sub_rows), :].astype(jnp.float32)
            for s in range(NSUB)
        )

        def step(_, carry):
            # Independent sub-tiles: their matmul->sin chains overlap.
            return tuple(rk4(y) for y in carry)

        # No unroll: the body is already long and step-dependent; unrolling
        # only increases code size / register pressure.
        ys = lax.fori_loop(0, N_STEPS - 1, step, ys)

        for s in range(NSUB):
            o_ref[pl.ds(s * sub_rows, sub_rows), :] = ys[s].astype(o_ref.dtype)

    return kernel


@functools.partial(jax.jit, static_argnames=("max_block_rows",))
def odeblock2_forward(x, w, b, *, max_block_rows=128):
    """x: (B, 64), w: (64, 64) nn.Linear weight, b: (64,) bias."""
    B, D = x.shape
    assert D == DIM
    orig_dtype = x.dtype
    xf = jnp.asarray(x, jnp.float32)

    # Fold the ODEfunc negation into the parameters.
    wt_neg = -jnp.asarray(w, jnp.float32).T          # (in, out) so y @ W^T
    b_neg = -jnp.asarray(b, jnp.float32)

    # Lane-dense packing: two batch rows per 128-lane row.
    b_pad = _round_up(B, PACK)
    if b_pad != B:
        xf = jnp.pad(xf, ((0, b_pad - B), (0, 0)))
    rows = b_pad // PACK
    x_packed = xf.reshape(rows, PACKED_DIM)

    zeros = jnp.zeros((DIM, DIM), jnp.float32)
    wt_big = jnp.block([[wt_neg, zeros], [zeros, wt_neg]])      # (128, 128)
    b_big = jnp.concatenate([b_neg, b_neg]).reshape(1, PACKED_DIM)

    # Tile sizing: always a multiple of ROW_MULT (=32) so every tile holds
    # NSUB=4 independent chains; pick a tile count >= 2 whenever there are
    # >= 2 groups (uses both TensorCores on v7x via "parallel"); the tile size
    # always divides the padded row count so no extra rows are integrated.
    # Padded rows (zeros) are integrated and sliced off at the end -- sin is
    # bounded so they stay finite; this is intentional throwaway work.
    rows32 = _round_up(rows, ROW_MULT)
    groups = rows32 // ROW_MULT
    max_bg = max(1, max_block_rows // ROW_MULT)
    bg = max(1, min(max_bg, groups // 2)) if groups >= 2 else 1
    while groups % bg:
        bg -= 1
    block_rows = bg * ROW_MULT
    if rows32 != rows:
        x_packed = jnp.pad(x_packed, ((0, rows32 - rows), (0, 0)))
    grid = (groups // bg,)

    dt = T_FINAL / (N_STEPS - 1)   # constant grid spacing (<=1 ULP vs linspace)
    kernel = _make_kernel(block_rows, dt)

    out_packed = pl.pallas_call(
        kernel,
        out_shape=jax.ShapeDtypeStruct((rows32, PACKED_DIM), jnp.float32),
        grid=grid,
        in_specs=[
            pl.BlockSpec((block_rows, PACKED_DIM), lambda i: (i, 0)),  # x0
            pl.BlockSpec((PACKED_DIM, PACKED_DIM), lambda i: (0, 0)),  # -W^T (blkdiag)
            pl.BlockSpec((1, PACKED_DIM), lambda i: (0, 0)),           # -bias
        ],
        out_specs=pl.BlockSpec((block_rows, PACKED_DIM), lambda i: (i, 0)),
        compiler_params=pltpu.CompilerParams(
            dimension_semantics=("parallel",)),
    )(x_packed, wt_big, b_big)

    out = out_packed[:rows].reshape(b_pad, DIM)[:B]
    return out.astype(orig_dtype)


def _reference(x, w, b):
    """Pure-JAX mirror of torchdiffeq fixed-grid rk4 over linspace(0,5,100)."""
    y = jnp.asarray(x, jnp.float32)
    w = jnp.asarray(w, jnp.float32)
    b = jnp.asarray(b, jnp.float32)
    dt = T_FINAL / (N_STEPS - 1)

    def f(y):
        return jnp.sin(-(jnp.dot(y, w.T,
                                 precision=jax.lax.Precision.HIGHEST) + b))

    def rk4(y):
        k1 = f(y)
        k2 = f(y + (dt / 3.0) * k1)
        k3 = f(y + dt * (k2 - (1.0 / 3.0) * k1))
        k4 = f(y + dt * (k1 - k2 + k3))
        return y + (dt * 0.125) * (k1 + 3.0 * (k2 + k3) + k4)

    return lax.fori_loop(0, N_STEPS - 1, lambda _, y: rk4(y), y)


if __name__ == "__main__":
    key = jax.random.PRNGKey(0)
    kx, kw, kb = jax.random.split(key, 3)

    B = 8
    # Deterministic params matching nn.Linear's U(-1/sqrt(fan_in), 1/sqrt(fan_in))
    bound = 1.0 / jnp.sqrt(jnp.float32(DIM))
    w = jax.random.uniform(kw, (DIM, DIM), jnp.float32, -bound, bound)
    b = jax.random.uniform(kb, (DIM,), jnp.float32, -bound, bound)
    x = jax.random.normal(kx, (B, DIM), jnp.float32)

    out = odeblock2_forward(x, w, b)
    out = jax.block_until_ready(out)
    assert out.shape == (B, DIM) and out.dtype == jnp.float32
    assert bool(jnp.all(jnp.isfinite(out)))

    ref = jax.block_until_ready(_reference(x, w, b))
    max_err = float(jnp.max(jnp.abs(out - ref)))
    assert max_err < 1e-2, f"mismatch vs reference: {max_err}"

    print("KERNEL_OK")
</pallas_src>

<mosaic_0001>
module attributes {stable_mosaic.version = 11 : i64} {
  func.func @kernel(%arg0: i32, %arg1: memref<32x128xf32, #tpu.memory_space<vmem>>, %arg2: memref<128x128xf32, #tpu.memory_space<vmem>>, %arg3: memref<1x128xf32, #tpu.memory_space<vmem>>, %arg4: memref<32x128xf32, #tpu.memory_space<vmem>>) attributes {dimension_semantics = [#tpu.dimension_semantics<parallel>], iteration_bounds = array<i64: 1>, scalar_prefetch = 0 : i64, scratch_operands = 0 : i64, tpu.core_type = #tpu.core_type<tc>, window_params = [{transform_indices = @transform_0, window_bounds = array<i64: 32, 128>}, {pipeline_mode = #tpu.pipeline_mode<synchronous>, transform_indices = @transform_1, window_bounds = array<i64: 128, 128>}, {pipeline_mode = #tpu.pipeline_mode<synchronous>, transform_indices = @transform_2, window_bounds = array<i64: 1, 128>}, {transform_indices = @transform_3, window_bounds = array<i64: 32, 128>}]} {
    %c0 = arith.constant 0 : index
    %c0_0 = arith.constant 0 : index
    %0 = vector.load %arg2[%c0, %c0_0] : memref<128x128xf32, #tpu.memory_space<vmem>>, vector<128x128xf32>
    %c0_1 = arith.constant 0 : index
    %c0_2 = arith.constant 0 : index
    %1 = vector.load %arg3[%c0_1, %c0_2] : memref<1x128xf32, #tpu.memory_space<vmem>>, vector<1x128xf32>
    %2 = vector.shape_cast %1 : vector<1x128xf32> to vector<1x128xf32>
    %3 = vector.broadcast %2 : vector<1x128xf32> to vector<8x128xf32>
    %c0_3 = arith.constant 0 : index
    %c0_4 = arith.constant 0 : index
    %4 = vector.load %arg1[%c0_3, %c0_4] : memref<32x128xf32, #tpu.memory_space<vmem>>, vector<8x128xf32>
    %c8 = arith.constant 8 : index
    %c0_5 = arith.constant 0 : index
    %5 = vector.load %arg1[%c8, %c0_5] : memref<32x128xf32, #tpu.memory_space<vmem>>, vector<8x128xf32>
    %c16 = arith.constant 16 : index
    %c0_6 = arith.constant 0 : index
    %6 = vector.load %arg1[%c16, %c0_6] : memref<32x128xf32, #tpu.memory_space<vmem>>, vector<8x128xf32>
    %c24 = arith.constant 24 : index
    %c0_7 = arith.constant 0 : index
    %7 = vector.load %arg1[%c24, %c0_7] : memref<32x128xf32, #tpu.memory_space<vmem>>, vector<8x128xf32>
    %c0_i32 = arith.constant 0 : i32
    %c99_i32 = arith.constant 99 : i32
    %8 = arith.addi %c0_i32, %c99_i32 : i32
    %c1_i32 = arith.constant 1 : i32
    %9:4 = scf.for %arg5 = %c0_i32 to %8 step %c1_i32 iter_args(%arg6 = %4, %arg7 = %5, %arg8 = %6, %arg9 = %7) -> (vector<8x128xf32>, vector<8x128xf32>, vector<8x128xf32>, vector<8x128xf32>)  : i32 {
      %cst = arith.constant dense<0.000000e+00> : vector<8x128xf32>
      %14 = tpu.matmul %arg6, %0, %cst {dimension_numbers = #tpu.dot_dimension_numbers<[1], [0], [0], [1], [0, 0, 1, 1], [], []>, precision = #tpu.contract_precision<fp32>} : vector<8x128xf32>, vector<128x128xf32>, vector<8x128xf32> -> vector<8x128xf32>
      %15 = arith.addf %14, %3 : vector<8x128xf32>
      %16 = math.sin %15 : vector<8x128xf32>
      %cst_16 = arith.constant 0.0168350171 : f32
      %17 = vector.broadcast %cst_16 : f32 to vector<8x128xf32>
      %18 = arith.mulf %17, %16 : vector<8x128xf32>
      %19 = arith.addf %arg6, %18 : vector<8x128xf32>
      %cst_17 = arith.constant dense<0.000000e+00> : vector<8x128xf32>
      %20 = tpu.matmul %19, %0, %cst_17 {dimension_numbers = #tpu.dot_dimension_numbers<[1], [0], [0], [1], [0, 0, 1, 1], [], []>, precision = #tpu.contract_precision<fp32>} : vector<8x128xf32>, vector<128x128xf32>, vector<8x128xf32> -> vector<8x128xf32>
      %21 = arith.addf %20, %3 : vector<8x128xf32>
      %22 = math.sin %21 : vector<8x128xf32>
      %cst_18 = arith.constant 0.333333343 : f32
      %23 = vector.broadcast %cst_18 : f32 to vector<8x128xf32>
      %24 = arith.mulf %23, %16 : vector<8x128xf32>
      %25 = arith.subf %22, %24 : vector<8x128xf32>
      %cst_19 = arith.constant 0.0505050495 : f32
      %26 = vector.broadcast %cst_19 : f32 to vector<8x128xf32>
      %27 = arith.mulf %26, %25 : vector<8x128xf32>
      %28 = arith.addf %arg6, %27 : vector<8x128xf32>
      %cst_20 = arith.constant dense<0.000000e+00> : vector<8x128xf32>
      %29 = tpu.matmul %28, %0, %cst_20 {dimension_numbers = #tpu.dot_dimension_numbers<[1], [0], [0], [1], [0, 0, 1, 1], [], []>, precision = #tpu.contract_precision<fp32>} : vector<8x128xf32>, vector<128x128xf32>, vector<8x128xf32> -> vector<8x128xf32>
      %30 = arith.addf %29, %3 : vector<8x128xf32>
      %31 = math.sin %30 : vector<8x128xf32>
      %32 = arith.subf %16, %22 : vector<8x128xf32>
      %33 = arith.addf %32, %31 : vector<8x128xf32>
      %cst_21 = arith.constant 0.0505050495 : f32
      %34 = vector.broadcast %cst_21 : f32 to vector<8x128xf32>
      %35 = arith.mulf %34, %33 : vector<8x128xf32>
      %36 = arith.addf %arg6, %35 : vector<8x128xf32>
      %cst_22 = arith.constant dense<0.000000e+00> : vector<8x128xf32>
      %37 = tpu.matmul %36, %0, %cst_22 {dimension_numbers = #tpu.dot_dimension_numbers<[1], [0], [0], [1], [0, 0, 1, 1], [], []>, precision = #tpu.contract_precision<fp32>} : vector<8x128xf32>, vector<128x128xf32>, vector<8x128xf32> -> vector<8x128xf32>
      %38 = arith.addf %37, %3 : vector<8x128xf32>
      %39 = math.sin %38 : vector<8x128xf32>
      %40 = arith.addf %22, %31 : vector<8x128xf32>
      %cst_23 = arith.constant 3.000000e+00 : f32
      %41 = vector.broadcast %cst_23 : f32 to vector<8x128xf32>
      %42 = arith.mulf %41, %40 : vector<8x128xf32>
      %43 = arith.addf %16, %42 : vector<8x128xf32>
      %44 = arith.addf %43, %39 : vector<8x128xf32>
      %cst_24 = arith.constant 0.00631313119 : f32
      %45 = vector.broadcast %cst_24 : f32 to vector<8x128xf32>
      %46 = arith.mulf %45, %44 : vector<8x128xf32>
      %47 = arith.addf %arg6, %46 : vector<8x128xf32>
      %cst_25 = arith.constant dense<0.000000e+00> : vector<8x128xf32>
      %48 = tpu.matmul %arg7, %0, %cst_25 {dimension_numbers = #tpu.dot_dimension_numbers<[1], [0], [0], [1], [0, 0, 1, 1], [], []>, precision = #tpu.contract_precision<fp32>} : vector<8x128xf32>, vector<128x128xf32>, vector<8x128xf32> -> vector<8x128xf32>
      %49 = arith.addf %48, %3 : vector<8x128xf32>
      %50 = math.sin %49 : vector<8x128xf32>
      %cst_26 = arith.constant 0.0168350171 : f32
      %51 = vector.broadcast %cst_26 : f32 to vector<8x128xf32>
      %52 = arith.mulf %51, %50 : vector<8x128xf32>
      %53 = arith.addf %arg7, %52 : vector<8x128xf32>
      %cst_27 = arith.constant dense<0.000000e+00> : vector<8x128xf32>
      %54 = tpu.matmul %53, %0, %cst_27 {dimension_numbers = #tpu.dot_dimension_numbers<[1], [0], [0], [1], [0, 0, 1, 1], [], []>, precision = #tpu.contract_precision<fp32>} : vector<8x128xf32>, vector<128x128xf32>, vector<8x128xf32> -> vector<8x128xf32>
      %55 = arith.addf %54, %3 : vector<8x128xf32>
      %56 = math.sin %55 : vector<8x128xf32>
      %cst_28 = arith.constant 0.333333343 : f32
      %57 = vector.broadcast %cst_28 : f32 to vector<8x128xf32>
      %58 = arith.mulf %57, %50 : vector<8x128xf32>
      %59 = arith.subf %56, %58 : vector<8x128xf32>
      %cst_29 = arith.constant 0.0505050495 : f32
      %60 = vector.broadcast %cst_29 : f32 to vector<8x128xf32>
      %61 = arith.mulf %60, %59 : vector<8x128xf32>
      %62 = arith.addf %arg7, %61 : vector<8x128xf32>
      %cst_30 = arith.constant dense<0.000000e+00> : vector<8x128xf32>
      %63 = tpu.matmul %62, %0, %cst_30 {dimension_numbers = #tpu.dot_dimension_numbers<[1], [0], [0], [1], [0, 0, 1, 1], [], []>, precision = #tpu.contract_precision<fp32>} : vector<8x128xf32>, vector<128x128xf32>, vector<8x128xf32> -> vector<8x128xf32>
      %64 = arith.addf %63, %3 : vector<8x128xf32>
      %65 = math.sin %64 : vector<8x128xf32>
      %66 = arith.subf %50, %56 : vector<8x128xf32>
      %67 = arith.addf %66, %65 : vector<8x128xf32>
      %cst_31 = arith.constant 0.0505050495 : f32
      %68 = vector.broadcast %cst_31 : f32 to vector<8x128xf32>
      %69 = arith.mulf %68, %67 : vector<8x128xf32>
      %70 = arith.addf %arg7, %69 : vector<8x128xf32>
      %cst_32 = arith.constant dense<0.000000e+00> : vector<8x128xf32>
      %71 = tpu.matmul %70, %0, %cst_32 {dimension_numbers = #tpu.dot_dimension_numbers<[1], [0], [0], [1], [0, 0, 1, 1], [], []>, precision = #tpu.contract_precision<fp32>} : vector<8x128xf32>, vector<128x128xf32>, vector<8x128xf32> -> vector<8x128xf32>
      %72 = arith.addf %71, %3 : vector<8x128xf32>
      %73 = math.sin %72 : vector<8x128xf32>
      %74 = arith.addf %56, %65 : vector<8x128xf32>
      %cst_33 = arith.constant 3.000000e+00 : f32
      %75 = vector.broadcast %cst_33 : f32 to vector<8x128xf32>
      %76 = arith.mulf %75, %74 : vector<8x128xf32>
      %77 = arith.addf %50, %76 : vector<8x128xf32>
      %78 = arith.addf %77, %73 : vector<8x128xf32>
      %cst_34 = arith.constant 0.00631313119 : f32
      %79 = vector.broadcast %cst_34 : f32 to vector<8x128xf32>
      %80 = arith.mulf %79, %78 : vector<8x128xf32>
      %81 = arith.addf %arg7, %80 : vector<8x128xf32>
      %cst_35 = arith.constant dense<0.000000e+00> : vector<8x128xf32>
      %82 = tpu.matmul %arg8, %0, %cst_35 {dimension_numbers = #tpu.dot_dimension_numbers<[1], [0], [0], [1], [0, 0, 1, 1], [], []>, precision = #tpu.contract_precision<fp32>} : vector<8x128xf32>, vector<128x128xf32>, vector<8x128xf32> -> vector<8x128xf32>
      %83 = arith.addf %82, %3 : vector<8x128xf32>
      %84 = math.sin %83 : vector<8x128xf32>
      %cst_36 = arith.constant 0.0168350171 : f32
      %85 = vector.broadcast %cst_36 : f32 to vector<8x128xf32>
      %86 = arith.mulf %85, %84 : vector<8x128xf32>
      %87 = arith.addf %arg8, %86 : vector<8x128xf32>
      %cst_37 = arith.constant dense<0.000000e+00> : vector<8x128xf32>
      %88 = tpu.matmul %87, %0, %cst_37 {dimension_numbers = #tpu.dot_dimension_numbers<[1], [0], [0], [1], [0, 0, 1, 1], [], []>, precision = #tpu.contract_precision<fp32>} : vector<8x128xf32>, vector<128x128xf32>, vector<8x128xf32> -> vector<8x128xf32>
      %89 = arith.addf %88, %3 : vector<8x128xf32>
      %90 = math.sin %89 : vector<8x128xf32>
      %cst_38 = arith.constant 0.333333343 : f32
      %91 = vector.broadcast %cst_38 : f32 to vector<8x128xf32>
      %92 = arith.mulf %91, %84 : vector<8x128xf32>
      %93 = arith.subf %90, %92 : vector<8x128xf32>
      %cst_39 = arith.constant 0.0505050495 : f32
      %94 = vector.broadcast %cst_39 : f32 to vector<8x128xf32>
      %95 = arith.mulf %94, %93 : vector<8x128xf32>
      %96 = arith.addf %arg8, %95 : vector<8x128xf32>
      %cst_40 = arith.constant dense<0.000000e+00> : vector<8x128xf32>
      %97 = tpu.matmul %96, %0, %cst_40 {dimension_numbers = #tpu.dot_dimension_numbers<[1], [0], [0], [1], [0, 0, 1, 1], [], []>, precision = #tpu.contract_precision<fp32>} : vector<8x128xf32>, vector<128x128xf32>, vector<8x128xf32> -> vector<8x128xf32>
      %98 = arith.addf %97, %3 : vector<8x128xf32>
      %99 = math.sin %98 : vector<8x128xf32>
      %100 = arith.subf %84, %90 : vector<8x128xf32>
      %101 = arith.addf %100, %99 : vector<8x128xf32>
      %cst_41 = arith.constant 0.0505050495 : f32
      %102 = vector.broadcast %cst_41 : f32 to vector<8x128xf32>
      %103 = arith.mulf %102, %101 : vector<8x128xf32>
      %104 = arith.addf %arg8, %103 : vector<8x128xf32>
      %cst_42 = arith.constant dense<0.000000e+00> : vector<8x128xf32>
      %105 = tpu.matmul %104, %0, %cst_42 {dimension_numbers = #tpu.dot_dimension_numbers<[1], [0], [0], [1], [0, 0, 1, 1], [], []>, precision = #tpu.contract_precision<fp32>} : vector<8x128xf32>, vector<128x128xf32>, vector<8x128xf32> -> vector<8x128xf32>
      %106 = arith.addf %105, %3 : vector<8x128xf32>
      %107 = math.sin %106 : vector<8x128xf32>
      %108 = arith.addf %90, %99 : vector<8x128xf32>
      %cst_43 = arith.constant 3.000000e+00 : f32
      %109 = vector.broadcast %cst_43 : f32 to vector<8x128xf32>
      %110 = arith.mulf %109, %108 : vector<8x128xf32>
      %111 = arith.addf %84, %110 : vector<8x128xf32>
      %112 = arith.addf %111, %107 : vector<8x128xf32>
      %cst_44 = arith.constant 0.00631313119 : f32
      %113 = vector.broadcast %cst_44 : f32 to vector<8x128xf32>
      %114 = arith.mulf %113, %112 : vector<8x128xf32>
      %115 = arith.addf %arg8, %114 : vector<8x128xf32>
      %cst_45 = arith.constant dense<0.000000e+00> : vector<8x128xf32>
      %116 = tpu.matmul %arg9, %0, %cst_45 {dimension_numbers = #tpu.dot_dimension_numbers<[1], [0], [0], [1], [0, 0, 1, 1], [], []>, precision = #tpu.contract_precision<fp32>} : vector<8x128xf32>, vector<128x128xf32>, vector<8x128xf32> -> vector<8x128xf32>
      %117 = arith.addf %116, %3 : vector<8x128xf32>
      %118 = math.sin %117 : vector<8x128xf32>
      %cst_46 = arith.constant 0.0168350171 : f32
      %119 = vector.broadcast %cst_46 : f32 to vector<8x128xf32>
      %120 = arith.mulf %119, %118 : vector<8x128xf32>
      %121 = arith.addf %arg9, %120 : vector<8x128xf32>
      %cst_47 = arith.constant dense<0.000000e+00> : vector<8x128xf32>
      %122 = tpu.matmul %121, %0, %cst_47 {dimension_numbers = #tpu.dot_dimension_numbers<[1], [0], [0], [1], [0, 0, 1, 1], [], []>, precision = #tpu.contract_precision<fp32>} : vector<8x128xf32>, vector<128x128xf32>, vector<8x128xf32> -> vector<8x128xf32>
      %123 = arith.addf %122, %3 : vector<8x128xf32>
      %124 = math.sin %123 : vector<8x128xf32>
      %cst_48 = arith.constant 0.333333343 : f32
      %125 = vector.broadcast %cst_48 : f32 to vector<8x128xf32>
      %126 = arith.mulf %125, %118 : vector<8x128xf32>
      %127 = arith.subf %124, %126 : vector<8x128xf32>
      %cst_49 = arith.constant 0.0505050495 : f32
      %128 = vector.broadcast %cst_49 : f32 to vector<8x128xf32>
      %129 = arith.mulf %128, %127 : vector<8x128xf32>
      %130 = arith.addf %arg9, %129 : vector<8x128xf32>
      %cst_50 = arith.constant dense<0.000000e+00> : vector<8x128xf32>
      %131 = tpu.matmul %130, %0, %cst_50 {dimension_numbers = #tpu.dot_dimension_numbers<[1], [0], [0], [1], [0, 0, 1, 1], [], []>, precision = #tpu.contract_precision<fp32>} : vector<8x128xf32>, vector<128x128xf32>, vector<8x128xf32> -> vector<8x128xf32>
      %132 = arith.addf %131, %3 : vector<8x128xf32>
      %133 = math.sin %132 : vector<8x128xf32>
      %134 = arith.subf %118, %124 : vector<8x128xf32>
      %135 = arith.addf %134, %133 : vector<8x128xf32>
      %cst_51 = arith.constant 0.0505050495 : f32
      %136 = vector.broadcast %cst_51 : f32 to vector<8x128xf32>
      %137 = arith.mulf %136, %135 : vector<8x128xf32>
      %138 = arith.addf %arg9, %137 : vector<8x128xf32>
      %cst_52 = arith.constant dense<0.000000e+00> : vector<8x128xf32>
      %139 = tpu.matmul %138, %0, %cst_52 {dimension_numbers = #tpu.dot_dimension_numbers<[1], [0], [0], [1], [0, 0, 1, 1], [], []>, precision = #tpu.contract_precision<fp32>} : vector<8x128xf32>, vector<128x128xf32>, vector<8x128xf32> -> vector<8x128xf32>
      %140 = arith.addf %139, %3 : vector<8x128xf32>
      %141 = math.sin %140 : vector<8x128xf32>
      %142 = arith.addf %124, %133 : vector<8x128xf32>
      %cst_53 = arith.constant 3.000000e+00 : f32
      %143 = vector.broadcast %cst_53 : f32 to vector<8x128xf32>
      %144 = arith.mulf %143, %142 : vector<8x128xf32>
      %145 = arith.addf %118, %144 : vector<8x128xf32>
      %146 = arith.addf %145, %141 : vector<8x128xf32>
      %cst_54 = arith.constant 0.00631313119 : f32
      %147 = vector.broadcast %cst_54 : f32 to vector<8x128xf32>
      %148 = arith.mulf %147, %146 : vector<8x128xf32>
      %149 = arith.addf %arg9, %148 : vector<8x128xf32>
      scf.yield %47, %81, %115, %149 : vector<8x128xf32>, vector<8x128xf32>, vector<8x128xf32>, vector<8x128xf32>
    }
    %c0_8 = arith.constant 0 : index
    %c0_9 = arith.constant 0 : index
    %10 = vector.load %arg4[%c0_8, %c0_9] : memref<32x128xf32, #tpu.memory_space<vmem>>, vector<8x128xf32>
    tpu.vector_store %arg4[%c0_8, %c0_9], %9#0 {strides = array<i32>} : memref<32x128xf32, #tpu.memory_space<vmem>>, vector<8x128xf32>,
    %c8_10 = arith.constant 8 : index
    %c0_11 = arith.constant 0 : index
    %11 = vector.load %arg4[%c8_10, %c0_11] : memref<32x128xf32, #tpu.memory_space<vmem>>, vector<8x128xf32>
    tpu.vector_store %arg4[%c8_10, %c0_11], %9#1 {strides = array<i32>} : memref<32x128xf32, #tpu.memory_space<vmem>>, vector<8x128xf32>,
    %c16_12 = arith.constant 16 : index
    %c0_13 = arith.constant 0 : index
    %12 = vector.load %arg4[%c16_12, %c0_13] : memref<32x128xf32, #tpu.memory_space<vmem>>, vector<8x128xf32>
    tpu.vector_store %arg4[%c16_12, %c0_13], %9#2 {strides = array<i32>} : memref<32x128xf32, #tpu.memory_space<vmem>>, vector<8x128xf32>,
    %c24_14 = arith.constant 24 : index
    %c0_15 = arith.constant 0 : index
    %13 = vector.load %arg4[%c24_14, %c0_15] : memref<32x128xf32, #tpu.memory_space<vmem>>, vector<8x128xf32>
    tpu.vector_store %arg4[%c24_14, %c0_15], %9#3 {strides = array<i32>} : memref<32x128xf32, #tpu.memory_space<vmem>>, vector<8x128xf32>,
    return
  }
  func.func @transform_0(%arg0: i32) -> (i32, i32) {
    %c0_i32 = arith.constant 0 : i32
    %c0_i32_0 = arith.constant 0 : i32
    return %arg0, %c0_i32 : i32, i32
  }
  func.func @transform_1(%arg0: i32) -> (i32, i32) {
    %c0_i32 = arith.constant 0 : i32
    %c0_i32_0 = arith.constant 0 : i32
    %c0_i32_1 = arith.constant 0 : i32
    return %c0_i32, %c0_i32_0 : i32, i32
  }
  func.func @transform_2(%arg0: i32) -> (i32, i32) {
    %c0_i32 = arith.constant 0 : i32
    %c0_i32_0 = arith.constant 0 : i32
    %c0_i32_1 = arith.constant 0 : i32
    return %c0_i32, %c0_i32_0 : i32, i32
  }
  func.func @transform_3(%arg0: i32) -> (i32, i32) {
    %c0_i32 = arith.constant 0 : i32
    %c0_i32_0 = arith.constant 0 : i32
    return %arg0, %c0_i32 : i32, i32
  }
}

</mosaic_0001>

<llo_original>
// kernel: neg.3
$region0: #{neg.3}
  #allocation0 [shape = 's32[1]{0}', space=sflag, size = 0x4, scoped, tag = 'scoped memory for neg.3']
  %s0 = inlined_call_operand.vmem [shape: f32[64], index: 0, kind: input, shape index: {}]
  %s1 = inlined_call_operand.vmem [shape: f32[64], index: 1, kind: output, shape index: {}]
  %v2 = vld [vmem:[%s0] sm:$0x1]
  %3 = xla_tuple %v2
  %4 = xla_tuple %3
  %v5 = vxor.u32 %v2, 2147483648
  %6 = xla_tuple %v5
  %7 = vst [vmem:[%s1] sm:$0x1] %v5

// kernel: odeblock2_forward.1
$region0: #{odeblock2_forward.1}
  #allocation0 [shape = 'u32[]', space=smem, size = 0x4, offset = 0x4, fixed_abs, tag = 'smem constant byte address 0x4 - core index']
  #allocation1 [shape = 'u32[144,128]{1,0:T(1,128)}', space=vmem, size = 0x12000, scoped, tag = 'internal scratch']
  %s0 = inlined_call_operand.vmem [shape: f32[32,128], index: 0, kind: input, shape index: {}]
  %s1 = inlined_call_operand.vmem [shape: f32[128,128], index: 1, kind: input, shape index: {}]
  %s2 = inlined_call_operand.vmem [shape: f32[1,128], index: 2, kind: input, shape index: {}]
  %s3 = inlined_call_operand.vmem [shape: f32[32,128], index: 3, kind: output, shape index: {}]
  %s4 = sld [smem:[#allocation0]]
  $region29: #{odeblock2_forward.1} parent=0
    _
  %s6 = ssub.s32 1, %s4
  %s7 = scalar_select 0, %s6, %s4
  // Predicated region
  $region2: #{odeblock2_forward.1} parent=0 // pred_check
    _
  $region3: #{odeblock2_forward.1} parent=0 // pred_check_branch
    %9 = sbr.rel (0) target = $region5
  $region4: #{odeblock2_forward.1} parent=0 // pred_region
    _
  $region5: #{odeblock2_forward.1} parent=0 // pred_fallthru
    _
  // Predicated region
  $region6: #{odeblock2_forward.1} parent=0 // pred_check
    _
  $region7: #{odeblock2_forward.1} parent=0 // pred_check_branch
    %11 = sbr.rel (0) target = $region9
  $region8: #{odeblock2_forward.1} parent=0 // pred_region
    _
  $region9: #{odeblock2_forward.1} parent=0 // pred_fallthru
    _
  // Predicated region
  $region10: #{odeblock2_forward.1} parent=0 // pred_check
    _
  $region11: #{odeblock2_forward.1} parent=0 // pred_check_branch
    %13 = sbr.rel (0) target = $region13
  $region12: #{odeblock2_forward.1} parent=0 // pred_region
    _
  $region13: #{odeblock2_forward.1} parent=0 // pred_fallthru
    _
  %v14 = vld [vmem:[%s1] sm:$0xff]
  %v15 = vld [vmem:[%s1 + $0x8] sm:$0xff]
  %v16 = vld [vmem:[%s1 + $0x10] sm:$0xff]
  %v17 = vld [vmem:[%s1 + $0x18] sm:$0xff]
  %v18 = vld [vmem:[%s1 + $0x20] sm:$0xff]
  %v19 = vld [vmem:[%s1 + $0x28] sm:$0xff]
  %v20 = vld [vmem:[%s1 + $0x30] sm:$0xff]
  %v21 = vld [vmem:[%s1 + $0x38] sm:$0xff]
  %v22 = vld [vmem:[%s1 + $0x40] sm:$0xff]
  %v23 = vld [vmem:[%s1 + $0x48] sm:$0xff]
  %v24 = vld [vmem:[%s1 + $0x50] sm:$0xff]
  %v25 = vld [vmem:[%s1 + $0x58] sm:$0xff]
  %v26 = vld [vmem:[%s1 + $0x60] sm:$0xff]
  %v27 = vld [vmem:[%s1 + $0x68] sm:$0xff]
  %v28 = vld [vmem:[%s1 + $0x70] sm:$0xff]
  %v29 = vld [vmem:[%s1 + $0x78] sm:$0xff]
  %v30 = vld [vmem:[%s2] sm:$0x1]
  %v32 = vlaneseq
  %v33 = vshrl.u32 %v32, 7
  %v34 = vsub.s32 0, %v33
  %v35 = vrot.slane %v30, %v34
  %v37 = vld [vmem:[%s0] sm:$0xff]
  %v38 = vld [vmem:[%s0 + $0x8] sm:$0xff]
  %v39 = vld [vmem:[%s0 + $0x10] sm:$0xff]
  %v40 = vld [vmem:[%s0 + $0x18] sm:$0xff]
  loop: start=0, step=1, limit=99
  $region14: #{odeblock2_forward.1} parent=0 // loop_pre_header
    _
  $region15: #{odeblock2_forward.1} parent=0 // loop_header
    %s42 = sphi 0, %s46
    %p43 = scmp.ge.s32.totalorder %s42, 99
    %v47 = vphi %v37, %v3046
    %v48 = vphi %v38, %v6042
    %v49 = vphi %v39, %v9038
    %v50 = vphi %v40, %v12034
  $region16: #{odeblock2_forward.1} parent=0 // loop_header_branch
    %45 = sbr.rel (%p43) target = $region20
  $region17: #{odeblock2_forward.1} parent=0 // loop_body
    %51 = vmatprep.subr.mxu0 0.0
    %v52 = vand.u32 %v29, 4294901760
    %53 = vmatpush1.msra.mxu0 %v52
    %54 = vmatprep.subr.mxu0 0.0
    %v55 = vand.u32 %v28, 4294901760
    %56 = vmatpush1.msra.mxu0 %v55
    %57 = vmatprep.subr.mxu0 0.0
    %v58 = vand.u32 %v27, 4294901760
    %59 = vmatpush1.msra.mxu0 %v58
    %60 = vmatprep.subr.mxu0 0.0
    %v61 = vand.u32 %v26, 4294901760
    %62 = vmatpush1.msra.mxu0 %v61
    %63 = vmatprep.subr.mxu0 0.0
    %v64 = vand.u32 %v25, 4294901760
    %65 = vmatpush1.msra.mxu0 %v64
    %66 = vmatprep.subr.mxu0 0.0
    %v67 = vand.u32 %v24, 4294901760
    %68 = vmatpush1.msra.mxu0 %v67
    %69 = vmatprep.subr.mxu0 0.0
    %v70 = vand.u32 %v23, 4294901760
    %71 = vmatpush1.msra.mxu0 %v70
    %72 = vmatprep.subr.mxu0 0.0
    %v73 = vand.u32 %v22, 4294901760
    %74 = vmatpush1.msra.mxu0 %v73
    %75 = vmatprep.subr.mxu0 0.0
    %v76 = vand.u32 %v21, 4294901760
    %77 = vmatpush1.msra.mxu0 %v76
    %78 = vmatprep.subr.mxu0 0.0
    %v79 = vand.u32 %v20, 4294901760
    %80 = vmatpush1.msra.mxu0 %v79
    %81 = vmatprep.subr.mxu0 0.0
    %v82 = vand.u32 %v19, 4294901760
    %83 = vmatpush1.msra.mxu0 %v82
    %84 = vmatprep.subr.mxu0 0.0
    %v85 = vand.u32 %v18, 4294901760
    %86 = vmatpush1.msra.mxu0 %v85
    %87 = vmatprep.subr.mxu0 0.0
    %v88 = vand.u32 %v17, 4294901760
    %89 = vmatpush1.msra.mxu0 %v88
    %90 = vmatprep.subr.mxu0 0.0
    %v91 = vand.u32 %v16, 4294901760
    %92 = vmatpush1.msra.mxu0 %v91
    %93 = vmatprep.subr.mxu0 0.0
    %v94 = vand.u32 %v15, 4294901760
    %95 = vmatpush1.msra.mxu0 %v94
    %96 = vmatprep.subr.mxu0 0.0
    %v97 = vand.u32 %v14, 4294901760
    %98 = vmatpush1.msra.mxu0 %v97
    %99 = vmatprep.subr.mxu0 0.0
    %100 = vmatpush2.msra.mxu0 0.0
    %101 = vmatprep.subr.mxu0 0.0
    %102 = vmatpush2.msra.mxu0 0.0
    %103 = vmatprep.subr.mxu0 0.0
    %104 = vmatpush2.msra.mxu0 0.0
    %105 = vmatprep.subr.mxu0 0.0
    %106 = vmatpush2.msra.mxu0 0.0
    %107 = vmatprep.subr.mxu0 0.0
    %108 = vmatpush2.msra.mxu0 0.0
    %109 = vmatprep.subr.mxu0 0.0
    %110 = vmatpush2.msra.mxu0 0.0
    %111 = vmatprep.subr.mxu0 0.0
    %112 = vmatpush2.msra.mxu0 0.0
    %113 = vmatprep.subr.mxu0 0.0
    %114 = vmatpush2.msra.mxu0 0.0
    %115 = vmatprep.subr.mxu0 0.0
    %116 = vmatpush2.msra.mxu0 0.0
    %117 = vmatprep.subr.mxu0 0.0
    %118 = vmatpush2.msra.mxu0 0.0
    %119 = vmatprep.subr.mxu0 0.0
    %120 = vmatpush2.msra.mxu0 0.0
    %121 = vmatprep.subr.mxu0 0.0
    %122 = vmatpush2.msra.mxu0 0.0
    %123 = vmatprep.subr.mxu0 0.0
    %124 = vmatpush2.msra.mxu0 0.0
    %125 = vmatprep.subr.mxu0 0.0
    %126 = vmatpush2.msra.mxu0 0.0
    %127 = vmatprep.subr.mxu0 0.0
    %128 = vmatpush2.msra.mxu0 0.0
    %129 = vmatprep.subr.mxu0 0.0
    %130 = vmatpush2.msra.mxu0 0.0
    %131 = vmatprep.mubr.f32.mxu0 0.0
    %v132 = vand.u32 %v47, 4294901760
    %v133 = vsub.f32 %v47, %v132
    %v134 = vand.u32 %v133, 4294901760
    %v135 = vsub.f32 %v133, %v134
    %v136 = vand.u32 %v135, 4294901760
    %137 = vmatmul.mubr.f32.gmra.mxu0 %v136
    %v138 = vpop.f32.mrf.mxu0
    %v139 = vadd.f32 %v35, %v138
    %v140 = vpop.f32.mrf.mxu0
    %141 = vdwg.mxu0
    %142 = vmatprep.subr.mxu0 0.0
    %v143 = vand.u32 %v29, 4294901760
    %v144 = vsub.f32 %v29, %v143
    %v145 = vand.u32 %v144, 4294901760
    %v146 = vsub.f32 %v144, %v145
    %v147 = vand.u32 %v146, 4294901760
    %148 = vmatpush1.msra.mxu0 %v147
    %149 = vmatprep.subr.mxu0 0.0
    %v150 = vand.u32 %v28, 4294901760
    %v151 = vsub.f32 %v28, %v150
    %v152 = vand.u32 %v151, 4294901760
    %v153 = vsub.f32 %v151, %v152
    %v154 = vand.u32 %v153, 4294901760
    %155 = vmatpush1.msra.mxu0 %v154
    %156 = vmatprep.subr.mxu0 0.0
    %v157 = vand.u32 %v27, 4294901760
    %v158 = vsub.f32 %v27, %v157
    %v159 = vand.u32 %v158, 4294901760
    %v160 = vsub.f32 %v158, %v159
    %v161 = vand.u32 %v160, 4294901760
    %162 = vmatpush1.msra.mxu0 %v161
    %163 = vmatprep.subr.mxu0 0.0
    %v164 = vand.u32 %v26, 4294901760
    %v165 = vsub.f32 %v26, %v164
    %v166 = vand.u32 %v165, 4294901760
    %v167 = vsub.f32 %v165, %v166
    %v168 = vand.u32 %v167, 4294901760
    %169 = vmatpush1.msra.mxu0 %v168
    %170 = vmatprep.subr.mxu0 0.0
    %v171 = vand.u32 %v25, 4294901760
    %v172 = vsub.f32 %v25, %v171
    %v173 = vand.u32 %v172, 4294901760
    %v174 = vsub.f32 %v172, %v173
    %v175 = vand.u32 %v174, 4294901760
    %176 = vmatpush1.msra.mxu0 %v175
    %177 = vmatprep.subr.mxu0 0.0
    %v178 = vand.u32 %v24, 4294901760
    %v179 = vsub.f32 %v24, %v178
    %v180 = vand.u32 %v179, 4294901760
    %v181 = vsub.f32 %v179, %v180
    %v182 = vand.u32 %v181, 4294901760
    %183 = vmatpush1.msra.mxu0 %v182
    %184 = vmatprep.subr.mxu0 0.0
    %v185 = vand.u32 %v23, 4294901760
    %v186 = vsub.f32 %v23, %v185
    %v187 = vand.u32 %v186, 4294901760
    %v188 = vsub.f32 %v186, %v187
    %v189 = vand.u32 %v188, 4294901760
    %190 = vmatpush1.msra.mxu0 %v189
    %191 = vmatprep.subr.mxu0 0.0
    %v192 = vand.u32 %v22, 4294901760
    %v193 = vsub.f32 %v22, %v192
    %v194 = vand.u32 %v193, 4294901760
    %v195 = vsub.f32 %v193, %v194
    %v196 = vand.u32 %v195, 4294901760
    %197 = vmatpush1.msra.mxu0 %v196
    %198 = vmatprep.subr.mxu0 0.0
    %v199 = vand.u32 %v21, 4294901760
    %v200 = vsub.f32 %v21, %v199
    %v201 = vand.u32 %v200, 4294901760
    %v202 = vsub.f32 %v200, %v201
    %v203 = vand.u32 %v202, 4294901760
    %204 = vmatpush1.msra.mxu0 %v203
    %205 = vmatprep.subr.mxu0 0.0
    %v206 = vand.u32 %v20, 4294901760
    %v207 = vsub.f32 %v20, %v206
    %v208 = vand.u32 %v207, 4294901760
    %v209 = vsub.f32 %v207, %v208
    %v210 = vand.u32 %v209, 4294901760
    %211 = vmatpush1.msra.mxu0 %v210
    %212 = vmatprep.subr.mxu0 0.0
    %v213 = vand.u32 %v19, 4294901760
    %v214 = vsub.f32 %v19, %v213
    %v215 = vand.u32 %v214, 4294901760
    %v216 = vsub.f32 %v214, %v215
    %v217 = vand.u32 %v216, 4294901760
    %218 = vmatpush1.msra.mxu0 %v217
    %219 = vmatprep.subr.mxu0 0.0
    %v220 = vand.u32 %v18, 4294901760
    %v221 = vsub.f32 %v18, %v220
    %v222 = vand.u32 %v221, 4294901760
    %v223 = vsub.f32 %v221, %v222
    %v224 = vand.u32 %v223, 4294901760
    %225 = vmatpush1.msra.mxu0 %v224
    %226 = vmatprep.subr.mxu0 0.0
    %v227 = vand.u32 %v17, 4294901760
    %v228 = vsub.f32 %v17, %v227
    %v229 = vand.u32 %v228, 4294901760
    %v230 = vsub.f32 %v228, %v229
    %v231 = vand.u32 %v230, 4294901760
    %232 = vmatpush1.msra.mxu0 %v231
    %233 = vmatprep.subr.mxu0 0.0
    %v234 = vand.u32 %v16, 4294901760
    %v235 = vsub.f32 %v16, %v234
    %v236 = vand.u32 %v235, 4294901760
    %v237 = vsub.f32 %v235, %v236
    %v238 = vand.u32 %v237, 4294901760
    %239 = vmatpush1.msra.mxu0 %v238
    %240 = vmatprep.subr.mxu0 0.0
    %v241 = vand.u32 %v15, 4294901760
    %v242 = vsub.f32 %v15, %v241
    %v243 = vand.u32 %v242, 4294901760
    %v244 = vsub.f32 %v242, %v243
    %v245 = vand.u32 %v244, 4294901760
    %246 = vmatpush1.msra.mxu0 %v245
    %247 = vmatprep.subr.mxu0 0.0
    %v248 = vand.u32 %v14, 4294901760
    %v249 = vsub.f32 %v14, %v248
    %v250 = vand.u32 %v249, 4294901760
    %v251 = vsub.f32 %v249, %v250
    %v252 = vand.u32 %v251, 4294901760
    %253 = vmatpush1.msra.mxu0 %v252
    %254 = vmatprep.subr.mxu0 0.0
    %255 = vmatpush2.msra.mxu0 0.0
    %256 = vmatprep.subr.mxu0 0.0
    %257 = vmatpush2.msra.mxu0 0.0
    %258 = vmatprep.subr.mxu0 0.0
    %259 = vmatpush2.msra.mxu0 0.0
    %260 = vmatprep.subr.mxu0 0.0
    %261 = vmatpush2.msra.mxu0 0.0
    %262 = vmatprep.subr.mxu0 0.0
    %263 = vmatpush2.msra.mxu0 0.0
    %264 = vmatprep.subr.mxu0 0.0
    %265 = vmatpush2.msra.mxu0 0.0
    %266 = vmatprep.subr.mxu0 0.0
    %267 = vmatpush2.msra.mxu0 0.0
    %268 = vmatprep.subr.mxu0 0.0
    %269 = vmatpush2.msra.mxu0 0.0
    %270 = vmatprep.subr.mxu0 0.0
    %271 = vmatpush2.msra.mxu0 0.0
    %272 = vmatprep.subr.mxu0 0.0
    %273 = vmatpush2.msra.mxu0 0.0
    %274 = vmatprep.subr.mxu0 0.0
    %275 = vmatpush2.msra.mxu0 0.0
    %276 = vmatprep.subr.mxu0 0.0
    %277 = vmatpush2.msra.mxu0 0.0
    %278 = vmatprep.subr.mxu0 0.0
    %279 = vmatpush2.msra.mxu0 0.0
    %280 = vmatprep.subr.mxu0 0.0
    %281 = vmatpush2.msra.mxu0 0.0
    %282 = vmatprep.subr.mxu0 0.0
    %283 = vmatpush2.msra.mxu0 0.0
    %284 = vmatprep.subr.mxu0 0.0
    %285 = vmatpush2.msra.mxu0 0.0
    %286 = vmatprep.mubr.f32.mxu0 0.0
    %v287 = vand.u32 %v47, 4294901760
    %288 = vmatmul.mubr.f32.gmra.mxu0 %v287
    %v289 = vpop.f32.mrf.mxu0
    %v290 = vadd.f32 %v139, %v289
    %v291 = vpop.f32.mrf.mxu0
    %292 = vdwg.mxu0
    %293 = vmatprep.subr.mxu0 0.0
    %v294 = vand.u32 %v29, 4294901760
    %v295 = vsub.f32 %v29, %v294
    %296 = vmatpush1.msra.mxu0 %v295
    %297 = vmatprep.subr.mxu0 0.0
    %v298 = vand.u32 %v28, 4294901760
    %v299 = vsub.f32 %v28, %v298
    %300 = vmatpush1.msra.mxu0 %v299
    %301 = vmatprep.subr.mxu0 0.0
    %v302 = vand.u32 %v27, 4294901760
    %v303 = vsub.f32 %v27, %v302
    %304 = vmatpush1.msra.mxu0 %v303
    %305 = vmatprep.subr.mxu0 0.0
    %v306 = vand.u32 %v26, 4294901760
    %v307 = vsub.f32 %v26, %v306
    %308 = vmatpush1.msra.mxu0 %v307
    %309 = vmatprep.subr.mxu0 0.0
    %v310 = vand.u32 %v25, 4294901760
    %v311 = vsub.f32 %v25, %v310
    %312 = vmatpush1.msra.mxu0 %v311
    %313 = vmatprep.subr.mxu0 0.0
    %v314 = vand.u32 %v24, 4294901760
    %v315 = vsub.f32 %v24, %v314
    %316 = vmatpush1.msra.mxu0 %v315
    %317 = vmatprep.subr.mxu0 0.0
    %v318 = vand.u32 %v23, 4294901760
    %v319 = vsub.f32 %v23, %v318
    %320 = vmatpush1.msra.mxu0 %v319
    %321 = vmatprep.subr.mxu0 0.0
    %v322 = vand.u32 %v22, 4294901760
    %v323 = vsub.f32 %v22, %v322
    %324 = vmatpush1.msra.mxu0 %v323
    %325 = vmatprep.subr.mxu0 0.0
    %v326 = vand.u32 %v21, 4294901760
    %v327 = vsub.f32 %v21, %v326
    %328 = vmatpush1.msra.mxu0 %v327
    %329 = vmatprep.subr.mxu0 0.0
    %v330 = vand.u32 %v20, 4294901760
    %v331 = vsub.f32 %v20, %v330
    %332 = vmatpush1.msra.mxu0 %v331
    %333 = vmatprep.subr.mxu0 0.0
    %v334 = vand.u32 %v19, 4294901760
    %v335 = vsub.f32 %v19, %v334
    %336 = vmatpush1.msra.mxu0 %v335
    %337 = vmatprep.subr.mxu0 0.0
    %v338 = vand.u32 %v18, 4294901760
    %v339 = vsub.f32 %v18, %v338
    %340 = vmatpush1.msra.mxu0 %v339
    %341 = vmatprep.subr.mxu0 0.0
    %v342 = vand.u32 %v17, 4294901760
    %v343 = vsub.f32 %v17, %v342
    %344 = vmatpush1.msra.mxu0 %v343
    %345 = vmatprep.subr.mxu0 0.0
    %v346 = vand.u32 %v16, 4294901760
    %v347 = vsub.f32 %v16, %v346
    %348 = vmatpush1.msra.mxu0 %v347
    %349 = vmatprep.subr.mxu0 0.0
    %v350 = vand.u32 %v15, 4294901760
    %v351 = vsub.f32 %v15, %v350
    %352 = vmatpush1.msra.mxu0 %v351
    %353 = vmatprep.subr.mxu0 0.0
    %v354 = vand.u32 %v14, 4294901760
    %v355 = vsub.f32 %v14, %v354
    %356 = vmatpush1.msra.mxu0 %v355
    %357 = vmatprep.subr.mxu0 0.0
    %358 = vmatpush2.msra.mxu0 0.0
    %359 = vmatprep.subr.mxu0 0.0
    %360 = vmatpush2.msra.mxu0 0.0
    %361 = vmatprep.subr.mxu0 0.0
    %362 = vmatpush2.msra.mxu0 0.0
    %363 = vmatprep.subr.mxu0 0.0
    %364 = vmatpush2.msra.mxu0 0.0
    %365 = vmatprep.subr.mxu0 0.0
    %366 = vmatpush2.msra.mxu0 0.0
    %367 = vmatprep.subr.mxu0 0.0
    %368 = vmatpush2.msra.mxu0 0.0
    %369 = vmatprep.subr.mxu0 0.0
    %370 = vmatpush2.msra.mxu0 0.0
    %371 = vmatprep.subr.mxu0 0.0
    %372 = vmatpush2.msra.mxu0 0.0
    %373 = vmatprep.subr.mxu0 0.0
    %374 = vmatpush2.msra.mxu0 0.0
    %375 = vmatprep.subr.mxu0 0.0
    %376 = vmatpush2.msra.mxu0 0.0
    %377 = vmatprep.subr.mxu0 0.0
    %378 = vmatpush2.msra.mxu0 0.0
    %379 = vmatprep.subr.mxu0 0.0
    %380 = vmatpush2.msra.mxu0 0.0
    %381 = vmatprep.subr.mxu0 0.0
    %382 = vmatpush2.msra.mxu0 0.0
    %383 = vmatprep.subr.mxu0 0.0
    %384 = vmatpush2.msra.mxu0 0.0
    %385 = vmatprep.subr.mxu0 0.0
    %386 = vmatpush2.msra.mxu0 0.0
    %387 = vmatprep.subr.mxu0 0.0
    %388 = vmatpush2.msra.mxu0 0.0
    %389 = vmatprep.mubr.f32.mxu0 0.0
    %v390 = vand.u32 %v47, 4294901760
    %v391 = vsub.f32 %v47, %v390
    %392 = vmatmul.mubr.f32.gmra.mxu0 %v391
    %v393 = vpop.f32.mrf.mxu0
    %v394 = vadd.f32 %v290, %v393
    %v395 = vpop.f32.mrf.mxu0
    %396 = vdwg.mxu0
    %397 = vmatprep.subr.mxu0 0.0
    %v398 = vand.u32 %v29, 4294901760
    %399 = vmatpush1.msra.mxu0 %v398
    %400 = vmatprep.subr.mxu0 0.0
    %v401 = vand.u32 %v28, 4294901760
    %402 = vmatpush1.msra.mxu0 %v401
    %403 = vmatprep.subr.mxu0 0.0
    %v404 = vand.u32 %v27, 4294901760
    %405 = vmatpush1.msra.mxu0 %v404
    %406 = vmatprep.subr.mxu0 0.0
    %v407 = vand.u32 %v26, 4294901760
    %408 = vmatpush1.msra.mxu0 %v407
    %409 = vmatprep.subr.mxu0 0.0
    %v410 = vand.u32 %v25, 4294901760
    %411 = vmatpush1.msra.mxu0 %v410
    %412 = vmatprep.subr.mxu0 0.0
    %v413 = vand.u32 %v24, 4294901760
    %414 = vmatpush1.msra.mxu0 %v413
    %415 = vmatprep.subr.mxu0 0.0
    %v416 = vand.u32 %v23, 4294901760
    %417 = vmatpush1.msra.mxu0 %v416
    %418 = vmatprep.subr.mxu0 0.0
    %v419 = vand.u32 %v22, 4294901760
    %420 = vmatpush1.msra.mxu0 %v419
    %421 = vmatprep.subr.mxu0 0.0
    %v422 = vand.u32 %v21, 4294901760
    %423 = vmatpush1.msra.mxu0 %v422
    %424 = vmatprep.subr.mxu0 0.0
    %v425 = vand.u32 %v20, 4294901760
    %426 = vmatpush1.msra.mxu0 %v425
    %427 = vmatprep.subr.mxu0 0.0
    %v428 = vand.u32 %v19, 4294901760
    %429 = vmatpush1.msra.mxu0 %v428
    %430 = vmatprep.subr.mxu0 0.0
    %v431 = vand.u32 %v18, 4294901760
    %432 = vmatpush1.msra.mxu0 %v431
    %433 = vmatprep.subr.mxu0 0.0
    %v434 = vand.u32 %v17, 4294901760
    %435 = vmatpush1.msra.mxu0 %v434
    %436 = vmatprep.subr.mxu0 0.0
    %v437 = vand.u32 %v16, 4294901760
    %438 = vmatpush1.msra.mxu0 %v437
    %439 = vmatprep.subr.mxu0 0.0
    %v440 = vand.u32 %v15, 4294901760
    %441 = vmatpush1.msra.mxu0 %v440
    %442 = vmatprep.subr.mxu0 0.0
    %v443 = vand.u32 %v14, 4294901760
    %444 = vmatpush1.msra.mxu0 %v443
    %445 = vmatprep.subr.mxu0 0.0
    %446 = vmatpush2.msra.mxu0 0.0
    %447 = vmatprep.subr.mxu0 0.0
    %448 = vmatpush2.msra.mxu0 0.0
    %449 = vmatprep.subr.mxu0 0.0
    %450 = vmatpush2.msra.mxu0 0.0
    %451 = vmatprep.subr.mxu0 0.0
    %452 = vmatpush2.msra.mxu0 0.0
    %453 = vmatprep.subr.mxu0 0.0
    %454 = vmatpush2.msra.mxu0 0.0
    %455 = vmatprep.subr.mxu0 0.0
    %456 = vmatpush2.msra.mxu0 0.0
    %457 = vmatprep.subr.mxu0 0.0
    %458 = vmatpush2.msra.mxu0 0.0
    %459 = vmatprep.subr.mxu0 0.0
    %460 = vmatpush2.msra.mxu0 0.0
    %461 = vmatprep.subr.mxu0 0.0
    %462 = vmatpush2.msra.mxu0 0.0
    %463 = vmatprep.subr.mxu0 0.0
    %464 = vmatpush2.msra.mxu0 0.0
    %465 = vmatprep.subr.mxu0 0.0
    %466 = vmatpush2.msra.mxu0 0.0
    %467 = vmatprep.subr.mxu0 0.0
    %468 = vmatpush2.msra.mxu0 0.0
    %469 = vmatprep.subr.mxu0 0.0
    %470 = vmatpush2.msra.mxu0 0.0
    %471 = vmatprep.subr.mxu0 0.0
    %472 = vmatpush2.msra.mxu0 0.0
    %473 = vmatprep.subr.mxu0 0.0
    %474 = vmatpush2.msra.mxu0 0.0
    %475 = vmatprep.subr.mxu0 0.0
    %476 = vmatpush2.msra.mxu0 0.0
    %477 = vmatprep.mubr.f32.mxu0 0.0
    %v478 = vand.u32 %v47, 4294901760
    %v479 = vsub.f32 %v47, %v478
    %v480 = vand.u32 %v479, 4294901760
    %481 = vmatmul.mubr.f32.gmra.mxu0 %v480
    %v482 = vpop.f32.mrf.mxu0
    %v483 = vadd.f32 %v394, %v482
    %v484 = vpop.f32.mrf.mxu0
    %485 = vdwg.mxu0
    %486 = vmatprep.subr.mxu0 0.0
    %v487 = vand.u32 %v29, 4294901760
    %v488 = vsub.f32 %v29, %v487
    %v489 = vand.u32 %v488, 4294901760
    %490 = vmatpush1.msra.mxu0 %v489
    %491 = vmatprep.subr.mxu0 0.0
    %v492 = vand.u32 %v28, 4294901760
    %v493 = vsub.f32 %v28, %v492
    %v494 = vand.u32 %v493, 4294901760
    %495 = vmatpush1.msra.mxu0 %v494
    %496 = vmatprep.subr.mxu0 0.0
    %v497 = vand.u32 %v27, 4294901760
    %v498 = vsub.f32 %v27, %v497
    %v499 = vand.u32 %v498, 4294901760
    %500 = vmatpush1.msra.mxu0 %v499
    %501 = vmatprep.subr.mxu0 0.0
    %v502 = vand.u32 %v26, 4294901760
    %v503 = vsub.f32 %v26, %v502
    %v504 = vand.u32 %v503, 4294901760
    %505 = vmatpush1.msra.mxu0 %v504
    %506 = vmatprep.subr.mxu0 0.0
    %v507 = vand.u32 %v25, 4294901760
    %v508 = vsub.f32 %v25, %v507
    %v509 = vand.u32 %v508, 4294901760
    %510 = vmatpush1.msra.mxu0 %v509
    %511 = vmatprep.subr.mxu0 0.0
    %v512 = vand.u32 %v24, 4294901760
    %v513 = vsub.f32 %v24, %v512
    %v514 = vand.u32 %v513, 4294901760
    %515 = vmatpush1.msra.mxu0 %v514
    %516 = vmatprep.subr.mxu0 0.0
    %v517 = vand.u32 %v23, 4294901760
    %v518 = vsub.f32 %v23, %v517
    %v519 = vand.u32 %v518, 4294901760
    %520 = vmatpush1.msra.mxu0 %v519
    %521 = vmatprep.subr.mxu0 0.0
    %v522 = vand.u32 %v22, 4294901760
    %v523 = vsub.f32 %v22, %v522
    %v524 = vand.u32 %v523, 4294901760
    %525 = vmatpush1.msra.mxu0 %v524
    %526 = vmatprep.subr.mxu0 0.0
    %v527 = vand.u32 %v21, 4294901760
    %v528 = vsub.f32 %v21, %v527
    %v529 = vand.u32 %v528, 4294901760
    %530 = vmatpush1.msra.mxu0 %v529
    %531 = vmatprep.subr.mxu0 0.0
    %v532 = vand.u32 %v20, 4294901760
    %v533 = vsub.f32 %v20, %v532
    %v534 = vand.u32 %v533, 4294901760
    %535 = vmatpush1.msra.mxu0 %v534
    %536 = vmatprep.subr.mxu0 0.0
    %v537 = vand.u32 %v19, 4294901760
    %v538 = vsub.f32 %v19, %v537
    %v539 = vand.u32 %v538, 4294901760
    %540 = vmatpush1.msra.mxu0 %v539
    %541 = vmatprep.subr.mxu0 0.0
    %v542 = vand.u32 %v18, 4294901760
    %v543 = vsub.f32 %v18, %v542
    %v544 = vand.u32 %v543, 4294901760
    %545 = vmatpush1.msra.mxu0 %v544
    %546 = vmatprep.subr.mxu0 0.0
    %v547 = vand.u32 %v17, 4294901760
    %v548 = vsub.f32 %v17, %v547
    %v549 = vand.u32 %v548, 4294901760
    %550 = vmatpush1.msra.mxu0 %v549
    %551 = vmatprep.subr.mxu0 0.0
    %v552 = vand.u32 %v16, 4294901760
    %v553 = vsub.f32 %v16, %v552
    %v554 = vand.u32 %v553, 4294901760
    %555 = vmatpush1.msra.mxu0 %v554
    %556 = vmatprep.subr.mxu0 0.0
    %v557 = vand.u32 %v15, 4294901760
    %v558 = vsub.f32 %v15, %v557
    %v559 = vand.u32 %v558, 4294901760
    %560 = vmatpush1.msra.mxu0 %v559
    %561 = vmatprep.subr.mxu0 0.0
    %v562 = vand.u32 %v14, 4294901760
    %v563 = vsub.f32 %v14, %v562
    %v564 = vand.u32 %v563, 4294901760
    %565 = vmatpush1.msra.mxu0 %v564
    %566 = vmatprep.subr.mxu0 0.0
    %567 = vmatpush2.msra.mxu0 0.0
    %568 = vmatprep.subr.mxu0 0.0
    %569 = vmatpush2.msra.mxu0 0.0
    %570 = vmatprep.subr.mxu0 0.0
    %571 = vmatpush2.msra.mxu0 0.0
    %572 = vmatprep.subr.mxu0 0.0
    %573 = vmatpush2.msra.mxu0 0.0
    %574 = vmatprep.subr.mxu0 0.0
    %575 = vmatpush2.msra.mxu0 0.0
    %576 = vmatprep.subr.mxu0 0.0
    %577 = vmatpush2.msra.mxu0 0.0
    %578 = vmatprep.subr.mxu0 0.0
    %579 = vmatpush2.msra.mxu0 0.0
    %580 = vmatprep.subr.mxu0 0.0
    %581 = vmatpush2.msra.mxu0 0.0
    %582 = vmatprep.subr.mxu0 0.0
    %583 = vmatpush2.msra.mxu0 0.0
    %584 = vmatprep.subr.mxu0 0.0
    %585 = vmatpush2.msra.mxu0 0.0
    %586 = vmatprep.subr.mxu0 0.0
    %587 = vmatpush2.msra.mxu0 0.0
    %588 = vmatprep.subr.mxu0 0.0
    %589 = vmatpush2.msra.mxu0 0.0
    %590 = vmatprep.subr.mxu0 0.0
    %591 = vmatpush2.msra.mxu0 0.0
    %592 = vmatprep.subr.mxu0 0.0
    %593 = vmatpush2.msra.mxu0 0.0
    %594 = vmatprep.subr.mxu0 0.0
    %595 = vmatpush2.msra.mxu0 0.0
    %596 = vmatprep.subr.mxu0 0.0
    %597 = vmatpush2.msra.mxu0 0.0
    %598 = vmatprep.mubr.f32.mxu0 0.0
    %v599 = vand.u32 %v47, 4294901760
    %600 = vmatmul.mubr.f32.gmra.mxu0 %v599
    %v601 = vpop.f32.mrf.mxu0
    %v602 = vadd.f32 %v483, %v601
    %v603 = vpop.f32.mrf.mxu0
    %604 = vdwg.mxu0
    %605 = vmatprep.subr.mxu0 0.0
    %v606 = vand.u32 %v29, 4294901760
    %607 = vmatpush1.msra.mxu0 %v606
    %608 = vmatprep.subr.mxu0 0.0
    %v609 = vand.u32 %v28, 4294901760
    %610 = vmatpush1.msra.mxu0 %v609
    %611 = vmatprep.subr.mxu0 0.0
    %v612 = vand.u32 %v27, 4294901760
    %613 = vmatpush1.msra.mxu0 %v612
    %614 = vmatprep.subr.mxu0 0.0
    %v615 = vand.u32 %v26, 4294901760
    %616 = vmatpush1.msra.mxu0 %v615
    %617 = vmatprep.subr.mxu0 0.0
    %v618 = vand.u32 %v25, 4294901760
    %619 = vmatpush1.msra.mxu0 %v618
    %620 = vmatprep.subr.mxu0 0.0
    %v621 = vand.u32 %v24, 4294901760
    %622 = vmatpush1.msra.mxu0 %v621
    %623 = vmatprep.subr.mxu0 0.0
    %v624 = vand.u32 %v23, 4294901760
    %625 = vmatpush1.msra.mxu0 %v624
    %626 = vmatprep.subr.mxu0 0.0
    %v627 = vand.u32 %v22, 4294901760
    %628 = vmatpush1.msra.mxu0 %v627
    %629 = vmatprep.subr.mxu0 0.0
    %v630 = vand.u32 %v21, 4294901760
    %631 = vmatpush1.msra.mxu0 %v630
    %632 = vmatprep.subr.mxu0 0.0
    %v633 = vand.u32 %v20, 4294901760
    %634 = vmatpush1.msra.mxu0 %v633
    %635 = vmatprep.subr.mxu0 0.0
    %v636 = vand.u32 %v19, 4294901760
    %637 = vmatpush1.msra.mxu0 %v636
    %638 = vmatprep.subr.mxu0 0.0
    %v639 = vand.u32 %v18, 4294901760
    %640 = vmatpush1.msra.mxu0 %v639
    %641 = vmatprep.subr.mxu0 0.0
    %v642 = vand.u32 %v17, 4294901760
    %643 = vmatpush1.msra.mxu0 %v642
    %644 = vmatprep.subr.mxu0 0.0
    %v645 = vand.u32 %v16, 4294901760
    %646 = vmatpush1.msra.mxu0 %v645
    %647 = vmatprep.subr.mxu0 0.0
    %v648 = vand.u32 %v15, 4294901760
    %649 = vmatpush1.msra.mxu0 %v648
    %650 = vmatprep.subr.mxu0 0.0
    %v651 = vand.u32 %v14, 4294901760
    %652 = vmatpush1.msra.mxu0 %v651
    %653 = vmatprep.subr.mxu0 0.0
    %654 = vmatpush2.msra.mxu0 0.0
    %655 = vmatprep.subr.mxu0 0.0
    %656 = vmatpush2.msra.mxu0 0.0
    %657 = vmatprep.subr.mxu0 0.0
    %658 = vmatpush2.msra.mxu0 0.0
    %659 = vmatprep.subr.mxu0 0.0
    %660 = vmatpush2.msra.mxu0 0.0
    %661 = vmatprep.subr.mxu0 0.0
    %662 = vmatpush2.msra.mxu0 0.0
    %663 = vmatprep.subr.mxu0 0.0
    %664 = vmatpush2.msra.mxu0 0.0
    %665 = vmatprep.subr.mxu0 0.0
    %666 = vmatpush2.msra.mxu0 0.0
    %667 = vmatprep.subr.mxu0 0.0
    %668 = vmatpush2.msra.mxu0 0.0
    %669 = vmatprep.subr.mxu0 0.0
    %670 = vmatpush2.msra.mxu0 0.0
    %671 = vmatprep.subr.mxu0 0.0
    %672 = vmatpush2.msra.mxu0 0.0
    %673 = vmatprep.subr.mxu0 0.0
    %674 = vmatpush2.msra.mxu0 0.0
    %675 = vmatprep.subr.mxu0 0.0
    %676 = vmatpush2.msra.mxu0 0.0
    %677 = vmatprep.subr.mxu0 0.0
    %678 = vmatpush2.msra.mxu0 0.0
    %679 = vmatprep.subr.mxu0 0.0
    %680 = vmatpush2.msra.mxu0 0.0
    %681 = vmatprep.subr.mxu0 0.0
    %682 = vmatpush2.msra.mxu0 0.0
    %683 = vmatprep.subr.mxu0 0.0
    %684 = vmatpush2.msra.mxu0 0.0
    %685 = vmatprep.mubr.f32.mxu0 0.0
    %v686 = vand.u32 %v47, 4294901760
    %687 = vmatmul.mubr.f32.gmra.mxu0 %v686
    %v688 = vpop.f32.mrf.mxu0
    %v689 = vadd.f32 %v602, %v688
    %v690 = vpop.f32.mrf.mxu0
    %691 = vdwg.mxu0
    %v692 = vand.u32 2147483647, %v689
    %vm693 = vcmp.le.f32.partialorder %v692, 0.7853982
    %vm694 = vcmp.lt.s32.totalorder %v689, 0
    %v695 = vand.u32 %v689, 2139095040
    %v696 = vshrl.u32 %v695, 23
    %v697 = vsub.s32 %v696, 127
    %v698 = vand.u32 2147483647, %v689
    %v699 = vand.u32 %v698, 8388607
    %v700 = vor.u32 %v699, 8388608
    %v701 = vsub.s32 0, %v700
    %v702 = vadd.s32 %v697, 1
    %vm703 = vcmp.gt.s32.totalorder %v702, 0
    %v704 = vsel %vm703, %v702, 0
    %v705 = vshrl.u32 %v704, 5
    %v706 = vand.u32 %v704, 31
    %v707 = vsub.s32 32, %v706
    %v708 = vshrl.u32 683565275, %v707
    %v709 = vshll.u32 683565275, %v706
    %v710 = vshrl.u32 2475754826, %v707
    %v711 = vor.u32 %v709, %v710
    %v712 = vshll.u32 2475754826, %v706
    %v713 = vshrl.u32 2131351028, %v707
    %v714 = vor.u32 %v712, %v713
    %v715 = vshll.u32 2131351028, %v706
    %v716 = vshrl.u32 2102212464, %v707
    %v717 = vor.u32 %v715, %v716
    %v718 = vshll.u32 2102212464, %v706
    %v719 = vshrl.u32 920167782, %v707
    %v720 = vor.u32 %v718, %v719
    %v721 = vshll.u32 920167782, %v706
    %v722 = vshrl.u32 1326507024, %v707
    %v723 = vor.u32 %v721, %v722
    %vm724 = vcmp.lt.s32.totalorder %v705, 1
    %vm725 = vcmp.lt.s32.totalorder %v705, 2
    %vm726 = vcmp.lt.s32.totalorder %v705, 3
    %vm727 = vcmp.lt.s32.totalorder %v705, 4
    %v728 = vsel %vm724, %v708, %v711
    %v729 = vsel %vm727, %v717, 2102212464
    %v730 = vsel %vm726, %v714, %v729
    %v731 = vsel %vm725, %v728, %v730
    %v732 = vsel %vm724, %v711, %v714
    %v733 = vsel %vm727, %v720, 920167782
    %v734 = vsel %vm726, %v717, %v733
    %v735 = vsel %vm725, %v732, %v734
    %v736 = vsel %vm724, %v714, %v717
    %v737 = vsel %vm727, %v723, 1326507024
    %v738 = vsel %vm726, %v720, %v737
    %v739 = vsel %vm725, %v736, %v738
    %v740 = vshll.u32 %v700, 8
    %v741 = vmul.u32.u64.compose %v740, %v739
    %v742 = vextract.low.u32 %v741
    %v743 = vextract.high.u32 %v741
    %v744 = vmul.u32.u64.compose %v740, %v735
    %v745 = vextract.low.u32 %v744
    %v746 = vextract.high.u32 %v744
    %v747 = vmul.u32 %v740, %v731
    %v748 = vadd.s32 %v743, %v745
    %vm749 = vc.u32 %v743, %v745
    %v750 = vadd.s32 %v746, 1
    %v751 = vsel %vm749, %v750, %v746
    %v752 = vadd.s32 %v747, %v751
    %v753 = vadd.s32 %v752, 536870912
    %v754 = vshrl.u32 %v753, 30
    %v755 = vshll.u32 %v754, 30
    %v756 = vsub.s32 %v752, %v755
    %vm757 = vcmp.lt.s32.totalorder %v756, 0
    %v758 = vsub.s32 0, %v756
    %v759 = vsel %vm757, %v758, %v756
    %v760 = vclz %v759
    %v761 = vsub.s32 %v760, 2
    %vm762 = vcmp.gt.s32.totalorder 0, %v761
    %v763 = vsel %vm762, 0, %v761
    %v764 = vsub.s32 32, %v763
    %v765 = vshll.u32 %v756, %v763
    %v766 = vshrl.u32 %v748, %v764
    %v767 = vor.u32 %v765, %v766
    %v768 = vsub.s32 4294967266, %v763
    %v769 = vadd.s32 %v768, 127
    %v770 = vshll.u32 %v769, 23
    %v771 = vor.u32 4788187, %v770
    %v772 = vand.u32 2147483647, %v771
    %v774 = vcvt.s32.f32 %v767
    %v775 = vmul.f32 %v774, %v772
    %v776 = vxor.u32 %v775, 2147483648
    %v777 = vsel %vm694, %v776, %v775
    %v778 = vsub.s32 4, %v754
    %v779 = vsel %vm694, %v778, %v754
    %v780 = vsel %vm693, %v689, %v777
    %v781 = vsel %vm693, 0, %v779
    %v782 = vcosq.f32.pop %v780
    %v783 = vsinq.f32.pop %v780
    %vm784 = vweird.f32 %v689
    %v785 = vadd.s32 %v781, 3
    %v786 = vand.u32 %v785, 3
    %vm787 = vcmp.lt.s32.totalorder %v786, 2
    %vm788 = vcmp.eq.s32.totalorder %v786, 0
    %v789 = vxor.u32 %v783, 2147483648
    %v790 = vsel %vm788, %v782, %v789
    %vm791 = vcmp.eq.s32.totalorder %v786, 2
    %v792 = vxor.u32 %v782, 2147483648
    %v793 = vsel %vm791, %v792, %v783
    %v794 = vsel %vm787, %v790, %v793
    %v795 = vsel %vm784, nan, %v794
    %v796 = vmul.f32 %v795, 0.016835017
    %v797 = vadd.f32 %v47, %v796
    %798 = vmatprep.subr.mxu0 0.0
    %v799 = vand.u32 %v29, 4294901760
    %800 = vmatpush1.msra.mxu0 %v799
    %801 = vmatprep.subr.mxu0 0.0
    %v802 = vand.u32 %v28, 4294901760
    %803 = vmatpush1.msra.mxu0 %v802
    %804 = vmatprep.subr.mxu0 0.0
    %v805 = vand.u32 %v27, 4294901760
    %806 = vmatpush1.msra.mxu0 %v805
    %807 = vmatprep.subr.mxu0 0.0
    %v808 = vand.u32 %v26, 4294901760
    %809 = vmatpush1.msra.mxu0 %v808
    %810 = vmatprep.subr.mxu0 0.0
    %v811 = vand.u32 %v25, 4294901760
    %812 = vmatpush1.msra.mxu0 %v811
    %813 = vmatprep.subr.mxu0 0.0
    %v814 = vand.u32 %v24, 4294901760
    %815 = vmatpush1.msra.mxu0 %v814
    %816 = vmatprep.subr.mxu0 0.0
    %v817 = vand.u32 %v23, 4294901760
    %818 = vmatpush1.msra.mxu0 %v817
    %819 = vmatprep.subr.mxu0 0.0
    %v820 = vand.u32 %v22, 4294901760
    %821 = vmatpush1.msra.mxu0 %v820
    %822 = vmatprep.subr.mxu0 0.0
    %v823 = vand.u32 %v21, 4294901760
    %824 = vmatpush1.msra.mxu0 %v823
    %825 = vmatprep.subr.mxu0 0.0
    %v826 = vand.u32 %v20, 4294901760
    %827 = vmatpush1.msra.mxu0 %v826
    %828 = vmatprep.subr.mxu0 0.0
    %v829 = vand.u32 %v19, 4294901760
    %830 = vmatpush1.msra.mxu0 %v829
    %831 = vmatprep.subr.mxu0 0.0
    %v832 = vand.u32 %v18, 4294901760
    %833 = vmatpush1.msra.mxu0 %v832
    %834 = vmatprep.subr.mxu0 0.0
    %v835 = vand.u32 %v17, 4294901760
    %836 = vmatpush1.msra.mxu0 %v835
    %837 = vmatprep.subr.mxu0 0.0
    %v838 = vand.u32 %v16, 4294901760
    %839 = vmatpush1.msra.mxu0 %v838
    %840 = vmatprep.subr.mxu0 0.0
    %v841 = vand.u32 %v15, 4294901760
    %842 = vmatpush1.msra.mxu0 %v841
    %843 = vmatprep.subr.mxu0 0.0
    %v844 = vand.u32 %v14, 4294901760
    %845 = vmatpush1.msra.mxu0 %v844
    %846 = vmatprep.subr.mxu0 0.0
    %847 = vmatpush2.msra.mxu0 0.0
    %848 = vmatprep.subr.mxu0 0.0
    %849 = vmatpush2.msra.mxu0 0.0
    %850 = vmatprep.subr.mxu0 0.0
    %851 = vmatpush2.msra.mxu0 0.0
    %852 = vmatprep.subr.mxu0 0.0
    %853 = vmatpush2.msra.mxu0 0.0
    %854 = vmatprep.subr.mxu0 0.0
    %855 = vmatpush2.msra.mxu0 0.0
    %856 = vmatprep.subr.mxu0 0.0
    %857 = vmatpush2.msra.mxu0 0.0
    %858 = vmatprep.subr.mxu0 0.0
    %859 = vmatpush2.msra.mxu0 0.0
    %860 = vmatprep.subr.mxu0 0.0
    %861 = vmatpush2.msra.mxu0 0.0
    %862 = vmatprep.subr.mxu0 0.0
    %863 = vmatpush2.msra.mxu0 0.0
    %864 = vmatprep.subr.mxu0 0.0
    %865 = vmatpush2.msra.mxu0 0.0
    %866 = vmatprep.subr.mxu0 0.0
    %867 = vmatpush2.msra.mxu0 0.0
    %868 = vmatprep.subr.mxu0 0.0
    %869 = vmatpush2.msra.mxu0 0.0
    %870 = vmatprep.subr.mxu0 0.0
    %871 = vmatpush2.msra.mxu0 0.0
    %872 = vmatprep.subr.mxu0 0.0
    %873 = vmatpush2.msra.mxu0 0.0
    %874 = vmatprep.subr.mxu0 0.0
    %875 = vmatpush2.msra.mxu0 0.0
    %876 = vmatprep.subr.mxu0 0.0
    %877 = vmatpush2.msra.mxu0 0.0
    %878 = vmatprep.mubr.f32.mxu0 0.0
    %v879 = vand.u32 %v797, 4294901760
    %v880 = vsub.f32 %v797, %v879
    %v881 = vand.u32 %v880, 4294901760
    %v882 = vsub.f32 %v880, %v881
    %v883 = vand.u32 %v882, 4294901760
    %884 = vmatmul.mubr.f32.gmra.mxu0 %v883
    %v885 = vpop.f32.mrf.mxu0
    %v886 = vadd.f32 %v35, %v885
    %v887 = vpop.f32.mrf.mxu0
    %888 = vdwg.mxu0
    %889 = vmatprep.subr.mxu0 0.0
    %v890 = vand.u32 %v29, 4294901760
    %v891 = vsub.f32 %v29, %v890
    %v892 = vand.u32 %v891, 4294901760
    %v893 = vsub.f32 %v891, %v892
    %v894 = vand.u32 %v893, 4294901760
    %895 = vmatpush1.msra.mxu0 %v894
    %896 = vmatprep.subr.mxu0 0.0
    %v897 = vand.u32 %v28, 4294901760
    %v898 = vsub.f32 %v28, %v897
    %v899 = vand.u32 %v898, 4294901760
    %v900 = vsub.f32 %v898, %v899
    %v901 = vand.u32 %v900, 4294901760
    %902 = vmatpush1.msra.mxu0 %v901
    %903 = vmatprep.subr.mxu0 0.0
    %v904 = vand.u32 %v27, 4294901760
    %v905 = vsub.f32 %v27, %v904
    %v906 = vand.u32 %v905, 4294901760
    %v907 = vsub.f32 %v905, %v906
    %v908 = vand.u32 %v907, 4294901760
    %909 = vmatpush1.msra.mxu0 %v908
    %910 = vmatprep.subr.mxu0 0.0
    %v911 = vand.u32 %v26, 4294901760
    %v912 = vsub.f32 %v26, %v911
    %v913 = vand.u32 %v912, 4294901760
    %v914 = vsub.f32 %v912, %v913
    %v915 = vand.u32 %v914, 4294901760
    %916 = vmatpush1.msra.mxu0 %v915
    %917 = vmatprep.subr.mxu0 0.0
    %v918 = vand.u32 %v25, 4294901760
    %v919 = vsub.f32 %v25, %v918
    %v920 = vand.u32 %v919, 4294901760
    %v921 = vsub.f32 %v919, %v920
    %v922 = vand.u32 %v921, 4294901760
    %923 = vmatpush1.msra.mxu0 %v922
    %924 = vmatprep.subr.mxu0 0.0
    %v925 = vand.u32 %v24, 4294901760
    %v926 = vsub.f32 %v24, %v925
    %v927 = vand.u32 %v926, 4294901760
    %v928 = vsub.f32 %v926, %v927
    %v929 = vand.u32 %v928, 4294901760
    %930 = vmatpush1.msra.mxu0 %v929
    %931 = vmatprep.subr.mxu0 0.0
    %v932 = vand.u32 %v23, 4294901760
    %v933 = vsub.f32 %v23, %v932
    %v934 = vand.u32 %v933, 4294901760
    %v935 = vsub.f32 %v933, %v934
    %v936 = vand.u32 %v935, 4294901760
    %937 = vmatpush1.msra.mxu0 %v936
    %938 = vmatprep.subr.mxu0 0.0
    %v939 = vand.u32 %v22, 4294901760
    %v940 = vsub.f32 %v22, %v939
    %v941 = vand.u32 %v940, 4294901760
    %v942 = vsub.f32 %v940, %v941
    %v943 = vand.u32 %v942, 4294901760
    %944 = vmatpush1.msra.mxu0 %v943
    %945 = vmatprep.subr.mxu0 0.0
    %v946 = vand.u32 %v21, 4294901760
    %v947 = vsub.f32 %v21, %v946
    %v948 = vand.u32 %v947, 4294901760
    %v949 = vsub.f32 %v947, %v948
    %v950 = vand.u32 %v949, 4294901760
    %951 = vmatpush1.msra.mxu0 %v950
    %952 = vmatprep.subr.mxu0 0.0
    %v953 = vand.u32 %v20, 4294901760
    %v954 = vsub.f32 %v20, %v953
    %v955 = vand.u32 %v954, 4294901760
    %v956 = vsub.f32 %v954, %v955
    %v957 = vand.u32 %v956, 4294901760
    %958 = vmatpush1.msra.mxu0 %v957
    %959 = vmatprep.subr.mxu0 0.0
    %v960 = vand.u32 %v19, 4294901760
    %v961 = vsub.f32 %v19, %v960
    %v962 = vand.u32 %v961, 4294901760
    %v963 = vsub.f32 %v961, %v962
    %v964 = vand.u32 %v963, 4294901760
    %965 = vmatpush1.msra.mxu0 %v964
    %966 = vmatprep.subr.mxu0 0.0
    %v967 = vand.u32 %v18, 4294901760
    %v968 = vsub.f32 %v18, %v967
    %v969 = vand.u32 %v968, 4294901760
    %v970 = vsub.f32 %v968, %v969
    %v971 = vand.u32 %v970, 4294901760
    %972 = vmatpush1.msra.mxu0 %v971
    %973 = vmatprep.subr.mxu0 0.0
    %v974 = vand.u32 %v17, 4294901760
    %v975 = vsub.f32 %v17, %v974
    %v976 = vand.u32 %v975, 4294901760
    %v977 = vsub.f32 %v975, %v976
    %v978 = vand.u32 %v977, 4294901760
    %979 = vmatpush1.msra.mxu0 %v978
    %980 = vmatprep.subr.mxu0 0.0
    %v981 = vand.u32 %v16, 4294901760
    %v982 = vsub.f32 %v16, %v981
    %v983 = vand.u32 %v982, 4294901760
    %v984 = vsub.f32 %v982, %v983
    %v985 = vand.u32 %v984, 4294901760
    %986 = vmatpush1.msra.mxu0 %v985
    %987 = vmatprep.subr.mxu0 0.0
    %v988 = vand.u32 %v15, 4294901760
    %v989 = vsub.f32 %v15, %v988
    %v990 = vand.u32 %v989, 4294901760
    %v991 = vsub.f32 %v989, %v990
    %v992 = vand.u32 %v991, 4294901760
    %993 = vmatpush1.msra.mxu0 %v992
    %994 = vmatprep.subr.mxu0 0.0
    %v995 = vand.u32 %v14, 4294901760
    %v996 = vsub.f32 %v14, %v995
    %v997 = vand.u32 %v996, 4294901760
    %v998 = vsub.f32 %v996, %v997
    %v999 = vand.u32 %v998, 4294901760
    %1000 = vmatpush1.msra.mxu0 %v999
    %1001 = vmatprep.subr.mxu0 0.0
    %1002 = vmatpush2.msra.mxu0 0.0
    %1003 = vmatprep.subr.mxu0 0.0
    %1004 = vmatpush2.msra.mxu0 0.0
    %1005 = vmatprep.subr.mxu0 0.0
    %1006 = vmatpush2.msra.mxu0 0.0
    %1007 = vmatprep.subr.mxu0 0.0
    %1008 = vmatpush2.msra.mxu0 0.0
    %1009 = vmatprep.subr.mxu0 0.0
    %1010 = vmatpush2.msra.mxu0 0.0
    %1011 = vmatprep.subr.mxu0 0.0
    %1012 = vmatpush2.msra.mxu0 0.0
    %1013 = vmatprep.subr.mxu0 0.0
    %1014 = vmatpush2.msra.mxu0 0.0
    %1015 = vmatprep.subr.mxu0 0.0
    %1016 = vmatpush2.msra.mxu0 0.0
    %1017 = vmatprep.subr.mxu0 0.0
    %1018 = vmatpush2.msra.mxu0 0.0
    %1019 = vmatprep.subr.mxu0 0.0
    %1020 = vmatpush2.msra.mxu0 0.0
    %1021 = vmatprep.subr.mxu0 0.0
    %1022 = vmatpush2.msra.mxu0 0.0
    %1023 = vmatprep.subr.mxu0 0.0
    %1024 = vmatpush2.msra.mxu0 0.0
    %1025 = vmatprep.subr.mxu0 0.0
    %1026 = vmatpush2.msra.mxu0 0.0
    %1027 = vmatprep.subr.mxu0 0.0
    %1028 = vmatpush2.msra.mxu0 0.0
    %1029 = vmatprep.subr.mxu0 0.0
    %1030 = vmatpush2.msra.mxu0 0.0
    %1031 = vmatprep.subr.mxu0 0.0
    %1032 = vmatpush2.msra.mxu0 0.0
    %1033 = vmatprep.mubr.f32.mxu0 0.0
    %v1034 = vand.u32 %v797, 4294901760
    %1035 = vmatmul.mubr.f32.gmra.mxu0 %v1034
    %v1036 = vpop.f32.mrf.mxu0
    %v1037 = vadd.f32 %v886, %v1036
    %v1038 = vpop.f32.mrf.mxu0
    %1039 = vdwg.mxu0
    %1040 = vmatprep.subr.mxu0 0.0
    %v1041 = vand.u32 %v29, 4294901760
    %v1042 = vsub.f32 %v29, %v1041
    %1043 = vmatpush1.msra.mxu0 %v1042
    %1044 = vmatprep.subr.mxu0 0.0
    %v1045 = vand.u32 %v28, 4294901760
    %v1046 = vsub.f32 %v28, %v1045
    %1047 = vmatpush1.msra.mxu0 %v1046
    %1048 = vmatprep.subr.mxu0 0.0
    %v1049 = vand.u32 %v27, 4294901760
    %v1050 = vsub.f32 %v27, %v1049
    %1051 = vmatpush1.msra.mxu0 %v1050
    %1052 = vmatprep.subr.mxu0 0.0
    %v1053 = vand.u32 %v26, 4294901760
    %v1054 = vsub.f32 %v26, %v1053
    %1055 = vmatpush1.msra.mxu0 %v1054
    %1056 = vmatprep.subr.mxu0 0.0
    %v1057 = vand.u32 %v25, 4294901760
    %v1058 = vsub.f32 %v25, %v1057
    %1059 = vmatpush1.msra.mxu0 %v1058
    %1060 = vmatprep.subr.mxu0 0.0
    %v1061 = vand.u32 %v24, 4294901760
    %v1062 = vsub.f32 %v24, %v1061
    %1063 = vmatpush1.msra.mxu0 %v1062
    %1064 = vmatprep.subr.mxu0 0.0
    %v1065 = vand.u32 %v23, 4294901760
    %v1066 = vsub.f32 %v23, %v1065
    %1067 = vmatpush1.msra.mxu0 %v1066
    %1068 = vmatprep.subr.mxu0 0.0
    %v1069 = vand.u32 %v22, 4294901760
    %v1070 = vsub.f32 %v22, %v1069
    %1071 = vmatpush1.msra.mxu0 %v1070
    %1072 = vmatprep.subr.mxu0 0.0
    %v1073 = vand.u32 %v21, 4294901760
    %v1074 = vsub.f32 %v21, %v1073
    %1075 = vmatpush1.msra.mxu0 %v1074
    %1076 = vmatprep.subr.mxu0 0.0
    %v1077 = vand.u32 %v20, 4294901760
    %v1078 = vsub.f32 %v20, %v1077
    %1079 = vmatpush1.msra.mxu0 %v1078
    %1080 = vmatprep.subr.mxu0 0.0
    %v1081 = vand.u32 %v19, 4294901760
    %v1082 = vsub.f32 %v19, %v1081
    %1083 = vmatpush1.msra.mxu0 %v1082
    %1084 = vmatprep.subr.mxu0 0.0
    %v1085 = vand.u32 %v18, 4294901760
    %v1086 = vsub.f32 %v18, %v1085
    %1087 = vmatpush1.msra.mxu0 %v1086
    %1088 = vmatprep.subr.mxu0 0.0
    %v1089 = vand.u32 %v17, 4294901760
    %v1090 = vsub.f32 %v17, %v1089
    %1091 = vmatpush1.msra.mxu0 %v1090
    %1092 = vmatprep.subr.mxu0 0.0
    %v1093 = vand.u32 %v16, 4294901760
    %v1094 = vsub.f32 %v16, %v1093
    %1095 = vmatpush1.msra.mxu0 %v1094
    %1096 = vmatprep.subr.mxu0 0.0
    %v1097 = vand.u32 %v15, 4294901760
    %v1098 = vsub.f32 %v15, %v1097
    %1099 = vmatpush1.msra.mxu0 %v1098
    %1100 = vmatprep.subr.mxu0 0.0
    %v1101 = vand.u32 %v14, 4294901760
    %v1102 = vsub.f32 %v14, %v1101
    %1103 = vmatpush1.msra.mxu0 %v1102
    %1104 = vmatprep.subr.mxu0 0.0
    %1105 = vmatpush2.msra.mxu0 0.0
    %1106 = vmatprep.subr.mxu0 0.0
    %1107 = vmatpush2.msra.mxu0 0.0
    %1108 = vmatprep.subr.mxu0 0.0
    %1109 = vmatpush2.msra.mxu0 0.0
    %1110 = vmatprep.subr.mxu0 0.0
    %1111 = vmatpush2.msra.mxu0 0.0
    %1112 = vmatprep.subr.mxu0 0.0
    %1113 = vmatpush2.msra.mxu0 0.0
    %1114 = vmatprep.subr.mxu0 0.0
    %1115 = vmatpush2.msra.mxu0 0.0
    %1116 = vmatprep.subr.mxu0 0.0
    %1117 = vmatpush2.msra.mxu0 0.0
    %1118 = vmatprep.subr.mxu0 0.0
    %1119 = vmatpush2.msra.mxu0 0.0
    %1120 = vmatprep.subr.mxu0 0.0
    %1121 = vmatpush2.msra.mxu0 0.0
    %1122 = vmatprep.subr.mxu0 0.0
    %1123 = vmatpush2.msra.mxu0 0.0
    %1124 = vmatprep.subr.mxu0 0.0
    %1125 = vmatpush2.msra.mxu0 0.0
    %1126 = vmatprep.subr.mxu0 0.0
    %1127 = vmatpush2.msra.mxu0 0.0
    %1128 = vmatprep.subr.mxu0 0.0
    %1129 = vmatpush2.msra.mxu0 0.0
    %1130 = vmatprep.subr.mxu0 0.0
    %1131 = vmatpush2.msra.mxu0 0.0
    %1132 = vmatprep.subr.mxu0 0.0
    %1133 = vmatpush2.msra.mxu0 0.0
    %1134 = vmatprep.subr.mxu0 0.0
    %1135 = vmatpush2.msra.mxu0 0.0
    %1136 = vmatprep.mubr.f32.mxu0 0.0
    %v1137 = vand.u32 %v797, 4294901760
    %v1138 = vsub.f32 %v797, %v1137
    %1139 = vmatmul.mubr.f32.gmra.mxu0 %v1138
    %v1140 = vpop.f32.mrf.mxu0
    %v1141 = vadd.f32 %v1037, %v1140
    %v1142 = vpop.f32.mrf.mxu0
    %1143 = vdwg.mxu0
    %1144 = vmatprep.subr.mxu0 0.0
    %v1145 = vand.u32 %v29, 4294901760
    %1146 = vmatpush1.msra.mxu0 %v1145
    %1147 = vmatprep.subr.mxu0 0.0
    %v1148 = vand.u32 %v28, 4294901760
    %1149 = vmatpush1.msra.mxu0 %v1148
    %1150 = vmatprep.subr.mxu0 0.0
    %v1151 = vand.u32 %v27, 4294901760
    %1152 = vmatpush1.msra.mxu0 %v1151
    %1153 = vmatprep.subr.mxu0 0.0
    %v1154 = vand.u32 %v26, 4294901760
    %1155 = vmatpush1.msra.mxu0 %v1154
    %1156 = vmatprep.subr.mxu0 0.0
    %v1157 = vand.u32 %v25, 4294901760
    %1158 = vmatpush1.msra.mxu0 %v1157
    %1159 = vmatprep.subr.mxu0 0.0
    %v1160 = vand.u32 %v24, 4294901760
    %1161 = vmatpush1.msra.mxu0 %v1160
    %1162 = vmatprep.subr.mxu0 0.0
    %v1163 = vand.u32 %v23, 4294901760
    %1164 = vmatpush1.msra.mxu0 %v1163
    %1165 = vmatprep.subr.mxu0 0.0
    %v1166 = vand.u32 %v22, 4294901760
    %1167 = vmatpush1.msra.mxu0 %v1166
    %1168 = vmatprep.subr.mxu0 0.0
    %v1169 = vand.u32 %v21, 4294901760
    %1170 = vmatpush1.msra.mxu0 %v1169
    %1171 = vmatprep.subr.mxu0 0.0
    %v1172 = vand.u32 %v20, 4294901760
    %1173 = vmatpush1.msra.mxu0 %v1172
    %1174 = vmatprep.subr.mxu0 0.0
    %v1175 = vand.u32 %v19, 4294901760
    %1176 = vmatpush1.msra.mxu0 %v1175
    %1177 = vmatprep.subr.mxu0 0.0
    %v1178 = vand.u32 %v18, 4294901760
    %1179 = vmatpush1.msra.mxu0 %v1178
    %1180 = vmatprep.subr.mxu0 0.0
    %v1181 = vand.u32 %v17, 4294901760
    %1182 = vmatpush1.msra.mxu0 %v1181
    %1183 = vmatprep.subr.mxu0 0.0
    %v1184 = vand.u32 %v16, 4294901760
    %1185 = vmatpush1.msra.mxu0 %v1184
    %1186 = vmatprep.subr.mxu0 0.0
    %v1187 = vand.u32 %v15, 4294901760
    %1188 = vmatpush1.msra.mxu0 %v1187
    %1189 = vmatprep.subr.mxu0 0.0
    %v1190 = vand.u32 %v14, 4294901760
    %1191 = vmatpush1.msra.mxu0 %v1190
    %1192 = vmatprep.subr.mxu0 0.0
    %1193 = vmatpush2.msra.mxu0 0.0
    %1194 = vmatprep.subr.mxu0 0.0
    %1195 = vmatpush2.msra.mxu0 0.0
    %1196 = vmatprep.subr.mxu0 0.0
    %1197 = vmatpush2.msra.mxu0 0.0
    %1198 = vmatprep.subr.mxu0 0.0
    %1199 = vmatpush2.msra.mxu0 0.0
    %1200 = vmatprep.subr.mxu0 0.0
    %1201 = vmatpush2.msra.mxu0 0.0
    %1202 = vmatprep.subr.mxu0 0.0
    %1203 = vmatpush2.msra.mxu0 0.0
    %1204 = vmatprep.subr.mxu0 0.0
    %1205 = vmatpush2.msra.mxu0 0.0
    %1206 = vmatprep.subr.mxu0 0.0
    %1207 = vmatpush2.msra.mxu0 0.0
    %1208 = vmatprep.subr.mxu0 0.0
    %1209 = vmatpush2.msra.mxu0 0.0
    %1210 = vmatprep.subr.mxu0 0.0
    %1211 = vmatpush2.msra.mxu0 0.0
    %1212 = vmatprep.subr.mxu0 0.0
    %1213 = vmatpush2.msra.mxu0 0.0
    %1214 = vmatprep.subr.mxu0 0.0
    %1215 = vmatpush2.msra.mxu0 0.0
    %1216 = vmatprep.subr.mxu0 0.0
    %1217 = vmatpush2.msra.mxu0 0.0
    %1218 = vmatprep.subr.mxu0 0.0
    %1219 = vmatpush2.msra.mxu0 0.0
    %1220 = vmatprep.subr.mxu0 0.0
    %1221 = vmatpush2.msra.mxu0 0.0
    %1222 = vmatprep.subr.mxu0 0.0
    %1223 = vmatpush2.msra.mxu0 0.0
    %1224 = vmatprep.mubr.f32.mxu0 0.0
    %v1225 = vand.u32 %v797, 4294901760
    %v1226 = vsub.f32 %v797, %v1225
    %v1227 = vand.u32 %v1226, 4294901760
    %1228 = vmatmul.mubr.f32.gmra.mxu0 %v1227
    %v1229 = vpop.f32.mrf.mxu0
    %v1230 = vadd.f32 %v1141, %v1229
    %v1231 = vpop.f32.mrf.mxu0
    %1232 = vdwg.mxu0
    %1233 = vmatprep.subr.mxu0 0.0
    %v1234 = vand.u32 %v29, 4294901760
    %v1235 = vsub.f32 %v29, %v1234
    %v1236 = vand.u32 %v1235, 4294901760
    %1237 = vmatpush1.msra.mxu0 %v1236
    %1238 = vmatprep.subr.mxu0 0.0
    %v1239 = vand.u32 %v28, 4294901760
    %v1240 = vsub.f32 %v28, %v1239
    %v1241 = vand.u32 %v1240, 4294901760
    %1242 = vmatpush1.msra.mxu0 %v1241
    %1243 = vmatprep.subr.mxu0 0.0
    %v1244 = vand.u32 %v27, 4294901760
    %v1245 = vsub.f32 %v27, %v1244
    %v1246 = vand.u32 %v1245, 4294901760
    %1247 = vmatpush1.msra.mxu0 %v1246
    %1248 = vmatprep.subr.mxu0 0.0
    %v1249 = vand.u32 %v26, 4294901760
    %v1250 = vsub.f32 %v26, %v1249
    %v1251 = vand.u32 %v1250, 4294901760
    %1252 = vmatpush1.msra.mxu0 %v1251
    %1253 = vmatprep.subr.mxu0 0.0
    %v1254 = vand.u32 %v25, 4294901760
    %v1255 = vsub.f32 %v25, %v1254
    %v1256 = vand.u32 %v1255, 4294901760
    %1257 = vmatpush1.msra.mxu0 %v1256
    %1258 = vmatprep.subr.mxu0 0.0
    %v1259 = vand.u32 %v24, 4294901760
    %v1260 = vsub.f32 %v24, %v1259
    %v1261 = vand.u32 %v1260, 4294901760
    %1262 = vmatpush1.msra.mxu0 %v1261
    %1263 = vmatprep.subr.mxu0 0.0
    %v1264 = vand.u32 %v23, 4294901760
    %v1265 = vsub.f32 %v23, %v1264
    %v1266 = vand.u32 %v1265, 4294901760
    %1267 = vmatpush1.msra.mxu0 %v1266
    %1268 = vmatprep.subr.mxu0 0.0
    %v1269 = vand.u32 %v22, 4294901760
    %v1270 = vsub.f32 %v22, %v1269
    %v1271 = vand.u32 %v1270, 4294901760
    %1272 = vmatpush1.msra.mxu0 %v1271
    %1273 = vmatprep.subr.mxu0 0.0
    %v1274 = vand.u32 %v21, 4294901760
    %v1275 = vsub.f32 %v21, %v1274
    %v1276 = vand.u32 %v1275, 4294901760
    %1277 = vmatpush1.msra.mxu0 %v1276
    %1278 = vmatprep.subr.mxu0 0.0
    %v1279 = vand.u32 %v20, 4294901760
    %v1280 = vsub.f32 %v20, %v1279
    %v1281 = vand.u32 %v1280, 4294901760
    %1282 = vmatpush1.msra.mxu0 %v1281
    %1283 = vmatprep.subr.mxu0 0.0
    %v1284 = vand.u32 %v19, 4294901760
    %v1285 = vsub.f32 %v19, %v1284
    %v1286 = vand.u32 %v1285, 4294901760
    %1287 = vmatpush1.msra.mxu0 %v1286
    %1288 = vmatprep.subr.mxu0 0.0
    %v1289 = vand.u32 %v18, 4294901760
    %v1290 = vsub.f32 %v18, %v1289
    %v1291 = vand.u32 %v1290, 4294901760
    %1292 = vmatpush1.msra.mxu0 %v1291
    %1293 = vmatprep.subr.mxu0 0.0
    %v1294 = vand.u32 %v17, 4294901760
    %v1295 = vsub.f32 %v17, %v1294
    %v1296 = vand.u32 %v1295, 4294901760
    %1297 = vmatpush1.msra.mxu0 %v1296
    %1298 = vmatprep.subr.mxu0 0.0
    %v1299 = vand.u32 %v16, 4294901760
    %v1300 = vsub.f32 %v16, %v1299
    %v1301 = vand.u32 %v1300, 4294901760
    %1302 = vmatpush1.msra.mxu0 %v1301
    %1303 = vmatprep.subr.mxu0 0.0
    %v1304 = vand.u32 %v15, 4294901760
    %v1305 = vsub.f32 %v15, %v1304
    %v1306 = vand.u32 %v1305, 4294901760
    %1307 = vmatpush1.msra.mxu0 %v1306
    %1308 = vmatprep.subr.mxu0 0.0
    %v1309 = vand.u32 %v14, 4294901760
    %v1310 = vsub.f32 %v14, %v1309
    %v1311 = vand.u32 %v1310, 4294901760
    %1312 = vmatpush1.msra.mxu0 %v1311
    %1313 = vmatprep.subr.mxu0 0.0
    %1314 = vmatpush2.msra.mxu0 0.0
    %1315 = vmatprep.subr.mxu0 0.0
    %1316 = vmatpush2.msra.mxu0 0.0
    %1317 = vmatprep.subr.mxu0 0.0
    %1318 = vmatpush2.msra.mxu0 0.0
    %1319 = vmatprep.subr.mxu0 0.0
    %1320 = vmatpush2.msra.mxu0 0.0
    %1321 = vmatprep.subr.mxu0 0.0
    %1322 = vmatpush2.msra.mxu0 0.0
    %1323 = vmatprep.subr.mxu0 0.0
    %1324 = vmatpush2.msra.mxu0 0.0
    %1325 = vmatprep.subr.mxu0 0.0
    %1326 = vmatpush2.msra.mxu0 0.0
    %1327 = vmatprep.subr.mxu0 0.0
    %1328 = vmatpush2.msra.mxu0 0.0
    %1329 = vmatprep.subr.mxu0 0.0
    %1330 = vmatpush2.msra.mxu0 0.0
    %1331 = vmatprep.subr.mxu0 0.0
    %1332 = vmatpush2.msra.mxu0 0.0
    %1333 = vmatprep.subr.mxu0 0.0
    %1334 = vmatpush2.msra.mxu0 0.0
    %1335 = vmatprep.subr.mxu0 0.0
    %1336 = vmatpush2.msra.mxu0 0.0
    %1337 = vmatprep.subr.mxu0 0.0
    %1338 = vmatpush2.msra.mxu0 0.0
    %1339 = vmatprep.subr.mxu0 0.0
    %1340 = vmatpush2.msra.mxu0 0.0
    %1341 = vmatprep.subr.mxu0 0.0
    %1342 = vmatpush2.msra.mxu0 0.0
    %1343 = vmatprep.subr.mxu0 0.0
    %1344 = vmatpush2.msra.mxu0 0.0
    %1345 = vmatprep.mubr.f32.mxu0 0.0
    %v1346 = vand.u32 %v797, 4294901760
    %1347 = vmatmul.mubr.f32.gmra.mxu0 %v1346
    %v1348 = vpop.f32.mrf.mxu0
    %v1349 = vadd.f32 %v1230, %v1348
    %v1350 = vpop.f32.mrf.mxu0
    %1351 = vdwg.mxu0
    %1352 = vmatprep.subr.mxu0 0.0
    %v1353 = vand.u32 %v29, 4294901760
    %1354 = vmatpush1.msra.mxu0 %v1353
    %1355 = vmatprep.subr.mxu0 0.0
    %v1356 = vand.u32 %v28, 4294901760
    %1357 = vmatpush1.msra.mxu0 %v1356
    %1358 = vmatprep.subr.mxu0 0.0
    %v1359 = vand.u32 %v27, 4294901760
    %1360 = vmatpush1.msra.mxu0 %v1359
    %1361 = vmatprep.subr.mxu0 0.0
    %v1362 = vand.u32 %v26, 4294901760
    %1363 = vmatpush1.msra.mxu0 %v1362
    %1364 = vmatprep.subr.mxu0 0.0
    %v1365 = vand.u32 %v25, 4294901760
    %1366 = vmatpush1.msra.mxu0 %v1365
    %1367 = vmatprep.subr.mxu0 0.0
    %v1368 = vand.u32 %v24, 4294901760
    %1369 = vmatpush1.msra.mxu0 %v1368
    %1370 = vmatprep.subr.mxu0 0.0
    %v1371 = vand.u32 %v23, 4294901760
    %1372 = vmatpush1.msra.mxu0 %v1371
    %1373 = vmatprep.subr.mxu0 0.0
    %v1374 = vand.u32 %v22, 4294901760
    %1375 = vmatpush1.msra.mxu0 %v1374
    %1376 = vmatprep.subr.mxu0 0.0
    %v1377 = vand.u32 %v21, 4294901760
    %1378 = vmatpush1.msra.mxu0 %v1377
    %1379 = vmatprep.subr.mxu0 0.0
    %v1380 = vand.u32 %v20, 4294901760
    %1381 = vmatpush1.msra.mxu0 %v1380
    %1382 = vmatprep.subr.mxu0 0.0
    %v1383 = vand.u32 %v19, 4294901760
    %1384 = vmatpush1.msra.mxu0 %v1383
    %1385 = vmatprep.subr.mxu0 0.0
    %v1386 = vand.u32 %v18, 4294901760
    %1387 = vmatpush1.msra.mxu0 %v1386
    %1388 = vmatprep.subr.mxu0 0.0
    %v1389 = vand.u32 %v17, 4294901760
    %1390 = vmatpush1.msra.mxu0 %v1389
    %1391 = vmatprep.subr.mxu0 0.0
    %v1392 = vand.u32 %v16, 4294901760
    %1393 = vmatpush1.msra.mxu0 %v1392
    %1394 = vmatprep.subr.mxu0 0.0
    %v1395 = vand.u32 %v15, 4294901760
    %1396 = vmatpush1.msra.mxu0 %v1395
    %1397 = vmatprep.subr.mxu0 0.0
    %v1398 = vand.u32 %v14, 4294901760
    %1399 = vmatpush1.msra.mxu0 %v1398
    %1400 = vmatprep.subr.mxu0 0.0
    %1401 = vmatpush2.msra.mxu0 0.0
    %1402 = vmatprep.subr.mxu0 0.0
    %1403 = vmatpush2.msra.mxu0 0.0
    %1404 = vmatprep.subr.mxu0 0.0
    %1405 = vmatpush2.msra.mxu0 0.0
    %1406 = vmatprep.subr.mxu0 0.0
    %1407 = vmatpush2.msra.mxu0 0.0
    %1408 = vmatprep.subr.mxu0 0.0
    %1409 = vmatpush2.msra.mxu0 0.0
    %1410 = vmatprep.subr.mxu0 0.0
    %1411 = vmatpush2.msra.mxu0 0.0
    %1412 = vmatprep.subr.mxu0 0.0
    %1413 = vmatpush2.msra.mxu0 0.0
    %1414 = vmatprep.subr.mxu0 0.0
    %1415 = vmatpush2.msra.mxu0 0.0
    %1416 = vmatprep.subr.mxu0 0.0
    %1417 = vmatpush2.msra.mxu0 0.0
    %1418 = vmatprep.subr.mxu0 0.0
    %1419 = vmatpush2.msra.mxu0 0.0
    %1420 = vmatprep.subr.mxu0 0.0
    %1421 = vmatpush2.msra.mxu0 0.0
    %1422 = vmatprep.subr.mxu0 0.0
    %1423 = vmatpush2.msra.mxu0 0.0
    %1424 = vmatprep.subr.mxu0 0.0
    %1425 = vmatpush2.msra.mxu0 0.0
    %1426 = vmatprep.subr.mxu0 0.0
    %1427 = vmatpush2.msra.mxu0 0.0
    %1428 = vmatprep.subr.mxu0 0.0
    %1429 = vmatpush2.msra.mxu0 0.0
    %1430 = vmatprep.subr.mxu0 0.0
    %1431 = vmatpush2.msra.mxu0 0.0
    %1432 = vmatprep.mubr.f32.mxu0 0.0
    %v1433 = vand.u32 %v797, 4294901760
    %1434 = vmatmul.mubr.f32.gmra.mxu0 %v1433
    %v1435 = vpop.f32.mrf.mxu0
    %v1436 = vadd.f32 %v1349, %v1435
    %v1437 = vpop.f32.mrf.mxu0
    %1438 = vdwg.mxu0
    %v1439 = vand.u32 2147483647, %v1436
    %vm1440 = vcmp.le.f32.partialorder %v1439, 0.7853982
    %vm1441 = vcmp.lt.s32.totalorder %v1436, 0
    %v1442 = vand.u32 %v1436, 2139095040
    %v1443 = vshrl.u32 %v1442, 23
    %v1444 = vsub.s32 %v1443, 127
    %v1445 = vand.u32 2147483647, %v1436
    %v1446 = vand.u32 %v1445, 8388607
    %v1447 = vor.u32 %v1446, 8388608
    %v1448 = vsub.s32 0, %v1447
    %v1449 = vadd.s32 %v1444, 1
    %vm1450 = vcmp.gt.s32.totalorder %v1449, 0
    %v1451 = vsel %vm1450, %v1449, 0
    %v1452 = vshrl.u32 %v1451, 5
    %v1453 = vand.u32 %v1451, 31
    %v1454 = vsub.s32 32, %v1453
    %v1455 = vshrl.u32 683565275, %v1454
    %v1456 = vshll.u32 683565275, %v1453
    %v1457 = vshrl.u32 2475754826, %v1454
    %v1458 = vor.u32 %v1456, %v1457
    %v1459 = vshll.u32 2475754826, %v1453
    %v1460 = vshrl.u32 2131351028, %v1454
    %v1461 = vor.u32 %v1459, %v1460
    %v1462 = vshll.u32 2131351028, %v1453
    %v1463 = vshrl.u32 2102212464, %v1454
    %v1464 = vor.u32 %v1462, %v1463
    %v1465 = vshll.u32 2102212464, %v1453
    %v1466 = vshrl.u32 920167782, %v1454
    %v1467 = vor.u32 %v1465, %v1466
    %v1468 = vshll.u32 920167782, %v1453
    %v1469 = vshrl.u32 1326507024, %v1454
    %v1470 = vor.u32 %v1468, %v1469
    %vm1471 = vcmp.lt.s32.totalorder %v1452, 1
    %vm1472 = vcmp.lt.s32.totalorder %v1452, 2
    %vm1473 = vcmp.lt.s32.totalorder %v1452, 3
    %vm1474 = vcmp.lt.s32.totalorder %v1452, 4
    %v1475 = vsel %vm1471, %v1455, %v1458
    %v1476 = vsel %vm1474, %v1464, 2102212464
    %v1477 = vsel %vm1473, %v1461, %v1476
    %v1478 = vsel %vm1472, %v1475, %v1477
    %v1479 = vsel %vm1471, %v1458, %v1461
    %v1480 = vsel %vm1474, %v1467, 920167782
    %v1481 = vsel %vm1473, %v1464, %v1480
    %v1482 = vsel %vm1472, %v1479, %v1481
    %v1483 = vsel %vm1471, %v1461, %v1464
    %v1484 = vsel %vm1474, %v1470, 1326507024
    %v1485 = vsel %vm1473, %v1467, %v1484
    %v1486 = vsel %vm1472, %v1483, %v1485
    %v1487 = vshll.u32 %v1447, 8
    %v1488 = vmul.u32.u64.compose %v1487, %v1486
    %v1489 = vextract.low.u32 %v1488
    %v1490 = vextract.high.u32 %v1488
    %v1491 = vmul.u32.u64.compose %v1487, %v1482
    %v1492 = vextract.low.u32 %v1491
    %v1493 = vextract.high.u32 %v1491
    %v1494 = vmul.u32 %v1487, %v1478
    %v1495 = vadd.s32 %v1490, %v1492
    %vm1496 = vc.u32 %v1490, %v1492
    %v1497 = vadd.s32 %v1493, 1
    %v1498 = vsel %vm1496, %v1497, %v1493
    %v1499 = vadd.s32 %v1494, %v1498
    %v1500 = vadd.s32 %v1499, 536870912
    %v1501 = vshrl.u32 %v1500, 30
    %v1502 = vshll.u32 %v1501, 30
    %v1503 = vsub.s32 %v1499, %v1502
    %vm1504 = vcmp.lt.s32.totalorder %v1503, 0
    %v1505 = vsub.s32 0, %v1503
    %v1506 = vsel %vm1504, %v1505, %v1503
    %v1507 = vclz %v1506
    %v1508 = vsub.s32 %v1507, 2
    %vm1509 = vcmp.gt.s32.totalorder 0, %v1508
    %v1510 = vsel %vm1509, 0, %v1508
    %v1511 = vsub.s32 32, %v1510
    %v1512 = vshll.u32 %v1503, %v1510
    %v1513 = vshrl.u32 %v1495, %v1511
    %v1514 = vor.u32 %v1512, %v1513
    %v1515 = vsub.s32 4294967266, %v1510
    %v1516 = vadd.s32 %v1515, 127
    %v1517 = vshll.u32 %v1516, 23
    %v1518 = vor.u32 4788187, %v1517
    %v1519 = vand.u32 2147483647, %v1518
    %v1521 = vcvt.s32.f32 %v1514
    %v1522 = vmul.f32 %v1521, %v1519
    %v1523 = vxor.u32 %v1522, 2147483648
    %v1524 = vsel %vm1441, %v1523, %v1522
    %v1525 = vsub.s32 4, %v1501
    %v1526 = vsel %vm1441, %v1525, %v1501
    %v1527 = vsel %vm1440, %v1436, %v1524
    %v1528 = vsel %vm1440, 0, %v1526
    %v1529 = vcosq.f32.pop %v1527
    %v1530 = vsinq.f32.pop %v1527
    %vm1531 = vweird.f32 %v1436
    %v1532 = vadd.s32 %v1528, 3
    %v1533 = vand.u32 %v1532, 3
    %vm1534 = vcmp.lt.s32.totalorder %v1533, 2
    %vm1535 = vcmp.eq.s32.totalorder %v1533, 0
    %v1536 = vxor.u32 %v1530, 2147483648
    %v1537 = vsel %vm1535, %v1529, %v1536
    %vm1538 = vcmp.eq.s32.totalorder %v1533, 2
    %v1539 = vxor.u32 %v1529, 2147483648
    %v1540 = vsel %vm1538, %v1539, %v1530
    %v1541 = vsel %vm1534, %v1537, %v1540
    %v1542 = vsel %vm1531, nan, %v1541
    %v1543 = vmul.f32 %v795, 0.33333334
    %v1544 = vsub.f32 %v1542, %v1543
    %v1545 = vmul.f32 %v1544, 0.05050505
    %v1546 = vadd.f32 %v47, %v1545
    %1547 = vmatprep.subr.mxu0 0.0
    %v1548 = vand.u32 %v29, 4294901760
    %1549 = vmatpush1.msra.mxu0 %v1548
    %1550 = vmatprep.subr.mxu0 0.0
    %v1551 = vand.u32 %v28, 4294901760
    %1552 = vmatpush1.msra.mxu0 %v1551
    %1553 = vmatprep.subr.mxu0 0.0
    %v1554 = vand.u32 %v27, 4294901760
    %1555 = vmatpush1.msra.mxu0 %v1554
    %1556 = vmatprep.subr.mxu0 0.0
    %v1557 = vand.u32 %v26, 4294901760
    %1558 = vmatpush1.msra.mxu0 %v1557
    %1559 = vmatprep.subr.mxu0 0.0
    %v1560 = vand.u32 %v25, 4294901760
    %1561 = vmatpush1.msra.mxu0 %v1560
    %1562 = vmatprep.subr.mxu0 0.0
    %v1563 = vand.u32 %v24, 4294901760
    %1564 = vmatpush1.msra.mxu0 %v1563
    %1565 = vmatprep.subr.mxu0 0.0
    %v1566 = vand.u32 %v23, 4294901760
    %1567 = vmatpush1.msra.mxu0 %v1566
    %1568 = vmatprep.subr.mxu0 0.0
    %v1569 = vand.u32 %v22, 4294901760
    %1570 = vmatpush1.msra.mxu0 %v1569
    %1571 = vmatprep.subr.mxu0 0.0
    %v1572 = vand.u32 %v21, 4294901760
    %1573 = vmatpush1.msra.mxu0 %v1572
    %1574 = vmatprep.subr.mxu0 0.0
    %v1575 = vand.u32 %v20, 4294901760
    %1576 = vmatpush1.msra.mxu0 %v1575
    %1577 = vmatprep.subr.mxu0 0.0
    %v1578 = vand.u32 %v19, 4294901760
    %1579 = vmatpush1.msra.mxu0 %v1578
    %1580 = vmatprep.subr.mxu0 0.0
    %v1581 = vand.u32 %v18, 4294901760
    %1582 = vmatpush1.msra.mxu0 %v1581
    %1583 = vmatprep.subr.mxu0 0.0
    %v1584 = vand.u32 %v17, 4294901760
    %1585 = vmatpush1.msra.mxu0 %v1584
    %1586 = vmatprep.subr.mxu0 0.0
    %v1587 = vand.u32 %v16, 4294901760
    %1588 = vmatpush1.msra.mxu0 %v1587
    %1589 = vmatprep.subr.mxu0 0.0
    %v1590 = vand.u32 %v15, 4294901760
    %1591 = vmatpush1.msra.mxu0 %v1590
    %1592 = vmatprep.subr.mxu0 0.0
    %v1593 = vand.u32 %v14, 4294901760
    %1594 = vmatpush1.msra.mxu0 %v1593
    %1595 = vmatprep.subr.mxu0 0.0
    %1596 = vmatpush2.msra.mxu0 0.0
    %1597 = vmatprep.subr.mxu0 0.0
    %1598 = vmatpush2.msra.mxu0 0.0
    %1599 = vmatprep.subr.mxu0 0.0
    %1600 = vmatpush2.msra.mxu0 0.0
    %1601 = vmatprep.subr.mxu0 0.0
    %1602 = vmatpush2.msra.mxu0 0.0
    %1603 = vmatprep.subr.mxu0 0.0
    %1604 = vmatpush2.msra.mxu0 0.0
    %1605 = vmatprep.subr.mxu0 0.0
    %1606 = vmatpush2.msra.mxu0 0.0
    %1607 = vmatprep.subr.mxu0 0.0
    %1608 = vmatpush2.msra.mxu0 0.0
    %1609 = vmatprep.subr.mxu0 0.0
    %1610 = vmatpush2.msra.mxu0 0.0
    %1611 = vmatprep.subr.mxu0 0.0
    %1612 = vmatpush2.msra.mxu0 0.0
    %1613 = vmatprep.subr.mxu0 0.0
    %1614 = vmatpush2.msra.mxu0 0.0
    %1615 = vmatprep.subr.mxu0 0.0
    %1616 = vmatpush2.msra.mxu0 0.0
    %1617 = vmatprep.subr.mxu0 0.0
    %1618 = vmatpush2.msra.mxu0 0.0
    %1619 = vmatprep.subr.mxu0 0.0
    %1620 = vmatpush2.msra.mxu0 0.0
    %1621 = vmatprep.subr.mxu0 0.0
    %1622 = vmatpush2.msra.mxu0 0.0
    %1623 = vmatprep.subr.mxu0 0.0
    %1624 = vmatpush2.msra.mxu0 0.0
    %1625 = vmatprep.subr.mxu0 0.0
    %1626 = vmatpush2.msra.mxu0 0.0
    %1627 = vmatprep.mubr.f32.mxu0 0.0
    %v1628 = vand.u32 %v1546, 4294901760
    %v1629 = vsub.f32 %v1546, %v1628
    %v1630 = vand.u32 %v1629, 4294901760
    %v1631 = vsub.f32 %v1629, %v1630
    %v1632 = vand.u32 %v1631, 4294901760
    %1633 = vmatmul.mubr.f32.gmra.mxu0 %v1632
    %v1634 = vpop.f32.mrf.mxu0
    %v1635 = vadd.f32 %v35, %v1634
    %v1636 = vpop.f32.mrf.mxu0
    %1637 = vdwg.mxu0
    %1638 = vmatprep.subr.mxu0 0.0
    %v1639 = vand.u32 %v29, 4294901760
    %v1640 = vsub.f32 %v29, %v1639
    %v1641 = vand.u32 %v1640, 4294901760
    %v1642 = vsub.f32 %v1640, %v1641
    %v1643 = vand.u32 %v1642, 4294901760
    %1644 = vmatpush1.msra.mxu0 %v1643
    %1645 = vmatprep.subr.mxu0 0.0
    %v1646 = vand.u32 %v28, 4294901760
    %v1647 = vsub.f32 %v28, %v1646
    %v1648 = vand.u32 %v1647, 4294901760
    %v1649 = vsub.f32 %v1647, %v1648
    %v1650 = vand.u32 %v1649, 4294901760
    %1651 = vmatpush1.msra.mxu0 %v1650
    %1652 = vmatprep.subr.mxu0 0.0
    %v1653 = vand.u32 %v27, 4294901760
    %v1654 = vsub.f32 %v27, %v1653
    %v1655 = vand.u32 %v1654, 4294901760
    %v1656 = vsub.f32 %v1654, %v1655
    %v1657 = vand.u32 %v1656, 4294901760
    %1658 = vmatpush1.msra.mxu0 %v1657
    %1659 = vmatprep.subr.mxu0 0.0
    %v1660 = vand.u32 %v26, 4294901760
    %v1661 = vsub.f32 %v26, %v1660
    %v1662 = vand.u32 %v1661, 4294901760
    %v1663 = vsub.f32 %v1661, %v1662
    %v1664 = vand.u32 %v1663, 4294901760
    %1665 = vmatpush1.msra.mxu0 %v1664
    %1666 = vmatprep.subr.mxu0 0.0
    %v1667 = vand.u32 %v25, 4294901760
    %v1668 = vsub.f32 %v25, %v1667
    %v1669 = vand.u32 %v1668, 4294901760
    %v1670 = vsub.f32 %v1668, %v1669
    %v1671 = vand.u32 %v1670, 4294901760
    %1672 = vmatpush1.msra.mxu0 %v1671
    %1673 = vmatprep.subr.mxu0 0.0
    %v1674 = vand.u32 %v24, 4294901760
    %v1675 = vsub.f32 %v24, %v1674
    %v1676 = vand.u32 %v1675, 4294901760
    %v1677 = vsub.f32 %v1675, %v1676
    %v1678 = vand.u32 %v1677, 4294901760
    %1679 = vmatpush1.msra.mxu0 %v1678
    %1680 = vmatprep.subr.mxu0 0.0
    %v1681 = vand.u32 %v23, 4294901760
    %v1682 = vsub.f32 %v23, %v1681
    %v1683 = vand.u32 %v1682, 4294901760
    %v1684 = vsub.f32 %v1682, %v1683
    %v1685 = vand.u32 %v1684, 4294901760
    %1686 = vmatpush1.msra.mxu0 %v1685
    %1687 = vmatprep.subr.mxu0 0.0
    %v1688 = vand.u32 %v22, 4294901760
    %v1689 = vsub.f32 %v22, %v1688
    %v1690 = vand.u32 %v1689, 4294901760
    %v1691 = vsub.f32 %v1689, %v1690
    %v1692 = vand.u32 %v1691, 4294901760
    %1693 = vmatpush1.msra.mxu0 %v1692
    %1694 = vmatprep.subr.mxu0 0.0
    %v1695 = vand.u32 %v21, 4294901760
    %v1696 = vsub.f32 %v21, %v1695
    %v1697 = vand.u32 %v1696, 4294901760
    %v1698 = vsub.f32 %v1696, %v1697
    %v1699 = vand.u32 %v1698, 4294901760
    %1700 = vmatpush1.msra.mxu0 %v1699
    %1701 = vmatprep.subr.mxu0 0.0
    %v1702 = vand.u32 %v20, 4294901760
    %v1703 = vsub.f32 %v20, %v1702
    %v1704 = vand.u32 %v1703, 4294901760
    %v1705 = vsub.f32 %v1703, %v1704
    %v1706 = vand.u32 %v1705, 4294901760
    %1707 = vmatpush1.msra.mxu0 %v1706
    %1708 = vmatprep.subr.mxu0 0.0
    %v1709 = vand.u32 %v19, 4294901760
    %v1710 = vsub.f32 %v19, %v1709
    %v1711 = vand.u32 %v1710, 4294901760
    %v1712 = vsub.f32 %v1710, %v1711
    %v1713 = vand.u32 %v1712, 4294901760
    %1714 = vmatpush1.msra.mxu0 %v1713
    %1715 = vmatprep.subr.mxu0 0.0
    %v1716 = vand.u32 %v18, 4294901760
    %v1717 = vsub.f32 %v18, %v1716
    %v1718 = vand.u32 %v1717, 4294901760
    %v1719 = vsub.f32 %v1717, %v1718
    %v1720 = vand.u32 %v1719, 4294901760
    %1721 = vmatpush1.msra.mxu0 %v1720
    %1722 = vmatprep.subr.mxu0 0.0
    %v1723 = vand.u32 %v17, 4294901760
    %v1724 = vsub.f32 %v17, %v1723
    %v1725 = vand.u32 %v1724, 4294901760
    %v1726 = vsub.f32 %v1724, %v1725
    %v1727 = vand.u32 %v1726, 4294901760
    %1728 = vmatpush1.msra.mxu0 %v1727
    %1729 = vmatprep.subr.mxu0 0.0
    %v1730 = vand.u32 %v16, 4294901760
    %v1731 = vsub.f32 %v16, %v1730
    %v1732 = vand.u32 %v1731, 4294901760
    %v1733 = vsub.f32 %v1731, %v1732
    %v1734 = vand.u32 %v1733, 4294901760
    %1735 = vmatpush1.msra.mxu0 %v1734
    %1736 = vmatprep.subr.mxu0 0.0
    %v1737 = vand.u32 %v15, 4294901760
    %v1738 = vsub.f32 %v15, %v1737
    %v1739 = vand.u32 %v1738, 4294901760
    %v1740 = vsub.f32 %v1738, %v1739
    %v1741 = vand.u32 %v1740, 4294901760
    %1742 = vmatpush1.msra.mxu0 %v1741
    %1743 = vmatprep.subr.mxu0 0.0
    %v1744 = vand.u32 %v14, 4294901760
    %v1745 = vsub.f32 %v14, %v1744
    %v1746 = vand.u32 %v1745, 4294901760
    %v1747 = vsub.f32 %v1745, %v1746
    %v1748 = vand.u32 %v1747, 4294901760
    %1749 = vmatpush1.msra.mxu0 %v1748
    %1750 = vmatprep.subr.mxu0 0.0
    %1751 = vmatpush2.msra.mxu0 0.0
    %1752 = vmatprep.subr.mxu0 0.0
    %1753 = vmatpush2.msra.mxu0 0.0
    %1754 = vmatprep.subr.mxu0 0.0
    %1755 = vmatpush2.msra.mxu0 0.0
    %1756 = vmatprep.subr.mxu0 0.0
    %1757 = vmatpush2.msra.mxu0 0.0
    %1758 = vmatprep.subr.mxu0 0.0
    %1759 = vmatpush2.msra.mxu0 0.0
    %1760 = vmatprep.subr.mxu0 0.0
    %1761 = vmatpush2.msra.mxu0 0.0
    %1762 = vmatprep.subr.mxu0 0.0
    %1763 = vmatpush2.msra.mxu0 0.0
    %1764 = vmatprep.subr.mxu0 0.0
    %1765 = vmatpush2.msra.mxu0 0.0
    %1766 = vmatprep.subr.mxu0 0.0
    %1767 = vmatpush2.msra.mxu0 0.0
    %1768 = vmatprep.subr.mxu0 0.0
    %1769 = vmatpush2.msra.mxu0 0.0
    %1770 = vmatprep.subr.mxu0 0.0
    %1771 = vmatpush2.msra.mxu0 0.0
    %1772 = vmatprep.subr.mxu0 0.0
    %1773 = vmatpush2.msra.mxu0 0.0
    %1774 = vmatprep.subr.mxu0 0.0
    %1775 = vmatpush2.msra.mxu0 0.0
    %1776 = vmatprep.subr.mxu0 0.0
    %1777 = vmatpush2.msra.mxu0 0.0
    %1778 = vmatprep.subr.mxu0 0.0
    %1779 = vmatpush2.msra.mxu0 0.0
    %1780 = vmatprep.subr.mxu0 0.0
    %1781 = vmatpush2.msra.mxu0 0.0
    %1782 = vmatprep.mubr.f32.mxu0 0.0
    %v1783 = vand.u32 %v1546, 4294901760
    %1784 = vmatmul.mubr.f32.gmra.mxu0 %v1783
    %v1785 = vpop.f32.mrf.mxu0
    %v1786 = vadd.f32 %v1635, %v1785
    %v1787 = vpop.f32.mrf.mxu0
    %1788 = vdwg.mxu0
    %1789 = vmatprep.subr.mxu0 0.0
    %v1790 = vand.u32 %v29, 4294901760
    %v1791 = vsub.f32 %v29, %v1790
    %1792 = vmatpush1.msra.mxu0 %v1791
    %1793 = vmatprep.subr.mxu0 0.0
    %v1794 = vand.u32 %v28, 4294901760
    %v1795 = vsub.f32 %v28, %v1794
    %1796 = vmatpush1.msra.mxu0 %v1795
    %1797 = vmatprep.subr.mxu0 0.0
    %v1798 = vand.u32 %v27, 4294901760
    %v1799 = vsub.f32 %v27, %v1798
    %1800 = vmatpush1.msra.mxu0 %v1799
    %1801 = vmatprep.subr.mxu0 0.0
    %v1802 = vand.u32 %v26, 4294901760
    %v1803 = vsub.f32 %v26, %v1802
    %1804 = vmatpush1.msra.mxu0 %v1803
    %1805 = vmatprep.subr.mxu0 0.0
    %v1806 = vand.u32 %v25, 4294901760
    %v1807 = vsub.f32 %v25, %v1806
    %1808 = vmatpush1.msra.mxu0 %v1807
    %1809 = vmatprep.subr.mxu0 0.0
    %v1810 = vand.u32 %v24, 4294901760
    %v1811 = vsub.f32 %v24, %v1810
    %1812 = vmatpush1.msra.mxu0 %v1811
    %1813 = vmatprep.subr.mxu0 0.0
    %v1814 = vand.u32 %v23, 4294901760
    %v1815 = vsub.f32 %v23, %v1814
    %1816 = vmatpush1.msra.mxu0 %v1815
    %1817 = vmatprep.subr.mxu0 0.0
    %v1818 = vand.u32 %v22, 4294901760
    %v1819 = vsub.f32 %v22, %v1818
    %1820 = vmatpush1.msra.mxu0 %v1819
    %1821 = vmatprep.subr.mxu0 0.0
    %v1822 = vand.u32 %v21, 4294901760
    %v1823 = vsub.f32 %v21, %v1822
    %1824 = vmatpush1.msra.mxu0 %v1823
    %1825 = vmatprep.subr.mxu0 0.0
    %v1826 = vand.u32 %v20, 4294901760
    %v1827 = vsub.f32 %v20, %v1826
    %1828 = vmatpush1.msra.mxu0 %v1827
    %1829 = vmatprep.subr.mxu0 0.0
    %v1830 = vand.u32 %v19, 4294901760
    %v1831 = vsub.f32 %v19, %v1830
    %1832 = vmatpush1.msra.mxu0 %v1831
    %1833 = vmatprep.subr.mxu0 0.0
    %v1834 = vand.u32 %v18, 4294901760
    %v1835 = vsub.f32 %v18, %v1834
    %1836 = vmatpush1.msra.mxu0 %v1835
    %1837 = vmatprep.subr.mxu0 0.0
    %v1838 = vand.u32 %v17, 4294901760
    %v1839 = vsub.f32 %v17, %v1838
    %1840 = vmatpush1.msra.mxu0 %v1839
    %1841 = vmatprep.subr.mxu0 0.0
    %v1842 = vand.u32 %v16, 4294901760
    %v1843 = vsub.f32 %v16, %v1842
    %1844 = vmatpush1.msra.mxu0 %v1843
    %1845 = vmatprep.subr.mxu0 0.0
    %v1846 = vand.u32 %v15, 4294901760
    %v1847 = vsub.f32 %v15, %v1846
    %1848 = vmatpush1.msra.mxu0 %v1847
    %1849 = vmatprep.subr.mxu0 0.0
    %v1850 = vand.u32 %v14, 4294901760
    %v1851 = vsub.f32 %v14, %v1850
    %1852 = vmatpush1.msra.mxu0 %v1851
    %1853 = vmatprep.subr.mxu0 0.0
    %1854 = vmatpush2.msra.mxu0 0.0
    %1855 = vmatprep.subr.mxu0 0.0
    %1856 = vmatpush2.msra.mxu0 0.0
    %1857 = vmatprep.subr.mxu0 0.0
    %1858 = vmatpush2.msra.mxu0 0.0
    %1859 = vmatprep.subr.mxu0 0.0
    %1860 = vmatpush2.msra.mxu0 0.0
    %1861 = vmatprep.subr.mxu0 0.0
    %1862 = vmatpush2.msra.mxu0 0.0
    %1863 = vmatprep.subr.mxu0 0.0
    %1864 = vmatpush2.msra.mxu0 0.0
    %1865 = vmatprep.subr.mxu0 0.0
    %1866 = vmatpush2.msra.mxu0 0.0
    %1867 = vmatprep.subr.mxu0 0.0
    %1868 = vmatpush2.msra.mxu0 0.0
    %1869 = vmatprep.subr.mxu0 0.0
    %1870 = vmatpush2.msra.mxu0 0.0
    %1871 = vmatprep.subr.mxu0 0.0
    %1872 = vmatpush2.msra.mxu0 0.0
    %1873 = vmatprep.subr.mxu0 0.0
    %1874 = vmatpush2.msra.mxu0 0.0
    %1875 = vmatprep.subr.mxu0 0.0
    %1876 = vmatpush2.msra.mxu0 0.0
    %1877 = vmatprep.subr.mxu0 0.0
    %1878 = vmatpush2.msra.mxu0 0.0
    %1879 = vmatprep.subr.mxu0 0.0
    %1880 = vmatpush2.msra.mxu0 0.0
    %1881 = vmatprep.subr.mxu0 0.0
    %1882 = vmatpush2.msra.mxu0 0.0
    %1883 = vmatprep.subr.mxu0 0.0
    %1884 = vmatpush2.msra.mxu0 0.0
    %1885 = vmatprep.mubr.f32.mxu0 0.0
    %v1886 = vand.u32 %v1546, 4294901760
    %v1887 = vsub.f32 %v1546, %v1886
    %1888 = vmatmul.mubr.f32.gmra.mxu0 %v1887
    %v1889 = vpop.f32.mrf.mxu0
    %v1890 = vadd.f32 %v1786, %v1889
    %v1891 = vpop.f32.mrf.mxu0
    %1892 = vdwg.mxu0
    %1893 = vmatprep.subr.mxu0 0.0
    %v1894 = vand.u32 %v29, 4294901760
    %1895 = vmatpush1.msra.mxu0 %v1894
    %1896 = vmatprep.subr.mxu0 0.0
    %v1897 = vand.u32 %v28, 4294901760
    %1898 = vmatpush1.msra.mxu0 %v1897
    %1899 = vmatprep.subr.mxu0 0.0
    %v1900 = vand.u32 %v27, 4294901760
    %1901 = vmatpush1.msra.mxu0 %v1900
    %1902 = vmatprep.subr.mxu0 0.0
    %v1903 = vand.u32 %v26, 4294901760
    %1904 = vmatpush1.msra.mxu0 %v1903
    %1905 = vmatprep.subr.mxu0 0.0
    %v1906 = vand.u32 %v25, 4294901760
    %1907 = vmatpush1.msra.mxu0 %v1906
    %1908 = vmatprep.subr.mxu0 0.0
    %v1909 = vand.u32 %v24, 4294901760
    %1910 = vmatpush1.msra.mxu0 %v1909
    %1911 = vmatprep.subr.mxu0 0.0
    %v1912 = vand.u32 %v23, 4294901760
    %1913 = vmatpush1.msra.mxu0 %v1912
    %1914 = vmatprep.subr.mxu0 0.0
    %v1915 = vand.u32 %v22, 4294901760
    %1916 = vmatpush1.msra.mxu0 %v1915
    %1917 = vmatprep.subr.mxu0 0.0
    %v1918 = vand.u32 %v21, 4294901760
    %1919 = vmatpush1.msra.mxu0 %v1918
    %1920 = vmatprep.subr.mxu0 0.0
    %v1921 = vand.u32 %v20, 4294901760
    %1922 = vmatpush1.msra.mxu0 %v1921
    %1923 = vmatprep.subr.mxu0 0.0
    %v1924 = vand.u32 %v19, 4294901760
    %1925 = vmatpush1.msra.mxu0 %v1924
    %1926 = vmatprep.subr.mxu0 0.0
    %v1927 = vand.u32 %v18, 4294901760
    %1928 = vmatpush1.msra.mxu0 %v1927
    %1929 = vmatprep.subr.mxu0 0.0
    %v1930 = vand.u32 %v17, 4294901760
    %1931 = vmatpush1.msra.mxu0 %v1930
    %1932 = vmatprep.subr.mxu0 0.0
    %v1933 = vand.u32 %v16, 4294901760
    %1934 = vmatpush1.msra.mxu0 %v1933
    %1935 = vmatprep.subr.mxu0 0.0
    %v1936 = vand.u32 %v15, 4294901760
    %1937 = vmatpush1.msra.mxu0 %v1936
    %1938 = vmatprep.subr.mxu0 0.0
    %v1939 = vand.u32 %v14, 4294901760
    %1940 = vmatpush1.msra.mxu0 %v1939
    %1941 = vmatprep.subr.mxu0 0.0
    %1942 = vmatpush2.msra.mxu0 0.0
    %1943 = vmatprep.subr.mxu0 0.0
    %1944 = vmatpush2.msra.mxu0 0.0
    %1945 = vmatprep.subr.mxu0 0.0
    %1946 = vmatpush2.msra.mxu0 0.0
    %1947 = vmatprep.subr.mxu0 0.0
    %1948 = vmatpush2.msra.mxu0 0.0
    %1949 = vmatprep.subr.mxu0 0.0
    %1950 = vmatpush2.msra.mxu0 0.0
    %1951 = vmatprep.subr.mxu0 0.0
    %1952 = vmatpush2.msra.mxu0 0.0
    %1953 = vmatprep.subr.mxu0 0.0
    %1954 = vmatpush2.msra.mxu0 0.0
    %1955 = vmatprep.subr.mxu0 0.0
    %1956 = vmatpush2.msra.mxu0 0.0
    %1957 = vmatprep.subr.mxu0 0.0
    %1958 = vmatpush2.msra.mxu0 0.0
    %1959 = vmatprep.subr.mxu0 0.0
    %1960 = vmatpush2.msra.mxu0 0.0
    %1961 = vmatprep.subr.mxu0 0.0
    %1962 = vmatpush2.msra.mxu0 0.0
    %1963 = vmatprep.subr.mxu0 0.0
    %1964 = vmatpush2.msra.mxu0 0.0
    %1965 = vmatprep.subr.mxu0 0.0
    %1966 = vmatpush2.msra.mxu0 0.0
    %1967 = vmatprep.subr.mxu0 0.0
    %1968 = vmatpush2.msra.mxu0 0.0
    %1969 = vmatprep.subr.mxu0 0.0
    %1970 = vmatpush2.msra.mxu0 0.0
    %1971 = vmatprep.subr.mxu0 0.0
    %1972 = vmatpush2.msra.mxu0 0.0
    %1973 = vmatprep.mubr.f32.mxu0 0.0
    %v1974 = vand.u32 %v1546, 4294901760
    %v1975 = vsub.f32 %v1546, %v1974
    %v1976 = vand.u32 %v1975, 4294901760
    %1977 = vmatmul.mubr.f32.gmra.mxu0 %v1976
    %v1978 = vpop.f32.mrf.mxu0
    %v1979 = vadd.f32 %v1890, %v1978
    %v1980 = vpop.f32.mrf.mxu0
    %1981 = vdwg.mxu0
    %1982 = vmatprep.subr.mxu0 0.0
    %v1983 = vand.u32 %v29, 4294901760
    %v1984 = vsub.f32 %v29, %v1983
    %v1985 = vand.u32 %v1984, 4294901760
    %1986 = vmatpush1.msra.mxu0 %v1985
    %1987 = vmatprep.subr.mxu0 0.0
    %v1988 = vand.u32 %v28, 4294901760
    %v1989 = vsub.f32 %v28, %v1988
    %v1990 = vand.u32 %v1989, 4294901760
    %1991 = vmatpush1.msra.mxu0 %v1990
    %1992 = vmatprep.subr.mxu0 0.0
    %v1993 = vand.u32 %v27, 4294901760
    %v1994 = vsub.f32 %v27, %v1993
    %v1995 = vand.u32 %v1994, 4294901760
    %1996 = vmatpush1.msra.mxu0 %v1995
    %1997 = vmatprep.subr.mxu0 0.0
    %v1998 = vand.u32 %v26, 4294901760
    %v1999 = vsub.f32 %v26, %v1998
    %v2000 = vand.u32 %v1999, 4294901760
    %2001 = vmatpush1.msra.mxu0 %v2000
    %2002 = vmatprep.subr.mxu0 0.0
    %v2003 = vand.u32 %v25, 4294901760
    %v2004 = vsub.f32 %v25, %v2003
    %v2005 = vand.u32 %v2004, 4294901760
    %2006 = vmatpush1.msra.mxu0 %v2005
    %2007 = vmatprep.subr.mxu0 0.0
    %v2008 = vand.u32 %v24, 4294901760
    %v2009 = vsub.f32 %v24, %v2008
    %v2010 = vand.u32 %v2009, 4294901760
    %2011 = vmatpush1.msra.mxu0 %v2010
    %2012 = vmatprep.subr.mxu0 0.0
    %v2013 = vand.u32 %v23, 4294901760
    %v2014 = vsub.f32 %v23, %v2013
    %v2015 = vand.u32 %v2014, 4294901760
    %2016 = vmatpush1.msra.mxu0 %v2015
    %2017 = vmatprep.subr.mxu0 0.0
    %v2018 = vand.u32 %v22, 4294901760
    %v2019 = vsub.f32 %v22, %v2018
    %v2020 = vand.u32 %v2019, 4294901760
    %2021 = vmatpush1.msra.mxu0 %v2020
    %2022 = vmatprep.subr.mxu0 0.0
    %v2023 = vand.u32 %v21, 4294901760
    %v2024 = vsub.f32 %v21, %v2023
    %v2025 = vand.u32 %v2024, 4294901760
    %2026 = vmatpush1.msra.mxu0 %v2025
    %2027 = vmatprep.subr.mxu0 0.0
    %v2028 = vand.u32 %v20, 4294901760
    %v2029 = vsub.f32 %v20, %v2028
    %v2030 = vand.u32 %v2029, 4294901760
    %2031 = vmatpush1.msra.mxu0 %v2030
    %2032 = vmatprep.subr.mxu0 0.0
    %v2033 = vand.u32 %v19, 4294901760
    %v2034 = vsub.f32 %v19, %v2033
    %v2035 = vand.u32 %v2034, 4294901760
    %2036 = vmatpush1.msra.mxu0 %v2035
    %2037 = vmatprep.subr.mxu0 0.0
    %v2038 = vand.u32 %v18, 4294901760
    %v2039 = vsub.f32 %v18, %v2038
    %v2040 = vand.u32 %v2039, 4294901760
    %2041 = vmatpush1.msra.mxu0 %v2040
    %2042 = vmatprep.subr.mxu0 0.0
    %v2043 = vand.u32 %v17, 4294901760
    %v2044 = vsub.f32 %v17, %v2043
    %v2045 = vand.u32 %v2044, 4294901760
    %2046 = vmatpush1.msra.mxu0 %v2045
    %2047 = vmatprep.subr.mxu0 0.0
    %v2048 = vand.u32 %v16, 4294901760
    %v2049 = vsub.f32 %v16, %v2048
    %v2050 = vand.u32 %v2049, 4294901760
    %2051 = vmatpush1.msra.mxu0 %v2050
    %2052 = vmatprep.subr.mxu0 0.0
    %v2053 = vand.u32 %v15, 4294901760
    %v2054 = vsub.f32 %v15, %v2053
    %v2055 = vand.u32 %v2054, 4294901760
    %2056 = vmatpush1.msra.mxu0 %v2055
    %2057 = vmatprep.subr.mxu0 0.0
    %v2058 = vand.u32 %v14, 4294901760
    %v2059 = vsub.f32 %v14, %v2058
    %v2060 = vand.u32 %v2059, 4294901760
    %2061 = vmatpush1.msra.mxu0 %v2060
    %2062 = vmatprep.subr.mxu0 0.0
    %2063 = vmatpush2.msra.mxu0 0.0
    %2064 = vmatprep.subr.mxu0 0.0
    %2065 = vmatpush2.msra.mxu0 0.0
    %2066 = vmatprep.subr.mxu0 0.0
    %2067 = vmatpush2.msra.mxu0 0.0
    %2068 = vmatprep.subr.mxu0 0.0
    %2069 = vmatpush2.msra.mxu0 0.0
    %2070 = vmatprep.subr.mxu0 0.0
    %2071 = vmatpush2.msra.mxu0 0.0
    %2072 = vmatprep.subr.mxu0 0.0
    %2073 = vmatpush2.msra.mxu0 0.0
    %2074 = vmatprep.subr.mxu0 0.0
    %2075 = vmatpush2.msra.mxu0 0.0
    %2076 = vmatprep.subr.mxu0 0.0
    %2077 = vmatpush2.msra.mxu0 0.0
    %2078 = vmatprep.subr.mxu0 0.0
    %2079 = vmatpush2.msra.mxu0 0.0
    %2080 = vmatprep.subr.mxu0 0.0
    %2081 = vmatpush2.msra.mxu0 0.0
    %2082 = vmatprep.subr.mxu0 0.0
    %2083 = vmatpush2.msra.mxu0 0.0
    %2084 = vmatprep.subr.mxu0 0.0
    %2085 = vmatpush2.msra.mxu0 0.0
    %2086 = vmatprep.subr.mxu0 0.0
    %2087 = vmatpush2.msra.mxu0 0.0
    %2088 = vmatprep.subr.mxu0 0.0
    %2089 = vmatpush2.msra.mxu0 0.0
    %2090 = vmatprep.subr.mxu0 0.0
    %2091 = vmatpush2.msra.mxu0 0.0
    %2092 = vmatprep.subr.mxu0 0.0
    %2093 = vmatpush2.msra.mxu0 0.0
    %2094 = vmatprep.mubr.f32.mxu0 0.0
    %v2095 = vand.u32 %v1546, 4294901760
    %2096 = vmatmul.mubr.f32.gmra.mxu0 %v2095
    %v2097 = vpop.f32.mrf.mxu0
    %v2098 = vadd.f32 %v1979, %v2097
    %v2099 = vpop.f32.mrf.mxu0
    %2100 = vdwg.mxu0
    %2101 = vmatprep.subr.mxu0 0.0
    %v2102 = vand.u32 %v29, 4294901760
    %2103 = vmatpush1.msra.mxu0 %v2102
    %2104 = vmatprep.subr.mxu0 0.0
    %v2105 = vand.u32 %v28, 4294901760
    %2106 = vmatpush1.msra.mxu0 %v2105
    %2107 = vmatprep.subr.mxu0 0.0
    %v2108 = vand.u32 %v27, 4294901760
    %2109 = vmatpush1.msra.mxu0 %v2108
    %2110 = vmatprep.subr.mxu0 0.0
    %v2111 = vand.u32 %v26, 4294901760
    %2112 = vmatpush1.msra.mxu0 %v2111
    %2113 = vmatprep.subr.mxu0 0.0
    %v2114 = vand.u32 %v25, 4294901760
    %2115 = vmatpush1.msra.mxu0 %v2114
    %2116 = vmatprep.subr.mxu0 0.0
    %v2117 = vand.u32 %v24, 4294901760
    %2118 = vmatpush1.msra.mxu0 %v2117
    %2119 = vmatprep.subr.mxu0 0.0
    %v2120 = vand.u32 %v23, 4294901760
    %2121 = vmatpush1.msra.mxu0 %v2120
    %2122 = vmatprep.subr.mxu0 0.0
    %v2123 = vand.u32 %v22, 4294901760
    %2124 = vmatpush1.msra.mxu0 %v2123
    %2125 = vmatprep.subr.mxu0 0.0
    %v2126 = vand.u32 %v21, 4294901760
    %2127 = vmatpush1.msra.mxu0 %v2126
    %2128 = vmatprep.subr.mxu0 0.0
    %v2129 = vand.u32 %v20, 4294901760
    %2130 = vmatpush1.msra.mxu0 %v2129
    %2131 = vmatprep.subr.mxu0 0.0
    %v2132 = vand.u32 %v19, 4294901760
    %2133 = vmatpush1.msra.mxu0 %v2132
    %2134 = vmatprep.subr.mxu0 0.0
    %v2135 = vand.u32 %v18, 4294901760
    %2136 = vmatpush1.msra.mxu0 %v2135
    %2137 = vmatprep.subr.mxu0 0.0
    %v2138 = vand.u32 %v17, 4294901760
    %2139 = vmatpush1.msra.mxu0 %v2138
    %2140 = vmatprep.subr.mxu0 0.0
    %v2141 = vand.u32 %v16, 4294901760
    %2142 = vmatpush1.msra.mxu0 %v2141
    %2143 = vmatprep.subr.mxu0 0.0
    %v2144 = vand.u32 %v15, 4294901760
    %2145 = vmatpush1.msra.mxu0 %v2144
    %2146 = vmatprep.subr.mxu0 0.0
    %v2147 = vand.u32 %v14, 4294901760
    %2148 = vmatpush1.msra.mxu0 %v2147
    %2149 = vmatprep.subr.mxu0 0.0
    %2150 = vmatpush2.msra.mxu0 0.0
    %2151 = vmatprep.subr.mxu0 0.0
    %2152 = vmatpush2.msra.mxu0 0.0
    %2153 = vmatprep.subr.mxu0 0.0
    %2154 = vmatpush2.msra.mxu0 0.0
    %2155 = vmatprep.subr.mxu0 0.0
    %2156 = vmatpush2.msra.mxu0 0.0
    %2157 = vmatprep.subr.mxu0 0.0
    %2158 = vmatpush2.msra.mxu0 0.0
    %2159 = vmatprep.subr.mxu0 0.0
    %2160 = vmatpush2.msra.mxu0 0.0
    %2161 = vmatprep.subr.mxu0 0.0
    %2162 = vmatpush2.msra.mxu0 0.0
    %2163 = vmatprep.subr.mxu0 0.0
    %2164 = vmatpush2.msra.mxu0 0.0
    %2165 = vmatprep.subr.mxu0 0.0
    %2166 = vmatpush2.msra.mxu0 0.0
    %2167 = vmatprep.subr.mxu0 0.0
    %2168 = vmatpush2.msra.mxu0 0.0
    %2169 = vmatprep.subr.mxu0 0.0
    %2170 = vmatpush2.msra.mxu0 0.0
    %2171 = vmatprep.subr.mxu0 0.0
    %2172 = vmatpush2.msra.mxu0 0.0
    %2173 = vmatprep.subr.mxu0 0.0
    %2174 = vmatpush2.msra.mxu0 0.0
    %2175 = vmatprep.subr.mxu0 0.0
    %2176 = vmatpush2.msra.mxu0 0.0
    %2177 = vmatprep.subr.mxu0 0.0
    %2178 = vmatpush2.msra.mxu0 0.0
    %2179 = vmatprep.subr.mxu0 0.0
    %2180 = vmatpush2.msra.mxu0 0.0
    %2181 = vmatprep.mubr.f32.mxu0 0.0
    %v2182 = vand.u32 %v1546, 4294901760
    %2183 = vmatmul.mubr.f32.gmra.mxu0 %v2182
    %v2184 = vpop.f32.mrf.mxu0
    %v2185 = vadd.f32 %v2098, %v2184
    %v2186 = vpop.f32.mrf.mxu0
    %2187 = vdwg.mxu0
    %v2188 = vand.u32 2147483647, %v2185
    %vm2189 = vcmp.le.f32.partialorder %v2188, 0.7853982
    %vm2190 = vcmp.lt.s32.totalorder %v2185, 0
    %v2191 = vand.u32 %v2185, 2139095040
    %v2192 = vshrl.u32 %v2191, 23
    %v2193 = vsub.s32 %v2192, 127
    %v2194 = vand.u32 2147483647, %v2185
    %v2195 = vand.u32 %v2194, 8388607
    %v2196 = vor.u32 %v2195, 8388608
    %v2197 = vsub.s32 0, %v2196
    %v2198 = vadd.s32 %v2193, 1
    %vm2199 = vcmp.gt.s32.totalorder %v2198, 0
    %v2200 = vsel %vm2199, %v2198, 0
    %v2201 = vshrl.u32 %v2200, 5
    %v2202 = vand.u32 %v2200, 31
    %v2203 = vsub.s32 32, %v2202
    %v2204 = vshrl.u32 683565275, %v2203
    %v2205 = vshll.u32 683565275, %v2202
    %v2206 = vshrl.u32 2475754826, %v2203
    %v2207 = vor.u32 %v2205, %v2206
    %v2208 = vshll.u32 2475754826, %v2202
    %v2209 = vshrl.u32 2131351028, %v2203
    %v2210 = vor.u32 %v2208, %v2209
    %v2211 = vshll.u32 2131351028, %v2202
    %v2212 = vshrl.u32 2102212464, %v2203
    %v2213 = vor.u32 %v2211, %v2212
    %v2214 = vshll.u32 2102212464, %v2202
    %v2215 = vshrl.u32 920167782, %v2203
    %v2216 = vor.u32 %v2214, %v2215
    %v2217 = vshll.u32 920167782, %v2202
    %v2218 = vshrl.u32 1326507024, %v2203
    %v2219 = vor.u32 %v2217, %v2218
    %vm2220 = vcmp.lt.s32.totalorder %v2201, 1
    %vm2221 = vcmp.lt.s32.totalorder %v2201, 2
    %vm2222 = vcmp.lt.s32.totalorder %v2201, 3
    %vm2223 = vcmp.lt.s32.totalorder %v2201, 4
    %v2224 = vsel %vm2220, %v2204, %v2207
    %v2225 = vsel %vm2223, %v2213, 2102212464
    %v2226 = vsel %vm2222, %v2210, %v2225
    %v2227 = vsel %vm2221, %v2224, %v2226
    %v2228 = vsel %vm2220, %v2207, %v2210
    %v2229 = vsel %vm2223, %v2216, 920167782
    %v2230 = vsel %vm2222, %v2213, %v2229
    %v2231 = vsel %vm2221, %v2228, %v2230
    %v2232 = vsel %vm2220, %v2210, %v2213
    %v2233 = vsel %vm2223, %v2219, 1326507024
    %v2234 = vsel %vm2222, %v2216, %v2233
    %v2235 = vsel %vm2221, %v2232, %v2234
    %v2236 = vshll.u32 %v2196, 8
    %v2237 = vmul.u32.u64.compose %v2236, %v2235
    %v2238 = vextract.low.u32 %v2237
    %v2239 = vextract.high.u32 %v2237
    %v2240 = vmul.u32.u64.compose %v2236, %v2231
    %v2241 = vextract.low.u32 %v2240
    %v2242 = vextract.high.u32 %v2240
    %v2243 = vmul.u32 %v2236, %v2227
    %v2244 = vadd.s32 %v2239, %v2241
    %vm2245 = vc.u32 %v2239, %v2241
    %v2246 = vadd.s32 %v2242, 1
    %v2247 = vsel %vm2245, %v2246, %v2242
    %v2248 = vadd.s32 %v2243, %v2247
    %v2249 = vadd.s32 %v2248, 536870912
    %v2250 = vshrl.u32 %v2249, 30
    %v2251 = vshll.u32 %v2250, 30
    %v2252 = vsub.s32 %v2248, %v2251
    %vm2253 = vcmp.lt.s32.totalorder %v2252, 0
    %v2254 = vsub.s32 0, %v2252
    %v2255 = vsel %vm2253, %v2254, %v2252
    %v2256 = vclz %v2255
    %v2257 = vsub.s32 %v2256, 2
    %vm2258 = vcmp.gt.s32.totalorder 0, %v2257
    %v2259 = vsel %vm2258, 0, %v2257
    %v2260 = vsub.s32 32, %v2259
    %v2261 = vshll.u32 %v2252, %v2259
    %v2262 = vshrl.u32 %v2244, %v2260
    %v2263 = vor.u32 %v2261, %v2262
    %v2264 = vsub.s32 4294967266, %v2259
    %v2265 = vadd.s32 %v2264, 127
    %v2266 = vshll.u32 %v2265, 23
    %v2267 = vor.u32 4788187, %v2266
    %v2268 = vand.u32 2147483647, %v2267
    %v2270 = vcvt.s32.f32 %v2263
    %v2271 = vmul.f32 %v2270, %v2268
    %v2272 = vxor.u32 %v2271, 2147483648
    %v2273 = vsel %vm2190, %v2272, %v2271
    %v2274 = vsub.s32 4, %v2250
    %v2275 = vsel %vm2190, %v2274, %v2250
    %v2276 = vsel %vm2189, %v2185, %v2273
    %v2277 = vsel %vm2189, 0, %v2275
    %v2278 = vcosq.f32.pop %v2276
    %v2279 = vsinq.f32.pop %v2276
    %vm2280 = vweird.f32 %v2185
    %v2281 = vadd.s32 %v2277, 3
    %v2282 = vand.u32 %v2281, 3
    %vm2283 = vcmp.lt.s32.totalorder %v2282, 2
    %vm2284 = vcmp.eq.s32.totalorder %v2282, 0
    %v2285 = vxor.u32 %v2279, 2147483648
    %v2286 = vsel %vm2284, %v2278, %v2285
    %vm2287 = vcmp.eq.s32.totalorder %v2282, 2
    %v2288 = vxor.u32 %v2278, 2147483648
    %v2289 = vsel %vm2287, %v2288, %v2279
    %v2290 = vsel %vm2283, %v2286, %v2289
    %v2291 = vsel %vm2280, nan, %v2290
    %v2292 = vsub.f32 %v795, %v1542
    %v2293 = vadd.f32 %v2292, %v2291
    %v2294 = vmul.f32 %v2293, 0.05050505
    %v2295 = vadd.f32 %v47, %v2294
    %2296 = vmatprep.subr.mxu0 0.0
    %v2297 = vand.u32 %v29, 4294901760
    %2298 = vmatpush1.msra.mxu0 %v2297
    %2299 = vmatprep.subr.mxu0 0.0
    %v2300 = vand.u32 %v28, 4294901760
    %2301 = vmatpush1.msra.mxu0 %v2300
    %2302 = vmatprep.subr.mxu0 0.0
    %v2303 = vand.u32 %v27, 4294901760
    %2304 = vmatpush1.msra.mxu0 %v2303
    %2305 = vmatprep.subr.mxu0 0.0
    %v2306 = vand.u32 %v26, 4294901760
    %2307 = vmatpush1.msra.mxu0 %v2306
    %2308 = vmatprep.subr.mxu0 0.0
    %v2309 = vand.u32 %v25, 4294901760
    %2310 = vmatpush1.msra.mxu0 %v2309
    %2311 = vmatprep.subr.mxu0 0.0
    %v2312 = vand.u32 %v24, 4294901760
    %2313 = vmatpush1.msra.mxu0 %v2312
    %2314 = vmatprep.subr.mxu0 0.0
    %v2315 = vand.u32 %v23, 4294901760
    %2316 = vmatpush1.msra.mxu0 %v2315
    %2317 = vmatprep.subr.mxu0 0.0
    %v2318 = vand.u32 %v22, 4294901760
    %2319 = vmatpush1.msra.mxu0 %v2318
    %2320 = vmatprep.subr.mxu0 0.0
    %v2321 = vand.u32 %v21, 4294901760
    %2322 = vmatpush1.msra.mxu0 %v2321
    %2323 = vmatprep.subr.mxu0 0.0
    %v2324 = vand.u32 %v20, 4294901760
    %2325 = vmatpush1.msra.mxu0 %v2324
    %2326 = vmatprep.subr.mxu0 0.0
    %v2327 = vand.u32 %v19, 4294901760
    %2328 = vmatpush1.msra.mxu0 %v2327
    %2329 = vmatprep.subr.mxu0 0.0
    %v2330 = vand.u32 %v18, 4294901760
    %2331 = vmatpush1.msra.mxu0 %v2330
    %2332 = vmatprep.subr.mxu0 0.0
    %v2333 = vand.u32 %v17, 4294901760
    %2334 = vmatpush1.msra.mxu0 %v2333
    %2335 = vmatprep.subr.mxu0 0.0
    %v2336 = vand.u32 %v16, 4294901760
    %2337 = vmatpush1.msra.mxu0 %v2336
    %2338 = vmatprep.subr.mxu0 0.0
    %v2339 = vand.u32 %v15, 4294901760
    %2340 = vmatpush1.msra.mxu0 %v2339
    %2341 = vmatprep.subr.mxu0 0.0
    %v2342 = vand.u32 %v14, 4294901760
    %2343 = vmatpush1.msra.mxu0 %v2342
    %2344 = vmatprep.subr.mxu0 0.0
    %2345 = vmatpush2.msra.mxu0 0.0
    %2346 = vmatprep.subr.mxu0 0.0
    %2347 = vmatpush2.msra.mxu0 0.0
    %2348 = vmatprep.subr.mxu0 0.0
    %2349 = vmatpush2.msra.mxu0 0.0
    %2350 = vmatprep.subr.mxu0 0.0
    %2351 = vmatpush2.msra.mxu0 0.0
    %2352 = vmatprep.subr.mxu0 0.0
    %2353 = vmatpush2.msra.mxu0 0.0
    %2354 = vmatprep.subr.mxu0 0.0
    %2355 = vmatpush2.msra.mxu0 0.0
    %2356 = vmatprep.subr.mxu0 0.0
    %2357 = vmatpush2.msra.mxu0 0.0
    %2358 = vmatprep.subr.mxu0 0.0
    %2359 = vmatpush2.msra.mxu0 0.0
    %2360 = vmatprep.subr.mxu0 0.0
    %2361 = vmatpush2.msra.mxu0 0.0
    %2362 = vmatprep.subr.mxu0 0.0
    %2363 = vmatpush2.msra.mxu0 0.0
    %2364 = vmatprep.subr.mxu0 0.0
    %2365 = vmatpush2.msra.mxu0 0.0
    %2366 = vmatprep.subr.mxu0 0.0
    %2367 = vmatpush2.msra.mxu0 0.0
    %2368 = vmatprep.subr.mxu0 0.0
    %2369 = vmatpush2.msra.mxu0 0.0
    %2370 = vmatprep.subr.mxu0 0.0
    %2371 = vmatpush2.msra.mxu0 0.0
    %2372 = vmatprep.subr.mxu0 0.0
    %2373 = vmatpush2.msra.mxu0 0.0
    %2374 = vmatprep.subr.mxu0 0.0
    %2375 = vmatpush2.msra.mxu0 0.0
    %2376 = vmatprep.mubr.f32.mxu0 0.0
    %v2377 = vand.u32 %v2295, 4294901760
    %v2378 = vsub.f32 %v2295, %v2377
    %v2379 = vand.u32 %v2378, 4294901760
    %v2380 = vsub.f32 %v2378, %v2379
    %v2381 = vand.u32 %v2380, 4294901760
    %2382 = vmatmul.mubr.f32.gmra.mxu0 %v2381
    %v2383 = vpop.f32.mrf.mxu0
    %v2384 = vadd.f32 %v35, %v2383
    %v2385 = vpop.f32.mrf.mxu0
    %2386 = vdwg.mxu0
    %2387 = vmatprep.subr.mxu0 0.0
    %v2388 = vand.u32 %v29, 4294901760
    %v2389 = vsub.f32 %v29, %v2388
    %v2390 = vand.u32 %v2389, 4294901760
    %v2391 = vsub.f32 %v2389, %v2390
    %v2392 = vand.u32 %v2391, 4294901760
    %2393 = vmatpush1.msra.mxu0 %v2392
    %2394 = vmatprep.subr.mxu0 0.0
    %v2395 = vand.u32 %v28, 4294901760
    %v2396 = vsub.f32 %v28, %v2395
    %v2397 = vand.u32 %v2396, 4294901760
    %v2398 = vsub.f32 %v2396, %v2397
    %v2399 = vand.u32 %v2398, 4294901760
    %2400 = vmatpush1.msra.mxu0 %v2399
    %2401 = vmatprep.subr.mxu0 0.0
    %v2402 = vand.u32 %v27, 4294901760
    %v2403 = vsub.f32 %v27, %v2402
    %v2404 = vand.u32 %v2403, 4294901760
    %v2405 = vsub.f32 %v2403, %v2404
    %v2406 = vand.u32 %v2405, 4294901760
    %2407 = vmatpush1.msra.mxu0 %v2406
    %2408 = vmatprep.subr.mxu0 0.0
    %v2409 = vand.u32 %v26, 4294901760
    %v2410 = vsub.f32 %v26, %v2409
    %v2411 = vand.u32 %v2410, 4294901760
    %v2412 = vsub.f32 %v2410, %v2411
    %v2413 = vand.u32 %v2412, 4294901760
    %2414 = vmatpush1.msra.mxu0 %v2413
    %2415 = vmatprep.subr.mxu0 0.0
    %v2416 = vand.u32 %v25, 4294901760
    %v2417 = vsub.f32 %v25, %v2416
    %v2418 = vand.u32 %v2417, 4294901760
    %v2419 = vsub.f32 %v2417, %v2418
    %v2420 = vand.u32 %v2419, 4294901760
    %2421 = vmatpush1.msra.mxu0 %v2420
    %2422 = vmatprep.subr.mxu0 0.0
    %v2423 = vand.u32 %v24, 4294901760
    %v2424 = vsub.f32 %v24, %v2423
    %v2425 = vand.u32 %v2424, 4294901760
    %v2426 = vsub.f32 %v2424, %v2425
    %v2427 = vand.u32 %v2426, 4294901760
    %2428 = vmatpush1.msra.mxu0 %v2427
    %2429 = vmatprep.subr.mxu0 0.0
    %v2430 = vand.u32 %v23, 4294901760
    %v2431 = vsub.f32 %v23, %v2430
    %v2432 = vand.u32 %v2431, 4294901760
    %v2433 = vsub.f32 %v2431, %v2432
    %v2434 = vand.u32 %v2433, 4294901760
    %2435 = vmatpush1.msra.mxu0 %v2434
    %2436 = vmatprep.subr.mxu0 0.0
    %v2437 = vand.u32 %v22, 4294901760
    %v2438 = vsub.f32 %v22, %v2437
    %v2439 = vand.u32 %v2438, 4294901760
    %v2440 = vsub.f32 %v2438, %v2439
    %v2441 = vand.u32 %v2440, 4294901760
    %2442 = vmatpush1.msra.mxu0 %v2441
    %2443 = vmatprep.subr.mxu0 0.0
    %v2444 = vand.u32 %v21, 4294901760
    %v2445 = vsub.f32 %v21, %v2444
    %v2446 = vand.u32 %v2445, 4294901760
    %v2447 = vsub.f32 %v2445, %v2446
    %v2448 = vand.u32 %v2447, 4294901760
    %2449 = vmatpush1.msra.mxu0 %v2448
    %2450 = vmatprep.subr.mxu0 0.0
    %v2451 = vand.u32 %v20, 4294901760
    %v2452 = vsub.f32 %v20, %v2451
    %v2453 = vand.u32 %v2452, 4294901760
    %v2454 = vsub.f32 %v2452, %v2453
    %v2455 = vand.u32 %v2454, 4294901760
    %2456 = vmatpush1.msra.mxu0 %v2455
    %2457 = vmatprep.subr.mxu0 0.0
    %v2458 = vand.u32 %v19, 4294901760
    %v2459 = vsub.f32 %v19, %v2458
    %v2460 = vand.u32 %v2459, 4294901760
    %v2461 = vsub.f32 %v2459, %v2460
    %v2462 = vand.u32 %v2461, 4294901760
    %2463 = vmatpush1.msra.mxu0 %v2462
    %2464 = vmatprep.subr.mxu0 0.0
    %v2465 = vand.u32 %v18, 4294901760
    %v2466 = vsub.f32 %v18, %v2465
    %v2467 = vand.u32 %v2466, 4294901760
    %v2468 = vsub.f32 %v2466, %v2467
    %v2469 = vand.u32 %v2468, 4294901760
    %2470 = vmatpush1.msra.mxu0 %v2469
    %2471 = vmatprep.subr.mxu0 0.0
    %v2472 = vand.u32 %v17, 4294901760
    %v2473 = vsub.f32 %v17, %v2472
    %v2474 = vand.u32 %v2473, 4294901760
    %v2475 = vsub.f32 %v2473, %v2474
    %v2476 = vand.u32 %v2475, 4294901760
    %2477 = vmatpush1.msra.mxu0 %v2476
    %2478 = vmatprep.subr.mxu0 0.0
    %v2479 = vand.u32 %v16, 4294901760
    %v2480 = vsub.f32 %v16, %v2479
    %v2481 = vand.u32 %v2480, 4294901760
    %v2482 = vsub.f32 %v2480, %v2481
    %v2483 = vand.u32 %v2482, 4294901760
    %2484 = vmatpush1.msra.mxu0 %v2483
    %2485 = vmatprep.subr.mxu0 0.0
    %v2486 = vand.u32 %v15, 4294901760
    %v2487 = vsub.f32 %v15, %v2486
    %v2488 = vand.u32 %v2487, 4294901760
    %v2489 = vsub.f32 %v2487, %v2488
    %v2490 = vand.u32 %v2489, 4294901760
    %2491 = vmatpush1.msra.mxu0 %v2490
    %2492 = vmatprep.subr.mxu0 0.0
    %v2493 = vand.u32 %v14, 4294901760
    %v2494 = vsub.f32 %v14, %v2493
    %v2495 = vand.u32 %v2494, 4294901760
    %v2496 = vsub.f32 %v2494, %v2495
    %v2497 = vand.u32 %v2496, 4294901760
    %2498 = vmatpush1.msra.mxu0 %v2497
    %2499 = vmatprep.subr.mxu0 0.0
    %2500 = vmatpush2.msra.mxu0 0.0
    %2501 = vmatprep.subr.mxu0 0.0
    %2502 = vmatpush2.msra.mxu0 0.0
    %2503 = vmatprep.subr.mxu0 0.0
    %2504 = vmatpush2.msra.mxu0 0.0
    %2505 = vmatprep.subr.mxu0 0.0
    %2506 = vmatpush2.msra.mxu0 0.0
    %2507 = vmatprep.subr.mxu0 0.0
    %2508 = vmatpush2.msra.mxu0 0.0
    %2509 = vmatprep.subr.mxu0 0.0
    %2510 = vmatpush2.msra.mxu0 0.0
    %2511 = vmatprep.subr.mxu0 0.0
    %2512 = vmatpush2.msra.mxu0 0.0
    %2513 = vmatprep.subr.mxu0 0.0
    %2514 = vmatpush2.msra.mxu0 0.0
    %2515 = vmatprep.subr.mxu0 0.0
    %2516 = vmatpush2.msra.mxu0 0.0
    %2517 = vmatprep.subr.mxu0 0.0
    %2518 = vmatpush2.msra.mxu0 0.0
    %2519 = vmatprep.subr.mxu0 0.0
    %2520 = vmatpush2.msra.mxu0 0.0
    %2521 = vmatprep.subr.mxu0 0.0
    %2522 = vmatpush2.msra.mxu0 0.0
    %2523 = vmatprep.subr.mxu0 0.0
    %2524 = vmatpush2.msra.mxu0 0.0
    %2525 = vmatprep.subr.mxu0 0.0
    %2526 = vmatpush2.msra.mxu0 0.0
    %2527 = vmatprep.subr.mxu0 0.0
    %2528 = vmatpush2.msra.mxu0 0.0
    %2529 = vmatprep.subr.mxu0 0.0
    %2530 = vmatpush2.msra.mxu0 0.0
    %2531 = vmatprep.mubr.f32.mxu0 0.0
    %v2532 = vand.u32 %v2295, 4294901760
    %2533 = vmatmul.mubr.f32.gmra.mxu0 %v2532
    %v2534 = vpop.f32.mrf.mxu0
    %v2535 = vadd.f32 %v2384, %v2534
    %v2536 = vpop.f32.mrf.mxu0
    %2537 = vdwg.mxu0
    %2538 = vmatprep.subr.mxu0 0.0
    %v2539 = vand.u32 %v29, 4294901760
    %v2540 = vsub.f32 %v29, %v2539
    %2541 = vmatpush1.msra.mxu0 %v2540
    %2542 = vmatprep.subr.mxu0 0.0
    %v2543 = vand.u32 %v28, 4294901760
    %v2544 = vsub.f32 %v28, %v2543
    %2545 = vmatpush1.msra.mxu0 %v2544
    %2546 = vmatprep.subr.mxu0 0.0
    %v2547 = vand.u32 %v27, 4294901760
    %v2548 = vsub.f32 %v27, %v2547
    %2549 = vmatpush1.msra.mxu0 %v2548
    %2550 = vmatprep.subr.mxu0 0.0
    %v2551 = vand.u32 %v26, 4294901760
    %v2552 = vsub.f32 %v26, %v2551
    %2553 = vmatpush1.msra.mxu0 %v2552
    %2554 = vmatprep.subr.mxu0 0.0
    %v2555 = vand.u32 %v25, 4294901760
    %v2556 = vsub.f32 %v25, %v2555
    %2557 = vmatpush1.msra.mxu0 %v2556
    %2558 = vmatprep.subr.mxu0 0.0
    %v2559 = vand.u32 %v24, 4294901760
    %v2560 = vsub.f32 %v24, %v2559
    %2561 = vmatpush1.msra.mxu0 %v2560
    %2562 = vmatprep.subr.mxu0 0.0
    %v2563 = vand.u32 %v23, 4294901760
    %v2564 = vsub.f32 %v23, %v2563
    %2565 = vmatpush1.msra.mxu0 %v2564
    %2566 = vmatprep.subr.mxu0 0.0
    %v2567 = vand.u32 %v22, 4294901760
    %v2568 = vsub.f32 %v22, %v2567
    %2569 = vmatpush1.msra.mxu0 %v2568
    %2570 = vmatprep.subr.mxu0 0.0
    %v2571 = vand.u32 %v21, 4294901760
    %v2572 = vsub.f32 %v21, %v2571
    %2573 = vmatpush1.msra.mxu0 %v2572
    %2574 = vmatprep.subr.mxu0 0.0
    %v2575 = vand.u32 %v20, 4294901760
    %v2576 = vsub.f32 %v20, %v2575
    %2577 = vmatpush1.msra.mxu0 %v2576
    %2578 = vmatprep.subr.mxu0 0.0
    %v2579 = vand.u32 %v19, 4294901760
    %v2580 = vsub.f32 %v19, %v2579
    %2581 = vmatpush1.msra.mxu0 %v2580
    %2582 = vmatprep.subr.mxu0 0.0
    %v2583 = vand.u32 %v18, 4294901760
    %v2584 = vsub.f32 %v18, %v2583
    %2585 = vmatpush1.msra.mxu0 %v2584
    %2586 = vmatprep.subr.mxu0 0.0
    %v2587 = vand.u32 %v17, 4294901760
    %v2588 = vsub.f32 %v17, %v2587
    %2589 = vmatpush1.msra.mxu0 %v2588
    %2590 = vmatprep.subr.mxu0 0.0
    %v2591 = vand.u32 %v16, 4294901760
    %v2592 = vsub.f32 %v16, %v2591
    %2593 = vmatpush1.msra.mxu0 %v2592
    %2594 = vmatprep.subr.mxu0 0.0
    %v2595 = vand.u32 %v15, 4294901760
    %v2596 = vsub.f32 %v15, %v2595
    %2597 = vmatpush1.msra.mxu0 %v2596
    %2598 = vmatprep.subr.mxu0 0.0
    %v2599 = vand.u32 %v14, 4294901760
    %v2600 = vsub.f32 %v14, %v2599
    %2601 = vmatpush1.msra.mxu0 %v2600
    %2602 = vmatprep.subr.mxu0 0.0
    %2603 = vmatpush2.msra.mxu0 0.0
    %2604 = vmatprep.subr.mxu0 0.0
    %2605 = vmatpush2.msra.mxu0 0.0
    %2606 = vmatprep.subr.mxu0 0.0
    %2607 = vmatpush2.msra.mxu0 0.0
    %2608 = vmatprep.subr.mxu0 0.0
    %2609 = vmatpush2.msra.mxu0 0.0
    %2610 = vmatprep.subr.mxu0 0.0
    %2611 = vmatpush2.msra.mxu0 0.0
    %2612 = vmatprep.subr.mxu0 0.0
    %2613 = vmatpush2.msra.mxu0 0.0
    %2614 = vmatprep.subr.mxu0 0.0
    %2615 = vmatpush2.msra.mxu0 0.0
    %2616 = vmatprep.subr.mxu0 0.0
    %2617 = vmatpush2.msra.mxu0 0.0
    %2618 = vmatprep.subr.mxu0 0.0
    %2619 = vmatpush2.msra.mxu0 0.0
    %2620 = vmatprep.subr.mxu0 0.0
    %2621 = vmatpush2.msra.mxu0 0.0
    %2622 = vmatprep.subr.mxu0 0.0
    %2623 = vmatpush2.msra.mxu0 0.0
    %2624 = vmatprep.subr.mxu0 0.0
    %2625 = vmatpush2.msra.mxu0 0.0
    %2626 = vmatprep.subr.mxu0 0.0
    %2627 = vmatpush2.msra.mxu0 0.0
    %2628 = vmatprep.subr.mxu0 0.0
    %2629 = vmatpush2.msra.mxu0 0.0
    %2630 = vmatprep.subr.mxu0 0.0
    %2631 = vmatpush2.msra.mxu0 0.0
    %2632 = vmatprep.subr.mxu0 0.0
    %2633 = vmatpush2.msra.mxu0 0.0
    %2634 = vmatprep.mubr.f32.mxu0 0.0
    %v2635 = vand.u32 %v2295, 4294901760
    %v2636 = vsub.f32 %v2295, %v2635
    %2637 = vmatmul.mubr.f32.gmra.mxu0 %v2636
    %v2638 = vpop.f32.mrf.mxu0
    %v2639 = vadd.f32 %v2535, %v2638
    %v2640 = vpop.f32.mrf.mxu0
    %2641 = vdwg.mxu0
    %2642 = vmatprep.subr.mxu0 0.0
    %v2643 = vand.u32 %v29, 4294901760
    %2644 = vmatpush1.msra.mxu0 %v2643
    %2645 = vmatprep.subr.mxu0 0.0
    %v2646 = vand.u32 %v28, 4294901760
    %2647 = vmatpush1.msra.mxu0 %v2646
    %2648 = vmatprep.subr.mxu0 0.0
    %v2649 = vand.u32 %v27, 4294901760
    %2650 = vmatpush1.msra.mxu0 %v2649
    %2651 = vmatprep.subr.mxu0 0.0
    %v2652 = vand.u32 %v26, 4294901760
    %2653 = vmatpush1.msra.mxu0 %v2652
    %2654 = vmatprep.subr.mxu0 0.0
    %v2655 = vand.u32 %v25, 4294901760
    %2656 = vmatpush1.msra.mxu0 %v2655
    %2657 = vmatprep.subr.mxu0 0.0
    %v2658 = vand.u32 %v24, 4294901760
    %2659 = vmatpush1.msra.mxu0 %v2658
    %2660 = vmatprep.subr.mxu0 0.0
    %v2661 = vand.u32 %v23, 4294901760
    %2662 = vmatpush1.msra.mxu0 %v2661
    %2663 = vmatprep.subr.mxu0 0.0
    %v2664 = vand.u32 %v22, 4294901760
    %2665 = vmatpush1.msra.mxu0 %v2664
    %2666 = vmatprep.subr.mxu0 0.0
    %v2667 = vand.u32 %v21, 4294901760
    %2668 = vmatpush1.msra.mxu0 %v2667
    %2669 = vmatprep.subr.mxu0 0.0
    %v2670 = vand.u32 %v20, 4294901760
    %2671 = vmatpush1.msra.mxu0 %v2670
    %2672 = vmatprep.subr.mxu0 0.0
    %v2673 = vand.u32 %v19, 4294901760
    %2674 = vmatpush1.msra.mxu0 %v2673
    %2675 = vmatprep.subr.mxu0 0.0
    %v2676 = vand.u32 %v18, 4294901760
    %2677 = vmatpush1.msra.mxu0 %v2676
    %2678 = vmatprep.subr.mxu0 0.0
    %v2679 = vand.u32 %v17, 4294901760
    %2680 = vmatpush1.msra.mxu0 %v2679
    %2681 = vmatprep.subr.mxu0 0.0
    %v2682 = vand.u32 %v16, 4294901760
    %2683 = vmatpush1.msra.mxu0 %v2682
    %2684 = vmatprep.subr.mxu0 0.0
    %v2685 = vand.u32 %v15, 4294901760
    %2686 = vmatpush1.msra.mxu0 %v2685
    %2687 = vmatprep.subr.mxu0 0.0
    %v2688 = vand.u32 %v14, 4294901760
    %2689 = vmatpush1.msra.mxu0 %v2688
    %2690 = vmatprep.subr.mxu0 0.0
    %2691 = vmatpush2.msra.mxu0 0.0
    %2692 = vmatprep.subr.mxu0 0.0
    %2693 = vmatpush2.msra.mxu0 0.0
    %2694 = vmatprep.subr.mxu0 0.0
    %2695 = vmatpush2.msra.mxu0 0.0
    %2696 = vmatprep.subr.mxu0 0.0
    %2697 = vmatpush2.msra.mxu0 0.0
    %2698 = vmatprep.subr.mxu0 0.0
    %2699 = vmatpush2.msra.mxu0 0.0
    %2700 = vmatprep.subr.mxu0 0.0
    %2701 = vmatpush2.msra.mxu0 0.0
    %2702 = vmatprep.subr.mxu0 0.0
    %2703 = vmatpush2.msra.mxu0 0.0
    %2704 = vmatprep.subr.mxu0 0.0
    %2705 = vmatpush2.msra.mxu0 0.0
    %2706 = vmatprep.subr.mxu0 0.0
    %2707 = vmatpush2.msra.mxu0 0.0
    %2708 = vmatprep.subr.mxu0 0.0
    %2709 = vmatpush2.msra.mxu0 0.0
    %2710 = vmatprep.subr.mxu0 0.0
    %2711 = vmatpush2.msra.mxu0 0.0
    %2712 = vmatprep.subr.mxu0 0.0
    %2713 = vmatpush2.msra.mxu0 0.0
    %2714 = vmatprep.subr.mxu0 0.0
    %2715 = vmatpush2.msra.mxu0 0.0
    %2716 = vmatprep.subr.mxu0 0.0
    %2717 = vmatpush2.msra.mxu0 0.0
    %2718 = vmatprep.subr.mxu0 0.0
    %2719 = vmatpush2.msra.mxu0 0.0
    %2720 = vmatprep.subr.mxu0 0.0
    %2721 = vmatpush2.msra.mxu0 0.0
    %2722 = vmatprep.mubr.f32.mxu0 0.0
    %v2723 = vand.u32 %v2295, 4294901760
    %v2724 = vsub.f32 %v2295, %v2723
    %v2725 = vand.u32 %v2724, 4294901760
    %2726 = vmatmul.mubr.f32.gmra.mxu0 %v2725
    %v2727 = vpop.f32.mrf.mxu0
    %v2728 = vadd.f32 %v2639, %v2727
    %v2729 = vpop.f32.mrf.mxu0
    %2730 = vdwg.mxu0
    %2731 = vmatprep.subr.mxu0 0.0
    %v2732 = vand.u32 %v29, 4294901760
    %v2733 = vsub.f32 %v29, %v2732
    %v2734 = vand.u32 %v2733, 4294901760
    %2735 = vmatpush1.msra.mxu0 %v2734
    %2736 = vmatprep.subr.mxu0 0.0
    %v2737 = vand.u32 %v28, 4294901760
    %v2738 = vsub.f32 %v28, %v2737
    %v2739 = vand.u32 %v2738, 4294901760
    %2740 = vmatpush1.msra.mxu0 %v2739
    %2741 = vmatprep.subr.mxu0 0.0
    %v2742 = vand.u32 %v27, 4294901760
    %v2743 = vsub.f32 %v27, %v2742
    %v2744 = vand.u32 %v2743, 4294901760
    %2745 = vmatpush1.msra.mxu0 %v2744
    %2746 = vmatprep.subr.mxu0 0.0
    %v2747 = vand.u32 %v26, 4294901760
    %v2748 = vsub.f32 %v26, %v2747
    %v2749 = vand.u32 %v2748, 4294901760
    %2750 = vmatpush1.msra.mxu0 %v2749
    %2751 = vmatprep.subr.mxu0 0.0
    %v2752 = vand.u32 %v25, 4294901760
    %v2753 = vsub.f32 %v25, %v2752
    %v2754 = vand.u32 %v2753, 4294901760
    %2755 = vmatpush1.msra.mxu0 %v2754
    %2756 = vmatprep.subr.mxu0 0.0
    %v2757 = vand.u32 %v24, 4294901760
    %v2758 = vsub.f32 %v24, %v2757
    %v2759 = vand.u32 %v2758, 4294901760
    %2760 = vmatpush1.msra.mxu0 %v2759
    %2761 = vmatprep.subr.mxu0 0.0
    %v2762 = vand.u32 %v23, 4294901760
    %v2763 = vsub.f32 %v23, %v2762
    %v2764 = vand.u32 %v2763, 4294901760
    %2765 = vmatpush1.msra.mxu0 %v2764
    %2766 = vmatprep.subr.mxu0 0.0
    %v2767 = vand.u32 %v22, 4294901760
    %v2768 = vsub.f32 %v22, %v2767
    %v2769 = vand.u32 %v2768, 4294901760
    %2770 = vmatpush1.msra.mxu0 %v2769
    %2771 = vmatprep.subr.mxu0 0.0
    %v2772 = vand.u32 %v21, 4294901760
    %v2773 = vsub.f32 %v21, %v2772
    %v2774 = vand.u32 %v2773, 4294901760
    %2775 = vmatpush1.msra.mxu0 %v2774
    %2776 = vmatprep.subr.mxu0 0.0
    %v2777 = vand.u32 %v20, 4294901760
    %v2778 = vsub.f32 %v20, %v2777
    %v2779 = vand.u32 %v2778, 4294901760
    %2780 = vmatpush1.msra.mxu0 %v2779
    %2781 = vmatprep.subr.mxu0 0.0
    %v2782 = vand.u32 %v19, 4294901760
    %v2783 = vsub.f32 %v19, %v2782
    %v2784 = vand.u32 %v2783, 4294901760
    %2785 = vmatpush1.msra.mxu0 %v2784
    %2786 = vmatprep.subr.mxu0 0.0
    %v2787 = vand.u32 %v18, 4294901760
    %v2788 = vsub.f32 %v18, %v2787
    %v2789 = vand.u32 %v2788, 4294901760
    %2790 = vmatpush1.msra.mxu0 %v2789
    %2791 = vmatprep.subr.mxu0 0.0
    %v2792 = vand.u32 %v17, 4294901760
    %v2793 = vsub.f32 %v17, %v2792
    %v2794 = vand.u32 %v2793, 4294901760
    %2795 = vmatpush1.msra.mxu0 %v2794
    %2796 = vmatprep.subr.mxu0 0.0
    %v2797 = vand.u32 %v16, 4294901760
    %v2798 = vsub.f32 %v16, %v2797
    %v2799 = vand.u32 %v2798, 4294901760
    %2800 = vmatpush1.msra.mxu0 %v2799
    %2801 = vmatprep.subr.mxu0 0.0
    %v2802 = vand.u32 %v15, 4294901760
    %v2803 = vsub.f32 %v15, %v2802
    %v2804 = vand.u32 %v2803, 4294901760
    %2805 = vmatpush1.msra.mxu0 %v2804
    %2806 = vmatprep.subr.mxu0 0.0
    %v2807 = vand.u32 %v14, 4294901760
    %v2808 = vsub.f32 %v14, %v2807
    %v2809 = vand.u32 %v2808, 4294901760
    %2810 = vmatpush1.msra.mxu0 %v2809
    %2811 = vmatprep.subr.mxu0 0.0
    %2812 = vmatpush2.msra.mxu0 0.0
    %2813 = vmatprep.subr.mxu0 0.0
    %2814 = vmatpush2.msra.mxu0 0.0
    %2815 = vmatprep.subr.mxu0 0.0
    %2816 = vmatpush2.msra.mxu0 0.0
    %2817 = vmatprep.subr.mxu0 0.0
    %2818 = vmatpush2.msra.mxu0 0.0
    %2819 = vmatprep.subr.mxu0 0.0
    %2820 = vmatpush2.msra.mxu0 0.0
    %2821 = vmatprep.subr.mxu0 0.0
    %2822 = vmatpush2.msra.mxu0 0.0
    %2823 = vmatprep.subr.mxu0 0.0
    %2824 = vmatpush2.msra.mxu0 0.0
    %2825 = vmatprep.subr.mxu0 0.0
    %2826 = vmatpush2.msra.mxu0 0.0
    %2827 = vmatprep.subr.mxu0 0.0
    %2828 = vmatpush2.msra.mxu0 0.0
    %2829 = vmatprep.subr.mxu0 0.0
    %2830 = vmatpush2.msra.mxu0 0.0
    %2831 = vmatprep.subr.mxu0 0.0
    %2832 = vmatpush2.msra.mxu0 0.0
    %2833 = vmatprep.subr.mxu0 0.0
    %2834 = vmatpush2.msra.mxu0 0.0
    %2835 = vmatprep.subr.mxu0 0.0
    %2836 = vmatpush2.msra.mxu0 0.0
    %2837 = vmatprep.subr.mxu0 0.0
    %2838 = vmatpush2.msra.mxu0 0.0
    %2839 = vmatprep.subr.mxu0 0.0
    %2840 = vmatpush2.msra.mxu0 0.0
    %2841 = vmatprep.subr.mxu0 0.0
    %2842 = vmatpush2.msra.mxu0 0.0
    %2843 = vmatprep.mubr.f32.mxu0 0.0
    %v2844 = vand.u32 %v2295, 4294901760
    %2845 = vmatmul.mubr.f32.gmra.mxu0 %v2844
    %v2846 = vpop.f32.mrf.mxu0
    %v2847 = vadd.f32 %v2728, %v2846
    %v2848 = vpop.f32.mrf.mxu0
    %2849 = vdwg.mxu0
    %2850 = vmatprep.subr.mxu0 0.0
    %v2851 = vand.u32 %v29, 4294901760
    %2852 = vmatpush1.msra.mxu0 %v2851
    %2853 = vmatprep.subr.mxu0 0.0
    %v2854 = vand.u32 %v28, 4294901760
    %2855 = vmatpush1.msra.mxu0 %v2854
    %2856 = vmatprep.subr.mxu0 0.0
    %v2857 = vand.u32 %v27, 4294901760
    %2858 = vmatpush1.msra.mxu0 %v2857
    %2859 = vmatprep.subr.mxu0 0.0
    %v2860 = vand.u32 %v26, 4294901760
    %2861 = vmatpush1.msra.mxu0 %v2860
    %2862 = vmatprep.subr.mxu0 0.0
    %v2863 = vand.u32 %v25, 4294901760
    %2864 = vmatpush1.msra.mxu0 %v2863
    %2865 = vmatprep.subr.mxu0 0.0
    %v2866 = vand.u32 %v24, 4294901760
    %2867 = vmatpush1.msra.mxu0 %v2866
    %2868 = vmatprep.subr.mxu0 0.0
    %v2869 = vand.u32 %v23, 4294901760
    %2870 = vmatpush1.msra.mxu0 %v2869
    %2871 = vmatprep.subr.mxu0 0.0
    %v2872 = vand.u32 %v22, 4294901760
    %2873 = vmatpush1.msra.mxu0 %v2872
    %2874 = vmatprep.subr.mxu0 0.0
    %v2875 = vand.u32 %v21, 4294901760
    %2876 = vmatpush1.msra.mxu0 %v2875
    %2877 = vmatprep.subr.mxu0 0.0
    %v2878 = vand.u32 %v20, 4294901760
    %2879 = vmatpush1.msra.mxu0 %v2878
    %2880 = vmatprep.subr.mxu0 0.0
    %v2881 = vand.u32 %v19, 4294901760
    %2882 = vmatpush1.msra.mxu0 %v2881
    %2883 = vmatprep.subr.mxu0 0.0
    %v2884 = vand.u32 %v18, 4294901760
    %2885 = vmatpush1.msra.mxu0 %v2884
    %2886 = vmatprep.subr.mxu0 0.0
    %v2887 = vand.u32 %v17, 4294901760
    %2888 = vmatpush1.msra.mxu0 %v2887
    %2889 = vmatprep.subr.mxu0 0.0
    %v2890 = vand.u32 %v16, 4294901760
    %2891 = vmatpush1.msra.mxu0 %v2890
    %2892 = vmatprep.subr.mxu0 0.0
    %v2893 = vand.u32 %v15, 4294901760
    %2894 = vmatpush1.msra.mxu0 %v2893
    %2895 = vmatprep.subr.mxu0 0.0
    %v2896 = vand.u32 %v14, 4294901760
    %2897 = vmatpush1.msra.mxu0 %v2896
    %2898 = vmatprep.subr.mxu0 0.0
    %2899 = vmatpush2.msra.mxu0 0.0
    %2900 = vmatprep.subr.mxu0 0.0
    %2901 = vmatpush2.msra.mxu0 0.0
    %2902 = vmatprep.subr.mxu0 0.0
    %2903 = vmatpush2.msra.mxu0 0.0
    %2904 = vmatprep.subr.mxu0 0.0
    %2905 = vmatpush2.msra.mxu0 0.0
    %2906 = vmatprep.subr.mxu0 0.0
    %2907 = vmatpush2.msra.mxu0 0.0
    %2908 = vmatprep.subr.mxu0 0.0
    %2909 = vmatpush2.msra.mxu0 0.0
    %2910 = vmatprep.subr.mxu0 0.0
    %2911 = vmatpush2.msra.mxu0 0.0
    %2912 = vmatprep.subr.mxu0 0.0
    %2913 = vmatpush2.msra.mxu0 0.0
    %2914 = vmatprep.subr.mxu0 0.0
    %2915 = vmatpush2.msra.mxu0 0.0
    %2916 = vmatprep.subr.mxu0 0.0
    %2917 = vmatpush2.msra.mxu0 0.0
    %2918 = vmatprep.subr.mxu0 0.0
    %2919 = vmatpush2.msra.mxu0 0.0
    %2920 = vmatprep.subr.mxu0 0.0
    %2921 = vmatpush2.msra.mxu0 0.0
    %2922 = vmatprep.subr.mxu0 0.0
    %2923 = vmatpush2.msra.mxu0 0.0
    %2924 = vmatprep.subr.mxu0 0.0
    %2925 = vmatpush2.msra.mxu0 0.0
    %2926 = vmatprep.subr.mxu0 0.0
    %2927 = vmatpush2.msra.mxu0 0.0
    %2928 = vmatprep.subr.mxu0 0.0
    %2929 = vmatpush2.msra.mxu0 0.0
    %2930 = vmatprep.mubr.f32.mxu0 0.0
    %v2931 = vand.u32 %v2295, 4294901760
    %2932 = vmatmul.mubr.f32.gmra.mxu0 %v2931
    %v2933 = vpop.f32.mrf.mxu0
    %v2934 = vadd.f32 %v2847, %v2933
    %v2935 = vpop.f32.mrf.mxu0
    %2936 = vdwg.mxu0
    %v2937 = vand.u32 2147483647, %v2934
    %vm2938 = vcmp.le.f32.partialorder %v2937, 0.7853982
    %vm2939 = vcmp.lt.s32.totalorder %v2934, 0
    %v2940 = vand.u32 %v2934, 2139095040
    %v2941 = vshrl.u32 %v2940, 23
    %v2942 = vsub.s32 %v2941, 127
    %v2943 = vand.u32 2147483647, %v2934
    %v2944 = vand.u32 %v2943, 8388607
    %v2945 = vor.u32 %v2944, 8388608
    %v2946 = vsub.s32 0, %v2945
    %v2947 = vadd.s32 %v2942, 1
    %vm2948 = vcmp.gt.s32.totalorder %v2947, 0
    %v2949 = vsel %vm2948, %v2947, 0
    %v2950 = vshrl.u32 %v2949, 5
    %v2951 = vand.u32 %v2949, 31
    %v2952 = vsub.s32 32, %v2951
    %v2953 = vshrl.u32 683565275, %v2952
    %v2954 = vshll.u32 683565275, %v2951
    %v2955 = vshrl.u32 2475754826, %v2952
    %v2956 = vor.u32 %v2954, %v2955
    %v2957 = vshll.u32 2475754826, %v2951
    %v2958 = vshrl.u32 2131351028, %v2952
    %v2959 = vor.u32 %v2957, %v2958
    %v2960 = vshll.u32 2131351028, %v2951
    %v2961 = vshrl.u32 2102212464, %v2952
    %v2962 = vor.u32 %v2960, %v2961
    %v2963 = vshll.u32 2102212464, %v2951
    %v2964 = vshrl.u32 920167782, %v2952
    %v2965 = vor.u32 %v2963, %v2964
    %v2966 = vshll.u32 920167782, %v2951
    %v2967 = vshrl.u32 1326507024, %v2952
    %v2968 = vor.u32 %v2966, %v2967
    %vm2969 = vcmp.lt.s32.totalorder %v2950, 1
    %vm2970 = vcmp.lt.s32.totalorder %v2950, 2
    %vm2971 = vcmp.lt.s32.totalorder %v2950, 3
    %vm2972 = vcmp.lt.s32.totalorder %v2950, 4
    %v2973 = vsel %vm2969, %v2953, %v2956
    %v2974 = vsel %vm2972, %v2962, 2102212464
    %v2975 = vsel %vm2971, %v2959, %v2974
    %v2976 = vsel %vm2970, %v2973, %v2975
    %v2977 = vsel %vm2969, %v2956, %v2959
    %v2978 = vsel %vm2972, %v2965, 920167782
    %v2979 = vsel %vm2971, %v2962, %v2978
    %v2980 = vsel %vm2970, %v2977, %v2979
    %v2981 = vsel %vm2969, %v2959, %v2962
    %v2982 = vsel %vm2972, %v2968, 1326507024
    %v2983 = vsel %vm2971, %v2965, %v2982
    %v2984 = vsel %vm2970, %v2981, %v2983
    %v2985 = vshll.u32 %v2945, 8
    %v2986 = vmul.u32.u64.compose %v2985, %v2984
    %v2987 = vextract.low.u32 %v2986
    %v2988 = vextract.high.u32 %v2986
    %v2989 = vmul.u32.u64.compose %v2985, %v2980
    %v2990 = vextract.low.u32 %v2989
    %v2991 = vextract.high.u32 %v2989
    %v2992 = vmul.u32 %v2985, %v2976
    %v2993 = vadd.s32 %v2988, %v2990
    %vm2994 = vc.u32 %v2988, %v2990
    %v2995 = vadd.s32 %v2991, 1
    %v2996 = vsel %vm2994, %v2995, %v2991
    %v2997 = vadd.s32 %v2992, %v2996
    %v2998 = vadd.s32 %v2997, 536870912
    %v2999 = vshrl.u32 %v2998, 30
    %v3000 = vshll.u32 %v2999, 30
    %v3001 = vsub.s32 %v2997, %v3000
    %vm3002 = vcmp.lt.s32.totalorder %v3001, 0
    %v3003 = vsub.s32 0, %v3001
    %v3004 = vsel %vm3002, %v3003, %v3001
    %v3005 = vclz %v3004
    %v3006 = vsub.s32 %v3005, 2
    %vm3007 = vcmp.gt.s32.totalorder 0, %v3006
    %v3008 = vsel %vm3007, 0, %v3006
    %v3009 = vsub.s32 32, %v3008
    %v3010 = vshll.u32 %v3001, %v3008
    %v3011 = vshrl.u32 %v2993, %v3009
    %v3012 = vor.u32 %v3010, %v3011
    %v3013 = vsub.s32 4294967266, %v3008
    %v3014 = vadd.s32 %v3013, 127
    %v3015 = vshll.u32 %v3014, 23
    %v3016 = vor.u32 4788187, %v3015
    %v3017 = vand.u32 2147483647, %v3016
    %v3019 = vcvt.s32.f32 %v3012
    %v3020 = vmul.f32 %v3019, %v3017
    %v3021 = vxor.u32 %v3020, 2147483648
    %v3022 = vsel %vm2939, %v3021, %v3020
    %v3023 = vsub.s32 4, %v2999
    %v3024 = vsel %vm2939, %v3023, %v2999
    %v3025 = vsel %vm2938, %v2934, %v3022
    %v3026 = vsel %vm2938, 0, %v3024
    %v3027 = vcosq.f32.pop %v3025
    %v3028 = vsinq.f32.pop %v3025
    %vm3029 = vweird.f32 %v2934
    %v3030 = vadd.s32 %v3026, 3
    %v3031 = vand.u32 %v3030, 3
    %vm3032 = vcmp.lt.s32.totalorder %v3031, 2
    %vm3033 = vcmp.eq.s32.totalorder %v3031, 0
    %v3034 = vxor.u32 %v3028, 2147483648
    %v3035 = vsel %vm3033, %v3027, %v3034
    %vm3036 = vcmp.eq.s32.totalorder %v3031, 2
    %v3037 = vxor.u32 %v3027, 2147483648
    %v3038 = vsel %vm3036, %v3037, %v3028
    %v3039 = vsel %vm3032, %v3035, %v3038
    %v3040 = vsel %vm3029, nan, %v3039
    %v3041 = vadd.f32 %v1542, %v2291
    %v3042 = vmul.f32 %v3041, 3.0
    %v3043 = vadd.f32 %v795, %v3042
    %v3044 = vadd.f32 %v3043, %v3040
    %v3045 = vmul.f32 %v3044, 0.006313131
    %v3046 = vadd.f32 %v47, %v3045
    %3047 = vmatprep.subr.mxu0 0.0
    %v3048 = vand.u32 %v29, 4294901760
    %3049 = vmatpush1.msra.mxu0 %v3048
    %3050 = vmatprep.subr.mxu0 0.0
    %v3051 = vand.u32 %v28, 4294901760
    %3052 = vmatpush1.msra.mxu0 %v3051
    %3053 = vmatprep.subr.mxu0 0.0
    %v3054 = vand.u32 %v27, 4294901760
    %3055 = vmatpush1.msra.mxu0 %v3054
    %3056 = vmatprep.subr.mxu0 0.0
    %v3057 = vand.u32 %v26, 4294901760
    %3058 = vmatpush1.msra.mxu0 %v3057
    %3059 = vmatprep.subr.mxu0 0.0
    %v3060 = vand.u32 %v25, 4294901760
    %3061 = vmatpush1.msra.mxu0 %v3060
    %3062 = vmatprep.subr.mxu0 0.0
    %v3063 = vand.u32 %v24, 4294901760
    %3064 = vmatpush1.msra.mxu0 %v3063
    %3065 = vmatprep.subr.mxu0 0.0
    %v3066 = vand.u32 %v23, 4294901760
    %3067 = vmatpush1.msra.mxu0 %v3066
    %3068 = vmatprep.subr.mxu0 0.0
    %v3069 = vand.u32 %v22, 4294901760
    %3070 = vmatpush1.msra.mxu0 %v3069
    %3071 = vmatprep.subr.mxu0 0.0
    %v3072 = vand.u32 %v21, 4294901760
    %3073 = vmatpush1.msra.mxu0 %v3072
    %3074 = vmatprep.subr.mxu0 0.0
    %v3075 = vand.u32 %v20, 4294901760
    %3076 = vmatpush1.msra.mxu0 %v3075
    %3077 = vmatprep.subr.mxu0 0.0
    %v3078 = vand.u32 %v19, 4294901760
    %3079 = vmatpush1.msra.mxu0 %v3078
    %3080 = vmatprep.subr.mxu0 0.0
    %v3081 = vand.u32 %v18, 4294901760
    %3082 = vmatpush1.msra.mxu0 %v3081
    %3083 = vmatprep.subr.mxu0 0.0
    %v3084 = vand.u32 %v17, 4294901760
    %3085 = vmatpush1.msra.mxu0 %v3084
    %3086 = vmatprep.subr.mxu0 0.0
    %v3087 = vand.u32 %v16, 4294901760
    %3088 = vmatpush1.msra.mxu0 %v3087
    %3089 = vmatprep.subr.mxu0 0.0
    %v3090 = vand.u32 %v15, 4294901760
    %3091 = vmatpush1.msra.mxu0 %v3090
    %3092 = vmatprep.subr.mxu0 0.0
    %v3093 = vand.u32 %v14, 4294901760
    %3094 = vmatpush1.msra.mxu0 %v3093
    %3095 = vmatprep.subr.mxu0 0.0
    %3096 = vmatpush2.msra.mxu0 0.0
    %3097 = vmatprep.subr.mxu0 0.0
    %3098 = vmatpush2.msra.mxu0 0.0
    %3099 = vmatprep.subr.mxu0 0.0
    %3100 = vmatpush2.msra.mxu0 0.0
    %3101 = vmatprep.subr.mxu0 0.0
    %3102 = vmatpush2.msra.mxu0 0.0
    %3103 = vmatprep.subr.mxu0 0.0
    %3104 = vmatpush2.msra.mxu0 0.0
    %3105 = vmatprep.subr.mxu0 0.0
    %3106 = vmatpush2.msra.mxu0 0.0
    %3107 = vmatprep.subr.mxu0 0.0
    %3108 = vmatpush2.msra.mxu0 0.0
    %3109 = vmatprep.subr.mxu0 0.0
    %3110 = vmatpush2.msra.mxu0 0.0
    %3111 = vmatprep.subr.mxu0 0.0
    %3112 = vmatpush2.msra.mxu0 0.0
    %3113 = vmatprep.subr.mxu0 0.0
    %3114 = vmatpush2.msra.mxu0 0.0
    %3115 = vmatprep.subr.mxu0 0.0
    %3116 = vmatpush2.msra.mxu0 0.0
    %3117 = vmatprep.subr.mxu0 0.0
    %3118 = vmatpush2.msra.mxu0 0.0
    %3119 = vmatprep.subr.mxu0 0.0
    %3120 = vmatpush2.msra.mxu0 0.0
    %3121 = vmatprep.subr.mxu0 0.0
    %3122 = vmatpush2.msra.mxu0 0.0
    %3123 = vmatprep.subr.mxu0 0.0
    %3124 = vmatpush2.msra.mxu0 0.0
    %3125 = vmatprep.subr.mxu0 0.0
    %3126 = vmatpush2.msra.mxu0 0.0
    %3127 = vmatprep.mubr.f32.mxu0 0.0
    %v3128 = vand.u32 %v48, 4294901760
    %v3129 = vsub.f32 %v48, %v3128
    %v3130 = vand.u32 %v3129, 4294901760
    %v3131 = vsub.f32 %v3129, %v3130
    %v3132 = vand.u32 %v3131, 4294901760
    %3133 = vmatmul.mubr.f32.gmra.mxu0 %v3132
    %v3134 = vpop.f32.mrf.mxu0
    %v3135 = vadd.f32 %v35, %v3134
    %v3136 = vpop.f32.mrf.mxu0
    %3137 = vdwg.mxu0
    %3138 = vmatprep.subr.mxu0 0.0
    %v3139 = vand.u32 %v29, 4294901760
    %v3140 = vsub.f32 %v29, %v3139
    %v3141 = vand.u32 %v3140, 4294901760
    %v3142 = vsub.f32 %v3140, %v3141
    %v3143 = vand.u32 %v3142, 4294901760
    %3144 = vmatpush1.msra.mxu0 %v3143
    %3145 = vmatprep.subr.mxu0 0.0
    %v3146 = vand.u32 %v28, 4294901760
    %v3147 = vsub.f32 %v28, %v3146
    %v3148 = vand.u32 %v3147, 4294901760
    %v3149 = vsub.f32 %v3147, %v3148
    %v3150 = vand.u32 %v3149, 4294901760
    %3151 = vmatpush1.msra.mxu0 %v3150
    %3152 = vmatprep.subr.mxu0 0.0
    %v3153 = vand.u32 %v27, 4294901760
    %v3154 = vsub.f32 %v27, %v3153
    %v3155 = vand.u32 %v3154, 4294901760
    %v3156 = vsub.f32 %v3154, %v3155
    %v3157 = vand.u32 %v3156, 4294901760
    %3158 = vmatpush1.msra.mxu0 %v3157
    %3159 = vmatprep.subr.mxu0 0.0
    %v3160 = vand.u32 %v26, 4294901760
    %v3161 = vsub.f32 %v26, %v3160
    %v3162 = vand.u32 %v3161, 4294901760
    %v3163 = vsub.f32 %v3161, %v3162
    %v3164 = vand.u32 %v3163, 4294901760
    %3165 = vmatpush1.msra.mxu0 %v3164
    %3166 = vmatprep.subr.mxu0 0.0
    %v3167 = vand.u32 %v25, 4294901760
    %v3168 = vsub.f32 %v25, %v3167
    %v3169 = vand.u32 %v3168, 4294901760
    %v3170 = vsub.f32 %v3168, %v3169
    %v3171 = vand.u32 %v3170, 4294901760
    %3172 = vmatpush1.msra.mxu0 %v3171
    %3173 = vmatprep.subr.mxu0 0.0
    %v3174 = vand.u32 %v24, 4294901760
    %v3175 = vsub.f32 %v24, %v3174
    %v3176 = vand.u32 %v3175, 4294901760
    %v3177 = vsub.f32 %v3175, %v3176
    %v3178 = vand.u32 %v3177, 4294901760
    %3179 = vmatpush1.msra.mxu0 %v3178
    %3180 = vmatprep.subr.mxu0 0.0
    %v3181 = vand.u32 %v23, 4294901760
    %v3182 = vsub.f32 %v23, %v3181
    %v3183 = vand.u32 %v3182, 4294901760
    %v3184 = vsub.f32 %v3182, %v3183
    %v3185 = vand.u32 %v3184, 4294901760
    %3186 = vmatpush1.msra.mxu0 %v3185
    %3187 = vmatprep.subr.mxu0 0.0
    %v3188 = vand.u32 %v22, 4294901760
    %v3189 = vsub.f32 %v22, %v3188
    %v3190 = vand.u32 %v3189, 4294901760
    %v3191 = vsub.f32 %v3189, %v3190
    %v3192 = vand.u32 %v3191, 4294901760
    %3193 = vmatpush1.msra.mxu0 %v3192
    %3194 = vmatprep.subr.mxu0 0.0
    %v3195 = vand.u32 %v21, 4294901760
    %v3196 = vsub.f32 %v21, %v3195
    %v3197 = vand.u32 %v3196, 4294901760
    %v3198 = vsub.f32 %v3196, %v3197
    %v3199 = vand.u32 %v3198, 4294901760
    %3200 = vmatpush1.msra.mxu0 %v3199
    %3201 = vmatprep.subr.mxu0 0.0
    %v3202 = vand.u32 %v20, 4294901760
    %v3203 = vsub.f32 %v20, %v3202
    %v3204 = vand.u32 %v3203, 4294901760
    %v3205 = vsub.f32 %v3203, %v3204
    %v3206 = vand.u32 %v3205, 4294901760
    %3207 = vmatpush1.msra.mxu0 %v3206
    %3208 = vmatprep.subr.mxu0 0.0
    %v3209 = vand.u32 %v19, 4294901760
    %v3210 = vsub.f32 %v19, %v3209
    %v3211 = vand.u32 %v3210, 4294901760
    %v3212 = vsub.f32 %v3210, %v3211
    %v3213 = vand.u32 %v3212, 4294901760
    %3214 = vmatpush1.msra.mxu0 %v3213
    %3215 = vmatprep.subr.mxu0 0.0
    %v3216 = vand.u32 %v18, 4294901760
    %v3217 = vsub.f32 %v18, %v3216
    %v3218 = vand.u32 %v3217, 4294901760
    %v3219 = vsub.f32 %v3217, %v3218
    %v3220 = vand.u32 %v3219, 4294901760
    %3221 = vmatpush1.msra.mxu0 %v3220
    %3222 = vmatprep.subr.mxu0 0.0
    %v3223 = vand.u32 %v17, 4294901760
    %v3224 = vsub.f32 %v17, %v3223
    %v3225 = vand.u32 %v3224, 4294901760
    %v3226 = vsub.f32 %v3224, %v3225
    %v3227 = vand.u32 %v3226, 4294901760
    %3228 = vmatpush1.msra.mxu0 %v3227
    %3229 = vmatprep.subr.mxu0 0.0
    %v3230 = vand.u32 %v16, 4294901760
    %v3231 = vsub.f32 %v16, %v3230
    %v3232 = vand.u32 %v3231, 4294901760
    %v3233 = vsub.f32 %v3231, %v3232
    %v3234 = vand.u32 %v3233, 4294901760
    %3235 = vmatpush1.msra.mxu0 %v3234
    %3236 = vmatprep.subr.mxu0 0.0
    %v3237 = vand.u32 %v15, 4294901760
    %v3238 = vsub.f32 %v15, %v3237
    %v3239 = vand.u32 %v3238, 4294901760
    %v3240 = vsub.f32 %v3238, %v3239
    %v3241 = vand.u32 %v3240, 4294901760
    %3242 = vmatpush1.msra.mxu0 %v3241
    %3243 = vmatprep.subr.mxu0 0.0
    %v3244 = vand.u32 %v14, 4294901760
    %v3245 = vsub.f32 %v14, %v3244
    %v3246 = vand.u32 %v3245, 4294901760
    %v3247 = vsub.f32 %v3245, %v3246
    %v3248 = vand.u32 %v3247, 4294901760
    %3249 = vmatpush1.msra.mxu0 %v3248
    %3250 = vmatprep.subr.mxu0 0.0
    %3251 = vmatpush2.msra.mxu0 0.0
    %3252 = vmatprep.subr.mxu0 0.0
    %3253 = vmatpush2.msra.mxu0 0.0
    %3254 = vmatprep.subr.mxu0 0.0
    %3255 = vmatpush2.msra.mxu0 0.0
    %3256 = vmatprep.subr.mxu0 0.0
    %3257 = vmatpush2.msra.mxu0 0.0
    %3258 = vmatprep.subr.mxu0 0.0
    %3259 = vmatpush2.msra.mxu0 0.0
    %3260 = vmatprep.subr.mxu0 0.0
    %3261 = vmatpush2.msra.mxu0 0.0
    %3262 = vmatprep.subr.mxu0 0.0
    %3263 = vmatpush2.msra.mxu0 0.0
    %3264 = vmatprep.subr.mxu0 0.0
    %3265 = vmatpush2.msra.mxu0 0.0
    %3266 = vmatprep.subr.mxu0 0.0
    %3267 = vmatpush2.msra.mxu0 0.0
    %3268 = vmatprep.subr.mxu0 0.0
    %3269 = vmatpush2.msra.mxu0 0.0
    %3270 = vmatprep.subr.mxu0 0.0
    %3271 = vmatpush2.msra.mxu0 0.0
    %3272 = vmatprep.subr.mxu0 0.0
    %3273 = vmatpush2.msra.mxu0 0.0
    %3274 = vmatprep.subr.mxu0 0.0
    %3275 = vmatpush2.msra.mxu0 0.0
    %3276 = vmatprep.subr.mxu0 0.0
    %3277 = vmatpush2.msra.mxu0 0.0
    %3278 = vmatprep.subr.mxu0 0.0
    %3279 = vmatpush2.msra.mxu0 0.0
    %3280 = vmatprep.subr.mxu0 0.0
    %3281 = vmatpush2.msra.mxu0 0.0
    %3282 = vmatprep.mubr.f32.mxu0 0.0
    %v3283 = vand.u32 %v48, 4294901760
    %3284 = vmatmul.mubr.f32.gmra.mxu0 %v3283
    %v3285 = vpop.f32.mrf.mxu0
    %v3286 = vadd.f32 %v3135, %v3285
    %v3287 = vpop.f32.mrf.mxu0
    %3288 = vdwg.mxu0
    %3289 = vmatprep.subr.mxu0 0.0
    %v3290 = vand.u32 %v29, 4294901760
    %v3291 = vsub.f32 %v29, %v3290
    %3292 = vmatpush1.msra.mxu0 %v3291
    %3293 = vmatprep.subr.mxu0 0.0
    %v3294 = vand.u32 %v28, 4294901760
    %v3295 = vsub.f32 %v28, %v3294
    %3296 = vmatpush1.msra.mxu0 %v3295
    %3297 = vmatprep.subr.mxu0 0.0
    %v3298 = vand.u32 %v27, 4294901760
    %v3299 = vsub.f32 %v27, %v3298
    %3300 = vmatpush1.msra.mxu0 %v3299
    %3301 = vmatprep.subr.mxu0 0.0
    %v3302 = vand.u32 %v26, 4294901760
    %v3303 = vsub.f32 %v26, %v3302
    %3304 = vmatpush1.msra.mxu0 %v3303
    %3305 = vmatprep.subr.mxu0 0.0
    %v3306 = vand.u32 %v25, 4294901760
    %v3307 = vsub.f32 %v25, %v3306
    %3308 = vmatpush1.msra.mxu0 %v3307
    %3309 = vmatprep.subr.mxu0 0.0
    %v3310 = vand.u32 %v24, 4294901760
    %v3311 = vsub.f32 %v24, %v3310
    %3312 = vmatpush1.msra.mxu0 %v3311
    %3313 = vmatprep.subr.mxu0 0.0
    %v3314 = vand.u32 %v23, 4294901760
    %v3315 = vsub.f32 %v23, %v3314
    %3316 = vmatpush1.msra.mxu0 %v3315
    %3317 = vmatprep.subr.mxu0 0.0
    %v3318 = vand.u32 %v22, 4294901760
    %v3319 = vsub.f32 %v22, %v3318
    %3320 = vmatpush1.msra.mxu0 %v3319
    %3321 = vmatprep.subr.mxu0 0.0
    %v3322 = vand.u32 %v21, 4294901760
    %v3323 = vsub.f32 %v21, %v3322
    %3324 = vmatpush1.msra.mxu0 %v3323
    %3325 = vmatprep.subr.mxu0 0.0
    %v3326 = vand.u32 %v20, 4294901760
    %v3327 = vsub.f32 %v20, %v3326
    %3328 = vmatpush1.msra.mxu0 %v3327
    %3329 = vmatprep.subr.mxu0 0.0
    %v3330 = vand.u32 %v19, 4294901760
    %v3331 = vsub.f32 %v19, %v3330
    %3332 = vmatpush1.msra.mxu0 %v3331
    %3333 = vmatprep.subr.mxu0 0.0
    %v3334 = vand.u32 %v18, 4294901760
    %v3335 = vsub.f32 %v18, %v3334
    %3336 = vmatpush1.msra.mxu0 %v3335
    %3337 = vmatprep.subr.mxu0 0.0
    %v3338 = vand.u32 %v17, 4294901760
    %v3339 = vsub.f32 %v17, %v3338
    %3340 = vmatpush1.msra.mxu0 %v3339
    %3341 = vmatprep.subr.mxu0 0.0
    %v3342 = vand.u32 %v16, 4294901760
    %v3343 = vsub.f32 %v16, %v3342
    %3344 = vmatpush1.msra.mxu0 %v3343
    %3345 = vmatprep.subr.mxu0 0.0
    %v3346 = vand.u32 %v15, 4294901760
    %v3347 = vsub.f32 %v15, %v3346
    %3348 = vmatpush1.msra.mxu0 %v3347
    %3349 = vmatprep.subr.mxu0 0.0
    %v3350 = vand.u32 %v14, 4294901760
    %v3351 = vsub.f32 %v14, %v3350
    %3352 = vmatpush1.msra.mxu0 %v3351
    %3353 = vmatprep.subr.mxu0 0.0
    %3354 = vmatpush2.msra.mxu0 0.0
    %3355 = vmatprep.subr.mxu0 0.0
    %3356 = vmatpush2.msra.mxu0 0.0
    %3357 = vmatprep.subr.mxu0 0.0
    %3358 = vmatpush2.msra.mxu0 0.0
    %3359 = vmatprep.subr.mxu0 0.0
    %3360 = vmatpush2.msra.mxu0 0.0
    %3361 = vmatprep.subr.mxu0 0.0
    %3362 = vmatpush2.msra.mxu0 0.0
    %3363 = vmatprep.subr.mxu0 0.0
    %3364 = vmatpush2.msra.mxu0 0.0
    %3365 = vmatprep.subr.mxu0 0.0
    %3366 = vmatpush2.msra.mxu0 0.0
    %3367 = vmatprep.subr.mxu0 0.0
    %3368 = vmatpush2.msra.mxu0 0.0
    %3369 = vmatprep.subr.mxu0 0.0
    %3370 = vmatpush2.msra.mxu0 0.0
    %3371 = vmatprep.subr.mxu0 0.0
    %3372 = vmatpush2.msra.mxu0 0.0
    %3373 = vmatprep.subr.mxu0 0.0
    %3374 = vmatpush2.msra.mxu0 0.0
    %3375 = vmatprep.subr.mxu0 0.0
    %3376 = vmatpush2.msra.mxu0 0.0
    %3377 = vmatprep.subr.mxu0 0.0
    %3378 = vmatpush2.msra.mxu0 0.0
    %3379 = vmatprep.subr.mxu0 0.0
    %3380 = vmatpush2.msra.mxu0 0.0
    %3381 = vmatprep.subr.mxu0 0.0
    %3382 = vmatpush2.msra.mxu0 0.0
    %3383 = vmatprep.subr.mxu0 0.0
    %3384 = vmatpush2.msra.mxu0 0.0
    %3385 = vmatprep.mubr.f32.mxu0 0.0
    %v3386 = vand.u32 %v48, 4294901760
    %v3387 = vsub.f32 %v48, %v3386
    %3388 = vmatmul.mubr.f32.gmra.mxu0 %v3387
    %v3389 = vpop.f32.mrf.mxu0
    %v3390 = vadd.f32 %v3286, %v3389
    %v3391 = vpop.f32.mrf.mxu0
    %3392 = vdwg.mxu0
    %3393 = vmatprep.subr.mxu0 0.0
    %v3394 = vand.u32 %v29, 4294901760
    %3395 = vmatpush1.msra.mxu0 %v3394
    %3396 = vmatprep.subr.mxu0 0.0
    %v3397 = vand.u32 %v28, 4294901760
    %3398 = vmatpush1.msra.mxu0 %v3397
    %3399 = vmatprep.subr.mxu0 0.0
    %v3400 = vand.u32 %v27, 4294901760
    %3401 = vmatpush1.msra.mxu0 %v3400
    %3402 = vmatprep.subr.mxu0 0.0
    %v3403 = vand.u32 %v26, 4294901760
    %3404 = vmatpush1.msra.mxu0 %v3403
    %3405 = vmatprep.subr.mxu0 0.0
    %v3406 = vand.u32 %v25, 4294901760
    %3407 = vmatpush1.msra.mxu0 %v3406
    %3408 = vmatprep.subr.mxu0 0.0
    %v3409 = vand.u32 %v24, 4294901760
    %3410 = vmatpush1.msra.mxu0 %v3409
    %3411 = vmatprep.subr.mxu0 0.0
    %v3412 = vand.u32 %v23, 4294901760
    %3413 = vmatpush1.msra.mxu0 %v3412
    %3414 = vmatprep.subr.mxu0 0.0
    %v3415 = vand.u32 %v22, 4294901760
    %3416 = vmatpush1.msra.mxu0 %v3415
    %3417 = vmatprep.subr.mxu0 0.0
    %v3418 = vand.u32 %v21, 4294901760
    %3419 = vmatpush1.msra.mxu0 %v3418
    %3420 = vmatprep.subr.mxu0 0.0
    %v3421 = vand.u32 %v20, 4294901760
    %3422 = vmatpush1.msra.mxu0 %v3421
    %3423 = vmatprep.subr.mxu0 0.0
    %v3424 = vand.u32 %v19, 4294901760
    %3425 = vmatpush1.msra.mxu0 %v3424
    %3426 = vmatprep.subr.mxu0 0.0
    %v3427 = vand.u32 %v18, 4294901760
    %3428 = vmatpush1.msra.mxu0 %v3427
    %3429 = vmatprep.subr.mxu0 0.0
    %v3430 = vand.u32 %v17, 4294901760
    %3431 = vmatpush1.msra.mxu0 %v3430
    %3432 = vmatprep.subr.mxu0 0.0
    %v3433 = vand.u32 %v16, 4294901760
    %3434 = vmatpush1.msra.mxu0 %v3433
    %3435 = vmatprep.subr.mxu0 0.0
    %v3436 = vand.u32 %v15, 4294901760
    %3437 = vmatpush1.msra.mxu0 %v3436
    %3438 = vmatprep.subr.mxu0 0.0
    %v3439 = vand.u32 %v14, 4294901760
    %3440 = vmatpush1.msra.mxu0 %v3439
    %3441 = vmatprep.subr.mxu0 0.0
    %3442 = vmatpush2.msra.mxu0 0.0
    %3443 = vmatprep.subr.mxu0 0.0
    %3444 = vmatpush2.msra.mxu0 0.0
    %3445 = vmatprep.subr.mxu0 0.0
    %3446 = vmatpush2.msra.mxu0 0.0
    %3447 = vmatprep.subr.mxu0 0.0
    %3448 = vmatpush2.msra.mxu0 0.0
    %3449 = vmatprep.subr.mxu0 0.0
    %3450 = vmatpush2.msra.mxu0 0.0
    %3451 = vmatprep.subr.mxu0 0.0
    %3452 = vmatpush2.msra.mxu0 0.0
    %3453 = vmatprep.subr.mxu0 0.0
    %3454 = vmatpush2.msra.mxu0 0.0
    %3455 = vmatprep.subr.mxu0 0.0
    %3456 = vmatpush2.msra.mxu0 0.0
    %3457 = vmatprep.subr.mxu0 0.0
    %3458 = vmatpush2.msra.mxu0 0.0
    %3459 = vmatprep.subr.mxu0 0.0
    %3460 = vmatpush2.msra.mxu0 0.0
    %3461 = vmatprep.subr.mxu0 0.0
    %3462 = vmatpush2.msra.mxu0 0.0
    %3463 = vmatprep.subr.mxu0 0.0
    %3464 = vmatpush2.msra.mxu0 0.0
    %3465 = vmatprep.subr.mxu0 0.0
    %3466 = vmatpush2.msra.mxu0 0.0
    %3467 = vmatprep.subr.mxu0 0.0
    %3468 = vmatpush2.msra.mxu0 0.0
    %3469 = vmatprep.subr.mxu0 0.0
    %3470 = vmatpush2.msra.mxu0 0.0
    %3471 = vmatprep.subr.mxu0 0.0
    %3472 = vmatpush2.msra.mxu0 0.0
    %3473 = vmatprep.mubr.f32.mxu0 0.0
    %v3474 = vand.u32 %v48, 4294901760
    %v3475 = vsub.f32 %v48, %v3474
    %v3476 = vand.u32 %v3475, 4294901760
    %3477 = vmatmul.mubr.f32.gmra.mxu0 %v3476
    %v3478 = vpop.f32.mrf.mxu0
    %v3479 = vadd.f32 %v3390, %v3478
    %v3480 = vpop.f32.mrf.mxu0
    %3481 = vdwg.mxu0
    %3482 = vmatprep.subr.mxu0 0.0
    %v3483 = vand.u32 %v29, 4294901760
    %v3484 = vsub.f32 %v29, %v3483
    %v3485 = vand.u32 %v3484, 4294901760
    %3486 = vmatpush1.msra.mxu0 %v3485
    %3487 = vmatprep.subr.mxu0 0.0
    %v3488 = vand.u32 %v28, 4294901760
    %v3489 = vsub.f32 %v28, %v3488
    %v3490 = vand.u32 %v3489, 4294901760
    %3491 = vmatpush1.msra.mxu0 %v3490
    %3492 = vmatprep.subr.mxu0 0.0
    %v3493 = vand.u32 %v27, 4294901760
    %v3494 = vsub.f32 %v27, %v3493
    %v3495 = vand.u32 %v3494, 4294901760
    %3496 = vmatpush1.msra.mxu0 %v3495
    %3497 = vmatprep.subr.mxu0 0.0
    %v3498 = vand.u32 %v26, 4294901760
    %v3499 = vsub.f32 %v26, %v3498
    %v3500 = vand.u32 %v3499, 4294901760
    %3501 = vmatpush1.msra.mxu0 %v3500
    %3502 = vmatprep.subr.mxu0 0.0
    %v3503 = vand.u32 %v25, 4294901760
    %v3504 = vsub.f32 %v25, %v3503
    %v3505 = vand.u32 %v3504, 4294901760
    %3506 = vmatpush1.msra.mxu0 %v3505
    %3507 = vmatprep.subr.mxu0 0.0
    %v3508 = vand.u32 %v24, 4294901760
    %v3509 = vsub.f32 %v24, %v3508
    %v3510 = vand.u32 %v3509, 4294901760
    %3511 = vmatpush1.msra.mxu0 %v3510
    %3512 = vmatprep.subr.mxu0 0.0
    %v3513 = vand.u32 %v23, 4294901760
    %v3514 = vsub.f32 %v23, %v3513
    %v3515 = vand.u32 %v3514, 4294901760
    %3516 = vmatpush1.msra.mxu0 %v3515
    %3517 = vmatprep.subr.mxu0 0.0
    %v3518 = vand.u32 %v22, 4294901760
    %v3519 = vsub.f32 %v22, %v3518
    %v3520 = vand.u32 %v3519, 4294901760
    %3521 = vmatpush1.msra.mxu0 %v3520
    %3522 = vmatprep.subr.mxu0 0.0
    %v3523 = vand.u32 %v21, 4294901760
    %v3524 = vsub.f32 %v21, %v3523
    %v3525 = vand.u32 %v3524, 4294901760
    %3526 = vmatpush1.msra.mxu0 %v3525
    %3527 = vmatprep.subr.mxu0 0.0
    %v3528 = vand.u32 %v20, 4294901760
    %v3529 = vsub.f32 %v20, %v3528
    %v3530 = vand.u32 %v3529, 4294901760
    %3531 = vmatpush1.msra.mxu0 %v3530
    %3532 = vmatprep.subr.mxu0 0.0
    %v3533 = vand.u32 %v19, 4294901760
    %v3534 = vsub.f32 %v19, %v3533
    %v3535 = vand.u32 %v3534, 4294901760
    %3536 = vmatpush1.msra.mxu0 %v3535
    %3537 = vmatprep.subr.mxu0 0.0
    %v3538 = vand.u32 %v18, 4294901760
    %v3539 = vsub.f32 %v18, %v3538
    %v3540 = vand.u32 %v3539, 4294901760
    %3541 = vmatpush1.msra.mxu0 %v3540
    %3542 = vmatprep.subr.mxu0 0.0
    %v3543 = vand.u32 %v17, 4294901760
    %v3544 = vsub.f32 %v17, %v3543
    %v3545 = vand.u32 %v3544, 4294901760
    %3546 = vmatpush1.msra.mxu0 %v3545
    %3547 = vmatprep.subr.mxu0 0.0
    %v3548 = vand.u32 %v16, 4294901760
    %v3549 = vsub.f32 %v16, %v3548
    %v3550 = vand.u32 %v3549, 4294901760
    %3551 = vmatpush1.msra.mxu0 %v3550
    %3552 = vmatprep.subr.mxu0 0.0
    %v3553 = vand.u32 %v15, 4294901760
    %v3554 = vsub.f32 %v15, %v3553
    %v3555 = vand.u32 %v3554, 4294901760
    %3556 = vmatpush1.msra.mxu0 %v3555
    %3557 = vmatprep.subr.mxu0 0.0
    %v3558 = vand.u32 %v14, 4294901760
    %v3559 = vsub.f32 %v14, %v3558
    %v3560 = vand.u32 %v3559, 4294901760
    %3561 = vmatpush1.msra.mxu0 %v3560
    %3562 = vmatprep.subr.mxu0 0.0
    %3563 = vmatpush2.msra.mxu0 0.0
    %3564 = vmatprep.subr.mxu0 0.0
    %3565 = vmatpush2.msra.mxu0 0.0
    %3566 = vmatprep.subr.mxu0 0.0
    %3567 = vmatpush2.msra.mxu0 0.0
    %3568 = vmatprep.subr.mxu0 0.0
    %3569 = vmatpush2.msra.mxu0 0.0
    %3570 = vmatprep.subr.mxu0 0.0
    %3571 = vmatpush2.msra.mxu0 0.0
    %3572 = vmatprep.subr.mxu0 0.0
    %3573 = vmatpush2.msra.mxu0 0.0
    %3574 = vmatprep.subr.mxu0 0.0
    %3575 = vmatpush2.msra.mxu0 0.0
    %3576 = vmatprep.subr.mxu0 0.0
    %3577 = vmatpush2.msra.mxu0 0.0
    %3578 = vmatprep.subr.mxu0 0.0
    %3579 = vmatpush2.msra.mxu0 0.0
    %3580 = vmatprep.subr.mxu0 0.0
    %3581 = vmatpush2.msra.mxu0 0.0
    %3582 = vmatprep.subr.mxu0 0.0
    %3583 = vmatpush2.msra.mxu0 0.0
    %3584 = vmatprep.subr.mxu0 0.0
    %3585 = vmatpush2.msra.mxu0 0.0
    %3586 = vmatprep.subr.mxu0 0.0
    %3587 = vmatpush2.msra.mxu0 0.0
    %3588 = vmatprep.subr.mxu0 0.0
    %3589 = vmatpush2.msra.mxu0 0.0
    %3590 = vmatprep.subr.mxu0 0.0
    %3591 = vmatpush2.msra.mxu0 0.0
    %3592 = vmatprep.subr.mxu0 0.0
    %3593 = vmatpush2.msra.mxu0 0.0
    %3594 = vmatprep.mubr.f32.mxu0 0.0
    %v3595 = vand.u32 %v48, 4294901760
    %3596 = vmatmul.mubr.f32.gmra.mxu0 %v3595
    %v3597 = vpop.f32.mrf.mxu0
    %v3598 = vadd.f32 %v3479, %v3597
    %v3599 = vpop.f32.mrf.mxu0
    %3600 = vdwg.mxu0
    %3601 = vmatprep.subr.mxu0 0.0
    %v3602 = vand.u32 %v29, 4294901760
    %3603 = vmatpush1.msra.mxu0 %v3602
    %3604 = vmatprep.subr.mxu0 0.0
    %v3605 = vand.u32 %v28, 4294901760
    %3606 = vmatpush1.msra.mxu0 %v3605
    %3607 = vmatprep.subr.mxu0 0.0
    %v3608 = vand.u32 %v27, 4294901760
    %3609 = vmatpush1.msra.mxu0 %v3608
    %3610 = vmatprep.subr.mxu0 0.0
    %v3611 = vand.u32 %v26, 4294901760
    %3612 = vmatpush1.msra.mxu0 %v3611
    %3613 = vmatprep.subr.mxu0 0.0
    %v3614 = vand.u32 %v25, 4294901760
    %3615 = vmatpush1.msra.mxu0 %v3614
    %3616 = vmatprep.subr.mxu0 0.0
    %v3617 = vand.u32 %v24, 4294901760
    %3618 = vmatpush1.msra.mxu0 %v3617
    %3619 = vmatprep.subr.mxu0 0.0
    %v3620 = vand.u32 %v23, 4294901760
    %3621 = vmatpush1.msra.mxu0 %v3620
    %3622 = vmatprep.subr.mxu0 0.0
    %v3623 = vand.u32 %v22, 4294901760
    %3624 = vmatpush1.msra.mxu0 %v3623
    %3625 = vmatprep.subr.mxu0 0.0
    %v3626 = vand.u32 %v21, 4294901760
    %3627 = vmatpush1.msra.mxu0 %v3626
    %3628 = vmatprep.subr.mxu0 0.0
    %v3629 = vand.u32 %v20, 4294901760
    %3630 = vmatpush1.msra.mxu0 %v3629
    %3631 = vmatprep.subr.mxu0 0.0
    %v3632 = vand.u32 %v19, 4294901760
    %3633 = vmatpush1.msra.mxu0 %v3632
    %3634 = vmatprep.subr.mxu0 0.0
    %v3635 = vand.u32 %v18, 4294901760
    %3636 = vmatpush1.msra.mxu0 %v3635
    %3637 = vmatprep.subr.mxu0 0.0
    %v3638 = vand.u32 %v17, 4294901760
    %3639 = vmatpush1.msra.mxu0 %v3638
    %3640 = vmatprep.subr.mxu0 0.0
    %v3641 = vand.u32 %v16, 4294901760
    %3642 = vmatpush1.msra.mxu0 %v3641
    %3643 = vmatprep.subr.mxu0 0.0
    %v3644 = vand.u32 %v15, 4294901760
    %3645 = vmatpush1.msra.mxu0 %v3644
    %3646 = vmatprep.subr.mxu0 0.0
    %v3647 = vand.u32 %v14, 4294901760
    %3648 = vmatpush1.msra.mxu0 %v3647
    %3649 = vmatprep.subr.mxu0 0.0
    %3650 = vmatpush2.msra.mxu0 0.0
    %3651 = vmatprep.subr.mxu0 0.0
    %3652 = vmatpush2.msra.mxu0 0.0
    %3653 = vmatprep.subr.mxu0 0.0
    %3654 = vmatpush2.msra.mxu0 0.0
    %3655 = vmatprep.subr.mxu0 0.0
    %3656 = vmatpush2.msra.mxu0 0.0
    %3657 = vmatprep.subr.mxu0 0.0
    %3658 = vmatpush2.msra.mxu0 0.0
    %3659 = vmatprep.subr.mxu0 0.0
    %3660 = vmatpush2.msra.mxu0 0.0
    %3661 = vmatprep.subr.mxu0 0.0
    %3662 = vmatpush2.msra.mxu0 0.0
    %3663 = vmatprep.subr.mxu0 0.0
    %3664 = vmatpush2.msra.mxu0 0.0
    %3665 = vmatprep.subr.mxu0 0.0
    %3666 = vmatpush2.msra.mxu0 0.0
    %3667 = vmatprep.subr.mxu0 0.0
    %3668 = vmatpush2.msra.mxu0 0.0
    %3669 = vmatprep.subr.mxu0 0.0
    %3670 = vmatpush2.msra.mxu0 0.0
    %3671 = vmatprep.subr.mxu0 0.0
    %3672 = vmatpush2.msra.mxu0 0.0
    %3673 = vmatprep.subr.mxu0 0.0
    %3674 = vmatpush2.msra.mxu0 0.0
    %3675 = vmatprep.subr.mxu0 0.0
    %3676 = vmatpush2.msra.mxu0 0.0
    %3677 = vmatprep.subr.mxu0 0.0
    %3678 = vmatpush2.msra.mxu0 0.0
    %3679 = vmatprep.subr.mxu0 0.0
    %3680 = vmatpush2.msra.mxu0 0.0
    %3681 = vmatprep.mubr.f32.mxu0 0.0
    %v3682 = vand.u32 %v48, 4294901760
    %3683 = vmatmul.mubr.f32.gmra.mxu0 %v3682
    %v3684 = vpop.f32.mrf.mxu0
    %v3685 = vadd.f32 %v3598, %v3684
    %v3686 = vpop.f32.mrf.mxu0
    %3687 = vdwg.mxu0
    %v3688 = vand.u32 2147483647, %v3685
    %vm3689 = vcmp.le.f32.partialorder %v3688, 0.7853982
    %vm3690 = vcmp.lt.s32.totalorder %v3685, 0
    %v3691 = vand.u32 %v3685, 2139095040
    %v3692 = vshrl.u32 %v3691, 23
    %v3693 = vsub.s32 %v3692, 127
    %v3694 = vand.u32 2147483647, %v3685
    %v3695 = vand.u32 %v3694, 8388607
    %v3696 = vor.u32 %v3695, 8388608
    %v3697 = vsub.s32 0, %v3696
    %v3698 = vadd.s32 %v3693, 1
    %vm3699 = vcmp.gt.s32.totalorder %v3698, 0
    %v3700 = vsel %vm3699, %v3698, 0
    %v3701 = vshrl.u32 %v3700, 5
    %v3702 = vand.u32 %v3700, 31
    %v3703 = vsub.s32 32, %v3702
    %v3704 = vshrl.u32 683565275, %v3703
    %v3705 = vshll.u32 683565275, %v3702
    %v3706 = vshrl.u32 2475754826, %v3703
    %v3707 = vor.u32 %v3705, %v3706
    %v3708 = vshll.u32 2475754826, %v3702
    %v3709 = vshrl.u32 2131351028, %v3703
    %v3710 = vor.u32 %v3708, %v3709
    %v3711 = vshll.u32 2131351028, %v3702
    %v3712 = vshrl.u32 2102212464, %v3703
    %v3713 = vor.u32 %v3711, %v3712
    %v3714 = vshll.u32 2102212464, %v3702
    %v3715 = vshrl.u32 920167782, %v3703
    %v3716 = vor.u32 %v3714, %v3715
    %v3717 = vshll.u32 920167782, %v3702
    %v3718 = vshrl.u32 1326507024, %v3703
    %v3719 = vor.u32 %v3717, %v3718
    %vm3720 = vcmp.lt.s32.totalorder %v3701, 1
    %vm3721 = vcmp.lt.s32.totalorder %v3701, 2
    %vm3722 = vcmp.lt.s32.totalorder %v3701, 3
    %vm3723 = vcmp.lt.s32.totalorder %v3701, 4
    %v3724 = vsel %vm3720, %v3704, %v3707
    %v3725 = vsel %vm3723, %v3713, 2102212464
    %v3726 = vsel %vm3722, %v3710, %v3725
    %v3727 = vsel %vm3721, %v3724, %v3726
    %v3728 = vsel %vm3720, %v3707, %v3710
    %v3729 = vsel %vm3723, %v3716, 920167782
    %v3730 = vsel %vm3722, %v3713, %v3729
    %v3731 = vsel %vm3721, %v3728, %v3730
    %v3732 = vsel %vm3720, %v3710, %v3713
    %v3733 = vsel %vm3723, %v3719, 1326507024
    %v3734 = vsel %vm3722, %v3716, %v3733
    %v3735 = vsel %vm3721, %v3732, %v3734
    %v3736 = vshll.u32 %v3696, 8
    %v3737 = vmul.u32.u64.compose %v3736, %v3735
    %v3738 = vextract.low.u32 %v3737
    %v3739 = vextract.high.u32 %v3737
    %v3740 = vmul.u32.u64.compose %v3736, %v3731
    %v3741 = vextract.low.u32 %v3740
    %v3742 = vextract.high.u32 %v3740
    %v3743 = vmul.u32 %v3736, %v3727
    %v3744 = vadd.s32 %v3739, %v3741
    %vm3745 = vc.u32 %v3739, %v3741
    %v3746 = vadd.s32 %v3742, 1
    %v3747 = vsel %vm3745, %v3746, %v3742
    %v3748 = vadd.s32 %v3743, %v3747
    %v3749 = vadd.s32 %v3748, 536870912
    %v3750 = vshrl.u32 %v3749, 30
    %v3751 = vshll.u32 %v3750, 30
    %v3752 = vsub.s32 %v3748, %v3751
    %vm3753 = vcmp.lt.s32.totalorder %v3752, 0
    %v3754 = vsub.s32 0, %v3752
    %v3755 = vsel %vm3753, %v3754, %v3752
    %v3756 = vclz %v3755
    %v3757 = vsub.s32 %v3756, 2
    %vm3758 = vcmp.gt.s32.totalorder 0, %v3757
    %v3759 = vsel %vm3758, 0, %v3757
    %v3760 = vsub.s32 32, %v3759
    %v3761 = vshll.u32 %v3752, %v3759
    %v3762 = vshrl.u32 %v3744, %v3760
    %v3763 = vor.u32 %v3761, %v3762
    %v3764 = vsub.s32 4294967266, %v3759
    %v3765 = vadd.s32 %v3764, 127
    %v3766 = vshll.u32 %v3765, 23
    %v3767 = vor.u32 4788187, %v3766
    %v3768 = vand.u32 2147483647, %v3767
    %v3770 = vcvt.s32.f32 %v3763
    %v3771 = vmul.f32 %v3770, %v3768
    %v3772 = vxor.u32 %v3771, 2147483648
    %v3773 = vsel %vm3690, %v3772, %v3771
    %v3774 = vsub.s32 4, %v3750
    %v3775 = vsel %vm3690, %v3774, %v3750
    %v3776 = vsel %vm3689, %v3685, %v3773
    %v3777 = vsel %vm3689, 0, %v3775
    %v3778 = vcosq.f32.pop %v3776
    %v3779 = vsinq.f32.pop %v3776
    %vm3780 = vweird.f32 %v3685
    %v3781 = vadd.s32 %v3777, 3
    %v3782 = vand.u32 %v3781, 3
    %vm3783 = vcmp.lt.s32.totalorder %v3782, 2
    %vm3784 = vcmp.eq.s32.totalorder %v3782, 0
    %v3785 = vxor.u32 %v3779, 2147483648
    %v3786 = vsel %vm3784, %v3778, %v3785
    %vm3787 = vcmp.eq.s32.totalorder %v3782, 2
    %v3788 = vxor.u32 %v3778, 2147483648
    %v3789 = vsel %vm3787, %v3788, %v3779
    %v3790 = vsel %vm3783, %v3786, %v3789
    %v3791 = vsel %vm3780, nan, %v3790
    %v3792 = vmul.f32 %v3791, 0.016835017
    %v3793 = vadd.f32 %v48, %v3792
    %3794 = vmatprep.subr.mxu0 0.0
    %v3795 = vand.u32 %v29, 4294901760
    %3796 = vmatpush1.msra.mxu0 %v3795
    %3797 = vmatprep.subr.mxu0 0.0
    %v3798 = vand.u32 %v28, 4294901760
    %3799 = vmatpush1.msra.mxu0 %v3798
    %3800 = vmatprep.subr.mxu0 0.0
    %v3801 = vand.u32 %v27, 4294901760
    %3802 = vmatpush1.msra.mxu0 %v3801
    %3803 = vmatprep.subr.mxu0 0.0
    %v3804 = vand.u32 %v26, 4294901760
    %3805 = vmatpush1.msra.mxu0 %v3804
    %3806 = vmatprep.subr.mxu0 0.0
    %v3807 = vand.u32 %v25, 4294901760
    %3808 = vmatpush1.msra.mxu0 %v3807
    %3809 = vmatprep.subr.mxu0 0.0
    %v3810 = vand.u32 %v24, 4294901760
    %3811 = vmatpush1.msra.mxu0 %v3810
    %3812 = vmatprep.subr.mxu0 0.0
    %v3813 = vand.u32 %v23, 4294901760
    %3814 = vmatpush1.msra.mxu0 %v3813
    %3815 = vmatprep.subr.mxu0 0.0
    %v3816 = vand.u32 %v22, 4294901760
    %3817 = vmatpush1.msra.mxu0 %v3816
    %3818 = vmatprep.subr.mxu0 0.0
    %v3819 = vand.u32 %v21, 4294901760
    %3820 = vmatpush1.msra.mxu0 %v3819
    %3821 = vmatprep.subr.mxu0 0.0
    %v3822 = vand.u32 %v20, 4294901760
    %3823 = vmatpush1.msra.mxu0 %v3822
    %3824 = vmatprep.subr.mxu0 0.0
    %v3825 = vand.u32 %v19, 4294901760
    %3826 = vmatpush1.msra.mxu0 %v3825
    %3827 = vmatprep.subr.mxu0 0.0
    %v3828 = vand.u32 %v18, 4294901760
    %3829 = vmatpush1.msra.mxu0 %v3828
    %3830 = vmatprep.subr.mxu0 0.0
    %v3831 = vand.u32 %v17, 4294901760
    %3832 = vmatpush1.msra.mxu0 %v3831
    %3833 = vmatprep.subr.mxu0 0.0
    %v3834 = vand.u32 %v16, 4294901760
    %3835 = vmatpush1.msra.mxu0 %v3834
    %3836 = vmatprep.subr.mxu0 0.0
    %v3837 = vand.u32 %v15, 4294901760
    %3838 = vmatpush1.msra.mxu0 %v3837
    %3839 = vmatprep.subr.mxu0 0.0
    %v3840 = vand.u32 %v14, 4294901760
    %3841 = vmatpush1.msra.mxu0 %v3840
    %3842 = vmatprep.subr.mxu0 0.0
    %3843 = vmatpush2.msra.mxu0 0.0
    %3844 = vmatprep.subr.mxu0 0.0
    %3845 = vmatpush2.msra.mxu0 0.0
    %3846 = vmatprep.subr.mxu0 0.0
    %3847 = vmatpush2.msra.mxu0 0.0
    %3848 = vmatprep.subr.mxu0 0.0
    %3849 = vmatpush2.msra.mxu0 0.0
    %3850 = vmatprep.subr.mxu0 0.0
    %3851 = vmatpush2.msra.mxu0 0.0
    %3852 = vmatprep.subr.mxu0 0.0
    %3853 = vmatpush2.msra.mxu0 0.0
    %3854 = vmatprep.subr.mxu0 0.0
    %3855 = vmatpush2.msra.mxu0 0.0
    %3856 = vmatprep.subr.mxu0 0.0
    %3857 = vmatpush2.msra.mxu0 0.0
    %3858 = vmatprep.subr.mxu0 0.0
    %3859 = vmatpush2.msra.mxu0 0.0
    %3860 = vmatprep.subr.mxu0 0.0
    %3861 = vmatpush2.msra.mxu0 0.0
    %3862 = vmatprep.subr.mxu0 0.0
    %3863 = vmatpush2.msra.mxu0 0.0
    %3864 = vmatprep.subr.mxu0 0.0
    %3865 = vmatpush2.msra.mxu0 0.0
    %3866 = vmatprep.subr.mxu0 0.0
    %3867 = vmatpush2.msra.mxu0 0.0
    %3868 = vmatprep.subr.mxu0 0.0
    %3869 = vmatpush2.msra.mxu0 0.0
    %3870 = vmatprep.subr.mxu0 0.0
    %3871 = vmatpush2.msra.mxu0 0.0
    %3872 = vmatprep.subr.mxu0 0.0
    %3873 = vmatpush2.msra.mxu0 0.0
    %3874 = vmatprep.mubr.f32.mxu0 0.0
    %v3875 = vand.u32 %v3793, 4294901760
    %v3876 = vsub.f32 %v3793, %v3875
    %v3877 = vand.u32 %v3876, 4294901760
    %v3878 = vsub.f32 %v3876, %v3877
    %v3879 = vand.u32 %v3878, 4294901760
    %3880 = vmatmul.mubr.f32.gmra.mxu0 %v3879
    %v3881 = vpop.f32.mrf.mxu0
    %v3882 = vadd.f32 %v35, %v3881
    %v3883 = vpop.f32.mrf.mxu0
    %3884 = vdwg.mxu0
    %3885 = vmatprep.subr.mxu0 0.0
    %v3886 = vand.u32 %v29, 4294901760
    %v3887 = vsub.f32 %v29, %v3886
    %v3888 = vand.u32 %v3887, 4294901760
    %v3889 = vsub.f32 %v3887, %v3888
    %v3890 = vand.u32 %v3889, 4294901760
    %3891 = vmatpush1.msra.mxu0 %v3890
    %3892 = vmatprep.subr.mxu0 0.0
    %v3893 = vand.u32 %v28, 4294901760
    %v3894 = vsub.f32 %v28, %v3893
    %v3895 = vand.u32 %v3894, 4294901760
    %v3896 = vsub.f32 %v3894, %v3895
    %v3897 = vand.u32 %v3896, 4294901760
    %3898 = vmatpush1.msra.mxu0 %v3897
    %3899 = vmatprep.subr.mxu0 0.0
    %v3900 = vand.u32 %v27, 4294901760
    %v3901 = vsub.f32 %v27, %v3900
    %v3902 = vand.u32 %v3901, 4294901760
    %v3903 = vsub.f32 %v3901, %v3902
    %v3904 = vand.u32 %v3903, 4294901760
    %3905 = vmatpush1.msra.mxu0 %v3904
    %3906 = vmatprep.subr.mxu0 0.0
    %v3907 = vand.u32 %v26, 4294901760
    %v3908 = vsub.f32 %v26, %v3907
    %v3909 = vand.u32 %v3908, 4294901760
    %v3910 = vsub.f32 %v3908, %v3909
    %v3911 = vand.u32 %v3910, 4294901760
    %3912 = vmatpush1.msra.mxu0 %v3911
    %3913 = vmatprep.subr.mxu0 0.0
    %v3914 = vand.u32 %v25, 4294901760
    %v3915 = vsub.f32 %v25, %v3914
    %v3916 = vand.u32 %v3915, 4294901760
    %v3917 = vsub.f32 %v3915, %v3916
    %v3918 = vand.u32 %v3917, 4294901760
    %3919 = vmatpush1.msra.mxu0 %v3918
    %3920 = vmatprep.subr.mxu0 0.0
    %v3921 = vand.u32 %v24, 4294901760
    %v3922 = vsub.f32 %v24, %v3921
    %v3923 = vand.u32 %v3922, 4294901760
    %v3924 = vsub.f32 %v3922, %v3923
    %v3925 = vand.u32 %v3924, 4294901760
    %3926 = vmatpush1.msra.mxu0 %v3925
    %3927 = vmatprep.subr.mxu0 0.0
    %v3928 = vand.u32 %v23, 4294901760
    %v3929 = vsub.f32 %v23, %v3928
    %v3930 = vand.u32 %v3929, 4294901760
    %v3931 = vsub.f32 %v3929, %v3930
    %v3932 = vand.u32 %v3931, 4294901760
    %3933 = vmatpush1.msra.mxu0 %v3932
    %3934 = vmatprep.subr.mxu0 0.0
    %v3935 = vand.u32 %v22, 4294901760
    %v3936 = vsub.f32 %v22, %v3935
    %v3937 = vand.u32 %v3936, 4294901760
    %v3938 = vsub.f32 %v3936, %v3937
    %v3939 = vand.u32 %v3938, 4294901760
    %3940 = vmatpush1.msra.mxu0 %v3939
    %3941 = vmatprep.subr.mxu0 0.0
    %v3942 = vand.u32 %v21, 4294901760
    %v3943 = vsub.f32 %v21, %v3942
    %v3944 = vand.u32 %v3943, 4294901760
    %v3945 = vsub.f32 %v3943, %v3944
    %v3946 = vand.u32 %v3945, 4294901760
    %3947 = vmatpush1.msra.mxu0 %v3946
    %3948 = vmatprep.subr.mxu0 0.0
    %v3949 = vand.u32 %v20, 4294901760
    %v3950 = vsub.f32 %v20, %v3949
    %v3951 = vand.u32 %v3950, 4294901760
    %v3952 = vsub.f32 %v3950, %v3951
    %v3953 = vand.u32 %v3952, 4294901760
    %3954 = vmatpush1.msra.mxu0 %v3953
    %3955 = vmatprep.subr.mxu0 0.0
    %v3956 = vand.u32 %v19, 4294901760
    %v3957 = vsub.f32 %v19, %v3956
    %v3958 = vand.u32 %v3957, 4294901760
    %v3959 = vsub.f32 %v3957, %v3958
    %v3960 = vand.u32 %v3959, 4294901760
    %3961 = vmatpush1.msra.mxu0 %v3960
    %3962 = vmatprep.subr.mxu0 0.0
    %v3963 = vand.u32 %v18, 4294901760
    %v3964 = vsub.f32 %v18, %v3963
    %v3965 = vand.u32 %v3964, 4294901760
    %v3966 = vsub.f32 %v3964, %v3965
    %v3967 = vand.u32 %v3966, 4294901760
    %3968 = vmatpush1.msra.mxu0 %v3967
    %3969 = vmatprep.subr.mxu0 0.0
    %v3970 = vand.u32 %v17, 4294901760
    %v3971 = vsub.f32 %v17, %v3970
    %v3972 = vand.u32 %v3971, 4294901760
    %v3973 = vsub.f32 %v3971, %v3972
    %v3974 = vand.u32 %v3973, 4294901760
    %3975 = vmatpush1.msra.mxu0 %v3974
    %3976 = vmatprep.subr.mxu0 0.0
    %v3977 = vand.u32 %v16, 4294901760
    %v3978 = vsub.f32 %v16, %v3977
    %v3979 = vand.u32 %v3978, 4294901760
    %v3980 = vsub.f32 %v3978, %v3979
    %v3981 = vand.u32 %v3980, 4294901760
    %3982 = vmatpush1.msra.mxu0 %v3981
    %3983 = vmatprep.subr.mxu0 0.0
    %v3984 = vand.u32 %v15, 4294901760
    %v3985 = vsub.f32 %v15, %v3984
    %v3986 = vand.u32 %v3985, 4294901760
    %v3987 = vsub.f32 %v3985, %v3986
    %v3988 = vand.u32 %v3987, 4294901760
    %3989 = vmatpush1.msra.mxu0 %v3988
    %3990 = vmatprep.subr.mxu0 0.0
    %v3991 = vand.u32 %v14, 4294901760
    %v3992 = vsub.f32 %v14, %v3991
    %v3993 = vand.u32 %v3992, 4294901760
    %v3994 = vsub.f32 %v3992, %v3993
    %v3995 = vand.u32 %v3994, 4294901760
    %3996 = vmatpush1.msra.mxu0 %v3995
    %3997 = vmatprep.subr.mxu0 0.0
    %3998 = vmatpush2.msra.mxu0 0.0
    %3999 = vmatprep.subr.mxu0 0.0
    %4000 = vmatpush2.msra.mxu0 0.0
    %4001 = vmatprep.subr.mxu0 0.0
    %4002 = vmatpush2.msra.mxu0 0.0
    %4003 = vmatprep.subr.mxu0 0.0
    %4004 = vmatpush2.msra.mxu0 0.0
    %4005 = vmatprep.subr.mxu0 0.0
    %4006 = vmatpush2.msra.mxu0 0.0
    %4007 = vmatprep.subr.mxu0 0.0
    %4008 = vmatpush2.msra.mxu0 0.0
    %4009 = vmatprep.subr.mxu0 0.0
    %4010 = vmatpush2.msra.mxu0 0.0
    %4011 = vmatprep.subr.mxu0 0.0
    %4012 = vmatpush2.msra.mxu0 0.0
    %4013 = vmatprep.subr.mxu0 0.0
    %4014 = vmatpush2.msra.mxu0 0.0
    %4015 = vmatprep.subr.mxu0 0.0
    %4016 = vmatpush2.msra.mxu0 0.0
    %4017 = vmatprep.subr.mxu0 0.0
    %4018 = vmatpush2.msra.mxu0 0.0
    %4019 = vmatprep.subr.mxu0 0.0
    %4020 = vmatpush2.msra.mxu0 0.0
    %4021 = vmatprep.subr.mxu0 0.0
    %4022 = vmatpush2.msra.mxu0 0.0
    %4023 = vmatprep.subr.mxu0 0.0
    %4024 = vmatpush2.msra.mxu0 0.0
    %4025 = vmatprep.subr.mxu0 0.0
    %4026 = vmatpush2.msra.mxu0 0.0
    %4027 = vmatprep.subr.mxu0 0.0
    %4028 = vmatpush2.msra.mxu0 0.0
    %4029 = vmatprep.mubr.f32.mxu0 0.0
    %v4030 = vand.u32 %v3793, 4294901760
    %4031 = vmatmul.mubr.f32.gmra.mxu0 %v4030
    %v4032 = vpop.f32.mrf.mxu0
    %v4033 = vadd.f32 %v3882, %v4032
    %v4034 = vpop.f32.mrf.mxu0
    %4035 = vdwg.mxu0
    %4036 = vmatprep.subr.mxu0 0.0
    %v4037 = vand.u32 %v29, 4294901760
    %v4038 = vsub.f32 %v29, %v4037
    %4039 = vmatpush1.msra.mxu0 %v4038
    %4040 = vmatprep.subr.mxu0 0.0
    %v4041 = vand.u32 %v28, 4294901760
    %v4042 = vsub.f32 %v28, %v4041
    %4043 = vmatpush1.msra.mxu0 %v4042
    %4044 = vmatprep.subr.mxu0 0.0
    %v4045 = vand.u32 %v27, 4294901760
    %v4046 = vsub.f32 %v27, %v4045
    %4047 = vmatpush1.msra.mxu0 %v4046
    %4048 = vmatprep.subr.mxu0 0.0
    %v4049 = vand.u32 %v26, 4294901760
    %v4050 = vsub.f32 %v26, %v4049
    %4051 = vmatpush1.msra.mxu0 %v4050
    %4052 = vmatprep.subr.mxu0 0.0
    %v4053 = vand.u32 %v25, 4294901760
    %v4054 = vsub.f32 %v25, %v4053
    %4055 = vmatpush1.msra.mxu0 %v4054
    %4056 = vmatprep.subr.mxu0 0.0
    %v4057 = vand.u32 %v24, 4294901760
    %v4058 = vsub.f32 %v24, %v4057
    %4059 = vmatpush1.msra.mxu0 %v4058
    %4060 = vmatprep.subr.mxu0 0.0
    %v4061 = vand.u32 %v23, 4294901760
    %v4062 = vsub.f32 %v23, %v4061
    %4063 = vmatpush1.msra.mxu0 %v4062
    %4064 = vmatprep.subr.mxu0 0.0
    %v4065 = vand.u32 %v22, 4294901760
    %v4066 = vsub.f32 %v22, %v4065
    %4067 = vmatpush1.msra.mxu0 %v4066
    %4068 = vmatprep.subr.mxu0 0.0
    %v4069 = vand.u32 %v21, 4294901760
    %v4070 = vsub.f32 %v21, %v4069
    %4071 = vmatpush1.msra.mxu0 %v4070
    %4072 = vmatprep.subr.mxu0 0.0
    %v4073 = vand.u32 %v20, 4294901760
    %v4074 = vsub.f32 %v20, %v4073
    %4075 = vmatpush1.msra.mxu0 %v4074
    %4076 = vmatprep.subr.mxu0 0.0
    %v4077 = vand.u32 %v19, 4294901760
    %v4078 = vsub.f32 %v19, %v4077
    %4079 = vmatpush1.msra.mxu0 %v4078
    %4080 = vmatprep.subr.mxu0 0.0
    %v4081 = vand.u32 %v18, 4294901760
    %v4082 = vsub.f32 %v18, %v4081
    %4083 = vmatpush1.msra.mxu0 %v4082
    %4084 = vmatprep.subr.mxu0 0.0
    %v4085 = vand.u32 %v17, 4294901760
    %v4086 = vsub.f32 %v17, %v4085
    %4087 = vmatpush1.msra.mxu0 %v4086
    %4088 = vmatprep.subr.mxu0 0.0
    %v4089 = vand.u32 %v16, 4294901760
    %v4090 = vsub.f32 %v16, %v4089
    %4091 = vmatpush1.msra.mxu0 %v4090
    %4092 = vmatprep.subr.mxu0 0.0
    %v4093 = vand.u32 %v15, 4294901760
    %v4094 = vsub.f32 %v15, %v4093
    %4095 = vmatpush1.msra.mxu0 %v4094
    %4096 = vmatprep.subr.mxu0 0.0
    %v4097 = vand.u32 %v14, 4294901760
    %v4098 = vsub.f32 %v14, %v4097
    %4099 = vmatpush1.msra.mxu0 %v4098
    %4100 = vmatprep.subr.mxu0 0.0
    %4101 = vmatpush2.msra.mxu0 0.0
    %4102 = vmatprep.subr.mxu0 0.0
    %4103 = vmatpush2.msra.mxu0 0.0
    %4104 = vmatprep.subr.mxu0 0.0
    %4105 = vmatpush2.msra.mxu0 0.0
    %4106 = vmatprep.subr.mxu0 0.0
    %4107 = vmatpush2.msra.mxu0 0.0
    %4108 = vmatprep.subr.mxu0 0.0
    %4109 = vmatpush2.msra.mxu0 0.0
    %4110 = vmatprep.subr.mxu0 0.0
    %4111 = vmatpush2.msra.mxu0 0.0
    %4112 = vmatprep.subr.mxu0 0.0
    %4113 = vmatpush2.msra.mxu0 0.0
    %4114 = vmatprep.subr.mxu0 0.0
    %4115 = vmatpush2.msra.mxu0 0.0
    %4116 = vmatprep.subr.mxu0 0.0
    %4117 = vmatpush2.msra.mxu0 0.0
    %4118 = vmatprep.subr.mxu0 0.0
    %4119 = vmatpush2.msra.mxu0 0.0
    %4120 = vmatprep.subr.mxu0 0.0
    %4121 = vmatpush2.msra.mxu0 0.0
    %4122 = vmatprep.subr.mxu0 0.0
    %4123 = vmatpush2.msra.mxu0 0.0
    %4124 = vmatprep.subr.mxu0 0.0
    %4125 = vmatpush2.msra.mxu0 0.0
    %4126 = vmatprep.subr.mxu0 0.0
    %4127 = vmatpush2.msra.mxu0 0.0
    %4128 = vmatprep.subr.mxu0 0.0
    %4129 = vmatpush2.msra.mxu0 0.0
    %4130 = vmatprep.subr.mxu0 0.0
    %4131 = vmatpush2.msra.mxu0 0.0
    %4132 = vmatprep.mubr.f32.mxu0 0.0
    %v4133 = vand.u32 %v3793, 4294901760
    %v4134 = vsub.f32 %v3793, %v4133
    %4135 = vmatmul.mubr.f32.gmra.mxu0 %v4134
    %v4136 = vpop.f32.mrf.mxu0
    %v4137 = vadd.f32 %v4033, %v4136
    %v4138 = vpop.f32.mrf.mxu0
    %4139 = vdwg.mxu0
    %4140 = vmatprep.subr.mxu0 0.0
    %v4141 = vand.u32 %v29, 4294901760
    %4142 = vmatpush1.msra.mxu0 %v4141
    %4143 = vmatprep.subr.mxu0 0.0
    %v4144 = vand.u32 %v28, 4294901760
    %4145 = vmatpush1.msra.mxu0 %v4144
    %4146 = vmatprep.subr.mxu0 0.0
    %v4147 = vand.u32 %v27, 4294901760
    %4148 = vmatpush1.msra.mxu0 %v4147
    %4149 = vmatprep.subr.mxu0 0.0
    %v4150 = vand.u32 %v26, 4294901760
    %4151 = vmatpush1.msra.mxu0 %v4150
    %4152 = vmatprep.subr.mxu0 0.0
    %v4153 = vand.u32 %v25, 4294901760
    %4154 = vmatpush1.msra.mxu0 %v4153
    %4155 = vmatprep.subr.mxu0 0.0
    %v4156 = vand.u32 %v24, 4294901760
    %4157 = vmatpush1.msra.mxu0 %v4156
    %4158 = vmatprep.subr.mxu0 0.0
    %v4159 = vand.u32 %v23, 4294901760
    %4160 = vmatpush1.msra.mxu0 %v4159
    %4161 = vmatprep.subr.mxu0 0.0
    %v4162 = vand.u32 %v22, 4294901760
    %4163 = vmatpush1.msra.mxu0 %v4162
    %4164 = vmatprep.subr.mxu0 0.0
    %v4165 = vand.u32 %v21, 4294901760
    %4166 = vmatpush1.msra.mxu0 %v4165
    %4167 = vmatprep.subr.mxu0 0.0
    %v4168 = vand.u32 %v20, 4294901760
    %4169 = vmatpush1.msra.mxu0 %v4168
    %4170 = vmatprep.subr.mxu0 0.0
    %v4171 = vand.u32 %v19, 4294901760
    %4172 = vmatpush1.msra.mxu0 %v4171
    %4173 = vmatprep.subr.mxu0 0.0
    %v4174 = vand.u32 %v18, 4294901760
    %4175 = vmatpush1.msra.mxu0 %v4174
    %4176 = vmatprep.subr.mxu0 0.0
    %v4177 = vand.u32 %v17, 4294901760
    %4178 = vmatpush1.msra.mxu0 %v4177
    %4179 = vmatprep.subr.mxu0 0.0
    %v4180 = vand.u32 %v16, 4294901760
    %4181 = vmatpush1.msra.mxu0 %v4180
    %4182 = vmatprep.subr.mxu0 0.0
    %v4183 = vand.u32 %v15, 4294901760
    %4184 = vmatpush1.msra.mxu0 %v4183
    %4185 = vmatprep.subr.mxu0 0.0
    %v4186 = vand.u32 %v14, 4294901760
    %4187 = vmatpush1.msra.mxu0 %v4186
    %4188 = vmatprep.subr.mxu0 0.0
    %4189 = vmatpush2.msra.mxu0 0.0
    %4190 = vmatprep.subr.mxu0 0.0
    %4191 = vmatpush2.msra.mxu0 0.0
    %4192 = vmatprep.subr.mxu0 0.0
    %4193 = vmatpush2.msra.mxu0 0.0
    %4194 = vmatprep.subr.mxu0 0.0
    %4195 = vmatpush2.msra.mxu0 0.0
    %4196 = vmatprep.subr.mxu0 0.0
    %4197 = vmatpush2.msra.mxu0 0.0
    %4198 = vmatprep.subr.mxu0 0.0
    %4199 = vmatpush2.msra.mxu0 0.0
    %4200 = vmatprep.subr.mxu0 0.0
    %4201 = vmatpush2.msra.mxu0 0.0
    %4202 = vmatprep.subr.mxu0 0.0
    %4203 = vmatpush2.msra.mxu0 0.0
    %4204 = vmatprep.subr.mxu0 0.0
    %4205 = vmatpush2.msra.mxu0 0.0
    %4206 = vmatprep.subr.mxu0 0.0
    %4207 = vmatpush2.msra.mxu0 0.0
    %4208 = vmatprep.subr.mxu0 0.0
    %4209 = vmatpush2.msra.mxu0 0.0
    %4210 = vmatprep.subr.mxu0 0.0
    %4211 = vmatpush2.msra.mxu0 0.0
    %4212 = vmatprep.subr.mxu0 0.0
    %4213 = vmatpush2.msra.mxu0 0.0
    %4214 = vmatprep.subr.mxu0 0.0
    %4215 = vmatpush2.msra.mxu0 0.0
    %4216 = vmatprep.subr.mxu0 0.0
    %4217 = vmatpush2.msra.mxu0 0.0
    %4218 = vmatprep.subr.mxu0 0.0
    %4219 = vmatpush2.msra.mxu0 0.0
    %4220 = vmatprep.mubr.f32.mxu0 0.0
    %v4221 = vand.u32 %v3793, 4294901760
    %v4222 = vsub.f32 %v3793, %v4221
    %v4223 = vand.u32 %v4222, 4294901760
    %4224 = vmatmul.mubr.f32.gmra.mxu0 %v4223
    %v4225 = vpop.f32.mrf.mxu0
    %v4226 = vadd.f32 %v4137, %v4225
    %v4227 = vpop.f32.mrf.mxu0
    %4228 = vdwg.mxu0
    %4229 = vmatprep.subr.mxu0 0.0
    %v4230 = vand.u32 %v29, 4294901760
    %v4231 = vsub.f32 %v29, %v4230
    %v4232 = vand.u32 %v4231, 4294901760
    %4233 = vmatpush1.msra.mxu0 %v4232
    %4234 = vmatprep.subr.mxu0 0.0
    %v4235 = vand.u32 %v28, 4294901760
    %v4236 = vsub.f32 %v28, %v4235
    %v4237 = vand.u32 %v4236, 4294901760
    %4238 = vmatpush1.msra.mxu0 %v4237
    %4239 = vmatprep.subr.mxu0 0.0
    %v4240 = vand.u32 %v27, 4294901760
    %v4241 = vsub.f32 %v27, %v4240
    %v4242 = vand.u32 %v4241, 4294901760
    %4243 = vmatpush1.msra.mxu0 %v4242
    %4244 = vmatprep.subr.mxu0 0.0
    %v4245 = vand.u32 %v26, 4294901760
    %v4246 = vsub.f32 %v26, %v4245
    %v4247 = vand.u32 %v4246, 4294901760
    %4248 = vmatpush1.msra.mxu0 %v4247
    %4249 = vmatprep.subr.mxu0 0.0
    %v4250 = vand.u32 %v25, 4294901760
    %v4251 = vsub.f32 %v25, %v4250
    %v4252 = vand.u32 %v4251, 4294901760
    %4253 = vmatpush1.msra.mxu0 %v4252
    %4254 = vmatprep.subr.mxu0 0.0
    %v4255 = vand.u32 %v24, 4294901760
    %v4256 = vsub.f32 %v24, %v4255
    %v4257 = vand.u32 %v4256, 4294901760
    %4258 = vmatpush1.msra.mxu0 %v4257
    %4259 = vmatprep.subr.mxu0 0.0
    %v4260 = vand.u32 %v23, 4294901760
    %v4261 = vsub.f32 %v23, %v4260
    %v4262 = vand.u32 %v4261, 4294901760
    %4263 = vmatpush1.msra.mxu0 %v4262
    %4264 = vmatprep.subr.mxu0 0.0
    %v4265 = vand.u32 %v22, 4294901760
    %v4266 = vsub.f32 %v22, %v4265
    %v4267 = vand.u32 %v4266, 4294901760
    %4268 = vmatpush1.msra.mxu0 %v4267
    %4269 = vmatprep.subr.mxu0 0.0
    %v4270 = vand.u32 %v21, 4294901760
    %v4271 = vsub.f32 %v21, %v4270
    %v4272 = vand.u32 %v4271, 4294901760
    %4273 = vmatpush1.msra.mxu0 %v4272
    %4274 = vmatprep.subr.mxu0 0.0
    %v4275 = vand.u32 %v20, 4294901760
    %v4276 = vsub.f32 %v20, %v4275
    %v4277 = vand.u32 %v4276, 4294901760
    %4278 = vmatpush1.msra.mxu0 %v4277
    %4279 = vmatprep.subr.mxu0 0.0
    %v4280 = vand.u32 %v19, 4294901760
    %v4281 = vsub.f32 %v19, %v4280
    %v4282 = vand.u32 %v4281, 4294901760
    %4283 = vmatpush1.msra.mxu0 %v4282
    %4284 = vmatprep.subr.mxu0 0.0
    %v4285 = vand.u32 %v18, 4294901760
    %v4286 = vsub.f32 %v18, %v4285
    %v4287 = vand.u32 %v4286, 4294901760
    %4288 = vmatpush1.msra.mxu0 %v4287
    %4289 = vmatprep.subr.mxu0 0.0
    %v4290 = vand.u32 %v17, 4294901760
    %v4291 = vsub.f32 %v17, %v4290
    %v4292 = vand.u32 %v4291, 4294901760
    %4293 = vmatpush1.msra.mxu0 %v4292
    %4294 = vmatprep.subr.mxu0 0.0
    %v4295 = vand.u32 %v16, 4294901760
    %v4296 = vsub.f32 %v16, %v4295
    %v4297 = vand.u32 %v4296, 4294901760
    %4298 = vmatpush1.msra.mxu0 %v4297
    %4299 = vmatprep.subr.mxu0 0.0
    %v4300 = vand.u32 %v15, 4294901760
    %v4301 = vsub.f32 %v15, %v4300
    %v4302 = vand.u32 %v4301, 4294901760
    %4303 = vmatpush1.msra.mxu0 %v4302
    %4304 = vmatprep.subr.mxu0 0.0
    %v4305 = vand.u32 %v14, 4294901760
    %v4306 = vsub.f32 %v14, %v4305
    %v4307 = vand.u32 %v4306, 4294901760
    %4308 = vmatpush1.msra.mxu0 %v4307
    %4309 = vmatprep.subr.mxu0 0.0
    %4310 = vmatpush2.msra.mxu0 0.0
    %4311 = vmatprep.subr.mxu0 0.0
    %4312 = vmatpush2.msra.mxu0 0.0
    %4313 = vmatprep.subr.mxu0 0.0
    %4314 = vmatpush2.msra.mxu0 0.0
    %4315 = vmatprep.subr.mxu0 0.0
    %4316 = vmatpush2.msra.mxu0 0.0
    %4317 = vmatprep.subr.mxu0 0.0
    %4318 = vmatpush2.msra.mxu0 0.0
    %4319 = vmatprep.subr.mxu0 0.0
    %4320 = vmatpush2.msra.mxu0 0.0
    %4321 = vmatprep.subr.mxu0 0.0
    %4322 = vmatpush2.msra.mxu0 0.0
    %4323 = vmatprep.subr.mxu0 0.0
    %4324 = vmatpush2.msra.mxu0 0.0
    %4325 = vmatprep.subr.mxu0 0.0
    %4326 = vmatpush2.msra.mxu0 0.0
    %4327 = vmatprep.subr.mxu0 0.0
    %4328 = vmatpush2.msra.mxu0 0.0
    %4329 = vmatprep.subr.mxu0 0.0
    %4330 = vmatpush2.msra.mxu0 0.0
    %4331 = vmatprep.subr.mxu0 0.0
    %4332 = vmatpush2.msra.mxu0 0.0
    %4333 = vmatprep.subr.mxu0 0.0
    %4334 = vmatpush2.msra.mxu0 0.0
    %4335 = vmatprep.subr.mxu0 0.0
    %4336 = vmatpush2.msra.mxu0 0.0
    %4337 = vmatprep.subr.mxu0 0.0
    %4338 = vmatpush2.msra.mxu0 0.0
    %4339 = vmatprep.subr.mxu0 0.0
    %4340 = vmatpush2.msra.mxu0 0.0
    %4341 = vmatprep.mubr.f32.mxu0 0.0
    %v4342 = vand.u32 %v3793, 4294901760
    %4343 = vmatmul.mubr.f32.gmra.mxu0 %v4342
    %v4344 = vpop.f32.mrf.mxu0
    %v4345 = vadd.f32 %v4226, %v4344
    %v4346 = vpop.f32.mrf.mxu0
    %4347 = vdwg.mxu0
    %4348 = vmatprep.subr.mxu0 0.0
    %v4349 = vand.u32 %v29, 4294901760
    %4350 = vmatpush1.msra.mxu0 %v4349
    %4351 = vmatprep.subr.mxu0 0.0
    %v4352 = vand.u32 %v28, 4294901760
    %4353 = vmatpush1.msra.mxu0 %v4352
    %4354 = vmatprep.subr.mxu0 0.0
    %v4355 = vand.u32 %v27, 4294901760
    %4356 = vmatpush1.msra.mxu0 %v4355
    %4357 = vmatprep.subr.mxu0 0.0
    %v4358 = vand.u32 %v26, 4294901760
    %4359 = vmatpush1.msra.mxu0 %v4358
    %4360 = vmatprep.subr.mxu0 0.0
    %v4361 = vand.u32 %v25, 4294901760
    %4362 = vmatpush1.msra.mxu0 %v4361
    %4363 = vmatprep.subr.mxu0 0.0
    %v4364 = vand.u32 %v24, 4294901760
    %4365 = vmatpush1.msra.mxu0 %v4364
    %4366 = vmatprep.subr.mxu0 0.0
    %v4367 = vand.u32 %v23, 4294901760
    %4368 = vmatpush1.msra.mxu0 %v4367
    %4369 = vmatprep.subr.mxu0 0.0
    %v4370 = vand.u32 %v22, 4294901760
    %4371 = vmatpush1.msra.mxu0 %v4370
    %4372 = vmatprep.subr.mxu0 0.0
    %v4373 = vand.u32 %v21, 4294901760
    %4374 = vmatpush1.msra.mxu0 %v4373
    %4375 = vmatprep.subr.mxu0 0.0
    %v4376 = vand.u32 %v20, 4294901760
    %4377 = vmatpush1.msra.mxu0 %v4376
    %4378 = vmatprep.subr.mxu0 0.0
    %v4379 = vand.u32 %v19, 4294901760
    %4380 = vmatpush1.msra.mxu0 %v4379
    %4381 = vmatprep.subr.mxu0 0.0
    %v4382 = vand.u32 %v18, 4294901760
    %4383 = vmatpush1.msra.mxu0 %v4382
    %4384 = vmatprep.subr.mxu0 0.0
    %v4385 = vand.u32 %v17, 4294901760
    %4386 = vmatpush1.msra.mxu0 %v4385
    %4387 = vmatprep.subr.mxu0 0.0
    %v4388 = vand.u32 %v16, 4294901760
    %4389 = vmatpush1.msra.mxu0 %v4388
    %4390 = vmatprep.subr.mxu0 0.0
    %v4391 = vand.u32 %v15, 4294901760
    %4392 = vmatpush1.msra.mxu0 %v4391
    %4393 = vmatprep.subr.mxu0 0.0
    %v4394 = vand.u32 %v14, 4294901760
    %4395 = vmatpush1.msra.mxu0 %v4394
    %4396 = vmatprep.subr.mxu0 0.0
    %4397 = vmatpush2.msra.mxu0 0.0
    %4398 = vmatprep.subr.mxu0 0.0
    %4399 = vmatpush2.msra.mxu0 0.0
    %4400 = vmatprep.subr.mxu0 0.0
    %4401 = vmatpush2.msra.mxu0 0.0
    %4402 = vmatprep.subr.mxu0 0.0
    %4403 = vmatpush2.msra.mxu0 0.0
    %4404 = vmatprep.subr.mxu0 0.0
    %4405 = vmatpush2.msra.mxu0 0.0
    %4406 = vmatprep.subr.mxu0 0.0
    %4407 = vmatpush2.msra.mxu0 0.0
    %4408 = vmatprep.subr.mxu0 0.0
    %4409 = vmatpush2.msra.mxu0 0.0
    %4410 = vmatprep.subr.mxu0 0.0
    %4411 = vmatpush2.msra.mxu0 0.0
    %4412 = vmatprep.subr.mxu0 0.0
    %4413 = vmatpush2.msra.mxu0 0.0
    %4414 = vmatprep.subr.mxu0 0.0
    %4415 = vmatpush2.msra.mxu0 0.0
    %4416 = vmatprep.subr.mxu0 0.0
    %4417 = vmatpush2.msra.mxu0 0.0
    %4418 = vmatprep.subr.mxu0 0.0
    %4419 = vmatpush2.msra.mxu0 0.0
    %4420 = vmatprep.subr.mxu0 0.0
    %4421 = vmatpush2.msra.mxu0 0.0
    %4422 = vmatprep.subr.mxu0 0.0
    %4423 = vmatpush2.msra.mxu0 0.0
    %4424 = vmatprep.subr.mxu0 0.0
    %4425 = vmatpush2.msra.mxu0 0.0
    %4426 = vmatprep.subr.mxu0 0.0
    %4427 = vmatpush2.msra.mxu0 0.0
    %4428 = vmatprep.mubr.f32.mxu0 0.0
    %v4429 = vand.u32 %v3793, 4294901760
    %4430 = vmatmul.mubr.f32.gmra.mxu0 %v4429
    %v4431 = vpop.f32.mrf.mxu0
    %v4432 = vadd.f32 %v4345, %v4431
    %v4433 = vpop.f32.mrf.mxu0
    %4434 = vdwg.mxu0
    %v4435 = vand.u32 2147483647, %v4432
    %vm4436 = vcmp.le.f32.partialorder %v4435, 0.7853982
    %vm4437 = vcmp.lt.s32.totalorder %v4432, 0
    %v4438 = vand.u32 %v4432, 2139095040
    %v4439 = vshrl.u32 %v4438, 23
    %v4440 = vsub.s32 %v4439, 127
    %v4441 = vand.u32 2147483647, %v4432
    %v4442 = vand.u32 %v4441, 8388607
    %v4443 = vor.u32 %v4442, 8388608
    %v4444 = vsub.s32 0, %v4443
    %v4445 = vadd.s32 %v4440, 1
    %vm4446 = vcmp.gt.s32.totalorder %v4445, 0
    %v4447 = vsel %vm4446, %v4445, 0
    %v4448 = vshrl.u32 %v4447, 5
    %v4449 = vand.u32 %v4447, 31
    %v4450 = vsub.s32 32, %v4449
    %v4451 = vshrl.u32 683565275, %v4450
    %v4452 = vshll.u32 683565275, %v4449
    %v4453 = vshrl.u32 2475754826, %v4450
    %v4454 = vor.u32 %v4452, %v4453
    %v4455 = vshll.u32 2475754826, %v4449
    %v4456 = vshrl.u32 2131351028, %v4450
    %v4457 = vor.u32 %v4455, %v4456
    %v4458 = vshll.u32 2131351028, %v4449
    %v4459 = vshrl.u32 2102212464, %v4450
    %v4460 = vor.u32 %v4458, %v4459
    %v4461 = vshll.u32 2102212464, %v4449
    %v4462 = vshrl.u32 920167782, %v4450
    %v4463 = vor.u32 %v4461, %v4462
    %v4464 = vshll.u32 920167782, %v4449
    %v4465 = vshrl.u32 1326507024, %v4450
    %v4466 = vor.u32 %v4464, %v4465
    %vm4467 = vcmp.lt.s32.totalorder %v4448, 1
    %vm4468 = vcmp.lt.s32.totalorder %v4448, 2
    %vm4469 = vcmp.lt.s32.totalorder %v4448, 3
    %vm4470 = vcmp.lt.s32.totalorder %v4448, 4
    %v4471 = vsel %vm4467, %v4451, %v4454
    %v4472 = vsel %vm4470, %v4460, 2102212464
    %v4473 = vsel %vm4469, %v4457, %v4472
    %v4474 = vsel %vm4468, %v4471, %v4473
    %v4475 = vsel %vm4467, %v4454, %v4457
    %v4476 = vsel %vm4470, %v4463, 920167782
    %v4477 = vsel %vm4469, %v4460, %v4476
    %v4478 = vsel %vm4468, %v4475, %v4477
    %v4479 = vsel %vm4467, %v4457, %v4460
    %v4480 = vsel %vm4470, %v4466, 1326507024
    %v4481 = vsel %vm4469, %v4463, %v4480
    %v4482 = vsel %vm4468, %v4479, %v4481
    %v4483 = vshll.u32 %v4443, 8
    %v4484 = vmul.u32.u64.compose %v4483, %v4482
    %v4485 = vextract.low.u32 %v4484
    %v4486 = vextract.high.u32 %v4484
    %v4487 = vmul.u32.u64.compose %v4483, %v4478
    %v4488 = vextract.low.u32 %v4487
    %v4489 = vextract.high.u32 %v4487
    %v4490 = vmul.u32 %v4483, %v4474
    %v4491 = vadd.s32 %v4486, %v4488
    %vm4492 = vc.u32 %v4486, %v4488
    %v4493 = vadd.s32 %v4489, 1
    %v4494 = vsel %vm4492, %v4493, %v4489
    %v4495 = vadd.s32 %v4490, %v4494
    %v4496 = vadd.s32 %v4495, 536870912
    %v4497 = vshrl.u32 %v4496, 30
    %v4498 = vshll.u32 %v4497, 30
    %v4499 = vsub.s32 %v4495, %v4498
    %vm4500 = vcmp.lt.s32.totalorder %v4499, 0
    %v4501 = vsub.s32 0, %v4499
    %v4502 = vsel %vm4500, %v4501, %v4499
    %v4503 = vclz %v4502
    %v4504 = vsub.s32 %v4503, 2
    %vm4505 = vcmp.gt.s32.totalorder 0, %v4504
    %v4506 = vsel %vm4505, 0, %v4504
    %v4507 = vsub.s32 32, %v4506
    %v4508 = vshll.u32 %v4499, %v4506
    %v4509 = vshrl.u32 %v4491, %v4507
    %v4510 = vor.u32 %v4508, %v4509
    %v4511 = vsub.s32 4294967266, %v4506
    %v4512 = vadd.s32 %v4511, 127
    %v4513 = vshll.u32 %v4512, 23
    %v4514 = vor.u32 4788187, %v4513
    %v4515 = vand.u32 2147483647, %v4514
    %v4517 = vcvt.s32.f32 %v4510
    %v4518 = vmul.f32 %v4517, %v4515
    %v4519 = vxor.u32 %v4518, 2147483648
    %v4520 = vsel %vm4437, %v4519, %v4518
    %v4521 = vsub.s32 4, %v4497
    %v4522 = vsel %vm4437, %v4521, %v4497
    %v4523 = vsel %vm4436, %v4432, %v4520
    %v4524 = vsel %vm4436, 0, %v4522
    %v4525 = vcosq.f32.pop %v4523
    %v4526 = vsinq.f32.pop %v4523
    %vm4527 = vweird.f32 %v4432
    %v4528 = vadd.s32 %v4524, 3
    %v4529 = vand.u32 %v4528, 3
    %vm4530 = vcmp.lt.s32.totalorder %v4529, 2
    %vm4531 = vcmp.eq.s32.totalorder %v4529, 0
    %v4532 = vxor.u32 %v4526, 2147483648
    %v4533 = vsel %vm4531, %v4525, %v4532
    %vm4534 = vcmp.eq.s32.totalorder %v4529, 2
    %v4535 = vxor.u32 %v4525, 2147483648
    %v4536 = vsel %vm4534, %v4535, %v4526
    %v4537 = vsel %vm4530, %v4533, %v4536
    %v4538 = vsel %vm4527, nan, %v4537
    %v4539 = vmul.f32 %v3791, 0.33333334
    %v4540 = vsub.f32 %v4538, %v4539
    %v4541 = vmul.f32 %v4540, 0.05050505
    %v4542 = vadd.f32 %v48, %v4541
    %4543 = vmatprep.subr.mxu0 0.0
    %v4544 = vand.u32 %v29, 4294901760
    %4545 = vmatpush1.msra.mxu0 %v4544
    %4546 = vmatprep.subr.mxu0 0.0
    %v4547 = vand.u32 %v28, 4294901760
    %4548 = vmatpush1.msra.mxu0 %v4547
    %4549 = vmatprep.subr.mxu0 0.0
    %v4550 = vand.u32 %v27, 4294901760
    %4551 = vmatpush1.msra.mxu0 %v4550
    %4552 = vmatprep.subr.mxu0 0.0
    %v4553 = vand.u32 %v26, 4294901760
    %4554 = vmatpush1.msra.mxu0 %v4553
    %4555 = vmatprep.subr.mxu0 0.0
    %v4556 = vand.u32 %v25, 4294901760
    %4557 = vmatpush1.msra.mxu0 %v4556
    %4558 = vmatprep.subr.mxu0 0.0
    %v4559 = vand.u32 %v24, 4294901760
    %4560 = vmatpush1.msra.mxu0 %v4559
    %4561 = vmatprep.subr.mxu0 0.0
    %v4562 = vand.u32 %v23, 4294901760
    %4563 = vmatpush1.msra.mxu0 %v4562
    %4564 = vmatprep.subr.mxu0 0.0
    %v4565 = vand.u32 %v22, 4294901760
    %4566 = vmatpush1.msra.mxu0 %v4565
    %4567 = vmatprep.subr.mxu0 0.0
    %v4568 = vand.u32 %v21, 4294901760
    %4569 = vmatpush1.msra.mxu0 %v4568
    %4570 = vmatprep.subr.mxu0 0.0
    %v4571 = vand.u32 %v20, 4294901760
    %4572 = vmatpush1.msra.mxu0 %v4571
    %4573 = vmatprep.subr.mxu0 0.0
    %v4574 = vand.u32 %v19, 4294901760
    %4575 = vmatpush1.msra.mxu0 %v4574
    %4576 = vmatprep.subr.mxu0 0.0
    %v4577 = vand.u32 %v18, 4294901760
    %4578 = vmatpush1.msra.mxu0 %v4577
    %4579 = vmatprep.subr.mxu0 0.0
    %v4580 = vand.u32 %v17, 4294901760
    %4581 = vmatpush1.msra.mxu0 %v4580
    %4582 = vmatprep.subr.mxu0 0.0
    %v4583 = vand.u32 %v16, 4294901760
    %4584 = vmatpush1.msra.mxu0 %v4583
    %4585 = vmatprep.subr.mxu0 0.0
    %v4586 = vand.u32 %v15, 4294901760
    %4587 = vmatpush1.msra.mxu0 %v4586
    %4588 = vmatprep.subr.mxu0 0.0
    %v4589 = vand.u32 %v14, 4294901760
    %4590 = vmatpush1.msra.mxu0 %v4589
    %4591 = vmatprep.subr.mxu0 0.0
    %4592 = vmatpush2.msra.mxu0 0.0
    %4593 = vmatprep.subr.mxu0 0.0
    %4594 = vmatpush2.msra.mxu0 0.0
    %4595 = vmatprep.subr.mxu0 0.0
    %4596 = vmatpush2.msra.mxu0 0.0
    %4597 = vmatprep.subr.mxu0 0.0
    %4598 = vmatpush2.msra.mxu0 0.0
    %4599 = vmatprep.subr.mxu0 0.0
    %4600 = vmatpush2.msra.mxu0 0.0
    %4601 = vmatprep.subr.mxu0 0.0
    %4602 = vmatpush2.msra.mxu0 0.0
    %4603 = vmatprep.subr.mxu0 0.0
    %4604 = vmatpush2.msra.mxu0 0.0
    %4605 = vmatprep.subr.mxu0 0.0
    %4606 = vmatpush2.msra.mxu0 0.0
    %4607 = vmatprep.subr.mxu0 0.0
    %4608 = vmatpush2.msra.mxu0 0.0
    %4609 = vmatprep.subr.mxu0 0.0
    %4610 = vmatpush2.msra.mxu0 0.0
    %4611 = vmatprep.subr.mxu0 0.0
    %4612 = vmatpush2.msra.mxu0 0.0
    %4613 = vmatprep.subr.mxu0 0.0
    %4614 = vmatpush2.msra.mxu0 0.0
    %4615 = vmatprep.subr.mxu0 0.0
    %4616 = vmatpush2.msra.mxu0 0.0
    %4617 = vmatprep.subr.mxu0 0.0
    %4618 = vmatpush2.msra.mxu0 0.0
    %4619 = vmatprep.subr.mxu0 0.0
    %4620 = vmatpush2.msra.mxu0 0.0
    %4621 = vmatprep.subr.mxu0 0.0
    %4622 = vmatpush2.msra.mxu0 0.0
    %4623 = vmatprep.mubr.f32.mxu0 0.0
    %v4624 = vand.u32 %v4542, 4294901760
    %v4625 = vsub.f32 %v4542, %v4624
    %v4626 = vand.u32 %v4625, 4294901760
    %v4627 = vsub.f32 %v4625, %v4626
    %v4628 = vand.u32 %v4627, 4294901760
    %4629 = vmatmul.mubr.f32.gmra.mxu0 %v4628
    %v4630 = vpop.f32.mrf.mxu0
    %v4631 = vadd.f32 %v35, %v4630
    %v4632 = vpop.f32.mrf.mxu0
    %4633 = vdwg.mxu0
    %4634 = vmatprep.subr.mxu0 0.0
    %v4635 = vand.u32 %v29, 4294901760
    %v4636 = vsub.f32 %v29, %v4635
    %v4637 = vand.u32 %v4636, 4294901760
    %v4638 = vsub.f32 %v4636, %v4637
    %v4639 = vand.u32 %v4638, 4294901760
    %4640 = vmatpush1.msra.mxu0 %v4639
    %4641 = vmatprep.subr.mxu0 0.0
    %v4642 = vand.u32 %v28, 4294901760
    %v4643 = vsub.f32 %v28, %v4642
    %v4644 = vand.u32 %v4643, 4294901760
    %v4645 = vsub.f32 %v4643, %v4644
    %v4646 = vand.u32 %v4645, 4294901760
    %4647 = vmatpush1.msra.mxu0 %v4646
    %4648 = vmatprep.subr.mxu0 0.0
    %v4649 = vand.u32 %v27, 4294901760
    %v4650 = vsub.f32 %v27, %v4649
    %v4651 = vand.u32 %v4650, 4294901760
    %v4652 = vsub.f32 %v4650, %v4651
    %v4653 = vand.u32 %v4652, 4294901760
    %4654 = vmatpush1.msra.mxu0 %v4653
    %4655 = vmatprep.subr.mxu0 0.0
    %v4656 = vand.u32 %v26, 4294901760
    %v4657 = vsub.f32 %v26, %v4656
    %v4658 = vand.u32 %v4657, 4294901760
    %v4659 = vsub.f32 %v4657, %v4658
    %v4660 = vand.u32 %v4659, 4294901760
    %4661 = vmatpush1.msra.mxu0 %v4660
    %4662 = vmatprep.subr.mxu0 0.0
    %v4663 = vand.u32 %v25, 4294901760
    %v4664 = vsub.f32 %v25, %v4663
    %v4665 = vand.u32 %v4664, 4294901760
    %v4666 = vsub.f32 %v4664, %v4665
    %v4667 = vand.u32 %v4666, 4294901760
    %4668 = vmatpush1.msra.mxu0 %v4667
    %4669 = vmatprep.subr.mxu0 0.0
    %v4670 = vand.u32 %v24, 4294901760
    %v4671 = vsub.f32 %v24, %v4670
    %v4672 = vand.u32 %v4671, 4294901760
    %v4673 = vsub.f32 %v4671, %v4672
    %v4674 = vand.u32 %v4673, 4294901760
    %4675 = vmatpush1.msra.mxu0 %v4674
    %4676 = vmatprep.subr.mxu0 0.0
    %v4677 = vand.u32 %v23, 4294901760
    %v4678 = vsub.f32 %v23, %v4677
    %v4679 = vand.u32 %v4678, 4294901760
    %v4680 = vsub.f32 %v4678, %v4679
    %v4681 = vand.u32 %v4680, 4294901760
    %4682 = vmatpush1.msra.mxu0 %v4681
    %4683 = vmatprep.subr.mxu0 0.0
    %v4684 = vand.u32 %v22, 4294901760
    %v4685 = vsub.f32 %v22, %v4684
    %v4686 = vand.u32 %v4685, 4294901760
    %v4687 = vsub.f32 %v4685, %v4686
    %v4688 = vand.u32 %v4687, 4294901760
    %4689 = vmatpush1.msra.mxu0 %v4688
    %4690 = vmatprep.subr.mxu0 0.0
    %v4691 = vand.u32 %v21, 4294901760
    %v4692 = vsub.f32 %v21, %v4691
    %v4693 = vand.u32 %v4692, 4294901760
    %v4694 = vsub.f32 %v4692, %v4693
    %v4695 = vand.u32 %v4694, 4294901760
    %4696 = vmatpush1.msra.mxu0 %v4695
    %4697 = vmatprep.subr.mxu0 0.0
    %v4698 = vand.u32 %v20, 4294901760
    %v4699 = vsub.f32 %v20, %v4698
    %v4700 = vand.u32 %v4699, 4294901760
    %v4701 = vsub.f32 %v4699, %v4700
    %v4702 = vand.u32 %v4701, 4294901760
    %4703 = vmatpush1.msra.mxu0 %v4702
    %4704 = vmatprep.subr.mxu0 0.0
    %v4705 = vand.u32 %v19, 4294901760
    %v4706 = vsub.f32 %v19, %v4705
    %v4707 = vand.u32 %v4706, 4294901760
    %v4708 = vsub.f32 %v4706, %v4707
    %v4709 = vand.u32 %v4708, 4294901760
    %4710 = vmatpush1.msra.mxu0 %v4709
    %4711 = vmatprep.subr.mxu0 0.0
    %v4712 = vand.u32 %v18, 4294901760
    %v4713 = vsub.f32 %v18, %v4712
    %v4714 = vand.u32 %v4713, 4294901760
    %v4715 = vsub.f32 %v4713, %v4714
    %v4716 = vand.u32 %v4715, 4294901760
    %4717 = vmatpush1.msra.mxu0 %v4716
    %4718 = vmatprep.subr.mxu0 0.0
    %v4719 = vand.u32 %v17, 4294901760
    %v4720 = vsub.f32 %v17, %v4719
    %v4721 = vand.u32 %v4720, 4294901760
    %v4722 = vsub.f32 %v4720, %v4721
    %v4723 = vand.u32 %v4722, 4294901760
    %4724 = vmatpush1.msra.mxu0 %v4723
    %4725 = vmatprep.subr.mxu0 0.0
    %v4726 = vand.u32 %v16, 4294901760
    %v4727 = vsub.f32 %v16, %v4726
    %v4728 = vand.u32 %v4727, 4294901760
    %v4729 = vsub.f32 %v4727, %v4728
    %v4730 = vand.u32 %v4729, 4294901760
    %4731 = vmatpush1.msra.mxu0 %v4730
    %4732 = vmatprep.subr.mxu0 0.0
    %v4733 = vand.u32 %v15, 4294901760
    %v4734 = vsub.f32 %v15, %v4733
    %v4735 = vand.u32 %v4734, 4294901760
    %v4736 = vsub.f32 %v4734, %v4735
    %v4737 = vand.u32 %v4736, 4294901760
    %4738 = vmatpush1.msra.mxu0 %v4737
    %4739 = vmatprep.subr.mxu0 0.0
    %v4740 = vand.u32 %v14, 4294901760
    %v4741 = vsub.f32 %v14, %v4740
    %v4742 = vand.u32 %v4741, 4294901760
    %v4743 = vsub.f32 %v4741, %v4742
    %v4744 = vand.u32 %v4743, 4294901760
    %4745 = vmatpush1.msra.mxu0 %v4744
    %4746 = vmatprep.subr.mxu0 0.0
    %4747 = vmatpush2.msra.mxu0 0.0
    %4748 = vmatprep.subr.mxu0 0.0
    %4749 = vmatpush2.msra.mxu0 0.0
    %4750 = vmatprep.subr.mxu0 0.0
    %4751 = vmatpush2.msra.mxu0 0.0
    %4752 = vmatprep.subr.mxu0 0.0
    %4753 = vmatpush2.msra.mxu0 0.0
    %4754 = vmatprep.subr.mxu0 0.0
    %4755 = vmatpush2.msra.mxu0 0.0
    %4756 = vmatprep.subr.mxu0 0.0
    %4757 = vmatpush2.msra.mxu0 0.0
    %4758 = vmatprep.subr.mxu0 0.0
    %4759 = vmatpush2.msra.mxu0 0.0
    %4760 = vmatprep.subr.mxu0 0.0
    %4761 = vmatpush2.msra.mxu0 0.0
    %4762 = vmatprep.subr.mxu0 0.0
    %4763 = vmatpush2.msra.mxu0 0.0
    %4764 = vmatprep.subr.mxu0 0.0
    %4765 = vmatpush2.msra.mxu0 0.0
    %4766 = vmatprep.subr.mxu0 0.0
    %4767 = vmatpush2.msra.mxu0 0.0
    %4768 = vmatprep.subr.mxu0 0.0
    %4769 = vmatpush2.msra.mxu0 0.0
    %4770 = vmatprep.subr.mxu0 0.0
    %4771 = vmatpush2.msra.mxu0 0.0
    %4772 = vmatprep.subr.mxu0 0.0
    %4773 = vmatpush2.msra.mxu0 0.0
    %4774 = vmatprep.subr.mxu0 0.0
    %4775 = vmatpush2.msra.mxu0 0.0
    %4776 = vmatprep.subr.mxu0 0.0
    %4777 = vmatpush2.msra.mxu0 0.0
    %4778 = vmatprep.mubr.f32.mxu0 0.0
    %v4779 = vand.u32 %v4542, 4294901760
    %4780 = vmatmul.mubr.f32.gmra.mxu0 %v4779
    %v4781 = vpop.f32.mrf.mxu0
    %v4782 = vadd.f32 %v4631, %v4781
    %v4783 = vpop.f32.mrf.mxu0
    %4784 = vdwg.mxu0
    %4785 = vmatprep.subr.mxu0 0.0
    %v4786 = vand.u32 %v29, 4294901760
    %v4787 = vsub.f32 %v29, %v4786
    %4788 = vmatpush1.msra.mxu0 %v4787
    %4789 = vmatprep.subr.mxu0 0.0
    %v4790 = vand.u32 %v28, 4294901760
    %v4791 = vsub.f32 %v28, %v4790
    %4792 = vmatpush1.msra.mxu0 %v4791
    %4793 = vmatprep.subr.mxu0 0.0
    %v4794 = vand.u32 %v27, 4294901760
    %v4795 = vsub.f32 %v27, %v4794
    %4796 = vmatpush1.msra.mxu0 %v4795
    %4797 = vmatprep.subr.mxu0 0.0
    %v4798 = vand.u32 %v26, 4294901760
    %v4799 = vsub.f32 %v26, %v4798
    %4800 = vmatpush1.msra.mxu0 %v4799
    %4801 = vmatprep.subr.mxu0 0.0
    %v4802 = vand.u32 %v25, 4294901760
    %v4803 = vsub.f32 %v25, %v4802
    %4804 = vmatpush1.msra.mxu0 %v4803
    %4805 = vmatprep.subr.mxu0 0.0
    %v4806 = vand.u32 %v24, 4294901760
    %v4807 = vsub.f32 %v24, %v4806
    %4808 = vmatpush1.msra.mxu0 %v4807
    %4809 = vmatprep.subr.mxu0 0.0
    %v4810 = vand.u32 %v23, 4294901760
    %v4811 = vsub.f32 %v23, %v4810
    %4812 = vmatpush1.msra.mxu0 %v4811
    %4813 = vmatprep.subr.mxu0 0.0
    %v4814 = vand.u32 %v22, 4294901760
    %v4815 = vsub.f32 %v22, %v4814
    %4816 = vmatpush1.msra.mxu0 %v4815
    %4817 = vmatprep.subr.mxu0 0.0
    %v4818 = vand.u32 %v21, 4294901760
    %v4819 = vsub.f32 %v21, %v4818
    %4820 = vmatpush1.msra.mxu0 %v4819
    %4821 = vmatprep.subr.mxu0 0.0
    %v4822 = vand.u32 %v20, 4294901760
    %v4823 = vsub.f32 %v20, %v4822
    %4824 = vmatpush1.msra.mxu0 %v4823
    %4825 = vmatprep.subr.mxu0 0.0
    %v4826 = vand.u32 %v19, 4294901760
    %v4827 = vsub.f32 %v19, %v4826
    %4828 = vmatpush1.msra.mxu0 %v4827
    %4829 = vmatprep.subr.mxu0 0.0
    %v4830 = vand.u32 %v18, 4294901760
    %v4831 = vsub.f32 %v18, %v4830
    %4832 = vmatpush1.msra.mxu0 %v4831
    %4833 = vmatprep.subr.mxu0 0.0
    %v4834 = vand.u32 %v17, 4294901760
    %v4835 = vsub.f32 %v17, %v4834
    %4836 = vmatpush1.msra.mxu0 %v4835
    %4837 = vmatprep.subr.mxu0 0.0
    %v4838 = vand.u32 %v16, 4294901760
    %v4839 = vsub.f32 %v16, %v4838
    %4840 = vmatpush1.msra.mxu0 %v4839
    %4841 = vmatprep.subr.mxu0 0.0
    %v4842 = vand.u32 %v15, 4294901760
    %v4843 = vsub.f32 %v15, %v4842
    %4844 = vmatpush1.msra.mxu0 %v4843
    %4845 = vmatprep.subr.mxu0 0.0
    %v4846 = vand.u32 %v14, 4294901760
    %v4847 = vsub.f32 %v14, %v4846
    %4848 = vmatpush1.msra.mxu0 %v4847
    %4849 = vmatprep.subr.mxu0 0.0
    %4850 = vmatpush2.msra.mxu0 0.0
    %4851 = vmatprep.subr.mxu0 0.0
    %4852 = vmatpush2.msra.mxu0 0.0
    %4853 = vmatprep.subr.mxu0 0.0
    %4854 = vmatpush2.msra.mxu0 0.0
    %4855 = vmatprep.subr.mxu0 0.0
    %4856 = vmatpush2.msra.mxu0 0.0
    %4857 = vmatprep.subr.mxu0 0.0
    %4858 = vmatpush2.msra.mxu0 0.0
    %4859 = vmatprep.subr.mxu0 0.0
    %4860 = vmatpush2.msra.mxu0 0.0
    %4861 = vmatprep.subr.mxu0 0.0
    %4862 = vmatpush2.msra.mxu0 0.0
    %4863 = vmatprep.subr.mxu0 0.0
    %4864 = vmatpush2.msra.mxu0 0.0
    %4865 = vmatprep.subr.mxu0 0.0
    %4866 = vmatpush2.msra.mxu0 0.0
    %4867 = vmatprep.subr.mxu0 0.0
    %4868 = vmatpush2.msra.mxu0 0.0
    %4869 = vmatprep.subr.mxu0 0.0
    %4870 = vmatpush2.msra.mxu0 0.0
    %4871 = vmatprep.subr.mxu0 0.0
    %4872 = vmatpush2.msra.mxu0 0.0
    %4873 = vmatprep.subr.mxu0 0.0
    %4874 = vmatpush2.msra.mxu0 0.0
    %4875 = vmatprep.subr.mxu0 0.0
    %4876 = vmatpush2.msra.mxu0 0.0
    %4877 = vmatprep.subr.mxu0 0.0
    %4878 = vmatpush2.msra.mxu0 0.0
    %4879 = vmatprep.subr.mxu0 0.0
    %4880 = vmatpush2.msra.mxu0 0.0
    %4881 = vmatprep.mubr.f32.mxu0 0.0
    %v4882 = vand.u32 %v4542, 4294901760
    %v4883 = vsub.f32 %v4542, %v4882
    %4884 = vmatmul.mubr.f32.gmra.mxu0 %v4883
    %v4885 = vpop.f32.mrf.mxu0
    %v4886 = vadd.f32 %v4782, %v4885
    %v4887 = vpop.f32.mrf.mxu0
    %4888 = vdwg.mxu0
    %4889 = vmatprep.subr.mxu0 0.0
    %v4890 = vand.u32 %v29, 4294901760
    %4891 = vmatpush1.msra.mxu0 %v4890
    %4892 = vmatprep.subr.mxu0 0.0
    %v4893 = vand.u32 %v28, 4294901760
    %4894 = vmatpush1.msra.mxu0 %v4893
    %4895 = vmatprep.subr.mxu0 0.0
    %v4896 = vand.u32 %v27, 4294901760
    %4897 = vmatpush1.msra.mxu0 %v4896
    %4898 = vmatprep.subr.mxu0 0.0
    %v4899 = vand.u32 %v26, 4294901760
    %4900 = vmatpush1.msra.mxu0 %v4899
    %4901 = vmatprep.subr.mxu0 0.0
    %v4902 = vand.u32 %v25, 4294901760
    %4903 = vmatpush1.msra.mxu0 %v4902
    %4904 = vmatprep.subr.mxu0 0.0
    %v4905 = vand.u32 %v24, 4294901760
    %4906 = vmatpush1.msra.mxu0 %v4905
    %4907 = vmatprep.subr.mxu0 0.0
    %v4908 = vand.u32 %v23, 4294901760
    %4909 = vmatpush1.msra.mxu0 %v4908
    %4910 = vmatprep.subr.mxu0 0.0
    %v4911 = vand.u32 %v22, 4294901760
    %4912 = vmatpush1.msra.mxu0 %v4911
    %4913 = vmatprep.subr.mxu0 0.0
    %v4914 = vand.u32 %v21, 4294901760
    %4915 = vmatpush1.msra.mxu0 %v4914
    %4916 = vmatprep.subr.mxu0 0.0
    %v4917 = vand.u32 %v20, 4294901760
    %4918 = vmatpush1.msra.mxu0 %v4917
    %4919 = vmatprep.subr.mxu0 0.0
    %v4920 = vand.u32 %v19, 4294901760
    %4921 = vmatpush1.msra.mxu0 %v4920
    %4922 = vmatprep.subr.mxu0 0.0
    %v4923 = vand.u32 %v18, 4294901760
    %4924 = vmatpush1.msra.mxu0 %v4923
    %4925 = vmatprep.subr.mxu0 0.0
    %v4926 = vand.u32 %v17, 4294901760
    %4927 = vmatpush1.msra.mxu0 %v4926
    %4928 = vmatprep.subr.mxu0 0.0
    %v4929 = vand.u32 %v16, 4294901760
    %4930 = vmatpush1.msra.mxu0 %v4929
    %4931 = vmatprep.subr.mxu0 0.0
    %v4932 = vand.u32 %v15, 4294901760
    %4933 = vmatpush1.msra.mxu0 %v4932
    %4934 = vmatprep.subr.mxu0 0.0
    %v4935 = vand.u32 %v14, 4294901760
    %4936 = vmatpush1.msra.mxu0 %v4935
    %4937 = vmatprep.subr.mxu0 0.0
    %4938 = vmatpush2.msra.mxu0 0.0
    %4939 = vmatprep.subr.mxu0 0.0
    %4940 = vmatpush2.msra.mxu0 0.0
    %4941 = vmatprep.subr.mxu0 0.0
    %4942 = vmatpush2.msra.mxu0 0.0
    %4943 = vmatprep.subr.mxu0 0.0
    %4944 = vmatpush2.msra.mxu0 0.0
    %4945 = vmatprep.subr.mxu0 0.0
    %4946 = vmatpush2.msra.mxu0 0.0
    %4947 = vmatprep.subr.mxu0 0.0
    %4948 = vmatpush2.msra.mxu0 0.0
    %4949 = vmatprep.subr.mxu0 0.0
    %4950 = vmatpush2.msra.mxu0 0.0
    %4951 = vmatprep.subr.mxu0 0.0
    %4952 = vmatpush2.msra.mxu0 0.0
    %4953 = vmatprep.subr.mxu0 0.0
    %4954 = vmatpush2.msra.mxu0 0.0
    %4955 = vmatprep.subr.mxu0 0.0
    %4956 = vmatpush2.msra.mxu0 0.0
    %4957 = vmatprep.subr.mxu0 0.0
    %4958 = vmatpush2.msra.mxu0 0.0
    %4959 = vmatprep.subr.mxu0 0.0
    %4960 = vmatpush2.msra.mxu0 0.0
    %4961 = vmatprep.subr.mxu0 0.0
    %4962 = vmatpush2.msra.mxu0 0.0
    %4963 = vmatprep.subr.mxu0 0.0
    %4964 = vmatpush2.msra.mxu0 0.0
    %4965 = vmatprep.subr.mxu0 0.0
    %4966 = vmatpush2.msra.mxu0 0.0
    %4967 = vmatprep.subr.mxu0 0.0
    %4968 = vmatpush2.msra.mxu0 0.0
    %4969 = vmatprep.mubr.f32.mxu0 0.0
    %v4970 = vand.u32 %v4542, 4294901760
    %v4971 = vsub.f32 %v4542, %v4970
    %v4972 = vand.u32 %v4971, 4294901760
    %4973 = vmatmul.mubr.f32.gmra.mxu0 %v4972
    %v4974 = vpop.f32.mrf.mxu0
    %v4975 = vadd.f32 %v4886, %v4974
    %v4976 = vpop.f32.mrf.mxu0
    %4977 = vdwg.mxu0
    %4978 = vmatprep.subr.mxu0 0.0
    %v4979 = vand.u32 %v29, 4294901760
    %v4980 = vsub.f32 %v29, %v4979
    %v4981 = vand.u32 %v4980, 4294901760
    %4982 = vmatpush1.msra.mxu0 %v4981
    %4983 = vmatprep.subr.mxu0 0.0
    %v4984 = vand.u32 %v28, 4294901760
    %v4985 = vsub.f32 %v28, %v4984
    %v4986 = vand.u32 %v4985, 4294901760
    %4987 = vmatpush1.msra.mxu0 %v4986
    %4988 = vmatprep.subr.mxu0 0.0
    %v4989 = vand.u32 %v27, 4294901760
    %v4990 = vsub.f32 %v27, %v4989
    %v4991 = vand.u32 %v4990, 4294901760
    %4992 = vmatpush1.msra.mxu0 %v4991
    %4993 = vmatprep.subr.mxu0 0.0
    %v4994 = vand.u32 %v26, 4294901760
    %v4995 = vsub.f32 %v26, %v4994
    %v4996 = vand.u32 %v4995, 4294901760
    %4997 = vmatpush1.msra.mxu0 %v4996
    %4998 = vmatprep.subr.mxu0 0.0
    %v4999 = vand.u32 %v25, 4294901760
    %v5000 = vsub.f32 %v25, %v4999
    %v5001 = vand.u32 %v5000, 4294901760
    %5002 = vmatpush1.msra.mxu0 %v5001
    %5003 = vmatprep.subr.mxu0 0.0
    %v5004 = vand.u32 %v24, 4294901760
    %v5005 = vsub.f32 %v24, %v5004
    %v5006 = vand.u32 %v5005, 4294901760
    %5007 = vmatpush1.msra.mxu0 %v5006
    %5008 = vmatprep.subr.mxu0 0.0
    %v5009 = vand.u32 %v23, 4294901760
    %v5010 = vsub.f32 %v23, %v5009
    %v5011 = vand.u32 %v5010, 4294901760
    %5012 = vmatpush1.msra.mxu0 %v5011
    %5013 = vmatprep.subr.mxu0 0.0
    %v5014 = vand.u32 %v22, 4294901760
    %v5015 = vsub.f32 %v22, %v5014
    %v5016 = vand.u32 %v5015, 4294901760
    %5017 = vmatpush1.msra.mxu0 %v5016
    %5018 = vmatprep.subr.mxu0 0.0
    %v5019 = vand.u32 %v21, 4294901760
    %v5020 = vsub.f32 %v21, %v5019
    %v5021 = vand.u32 %v5020, 4294901760
    %5022 = vmatpush1.msra.mxu0 %v5021
    %5023 = vmatprep.subr.mxu0 0.0
    %v5024 = vand.u32 %v20, 4294901760
    %v5025 = vsub.f32 %v20, %v5024
    %v5026 = vand.u32 %v5025, 4294901760
    %5027 = vmatpush1.msra.mxu0 %v5026
    %5028 = vmatprep.subr.mxu0 0.0
    %v5029 = vand.u32 %v19, 4294901760
    %v5030 = vsub.f32 %v19, %v5029
    %v5031 = vand.u32 %v5030, 4294901760
    %5032 = vmatpush1.msra.mxu0 %v5031
    %5033 = vmatprep.subr.mxu0 0.0
    %v5034 = vand.u32 %v18, 4294901760
    %v5035 = vsub.f32 %v18, %v5034
    %v5036 = vand.u32 %v5035, 4294901760
    %5037 = vmatpush1.msra.mxu0 %v5036
    %5038 = vmatprep.subr.mxu0 0.0
    %v5039 = vand.u32 %v17, 4294901760
    %v5040 = vsub.f32 %v17, %v5039
    %v5041 = vand.u32 %v5040, 4294901760
    %5042 = vmatpush1.msra.mxu0 %v5041
    %5043 = vmatprep.subr.mxu0 0.0
    %v5044 = vand.u32 %v16, 4294901760
    %v5045 = vsub.f32 %v16, %v5044
    %v5046 = vand.u32 %v5045, 4294901760
    %5047 = vmatpush1.msra.mxu0 %v5046
    %5048 = vmatprep.subr.mxu0 0.0
    %v5049 = vand.u32 %v15, 4294901760
    %v5050 = vsub.f32 %v15, %v5049
    %v5051 = vand.u32 %v5050, 4294901760
    %5052 = vmatpush1.msra.mxu0 %v5051
    %5053 = vmatprep.subr.mxu0 0.0
    %v5054 = vand.u32 %v14, 4294901760
    %v5055 = vsub.f32 %v14, %v5054
    %v5056 = vand.u32 %v5055, 4294901760
    %5057 = vmatpush1.msra.mxu0 %v5056
    %5058 = vmatprep.subr.mxu0 0.0
    %5059 = vmatpush2.msra.mxu0 0.0
    %5060 = vmatprep.subr.mxu0 0.0
    %5061 = vmatpush2.msra.mxu0 0.0
    %5062 = vmatprep.subr.mxu0 0.0
    %5063 = vmatpush2.msra.mxu0 0.0
    %5064 = vmatprep.subr.mxu0 0.0
    %5065 = vmatpush2.msra.mxu0 0.0
    %5066 = vmatprep.subr.mxu0 0.0
    %5067 = vmatpush2.msra.mxu0 0.0
    %5068 = vmatprep.subr.mxu0 0.0
    %5069 = vmatpush2.msra.mxu0 0.0
    %5070 = vmatprep.subr.mxu0 0.0
    %5071 = vmatpush2.msra.mxu0 0.0
    %5072 = vmatprep.subr.mxu0 0.0
    %5073 = vmatpush2.msra.mxu0 0.0
    %5074 = vmatprep.subr.mxu0 0.0
    %5075 = vmatpush2.msra.mxu0 0.0
    %5076 = vmatprep.subr.mxu0 0.0
    %5077 = vmatpush2.msra.mxu0 0.0
    %5078 = vmatprep.subr.mxu0 0.0
    %5079 = vmatpush2.msra.mxu0 0.0
    %5080 = vmatprep.subr.mxu0 0.0
    %5081 = vmatpush2.msra.mxu0 0.0
    %5082 = vmatprep.subr.mxu0 0.0
    %5083 = vmatpush2.msra.mxu0 0.0
    %5084 = vmatprep.subr.mxu0 0.0
    %5085 = vmatpush2.msra.mxu0 0.0
    %5086 = vmatprep.subr.mxu0 0.0
    %5087 = vmatpush2.msra.mxu0 0.0
    %5088 = vmatprep.subr.mxu0 0.0
    %5089 = vmatpush2.msra.mxu0 0.0
    %5090 = vmatprep.mubr.f32.mxu0 0.0
    %v5091 = vand.u32 %v4542, 4294901760
    %5092 = vmatmul.mubr.f32.gmra.mxu0 %v5091
    %v5093 = vpop.f32.mrf.mxu0
    %v5094 = vadd.f32 %v4975, %v5093
    %v5095 = vpop.f32.mrf.mxu0
    %5096 = vdwg.mxu0
    %5097 = vmatprep.subr.mxu0 0.0
    %v5098 = vand.u32 %v29, 4294901760
    %5099 = vmatpush1.msra.mxu0 %v5098
    %5100 = vmatprep.subr.mxu0 0.0
    %v5101 = vand.u32 %v28, 4294901760
    %5102 = vmatpush1.msra.mxu0 %v5101
    %5103 = vmatprep.subr.mxu0 0.0
    %v5104 = vand.u32 %v27, 4294901760
    %5105 = vmatpush1.msra.mxu0 %v5104
    %5106 = vmatprep.subr.mxu0 0.0
    %v5107 = vand.u32 %v26, 4294901760
    %5108 = vmatpush1.msra.mxu0 %v5107
    %5109 = vmatprep.subr.mxu0 0.0
    %v5110 = vand.u32 %v25, 4294901760
    %5111 = vmatpush1.msra.mxu0 %v5110
    %5112 = vmatprep.subr.mxu0 0.0
    %v5113 = vand.u32 %v24, 4294901760
    %5114 = vmatpush1.msra.mxu0 %v5113
    %5115 = vmatprep.subr.mxu0 0.0
    %v5116 = vand.u32 %v23, 4294901760
    %5117 = vmatpush1.msra.mxu0 %v5116
    %5118 = vmatprep.subr.mxu0 0.0
    %v5119 = vand.u32 %v22, 4294901760
    %5120 = vmatpush1.msra.mxu0 %v5119
    %5121 = vmatprep.subr.mxu0 0.0
    %v5122 = vand.u32 %v21, 4294901760
    %5123 = vmatpush1.msra.mxu0 %v5122
    %5124 = vmatprep.subr.mxu0 0.0
    %v5125 = vand.u32 %v20, 4294901760
    %5126 = vmatpush1.msra.mxu0 %v5125
    %5127 = vmatprep.subr.mxu0 0.0
    %v5128 = vand.u32 %v19, 4294901760
    %5129 = vmatpush1.msra.mxu0 %v5128
    %5130 = vmatprep.subr.mxu0 0.0
    %v5131 = vand.u32 %v18, 4294901760
    %5132 = vmatpush1.msra.mxu0 %v5131
    %5133 = vmatprep.subr.mxu0 0.0
    %v5134 = vand.u32 %v17, 4294901760
    %5135 = vmatpush1.msra.mxu0 %v5134
    %5136 = vmatprep.subr.mxu0 0.0
    %v5137 = vand.u32 %v16, 4294901760
    %5138 = vmatpush1.msra.mxu0 %v5137
    %5139 = vmatprep.subr.mxu0 0.0
    %v5140 = vand.u32 %v15, 4294901760
    %5141 = vmatpush1.msra.mxu0 %v5140
    %5142 = vmatprep.subr.mxu0 0.0
    %v5143 = vand.u32 %v14, 4294901760
    %5144 = vmatpush1.msra.mxu0 %v5143
    %5145 = vmatprep.subr.mxu0 0.0
    %5146 = vmatpush2.msra.mxu0 0.0
    %5147 = vmatprep.subr.mxu0 0.0
    %5148 = vmatpush2.msra.mxu0 0.0
    %5149 = vmatprep.subr.mxu0 0.0
    %5150 = vmatpush2.msra.mxu0 0.0
    %5151 = vmatprep.subr.mxu0 0.0
    %5152 = vmatpush2.msra.mxu0 0.0
    %5153 = vmatprep.subr.mxu0 0.0
    %5154 = vmatpush2.msra.mxu0 0.0
    %5155 = vmatprep.subr.mxu0 0.0
    %5156 = vmatpush2.msra.mxu0 0.0
    %5157 = vmatprep.subr.mxu0 0.0
    %5158 = vmatpush2.msra.mxu0 0.0
    %5159 = vmatprep.subr.mxu0 0.0
    %5160 = vmatpush2.msra.mxu0 0.0
    %5161 = vmatprep.subr.mxu0 0.0
    %5162 = vmatpush2.msra.mxu0 0.0
    %5163 = vmatprep.subr.mxu0 0.0
    %5164 = vmatpush2.msra.mxu0 0.0
    %5165 = vmatprep.subr.mxu0 0.0
    %5166 = vmatpush2.msra.mxu0 0.0
    %5167 = vmatprep.subr.mxu0 0.0
    %5168 = vmatpush2.msra.mxu0 0.0
    %5169 = vmatprep.subr.mxu0 0.0
    %5170 = vmatpush2.msra.mxu0 0.0
    %5171 = vmatprep.subr.mxu0 0.0
    %5172 = vmatpush2.msra.mxu0 0.0
    %5173 = vmatprep.subr.mxu0 0.0
    %5174 = vmatpush2.msra.mxu0 0.0
    %5175 = vmatprep.subr.mxu0 0.0
    %5176 = vmatpush2.msra.mxu0 0.0
    %5177 = vmatprep.mubr.f32.mxu0 0.0
    %v5178 = vand.u32 %v4542, 4294901760
    %5179 = vmatmul.mubr.f32.gmra.mxu0 %v5178
    %v5180 = vpop.f32.mrf.mxu0
    %v5181 = vadd.f32 %v5094, %v5180
    %v5182 = vpop.f32.mrf.mxu0
    %5183 = vdwg.mxu0
    %v5184 = vand.u32 2147483647, %v5181
    %vm5185 = vcmp.le.f32.partialorder %v5184, 0.7853982
    %vm5186 = vcmp.lt.s32.totalorder %v5181, 0
    %v5187 = vand.u32 %v5181, 2139095040
    %v5188 = vshrl.u32 %v5187, 23
    %v5189 = vsub.s32 %v5188, 127
    %v5190 = vand.u32 2147483647, %v5181
    %v5191 = vand.u32 %v5190, 8388607
    %v5192 = vor.u32 %v5191, 8388608
    %v5193 = vsub.s32 0, %v5192
    %v5194 = vadd.s32 %v5189, 1
    %vm5195 = vcmp.gt.s32.totalorder %v5194, 0
    %v5196 = vsel %vm5195, %v5194, 0
    %v5197 = vshrl.u32 %v5196, 5
    %v5198 = vand.u32 %v5196, 31
    %v5199 = vsub.s32 32, %v5198
    %v5200 = vshrl.u32 683565275, %v5199
    %v5201 = vshll.u32 683565275, %v5198
    %v5202 = vshrl.u32 2475754826, %v5199
    %v5203 = vor.u32 %v5201, %v5202
    %v5204 = vshll.u32 2475754826, %v5198
    %v5205 = vshrl.u32 2131351028, %v5199
    %v5206 = vor.u32 %v5204, %v5205
    %v5207 = vshll.u32 2131351028, %v5198
    %v5208 = vshrl.u32 2102212464, %v5199
    %v5209 = vor.u32 %v5207, %v5208
    %v5210 = vshll.u32 2102212464, %v5198
    %v5211 = vshrl.u32 920167782, %v5199
    %v5212 = vor.u32 %v5210, %v5211
    %v5213 = vshll.u32 920167782, %v5198
    %v5214 = vshrl.u32 1326507024, %v5199
    %v5215 = vor.u32 %v5213, %v5214
    %vm5216 = vcmp.lt.s32.totalorder %v5197, 1
    %vm5217 = vcmp.lt.s32.totalorder %v5197, 2
    %vm5218 = vcmp.lt.s32.totalorder %v5197, 3
    %vm5219 = vcmp.lt.s32.totalorder %v5197, 4
    %v5220 = vsel %vm5216, %v5200, %v5203
    %v5221 = vsel %vm5219, %v5209, 2102212464
    %v5222 = vsel %vm5218, %v5206, %v5221
    %v5223 = vsel %vm5217, %v5220, %v5222
    %v5224 = vsel %vm5216, %v5203, %v5206
    %v5225 = vsel %vm5219, %v5212, 920167782
    %v5226 = vsel %vm5218, %v5209, %v5225
    %v5227 = vsel %vm5217, %v5224, %v5226
    %v5228 = vsel %vm5216, %v5206, %v5209
    %v5229 = vsel %vm5219, %v5215, 1326507024
    %v5230 = vsel %vm5218, %v5212, %v5229
    %v5231 = vsel %vm5217, %v5228, %v5230
    %v5232 = vshll.u32 %v5192, 8
    %v5233 = vmul.u32.u64.compose %v5232, %v5231
    %v5234 = vextract.low.u32 %v5233
    %v5235 = vextract.high.u32 %v5233
    %v5236 = vmul.u32.u64.compose %v5232, %v5227
    %v5237 = vextract.low.u32 %v5236
    %v5238 = vextract.high.u32 %v5236
    %v5239 = vmul.u32 %v5232, %v5223
    %v5240 = vadd.s32 %v5235, %v5237
    %vm5241 = vc.u32 %v5235, %v5237
    %v5242 = vadd.s32 %v5238, 1
    %v5243 = vsel %vm5241, %v5242, %v5238
    %v5244 = vadd.s32 %v5239, %v5243
    %v5245 = vadd.s32 %v5244, 536870912
    %v5246 = vshrl.u32 %v5245, 30
    %v5247 = vshll.u32 %v5246, 30
    %v5248 = vsub.s32 %v5244, %v5247
    %vm5249 = vcmp.lt.s32.totalorder %v5248, 0
    %v5250 = vsub.s32 0, %v5248
    %v5251 = vsel %vm5249, %v5250, %v5248
    %v5252 = vclz %v5251
    %v5253 = vsub.s32 %v5252, 2
    %vm5254 = vcmp.gt.s32.totalorder 0, %v5253
    %v5255 = vsel %vm5254, 0, %v5253
    %v5256 = vsub.s32 32, %v5255
    %v5257 = vshll.u32 %v5248, %v5255
    %v5258 = vshrl.u32 %v5240, %v5256
    %v5259 = vor.u32 %v5257, %v5258
    %v5260 = vsub.s32 4294967266, %v5255
    %v5261 = vadd.s32 %v5260, 127
    %v5262 = vshll.u32 %v5261, 23
    %v5263 = vor.u32 4788187, %v5262
    %v5264 = vand.u32 2147483647, %v5263
    %v5266 = vcvt.s32.f32 %v5259
    %v5267 = vmul.f32 %v5266, %v5264
    %v5268 = vxor.u32 %v5267, 2147483648
    %v5269 = vsel %vm5186, %v5268, %v5267
    %v5270 = vsub.s32 4, %v5246
    %v5271 = vsel %vm5186, %v5270, %v5246
    %v5272 = vsel %vm5185, %v5181, %v5269
    %v5273 = vsel %vm5185, 0, %v5271
    %v5274 = vcosq.f32.pop %v5272
    %v5275 = vsinq.f32.pop %v5272
    %vm5276 = vweird.f32 %v5181
    %v5277 = vadd.s32 %v5273, 3
    %v5278 = vand.u32 %v5277, 3
    %vm5279 = vcmp.lt.s32.totalorder %v5278, 2
    %vm5280 = vcmp.eq.s32.totalorder %v5278, 0
    %v5281 = vxor.u32 %v5275, 2147483648
    %v5282 = vsel %vm5280, %v5274, %v5281
    %vm5283 = vcmp.eq.s32.totalorder %v5278, 2
    %v5284 = vxor.u32 %v5274, 2147483648
    %v5285 = vsel %vm5283, %v5284, %v5275
    %v5286 = vsel %vm5279, %v5282, %v5285
    %v5287 = vsel %vm5276, nan, %v5286
    %v5288 = vsub.f32 %v3791, %v4538
    %v5289 = vadd.f32 %v5288, %v5287
    %v5290 = vmul.f32 %v5289, 0.05050505
    %v5291 = vadd.f32 %v48, %v5290
    %5292 = vmatprep.subr.mxu0 0.0
    %v5293 = vand.u32 %v29, 4294901760
    %5294 = vmatpush1.msra.mxu0 %v5293
    %5295 = vmatprep.subr.mxu0 0.0
    %v5296 = vand.u32 %v28, 4294901760
    %5297 = vmatpush1.msra.mxu0 %v5296
    %5298 = vmatprep.subr.mxu0 0.0
    %v5299 = vand.u32 %v27, 4294901760
    %5300 = vmatpush1.msra.mxu0 %v5299
    %5301 = vmatprep.subr.mxu0 0.0
    %v5302 = vand.u32 %v26, 4294901760
    %5303 = vmatpush1.msra.mxu0 %v5302
    %5304 = vmatprep.subr.mxu0 0.0
    %v5305 = vand.u32 %v25, 4294901760
    %5306 = vmatpush1.msra.mxu0 %v5305
    %5307 = vmatprep.subr.mxu0 0.0
    %v5308 = vand.u32 %v24, 4294901760
    %5309 = vmatpush1.msra.mxu0 %v5308
    %5310 = vmatprep.subr.mxu0 0.0
    %v5311 = vand.u32 %v23, 4294901760
    %5312 = vmatpush1.msra.mxu0 %v5311
    %5313 = vmatprep.subr.mxu0 0.0
    %v5314 = vand.u32 %v22, 4294901760
    %5315 = vmatpush1.msra.mxu0 %v5314
    %5316 = vmatprep.subr.mxu0 0.0
    %v5317 = vand.u32 %v21, 4294901760
    %5318 = vmatpush1.msra.mxu0 %v5317
    %5319 = vmatprep.subr.mxu0 0.0
    %v5320 = vand.u32 %v20, 4294901760
    %5321 = vmatpush1.msra.mxu0 %v5320
    %5322 = vmatprep.subr.mxu0 0.0
    %v5323 = vand.u32 %v19, 4294901760
    %5324 = vmatpush1.msra.mxu0 %v5323
    %5325 = vmatprep.subr.mxu0 0.0
    %v5326 = vand.u32 %v18, 4294901760
    %5327 = vmatpush1.msra.mxu0 %v5326
    %5328 = vmatprep.subr.mxu0 0.0
    %v5329 = vand.u32 %v17, 4294901760
    %5330 = vmatpush1.msra.mxu0 %v5329
    %5331 = vmatprep.subr.mxu0 0.0
    %v5332 = vand.u32 %v16, 4294901760
    %5333 = vmatpush1.msra.mxu0 %v5332
    %5334 = vmatprep.subr.mxu0 0.0
    %v5335 = vand.u32 %v15, 4294901760
    %5336 = vmatpush1.msra.mxu0 %v5335
    %5337 = vmatprep.subr.mxu0 0.0
    %v5338 = vand.u32 %v14, 4294901760
    %5339 = vmatpush1.msra.mxu0 %v5338
    %5340 = vmatprep.subr.mxu0 0.0
    %5341 = vmatpush2.msra.mxu0 0.0
    %5342 = vmatprep.subr.mxu0 0.0
    %5343 = vmatpush2.msra.mxu0 0.0
    %5344 = vmatprep.subr.mxu0 0.0
    %5345 = vmatpush2.msra.mxu0 0.0
    %5346 = vmatprep.subr.mxu0 0.0
    %5347 = vmatpush2.msra.mxu0 0.0
    %5348 = vmatprep.subr.mxu0 0.0
    %5349 = vmatpush2.msra.mxu0 0.0
    %5350 = vmatprep.subr.mxu0 0.0
    %5351 = vmatpush2.msra.mxu0 0.0
    %5352 = vmatprep.subr.mxu0 0.0
    %5353 = vmatpush2.msra.mxu0 0.0
    %5354 = vmatprep.subr.mxu0 0.0
    %5355 = vmatpush2.msra.mxu0 0.0
    %5356 = vmatprep.subr.mxu0 0.0
    %5357 = vmatpush2.msra.mxu0 0.0
    %5358 = vmatprep.subr.mxu0 0.0
    %5359 = vmatpush2.msra.mxu0 0.0
    %5360 = vmatprep.subr.mxu0 0.0
    %5361 = vmatpush2.msra.mxu0 0.0
    %5362 = vmatprep.subr.mxu0 0.0
    %5363 = vmatpush2.msra.mxu0 0.0
    %5364 = vmatprep.subr.mxu0 0.0
    %5365 = vmatpush2.msra.mxu0 0.0
    %5366 = vmatprep.subr.mxu0 0.0
    %5367 = vmatpush2.msra.mxu0 0.0
    %5368 = vmatprep.subr.mxu0 0.0
    %5369 = vmatpush2.msra.mxu0 0.0
    %5370 = vmatprep.subr.mxu0 0.0
    %5371 = vmatpush2.msra.mxu0 0.0
    %5372 = vmatprep.mubr.f32.mxu0 0.0
    %v5373 = vand.u32 %v5291, 4294901760
    %v5374 = vsub.f32 %v5291, %v5373
    %v5375 = vand.u32 %v5374, 4294901760
    %v5376 = vsub.f32 %v5374, %v5375
    %v5377 = vand.u32 %v5376, 4294901760
    %5378 = vmatmul.mubr.f32.gmra.mxu0 %v5377
    %v5379 = vpop.f32.mrf.mxu0
    %v5380 = vadd.f32 %v35, %v5379
    %v5381 = vpop.f32.mrf.mxu0
    %5382 = vdwg.mxu0
    %5383 = vmatprep.subr.mxu0 0.0
    %v5384 = vand.u32 %v29, 4294901760
    %v5385 = vsub.f32 %v29, %v5384
    %v5386 = vand.u32 %v5385, 4294901760
    %v5387 = vsub.f32 %v5385, %v5386
    %v5388 = vand.u32 %v5387, 4294901760
    %5389 = vmatpush1.msra.mxu0 %v5388
    %5390 = vmatprep.subr.mxu0 0.0
    %v5391 = vand.u32 %v28, 4294901760
    %v5392 = vsub.f32 %v28, %v5391
    %v5393 = vand.u32 %v5392, 4294901760
    %v5394 = vsub.f32 %v5392, %v5393
    %v5395 = vand.u32 %v5394, 4294901760
    %5396 = vmatpush1.msra.mxu0 %v5395
    %5397 = vmatprep.subr.mxu0 0.0
    %v5398 = vand.u32 %v27, 4294901760
    %v5399 = vsub.f32 %v27, %v5398
    %v5400 = vand.u32 %v5399, 4294901760
    %v5401 = vsub.f32 %v5399, %v5400
    %v5402 = vand.u32 %v5401, 4294901760
    %5403 = vmatpush1.msra.mxu0 %v5402
    %5404 = vmatprep.subr.mxu0 0.0
    %v5405 = vand.u32 %v26, 4294901760
    %v5406 = vsub.f32 %v26, %v5405
    %v5407 = vand.u32 %v5406, 4294901760
    %v5408 = vsub.f32 %v5406, %v5407
    %v5409 = vand.u32 %v5408, 4294901760
    %5410 = vmatpush1.msra.mxu0 %v5409
    %5411 = vmatprep.subr.mxu0 0.0
    %v5412 = vand.u32 %v25, 4294901760
    %v5413 = vsub.f32 %v25, %v5412
    %v5414 = vand.u32 %v5413, 4294901760
    %v5415 = vsub.f32 %v5413, %v5414
    %v5416 = vand.u32 %v5415, 4294901760
    %5417 = vmatpush1.msra.mxu0 %v5416
    %5418 = vmatprep.subr.mxu0 0.0
    %v5419 = vand.u32 %v24, 4294901760
    %v5420 = vsub.f32 %v24, %v5419
    %v5421 = vand.u32 %v5420, 4294901760
    %v5422 = vsub.f32 %v5420, %v5421
    %v5423 = vand.u32 %v5422, 4294901760
    %5424 = vmatpush1.msra.mxu0 %v5423
    %5425 = vmatprep.subr.mxu0 0.0
    %v5426 = vand.u32 %v23, 4294901760
    %v5427 = vsub.f32 %v23, %v5426
    %v5428 = vand.u32 %v5427, 4294901760
    %v5429 = vsub.f32 %v5427, %v5428
    %v5430 = vand.u32 %v5429, 4294901760
    %5431 = vmatpush1.msra.mxu0 %v5430
    %5432 = vmatprep.subr.mxu0 0.0
    %v5433 = vand.u32 %v22, 4294901760
    %v5434 = vsub.f32 %v22, %v5433
    %v5435 = vand.u32 %v5434, 4294901760
    %v5436 = vsub.f32 %v5434, %v5435
    %v5437 = vand.u32 %v5436, 4294901760
    %5438 = vmatpush1.msra.mxu0 %v5437
    %5439 = vmatprep.subr.mxu0 0.0
    %v5440 = vand.u32 %v21, 4294901760
    %v5441 = vsub.f32 %v21, %v5440
    %v5442 = vand.u32 %v5441, 4294901760
    %v5443 = vsub.f32 %v5441, %v5442
    %v5444 = vand.u32 %v5443, 4294901760
    %5445 = vmatpush1.msra.mxu0 %v5444
    %5446 = vmatprep.subr.mxu0 0.0
    %v5447 = vand.u32 %v20, 4294901760
    %v5448 = vsub.f32 %v20, %v5447
    %v5449 = vand.u32 %v5448, 4294901760
    %v5450 = vsub.f32 %v5448, %v5449
    %v5451 = vand.u32 %v5450, 4294901760
    %5452 = vmatpush1.msra.mxu0 %v5451
    %5453 = vmatprep.subr.mxu0 0.0
    %v5454 = vand.u32 %v19, 4294901760
    %v5455 = vsub.f32 %v19, %v5454
    %v5456 = vand.u32 %v5455, 4294901760
    %v5457 = vsub.f32 %v5455, %v5456
    %v5458 = vand.u32 %v5457, 4294901760
    %5459 = vmatpush1.msra.mxu0 %v5458
    %5460 = vmatprep.subr.mxu0 0.0
    %v5461 = vand.u32 %v18, 4294901760
    %v5462 = vsub.f32 %v18, %v5461
    %v5463 = vand.u32 %v5462, 4294901760
    %v5464 = vsub.f32 %v5462, %v5463
    %v5465 = vand.u32 %v5464, 4294901760
    %5466 = vmatpush1.msra.mxu0 %v5465
    %5467 = vmatprep.subr.mxu0 0.0
    %v5468 = vand.u32 %v17, 4294901760
    %v5469 = vsub.f32 %v17, %v5468
    %v5470 = vand.u32 %v5469, 4294901760
    %v5471 = vsub.f32 %v5469, %v5470
    %v5472 = vand.u32 %v5471, 4294901760
    %5473 = vmatpush1.msra.mxu0 %v5472
    %5474 = vmatprep.subr.mxu0 0.0
    %v5475 = vand.u32 %v16, 4294901760
    %v5476 = vsub.f32 %v16, %v5475
    %v5477 = vand.u32 %v5476, 4294901760
    %v5478 = vsub.f32 %v5476, %v5477
    %v5479 = vand.u32 %v5478, 4294901760
    %5480 = vmatpush1.msra.mxu0 %v5479
    %5481 = vmatprep.subr.mxu0 0.0
    %v5482 = vand.u32 %v15, 4294901760
    %v5483 = vsub.f32 %v15, %v5482
    %v5484 = vand.u32 %v5483, 4294901760
    %v5485 = vsub.f32 %v5483, %v5484
    %v5486 = vand.u32 %v5485, 4294901760
    %5487 = vmatpush1.msra.mxu0 %v5486
    %5488 = vmatprep.subr.mxu0 0.0
    %v5489 = vand.u32 %v14, 4294901760
    %v5490 = vsub.f32 %v14, %v5489
    %v5491 = vand.u32 %v5490, 4294901760
    %v5492 = vsub.f32 %v5490, %v5491
    %v5493 = vand.u32 %v5492, 4294901760
    %5494 = vmatpush1.msra.mxu0 %v5493
    %5495 = vmatprep.subr.mxu0 0.0
    %5496 = vmatpush2.msra.mxu0 0.0
    %5497 = vmatprep.subr.mxu0 0.0
    %5498 = vmatpush2.msra.mxu0 0.0
    %5499 = vmatprep.subr.mxu0 0.0
    %5500 = vmatpush2.msra.mxu0 0.0
    %5501 = vmatprep.subr.mxu0 0.0
    %5502 = vmatpush2.msra.mxu0 0.0
    %5503 = vmatprep.subr.mxu0 0.0
    %5504 = vmatpush2.msra.mxu0 0.0
    %5505 = vmatprep.subr.mxu0 0.0
    %5506 = vmatpush2.msra.mxu0 0.0
    %5507 = vmatprep.subr.mxu0 0.0
    %5508 = vmatpush2.msra.mxu0 0.0
    %5509 = vmatprep.subr.mxu0 0.0
    %5510 = vmatpush2.msra.mxu0 0.0
    %5511 = vmatprep.subr.mxu0 0.0
    %5512 = vmatpush2.msra.mxu0 0.0
    %5513 = vmatprep.subr.mxu0 0.0
    %5514 = vmatpush2.msra.mxu0 0.0
    %5515 = vmatprep.subr.mxu0 0.0
    %5516 = vmatpush2.msra.mxu0 0.0
    %5517 = vmatprep.subr.mxu0 0.0
    %5518 = vmatpush2.msra.mxu0 0.0
    %5519 = vmatprep.subr.mxu0 0.0
    %5520 = vmatpush2.msra.mxu0 0.0
    %5521 = vmatprep.subr.mxu0 0.0
    %5522 = vmatpush2.msra.mxu0 0.0
    %5523 = vmatprep.subr.mxu0 0.0
    %5524 = vmatpush2.msra.mxu0 0.0
    %5525 = vmatprep.subr.mxu0 0.0
    %5526 = vmatpush2.msra.mxu0 0.0
    %5527 = vmatprep.mubr.f32.mxu0 0.0
    %v5528 = vand.u32 %v5291, 4294901760
    %5529 = vmatmul.mubr.f32.gmra.mxu0 %v5528
    %v5530 = vpop.f32.mrf.mxu0
    %v5531 = vadd.f32 %v5380, %v5530
    %v5532 = vpop.f32.mrf.mxu0
    %5533 = vdwg.mxu0
    %5534 = vmatprep.subr.mxu0 0.0
    %v5535 = vand.u32 %v29, 4294901760
    %v5536 = vsub.f32 %v29, %v5535
    %5537 = vmatpush1.msra.mxu0 %v5536
    %5538 = vmatprep.subr.mxu0 0.0
    %v5539 = vand.u32 %v28, 4294901760
    %v5540 = vsub.f32 %v28, %v5539
    %5541 = vmatpush1.msra.mxu0 %v5540
    %5542 = vmatprep.subr.mxu0 0.0
    %v5543 = vand.u32 %v27, 4294901760
    %v5544 = vsub.f32 %v27, %v5543
    %5545 = vmatpush1.msra.mxu0 %v5544
    %5546 = vmatprep.subr.mxu0 0.0
    %v5547 = vand.u32 %v26, 4294901760
    %v5548 = vsub.f32 %v26, %v5547
    %5549 = vmatpush1.msra.mxu0 %v5548
    %5550 = vmatprep.subr.mxu0 0.0
    %v5551 = vand.u32 %v25, 4294901760
    %v5552 = vsub.f32 %v25, %v5551
    %5553 = vmatpush1.msra.mxu0 %v5552
    %5554 = vmatprep.subr.mxu0 0.0
    %v5555 = vand.u32 %v24, 4294901760
    %v5556 = vsub.f32 %v24, %v5555
    %5557 = vmatpush1.msra.mxu0 %v5556
    %5558 = vmatprep.subr.mxu0 0.0
    %v5559 = vand.u32 %v23, 4294901760
    %v5560 = vsub.f32 %v23, %v5559
    %5561 = vmatpush1.msra.mxu0 %v5560
    %5562 = vmatprep.subr.mxu0 0.0
    %v5563 = vand.u32 %v22, 4294901760
    %v5564 = vsub.f32 %v22, %v5563
    %5565 = vmatpush1.msra.mxu0 %v5564
    %5566 = vmatprep.subr.mxu0 0.0
    %v5567 = vand.u32 %v21, 4294901760
    %v5568 = vsub.f32 %v21, %v5567
    %5569 = vmatpush1.msra.mxu0 %v5568
    %5570 = vmatprep.subr.mxu0 0.0
    %v5571 = vand.u32 %v20, 4294901760
    %v5572 = vsub.f32 %v20, %v5571
    %5573 = vmatpush1.msra.mxu0 %v5572
    %5574 = vmatprep.subr.mxu0 0.0
    %v5575 = vand.u32 %v19, 4294901760
    %v5576 = vsub.f32 %v19, %v5575
    %5577 = vmatpush1.msra.mxu0 %v5576
    %5578 = vmatprep.subr.mxu0 0.0
    %v5579 = vand.u32 %v18, 4294901760
    %v5580 = vsub.f32 %v18, %v5579
    %5581 = vmatpush1.msra.mxu0 %v5580
    %5582 = vmatprep.subr.mxu0 0.0
    %v5583 = vand.u32 %v17, 4294901760
    %v5584 = vsub.f32 %v17, %v5583
    %5585 = vmatpush1.msra.mxu0 %v5584
    %5586 = vmatprep.subr.mxu0 0.0
    %v5587 = vand.u32 %v16, 4294901760
    %v5588 = vsub.f32 %v16, %v5587
    %5589 = vmatpush1.msra.mxu0 %v5588
    %5590 = vmatprep.subr.mxu0 0.0
    %v5591 = vand.u32 %v15, 4294901760
    %v5592 = vsub.f32 %v15, %v5591
    %5593 = vmatpush1.msra.mxu0 %v5592
    %5594 = vmatprep.subr.mxu0 0.0
    %v5595 = vand.u32 %v14, 4294901760
    %v5596 = vsub.f32 %v14, %v5595
    %5597 = vmatpush1.msra.mxu0 %v5596
    %5598 = vmatprep.subr.mxu0 0.0
    %5599 = vmatpush2.msra.mxu0 0.0
    %5600 = vmatprep.subr.mxu0 0.0
    %5601 = vmatpush2.msra.mxu0 0.0
    %5602 = vmatprep.subr.mxu0 0.0
    %5603 = vmatpush2.msra.mxu0 0.0
    %5604 = vmatprep.subr.mxu0 0.0
    %5605 = vmatpush2.msra.mxu0 0.0
    %5606 = vmatprep.subr.mxu0 0.0
    %5607 = vmatpush2.msra.mxu0 0.0
    %5608 = vmatprep.subr.mxu0 0.0
    %5609 = vmatpush2.msra.mxu0 0.0
    %5610 = vmatprep.subr.mxu0 0.0
    %5611 = vmatpush2.msra.mxu0 0.0
    %5612 = vmatprep.subr.mxu0 0.0
    %5613 = vmatpush2.msra.mxu0 0.0
    %5614 = vmatprep.subr.mxu0 0.0
    %5615 = vmatpush2.msra.mxu0 0.0
    %5616 = vmatprep.subr.mxu0 0.0
    %5617 = vmatpush2.msra.mxu0 0.0
    %5618 = vmatprep.subr.mxu0 0.0
    %5619 = vmatpush2.msra.mxu0 0.0
    %5620 = vmatprep.subr.mxu0 0.0
    %5621 = vmatpush2.msra.mxu0 0.0
    %5622 = vmatprep.subr.mxu0 0.0
    %5623 = vmatpush2.msra.mxu0 0.0
    %5624 = vmatprep.subr.mxu0 0.0
    %5625 = vmatpush2.msra.mxu0 0.0
    %5626 = vmatprep.subr.mxu0 0.0
    %5627 = vmatpush2.msra.mxu0 0.0
    %5628 = vmatprep.subr.mxu0 0.0
    %5629 = vmatpush2.msra.mxu0 0.0
    %5630 = vmatprep.mubr.f32.mxu0 0.0
    %v5631 = vand.u32 %v5291, 4294901760
    %v5632 = vsub.f32 %v5291, %v5631
    %5633 = vmatmul.mubr.f32.gmra.mxu0 %v5632
    %v5634 = vpop.f32.mrf.mxu0
    %v5635 = vadd.f32 %v5531, %v5634
    %v5636 = vpop.f32.mrf.mxu0
    %5637 = vdwg.mxu0
    %5638 = vmatprep.subr.mxu0 0.0
    %v5639 = vand.u32 %v29, 4294901760
    %5640 = vmatpush1.msra.mxu0 %v5639
    %5641 = vmatprep.subr.mxu0 0.0
    %v5642 = vand.u32 %v28, 4294901760
    %5643 = vmatpush1.msra.mxu0 %v5642
    %5644 = vmatprep.subr.mxu0 0.0
    %v5645 = vand.u32 %v27, 4294901760
    %5646 = vmatpush1.msra.mxu0 %v5645
    %5647 = vmatprep.subr.mxu0 0.0
    %v5648 = vand.u32 %v26, 4294901760
    %5649 = vmatpush1.msra.mxu0 %v5648
    %5650 = vmatprep.subr.mxu0 0.0
    %v5651 = vand.u32 %v25, 4294901760
    %5652 = vmatpush1.msra.mxu0 %v5651
    %5653 = vmatprep.subr.mxu0 0.0
    %v5654 = vand.u32 %v24, 4294901760
    %5655 = vmatpush1.msra.mxu0 %v5654
    %5656 = vmatprep.subr.mxu0 0.0
    %v5657 = vand.u32 %v23, 4294901760
    %5658 = vmatpush1.msra.mxu0 %v5657
    %5659 = vmatprep.subr.mxu0 0.0
    %v5660 = vand.u32 %v22, 4294901760
    %5661 = vmatpush1.msra.mxu0 %v5660
    %5662 = vmatprep.subr.mxu0 0.0
    %v5663 = vand.u32 %v21, 4294901760
    %5664 = vmatpush1.msra.mxu0 %v5663
    %5665 = vmatprep.subr.mxu0 0.0
    %v5666 = vand.u32 %v20, 4294901760
    %5667 = vmatpush1.msra.mxu0 %v5666
    %5668 = vmatprep.subr.mxu0 0.0
    %v5669 = vand.u32 %v19, 4294901760
    %5670 = vmatpush1.msra.mxu0 %v5669
    %5671 = vmatprep.subr.mxu0 0.0
    %v5672 = vand.u32 %v18, 4294901760
    %5673 = vmatpush1.msra.mxu0 %v5672
    %5674 = vmatprep.subr.mxu0 0.0
    %v5675 = vand.u32 %v17, 4294901760
    %5676 = vmatpush1.msra.mxu0 %v5675
    %5677 = vmatprep.subr.mxu0 0.0
    %v5678 = vand.u32 %v16, 4294901760
    %5679 = vmatpush1.msra.mxu0 %v5678
    %5680 = vmatprep.subr.mxu0 0.0
    %v5681 = vand.u32 %v15, 4294901760
    %5682 = vmatpush1.msra.mxu0 %v5681
    %5683 = vmatprep.subr.mxu0 0.0
    %v5684 = vand.u32 %v14, 4294901760
    %5685 = vmatpush1.msra.mxu0 %v5684
    %5686 = vmatprep.subr.mxu0 0.0
    %5687 = vmatpush2.msra.mxu0 0.0
    %5688 = vmatprep.subr.mxu0 0.0
    %5689 = vmatpush2.msra.mxu0 0.0
    %5690 = vmatprep.subr.mxu0 0.0
    %5691 = vmatpush2.msra.mxu0 0.0
    %5692 = vmatprep.subr.mxu0 0.0
    %5693 = vmatpush2.msra.mxu0 0.0
    %5694 = vmatprep.subr.mxu0 0.0
    %5695 = vmatpush2.msra.mxu0 0.0
    %5696 = vmatprep.subr.mxu0 0.0
    %5697 = vmatpush2.msra.mxu0 0.0
    %5698 = vmatprep.subr.mxu0 0.0
    %5699 = vmatpush2.msra.mxu0 0.0
    %5700 = vmatprep.subr.mxu0 0.0
    %5701 = vmatpush2.msra.mxu0 0.0
    %5702 = vmatprep.subr.mxu0 0.0
    %5703 = vmatpush2.msra.mxu0 0.0
    %5704 = vmatprep.subr.mxu0 0.0
    %5705 = vmatpush2.msra.mxu0 0.0
    %5706 = vmatprep.subr.mxu0 0.0
    %5707 = vmatpush2.msra.mxu0 0.0
    %5708 = vmatprep.subr.mxu0 0.0
    %5709 = vmatpush2.msra.mxu0 0.0
    %5710 = vmatprep.subr.mxu0 0.0
    %5711 = vmatpush2.msra.mxu0 0.0
    %5712 = vmatprep.subr.mxu0 0.0
    %5713 = vmatpush2.msra.mxu0 0.0
    %5714 = vmatprep.subr.mxu0 0.0
    %5715 = vmatpush2.msra.mxu0 0.0
    %5716 = vmatprep.subr.mxu0 0.0
    %5717 = vmatpush2.msra.mxu0 0.0
    %5718 = vmatprep.mubr.f32.mxu0 0.0
    %v5719 = vand.u32 %v5291, 4294901760
    %v5720 = vsub.f32 %v5291, %v5719
    %v5721 = vand.u32 %v5720, 4294901760
    %5722 = vmatmul.mubr.f32.gmra.mxu0 %v5721
    %v5723 = vpop.f32.mrf.mxu0
    %v5724 = vadd.f32 %v5635, %v5723
    %v5725 = vpop.f32.mrf.mxu0
    %5726 = vdwg.mxu0
    %5727 = vmatprep.subr.mxu0 0.0
    %v5728 = vand.u32 %v29, 4294901760
    %v5729 = vsub.f32 %v29, %v5728
    %v5730 = vand.u32 %v5729, 4294901760
    %5731 = vmatpush1.msra.mxu0 %v5730
    %5732 = vmatprep.subr.mxu0 0.0
    %v5733 = vand.u32 %v28, 4294901760
    %v5734 = vsub.f32 %v28, %v5733
    %v5735 = vand.u32 %v5734, 4294901760
    %5736 = vmatpush1.msra.mxu0 %v5735
    %5737 = vmatprep.subr.mxu0 0.0
    %v5738 = vand.u32 %v27, 4294901760
    %v5739 = vsub.f32 %v27, %v5738
    %v5740 = vand.u32 %v5739, 4294901760
    %5741 = vmatpush1.msra.mxu0 %v5740
    %5742 = vmatprep.subr.mxu0 0.0
    %v5743 = vand.u32 %v26, 4294901760
    %v5744 = vsub.f32 %v26, %v5743
    %v5745 = vand.u32 %v5744, 4294901760
    %5746 = vmatpush1.msra.mxu0 %v5745
    %5747 = vmatprep.subr.mxu0 0.0
    %v5748 = vand.u32 %v25, 4294901760
    %v5749 = vsub.f32 %v25, %v5748
    %v5750 = vand.u32 %v5749, 4294901760
    %5751 = vmatpush1.msra.mxu0 %v5750
    %5752 = vmatprep.subr.mxu0 0.0
    %v5753 = vand.u32 %v24, 4294901760
    %v5754 = vsub.f32 %v24, %v5753
    %v5755 = vand.u32 %v5754, 4294901760
    %5756 = vmatpush1.msra.mxu0 %v5755
    %5757 = vmatprep.subr.mxu0 0.0
    %v5758 = vand.u32 %v23, 4294901760
    %v5759 = vsub.f32 %v23, %v5758
    %v5760 = vand.u32 %v5759, 4294901760
    %5761 = vmatpush1.msra.mxu0 %v5760
    %5762 = vmatprep.subr.mxu0 0.0
    %v5763 = vand.u32 %v22, 4294901760
    %v5764 = vsub.f32 %v22, %v5763
    %v5765 = vand.u32 %v5764, 4294901760
    %5766 = vmatpush1.msra.mxu0 %v5765
    %5767 = vmatprep.subr.mxu0 0.0
    %v5768 = vand.u32 %v21, 4294901760
    %v5769 = vsub.f32 %v21, %v5768
    %v5770 = vand.u32 %v5769, 4294901760
    %5771 = vmatpush1.msra.mxu0 %v5770
    %5772 = vmatprep.subr.mxu0 0.0
    %v5773 = vand.u32 %v20, 4294901760
    %v5774 = vsub.f32 %v20, %v5773
    %v5775 = vand.u32 %v5774, 4294901760
    %5776 = vmatpush1.msra.mxu0 %v5775
    %5777 = vmatprep.subr.mxu0 0.0
    %v5778 = vand.u32 %v19, 4294901760
    %v5779 = vsub.f32 %v19, %v5778
    %v5780 = vand.u32 %v5779, 4294901760
    %5781 = vmatpush1.msra.mxu0 %v5780
    %5782 = vmatprep.subr.mxu0 0.0
    %v5783 = vand.u32 %v18, 4294901760
    %v5784 = vsub.f32 %v18, %v5783
    %v5785 = vand.u32 %v5784, 4294901760
    %5786 = vmatpush1.msra.mxu0 %v5785
    %5787 = vmatprep.subr.mxu0 0.0
    %v5788 = vand.u32 %v17, 4294901760
    %v5789 = vsub.f32 %v17, %v5788
    %v5790 = vand.u32 %v5789, 4294901760
    %5791 = vmatpush1.msra.mxu0 %v5790
    %5792 = vmatprep.subr.mxu0 0.0
    %v5793 = vand.u32 %v16, 4294901760
    %v5794 = vsub.f32 %v16, %v5793
    %v5795 = vand.u32 %v5794, 4294901760
    %5796 = vmatpush1.msra.mxu0 %v5795
    %5797 = vmatprep.subr.mxu0 0.0
    %v5798 = vand.u32 %v15, 4294901760
    %v5799 = vsub.f32 %v15, %v5798
    %v5800 = vand.u32 %v5799, 4294901760
    %5801 = vmatpush1.msra.mxu0 %v5800
    %5802 = vmatprep.subr.mxu0 0.0
    %v5803 = vand.u32 %v14, 4294901760
    %v5804 = vsub.f32 %v14, %v5803
    %v5805 = vand.u32 %v5804, 4294901760
    %5806 = vmatpush1.msra.mxu0 %v5805
    %5807 = vmatprep.subr.mxu0 0.0
    %5808 = vmatpush2.msra.mxu0 0.0
    %5809 = vmatprep.subr.mxu0 0.0
    %5810 = vmatpush2.msra.mxu0 0.0
    %5811 = vmatprep.subr.mxu0 0.0
    %5812 = vmatpush2.msra.mxu0 0.0
    %5813 = vmatprep.subr.mxu0 0.0
    %5814 = vmatpush2.msra.mxu0 0.0
    %5815 = vmatprep.subr.mxu0 0.0
    %5816 = vmatpush2.msra.mxu0 0.0
    %5817 = vmatprep.subr.mxu0 0.0
    %5818 = vmatpush2.msra.mxu0 0.0
    %5819 = vmatprep.subr.mxu0 0.0
    %5820 = vmatpush2.msra.mxu0 0.0
    %5821 = vmatprep.subr.mxu0 0.0
    %5822 = vmatpush2.msra.mxu0 0.0
    %5823 = vmatprep.subr.mxu0 0.0
    %5824 = vmatpush2.msra.mxu0 0.0
    %5825 = vmatprep.subr.mxu0 0.0
    %5826 = vmatpush2.msra.mxu0 0.0
    %5827 = vmatprep.subr.mxu0 0.0
    %5828 = vmatpush2.msra.mxu0 0.0
    %5829 = vmatprep.subr.mxu0 0.0
    %5830 = vmatpush2.msra.mxu0 0.0
    %5831 = vmatprep.subr.mxu0 0.0
    %5832 = vmatpush2.msra.mxu0 0.0
    %5833 = vmatprep.subr.mxu0 0.0
    %5834 = vmatpush2.msra.mxu0 0.0
    %5835 = vmatprep.subr.mxu0 0.0
    %5836 = vmatpush2.msra.mxu0 0.0
    %5837 = vmatprep.subr.mxu0 0.0
    %5838 = vmatpush2.msra.mxu0 0.0
    %5839 = vmatprep.mubr.f32.mxu0 0.0
    %v5840 = vand.u32 %v5291, 4294901760
    %5841 = vmatmul.mubr.f32.gmra.mxu0 %v5840
    %v5842 = vpop.f32.mrf.mxu0
    %v5843 = vadd.f32 %v5724, %v5842
    %v5844 = vpop.f32.mrf.mxu0
    %5845 = vdwg.mxu0
    %5846 = vmatprep.subr.mxu0 0.0
    %v5847 = vand.u32 %v29, 4294901760
    %5848 = vmatpush1.msra.mxu0 %v5847
    %5849 = vmatprep.subr.mxu0 0.0
    %v5850 = vand.u32 %v28, 4294901760
    %5851 = vmatpush1.msra.mxu0 %v5850
    %5852 = vmatprep.subr.mxu0 0.0
    %v5853 = vand.u32 %v27, 4294901760
    %5854 = vmatpush1.msra.mxu0 %v5853
    %5855 = vmatprep.subr.mxu0 0.0
    %v5856 = vand.u32 %v26, 4294901760
    %5857 = vmatpush1.msra.mxu0 %v5856
    %5858 = vmatprep.subr.mxu0 0.0
    %v5859 = vand.u32 %v25, 4294901760
    %5860 = vmatpush1.msra.mxu0 %v5859
    %5861 = vmatprep.subr.mxu0 0.0
    %v5862 = vand.u32 %v24, 4294901760
    %5863 = vmatpush1.msra.mxu0 %v5862
    %5864 = vmatprep.subr.mxu0 0.0
    %v5865 = vand.u32 %v23, 4294901760
    %5866 = vmatpush1.msra.mxu0 %v5865
    %5867 = vmatprep.subr.mxu0 0.0
    %v5868 = vand.u32 %v22, 4294901760
    %5869 = vmatpush1.msra.mxu0 %v5868
    %5870 = vmatprep.subr.mxu0 0.0
    %v5871 = vand.u32 %v21, 4294901760
    %5872 = vmatpush1.msra.mxu0 %v5871
    %5873 = vmatprep.subr.mxu0 0.0
    %v5874 = vand.u32 %v20, 4294901760
    %5875 = vmatpush1.msra.mxu0 %v5874
    %5876 = vmatprep.subr.mxu0 0.0
    %v5877 = vand.u32 %v19, 4294901760
    %5878 = vmatpush1.msra.mxu0 %v5877
    %5879 = vmatprep.subr.mxu0 0.0
    %v5880 = vand.u32 %v18, 4294901760
    %5881 = vmatpush1.msra.mxu0 %v5880
    %5882 = vmatprep.subr.mxu0 0.0
    %v5883 = vand.u32 %v17, 4294901760
    %5884 = vmatpush1.msra.mxu0 %v5883
    %5885 = vmatprep.subr.mxu0 0.0
    %v5886 = vand.u32 %v16, 4294901760
    %5887 = vmatpush1.msra.mxu0 %v5886
    %5888 = vmatprep.subr.mxu0 0.0
    %v5889 = vand.u32 %v15, 4294901760
    %5890 = vmatpush1.msra.mxu0 %v5889
    %5891 = vmatprep.subr.mxu0 0.0
    %v5892 = vand.u32 %v14, 4294901760
    %5893 = vmatpush1.msra.mxu0 %v5892
    %5894 = vmatprep.subr.mxu0 0.0
    %5895 = vmatpush2.msra.mxu0 0.0
    %5896 = vmatprep.subr.mxu0 0.0
    %5897 = vmatpush2.msra.mxu0 0.0
    %5898 = vmatprep.subr.mxu0 0.0
    %5899 = vmatpush2.msra.mxu0 0.0
    %5900 = vmatprep.subr.mxu0 0.0
    %5901 = vmatpush2.msra.mxu0 0.0
    %5902 = vmatprep.subr.mxu0 0.0
    %5903 = vmatpush2.msra.mxu0 0.0
    %5904 = vmatprep.subr.mxu0 0.0
    %5905 = vmatpush2.msra.mxu0 0.0
    %5906 = vmatprep.subr.mxu0 0.0
    %5907 = vmatpush2.msra.mxu0 0.0
    %5908 = vmatprep.subr.mxu0 0.0
    %5909 = vmatpush2.msra.mxu0 0.0
    %5910 = vmatprep.subr.mxu0 0.0
    %5911 = vmatpush2.msra.mxu0 0.0
    %5912 = vmatprep.subr.mxu0 0.0
    %5913 = vmatpush2.msra.mxu0 0.0
    %5914 = vmatprep.subr.mxu0 0.0
    %5915 = vmatpush2.msra.mxu0 0.0
    %5916 = vmatprep.subr.mxu0 0.0
    %5917 = vmatpush2.msra.mxu0 0.0
    %5918 = vmatprep.subr.mxu0 0.0
    %5919 = vmatpush2.msra.mxu0 0.0
    %5920 = vmatprep.subr.mxu0 0.0
    %5921 = vmatpush2.msra.mxu0 0.0
    %5922 = vmatprep.subr.mxu0 0.0
    %5923 = vmatpush2.msra.mxu0 0.0
    %5924 = vmatprep.subr.mxu0 0.0
    %5925 = vmatpush2.msra.mxu0 0.0
    %5926 = vmatprep.mubr.f32.mxu0 0.0
    %v5927 = vand.u32 %v5291, 4294901760
    %5928 = vmatmul.mubr.f32.gmra.mxu0 %v5927
    %v5929 = vpop.f32.mrf.mxu0
    %v5930 = vadd.f32 %v5843, %v5929
    %v5931 = vpop.f32.mrf.mxu0
    %5932 = vdwg.mxu0
    %v5933 = vand.u32 2147483647, %v5930
    %vm5934 = vcmp.le.f32.partialorder %v5933, 0.7853982
    %vm5935 = vcmp.lt.s32.totalorder %v5930, 0
    %v5936 = vand.u32 %v5930, 2139095040
    %v5937 = vshrl.u32 %v5936, 23
    %v5938 = vsub.s32 %v5937, 127
    %v5939 = vand.u32 2147483647, %v5930
    %v5940 = vand.u32 %v5939, 8388607
    %v5941 = vor.u32 %v5940, 8388608
    %v5942 = vsub.s32 0, %v5941
    %v5943 = vadd.s32 %v5938, 1
    %vm5944 = vcmp.gt.s32.totalorder %v5943, 0
    %v5945 = vsel %vm5944, %v5943, 0
    %v5946 = vshrl.u32 %v5945, 5
    %v5947 = vand.u32 %v5945, 31
    %v5948 = vsub.s32 32, %v5947
    %v5949 = vshrl.u32 683565275, %v5948
    %v5950 = vshll.u32 683565275, %v5947
    %v5951 = vshrl.u32 2475754826, %v5948
    %v5952 = vor.u32 %v5950, %v5951
    %v5953 = vshll.u32 2475754826, %v5947
    %v5954 = vshrl.u32 2131351028, %v5948
    %v5955 = vor.u32 %v5953, %v5954
    %v5956 = vshll.u32 2131351028, %v5947
    %v5957 = vshrl.u32 2102212464, %v5948
    %v5958 = vor.u32 %v5956, %v5957
    %v5959 = vshll.u32 2102212464, %v5947
    %v5960 = vshrl.u32 920167782, %v5948
    %v5961 = vor.u32 %v5959, %v5960
    %v5962 = vshll.u32 920167782, %v5947
    %v5963 = vshrl.u32 1326507024, %v5948
    %v5964 = vor.u32 %v5962, %v5963
    %vm5965 = vcmp.lt.s32.totalorder %v5946, 1
    %vm5966 = vcmp.lt.s32.totalorder %v5946, 2
    %vm5967 = vcmp.lt.s32.totalorder %v5946, 3
    %vm5968 = vcmp.lt.s32.totalorder %v5946, 4
    %v5969 = vsel %vm5965, %v5949, %v5952
    %v5970 = vsel %vm5968, %v5958, 2102212464
    %v5971 = vsel %vm5967, %v5955, %v5970
    %v5972 = vsel %vm5966, %v5969, %v5971
    %v5973 = vsel %vm5965, %v5952, %v5955
    %v5974 = vsel %vm5968, %v5961, 920167782
    %v5975 = vsel %vm5967, %v5958, %v5974
    %v5976 = vsel %vm5966, %v5973, %v5975
    %v5977 = vsel %vm5965, %v5955, %v5958
    %v5978 = vsel %vm5968, %v5964, 1326507024
    %v5979 = vsel %vm5967, %v5961, %v5978
    %v5980 = vsel %vm5966, %v5977, %v5979
    %v5981 = vshll.u32 %v5941, 8
    %v5982 = vmul.u32.u64.compose %v5981, %v5980
    %v5983 = vextract.low.u32 %v5982
    %v5984 = vextract.high.u32 %v5982
    %v5985 = vmul.u32.u64.compose %v5981, %v5976
    %v5986 = vextract.low.u32 %v5985
    %v5987 = vextract.high.u32 %v5985
    %v5988 = vmul.u32 %v5981, %v5972
    %v5989 = vadd.s32 %v5984, %v5986
    %vm5990 = vc.u32 %v5984, %v5986
    %v5991 = vadd.s32 %v5987, 1
    %v5992 = vsel %vm5990, %v5991, %v5987
    %v5993 = vadd.s32 %v5988, %v5992
    %v5994 = vadd.s32 %v5993, 536870912
    %v5995 = vshrl.u32 %v5994, 30
    %v5996 = vshll.u32 %v5995, 30
    %v5997 = vsub.s32 %v5993, %v5996
    %vm5998 = vcmp.lt.s32.totalorder %v5997, 0
    %v5999 = vsub.s32 0, %v5997
    %v6000 = vsel %vm5998, %v5999, %v5997
    %v6001 = vclz %v6000
    %v6002 = vsub.s32 %v6001, 2
    %vm6003 = vcmp.gt.s32.totalorder 0, %v6002
    %v6004 = vsel %vm6003, 0, %v6002
    %v6005 = vsub.s32 32, %v6004
    %v6006 = vshll.u32 %v5997, %v6004
    %v6007 = vshrl.u32 %v5989, %v6005
    %v6008 = vor.u32 %v6006, %v6007
    %v6009 = vsub.s32 4294967266, %v6004
    %v6010 = vadd.s32 %v6009, 127
    %v6011 = vshll.u32 %v6010, 23
    %v6012 = vor.u32 4788187, %v6011
    %v6013 = vand.u32 2147483647, %v6012
    %v6015 = vcvt.s32.f32 %v6008
    %v6016 = vmul.f32 %v6015, %v6013
    %v6017 = vxor.u32 %v6016, 2147483648
    %v6018 = vsel %vm5935, %v6017, %v6016
    %v6019 = vsub.s32 4, %v5995
    %v6020 = vsel %vm5935, %v6019, %v5995
    %v6021 = vsel %vm5934, %v5930, %v6018
    %v6022 = vsel %vm5934, 0, %v6020
    %v6023 = vcosq.f32.pop %v6021
    %v6024 = vsinq.f32.pop %v6021
    %vm6025 = vweird.f32 %v5930
    %v6026 = vadd.s32 %v6022, 3
    %v6027 = vand.u32 %v6026, 3
    %vm6028 = vcmp.lt.s32.totalorder %v6027, 2
    %vm6029 = vcmp.eq.s32.totalorder %v6027, 0
    %v6030 = vxor.u32 %v6024, 2147483648
    %v6031 = vsel %vm6029, %v6023, %v6030
    %vm6032 = vcmp.eq.s32.totalorder %v6027, 2
    %v6033 = vxor.u32 %v6023, 2147483648
    %v6034 = vsel %vm6032, %v6033, %v6024
    %v6035 = vsel %vm6028, %v6031, %v6034
    %v6036 = vsel %vm6025, nan, %v6035
    %v6037 = vadd.f32 %v4538, %v5287
    %v6038 = vmul.f32 %v6037, 3.0
    %v6039 = vadd.f32 %v3791, %v6038
    %v6040 = vadd.f32 %v6039, %v6036
    %v6041 = vmul.f32 %v6040, 0.006313131
    %v6042 = vadd.f32 %v48, %v6041
    %6043 = vmatprep.subr.mxu0 0.0
    %v6044 = vand.u32 %v29, 4294901760
    %6045 = vmatpush1.msra.mxu0 %v6044
    %6046 = vmatprep.subr.mxu0 0.0
    %v6047 = vand.u32 %v28, 4294901760
    %6048 = vmatpush1.msra.mxu0 %v6047
    %6049 = vmatprep.subr.mxu0 0.0
    %v6050 = vand.u32 %v27, 4294901760
    %6051 = vmatpush1.msra.mxu0 %v6050
    %6052 = vmatprep.subr.mxu0 0.0
    %v6053 = vand.u32 %v26, 4294901760
    %6054 = vmatpush1.msra.mxu0 %v6053
    %6055 = vmatprep.subr.mxu0 0.0
    %v6056 = vand.u32 %v25, 4294901760
    %6057 = vmatpush1.msra.mxu0 %v6056
    %6058 = vmatprep.subr.mxu0 0.0
    %v6059 = vand.u32 %v24, 4294901760
    %6060 = vmatpush1.msra.mxu0 %v6059
    %6061 = vmatprep.subr.mxu0 0.0
    %v6062 = vand.u32 %v23, 4294901760
    %6063 = vmatpush1.msra.mxu0 %v6062
    %6064 = vmatprep.subr.mxu0 0.0
    %v6065 = vand.u32 %v22, 4294901760
    %6066 = vmatpush1.msra.mxu0 %v6065
    %6067 = vmatprep.subr.mxu0 0.0
    %v6068 = vand.u32 %v21, 4294901760
    %6069 = vmatpush1.msra.mxu0 %v6068
    %6070 = vmatprep.subr.mxu0 0.0
    %v6071 = vand.u32 %v20, 4294901760
    %6072 = vmatpush1.msra.mxu0 %v6071
    %6073 = vmatprep.subr.mxu0 0.0
    %v6074 = vand.u32 %v19, 4294901760
    %6075 = vmatpush1.msra.mxu0 %v6074
    %6076 = vmatprep.subr.mxu0 0.0
    %v6077 = vand.u32 %v18, 4294901760
    %6078 = vmatpush1.msra.mxu0 %v6077
    %6079 = vmatprep.subr.mxu0 0.0
    %v6080 = vand.u32 %v17, 4294901760
    %6081 = vmatpush1.msra.mxu0 %v6080
    %6082 = vmatprep.subr.mxu0 0.0
    %v6083 = vand.u32 %v16, 4294901760
    %6084 = vmatpush1.msra.mxu0 %v6083
    %6085 = vmatprep.subr.mxu0 0.0
    %v6086 = vand.u32 %v15, 4294901760
    %6087 = vmatpush1.msra.mxu0 %v6086
    %6088 = vmatprep.subr.mxu0 0.0
    %v6089 = vand.u32 %v14, 4294901760
    %6090 = vmatpush1.msra.mxu0 %v6089
    %6091 = vmatprep.subr.mxu0 0.0
    %6092 = vmatpush2.msra.mxu0 0.0
    %6093 = vmatprep.subr.mxu0 0.0
    %6094 = vmatpush2.msra.mxu0 0.0
    %6095 = vmatprep.subr.mxu0 0.0
    %6096 = vmatpush2.msra.mxu0 0.0
    %6097 = vmatprep.subr.mxu0 0.0
    %6098 = vmatpush2.msra.mxu0 0.0
    %6099 = vmatprep.subr.mxu0 0.0
    %6100 = vmatpush2.msra.mxu0 0.0
    %6101 = vmatprep.subr.mxu0 0.0
    %6102 = vmatpush2.msra.mxu0 0.0
    %6103 = vmatprep.subr.mxu0 0.0
    %6104 = vmatpush2.msra.mxu0 0.0
    %6105 = vmatprep.subr.mxu0 0.0
    %6106 = vmatpush2.msra.mxu0 0.0
    %6107 = vmatprep.subr.mxu0 0.0
    %6108 = vmatpush2.msra.mxu0 0.0
    %6109 = vmatprep.subr.mxu0 0.0
    %6110 = vmatpush2.msra.mxu0 0.0
    %6111 = vmatprep.subr.mxu0 0.0
    %6112 = vmatpush2.msra.mxu0 0.0
    %6113 = vmatprep.subr.mxu0 0.0
    %6114 = vmatpush2.msra.mxu0 0.0
    %6115 = vmatprep.subr.mxu0 0.0
    %6116 = vmatpush2.msra.mxu0 0.0
    %6117 = vmatprep.subr.mxu0 0.0
    %6118 = vmatpush2.msra.mxu0 0.0
    %6119 = vmatprep.subr.mxu0 0.0
    %6120 = vmatpush2.msra.mxu0 0.0
    %6121 = vmatprep.subr.mxu0 0.0
    %6122 = vmatpush2.msra.mxu0 0.0
    %6123 = vmatprep.mubr.f32.mxu0 0.0
    %v6124 = vand.u32 %v49, 4294901760
    %v6125 = vsub.f32 %v49, %v6124
    %v6126 = vand.u32 %v6125, 4294901760
    %v6127 = vsub.f32 %v6125, %v6126
    %v6128 = vand.u32 %v6127, 4294901760
    %6129 = vmatmul.mubr.f32.gmra.mxu0 %v6128
    %v6130 = vpop.f32.mrf.mxu0
    %v6131 = vadd.f32 %v35, %v6130
    %v6132 = vpop.f32.mrf.mxu0
    %6133 = vdwg.mxu0
    %6134 = vmatprep.subr.mxu0 0.0
    %v6135 = vand.u32 %v29, 4294901760
    %v6136 = vsub.f32 %v29, %v6135
    %v6137 = vand.u32 %v6136, 4294901760
    %v6138 = vsub.f32 %v6136, %v6137
    %v6139 = vand.u32 %v6138, 4294901760
    %6140 = vmatpush1.msra.mxu0 %v6139
    %6141 = vmatprep.subr.mxu0 0.0
    %v6142 = vand.u32 %v28, 4294901760
    %v6143 = vsub.f32 %v28, %v6142
    %v6144 = vand.u32 %v6143, 4294901760
    %v6145 = vsub.f32 %v6143, %v6144
    %v6146 = vand.u32 %v6145, 4294901760
    %6147 = vmatpush1.msra.mxu0 %v6146
    %6148 = vmatprep.subr.mxu0 0.0
    %v6149 = vand.u32 %v27, 4294901760
    %v6150 = vsub.f32 %v27, %v6149
    %v6151 = vand.u32 %v6150, 4294901760
    %v6152 = vsub.f32 %v6150, %v6151
    %v6153 = vand.u32 %v6152, 4294901760
    %6154 = vmatpush1.msra.mxu0 %v6153
    %6155 = vmatprep.subr.mxu0 0.0
    %v6156 = vand.u32 %v26, 4294901760
    %v6157 = vsub.f32 %v26, %v6156
    %v6158 = vand.u32 %v6157, 4294901760
    %v6159 = vsub.f32 %v6157, %v6158
    %v6160 = vand.u32 %v6159, 4294901760
    %6161 = vmatpush1.msra.mxu0 %v6160
    %6162 = vmatprep.subr.mxu0 0.0
    %v6163 = vand.u32 %v25, 4294901760
    %v6164 = vsub.f32 %v25, %v6163
    %v6165 = vand.u32 %v6164, 4294901760
    %v6166 = vsub.f32 %v6164, %v6165
    %v6167 = vand.u32 %v6166, 4294901760
    %6168 = vmatpush1.msra.mxu0 %v6167
    %6169 = vmatprep.subr.mxu0 0.0
    %v6170 = vand.u32 %v24, 4294901760
    %v6171 = vsub.f32 %v24, %v6170
    %v6172 = vand.u32 %v6171, 4294901760
    %v6173 = vsub.f32 %v6171, %v6172
    %v6174 = vand.u32 %v6173, 4294901760
    %6175 = vmatpush1.msra.mxu0 %v6174
    %6176 = vmatprep.subr.mxu0 0.0
    %v6177 = vand.u32 %v23, 4294901760
    %v6178 = vsub.f32 %v23, %v6177
    %v6179 = vand.u32 %v6178, 4294901760
    %v6180 = vsub.f32 %v6178, %v6179
    %v6181 = vand.u32 %v6180, 4294901760
    %6182 = vmatpush1.msra.mxu0 %v6181
    %6183 = vmatprep.subr.mxu0 0.0
    %v6184 = vand.u32 %v22, 4294901760
    %v6185 = vsub.f32 %v22, %v6184
    %v6186 = vand.u32 %v6185, 4294901760
    %v6187 = vsub.f32 %v6185, %v6186
    %v6188 = vand.u32 %v6187, 4294901760
    %6189 = vmatpush1.msra.mxu0 %v6188
    %6190 = vmatprep.subr.mxu0 0.0
    %v6191 = vand.u32 %v21, 4294901760
    %v6192 = vsub.f32 %v21, %v6191
    %v6193 = vand.u32 %v6192, 4294901760
    %v6194 = vsub.f32 %v6192, %v6193
    %v6195 = vand.u32 %v6194, 4294901760
    %6196 = vmatpush1.msra.mxu0 %v6195
    %6197 = vmatprep.subr.mxu0 0.0
    %v6198 = vand.u32 %v20, 4294901760
    %v6199 = vsub.f32 %v20, %v6198
    %v6200 = vand.u32 %v6199, 4294901760
    %v6201 = vsub.f32 %v6199, %v6200
    %v6202 = vand.u32 %v6201, 4294901760
    %6203 = vmatpush1.msra.mxu0 %v6202
    %6204 = vmatprep.subr.mxu0 0.0
    %v6205 = vand.u32 %v19, 4294901760
    %v6206 = vsub.f32 %v19, %v6205
    %v6207 = vand.u32 %v6206, 4294901760
    %v6208 = vsub.f32 %v6206, %v6207
    %v6209 = vand.u32 %v6208, 4294901760
    %6210 = vmatpush1.msra.mxu0 %v6209
    %6211 = vmatprep.subr.mxu0 0.0
    %v6212 = vand.u32 %v18, 4294901760
    %v6213 = vsub.f32 %v18, %v6212
    %v6214 = vand.u32 %v6213, 4294901760
    %v6215 = vsub.f32 %v6213, %v6214
    %v6216 = vand.u32 %v6215, 4294901760
    %6217 = vmatpush1.msra.mxu0 %v6216
    %6218 = vmatprep.subr.mxu0 0.0
    %v6219 = vand.u32 %v17, 4294901760
    %v6220 = vsub.f32 %v17, %v6219
    %v6221 = vand.u32 %v6220, 4294901760
    %v6222 = vsub.f32 %v6220, %v6221
    %v6223 = vand.u32 %v6222, 4294901760
    %6224 = vmatpush1.msra.mxu0 %v6223
    %6225 = vmatprep.subr.mxu0 0.0
    %v6226 = vand.u32 %v16, 4294901760
    %v6227 = vsub.f32 %v16, %v6226
    %v6228 = vand.u32 %v6227, 4294901760
    %v6229 = vsub.f32 %v6227, %v6228
    %v6230 = vand.u32 %v6229, 4294901760
    %6231 = vmatpush1.msra.mxu0 %v6230
    %6232 = vmatprep.subr.mxu0 0.0
    %v6233 = vand.u32 %v15, 4294901760
    %v6234 = vsub.f32 %v15, %v6233
    %v6235 = vand.u32 %v6234, 4294901760
    %v6236 = vsub.f32 %v6234, %v6235
    %v6237 = vand.u32 %v6236, 4294901760
    %6238 = vmatpush1.msra.mxu0 %v6237
    %6239 = vmatprep.subr.mxu0 0.0
    %v6240 = vand.u32 %v14, 4294901760
    %v6241 = vsub.f32 %v14, %v6240
    %v6242 = vand.u32 %v6241, 4294901760
    %v6243 = vsub.f32 %v6241, %v6242
    %v6244 = vand.u32 %v6243, 4294901760
    %6245 = vmatpush1.msra.mxu0 %v6244
    %6246 = vmatprep.subr.mxu0 0.0
    %6247 = vmatpush2.msra.mxu0 0.0
    %6248 = vmatprep.subr.mxu0 0.0
    %6249 = vmatpush2.msra.mxu0 0.0
    %6250 = vmatprep.subr.mxu0 0.0
    %6251 = vmatpush2.msra.mxu0 0.0
    %6252 = vmatprep.subr.mxu0 0.0
    %6253 = vmatpush2.msra.mxu0 0.0
    %6254 = vmatprep.subr.mxu0 0.0
    %6255 = vmatpush2.msra.mxu0 0.0
    %6256 = vmatprep.subr.mxu0 0.0
    %6257 = vmatpush2.msra.mxu0 0.0
    %6258 = vmatprep.subr.mxu0 0.0
    %6259 = vmatpush2.msra.mxu0 0.0
    %6260 = vmatprep.subr.mxu0 0.0
    %6261 = vmatpush2.msra.mxu0 0.0
    %6262 = vmatprep.subr.mxu0 0.0
    %6263 = vmatpush2.msra.mxu0 0.0
    %6264 = vmatprep.subr.mxu0 0.0
    %6265 = vmatpush2.msra.mxu0 0.0
    %6266 = vmatprep.subr.mxu0 0.0
    %6267 = vmatpush2.msra.mxu0 0.0
    %6268 = vmatprep.subr.mxu0 0.0
    %6269 = vmatpush2.msra.mxu0 0.0
    %6270 = vmatprep.subr.mxu0 0.0
    %6271 = vmatpush2.msra.mxu0 0.0
    %6272 = vmatprep.subr.mxu0 0.0
    %6273 = vmatpush2.msra.mxu0 0.0
    %6274 = vmatprep.subr.mxu0 0.0
    %6275 = vmatpush2.msra.mxu0 0.0
    %6276 = vmatprep.subr.mxu0 0.0
    %6277 = vmatpush2.msra.mxu0 0.0
    %6278 = vmatprep.mubr.f32.mxu0 0.0
    %v6279 = vand.u32 %v49, 4294901760
    %6280 = vmatmul.mubr.f32.gmra.mxu0 %v6279
    %v6281 = vpop.f32.mrf.mxu0
    %v6282 = vadd.f32 %v6131, %v6281
    %v6283 = vpop.f32.mrf.mxu0
    %6284 = vdwg.mxu0
    %6285 = vmatprep.subr.mxu0 0.0
    %v6286 = vand.u32 %v29, 4294901760
    %v6287 = vsub.f32 %v29, %v6286
    %6288 = vmatpush1.msra.mxu0 %v6287
    %6289 = vmatprep.subr.mxu0 0.0
    %v6290 = vand.u32 %v28, 4294901760
    %v6291 = vsub.f32 %v28, %v6290
    %6292 = vmatpush1.msra.mxu0 %v6291
    %6293 = vmatprep.subr.mxu0 0.0
    %v6294 = vand.u32 %v27, 4294901760
    %v6295 = vsub.f32 %v27, %v6294
    %6296 = vmatpush1.msra.mxu0 %v6295
    %6297 = vmatprep.subr.mxu0 0.0
    %v6298 = vand.u32 %v26, 4294901760
    %v6299 = vsub.f32 %v26, %v6298
    %6300 = vmatpush1.msra.mxu0 %v6299
    %6301 = vmatprep.subr.mxu0 0.0
    %v6302 = vand.u32 %v25, 4294901760
    %v6303 = vsub.f32 %v25, %v6302
    %6304 = vmatpush1.msra.mxu0 %v6303
    %6305 = vmatprep.subr.mxu0 0.0
    %v6306 = vand.u32 %v24, 4294901760
    %v6307 = vsub.f32 %v24, %v6306
    %6308 = vmatpush1.msra.mxu0 %v6307
    %6309 = vmatprep.subr.mxu0 0.0
    %v6310 = vand.u32 %v23, 4294901760
    %v6311 = vsub.f32 %v23, %v6310
    %6312 = vmatpush1.msra.mxu0 %v6311
    %6313 = vmatprep.subr.mxu0 0.0
    %v6314 = vand.u32 %v22, 4294901760
    %v6315 = vsub.f32 %v22, %v6314
    %6316 = vmatpush1.msra.mxu0 %v6315
    %6317 = vmatprep.subr.mxu0 0.0
    %v6318 = vand.u32 %v21, 4294901760
    %v6319 = vsub.f32 %v21, %v6318
    %6320 = vmatpush1.msra.mxu0 %v6319
    %6321 = vmatprep.subr.mxu0 0.0
    %v6322 = vand.u32 %v20, 4294901760
    %v6323 = vsub.f32 %v20, %v6322
    %6324 = vmatpush1.msra.mxu0 %v6323
    %6325 = vmatprep.subr.mxu0 0.0
    %v6326 = vand.u32 %v19, 4294901760
    %v6327 = vsub.f32 %v19, %v6326
    %6328 = vmatpush1.msra.mxu0 %v6327
    %6329 = vmatprep.subr.mxu0 0.0
    %v6330 = vand.u32 %v18, 4294901760
    %v6331 = vsub.f32 %v18, %v6330
    %6332 = vmatpush1.msra.mxu0 %v6331
    %6333 = vmatprep.subr.mxu0 0.0
    %v6334 = vand.u32 %v17, 4294901760
    %v6335 = vsub.f32 %v17, %v6334
    %6336 = vmatpush1.msra.mxu0 %v6335
    %6337 = vmatprep.subr.mxu0 0.0
    %v6338 = vand.u32 %v16, 4294901760
    %v6339 = vsub.f32 %v16, %v6338
    %6340 = vmatpush1.msra.mxu0 %v6339
    %6341 = vmatprep.subr.mxu0 0.0
    %v6342 = vand.u32 %v15, 4294901760
    %v6343 = vsub.f32 %v15, %v6342
    %6344 = vmatpush1.msra.mxu0 %v6343
    %6345 = vmatprep.subr.mxu0 0.0
    %v6346 = vand.u32 %v14, 4294901760
    %v6347 = vsub.f32 %v14, %v6346
    %6348 = vmatpush1.msra.mxu0 %v6347
    %6349 = vmatprep.subr.mxu0 0.0
    %6350 = vmatpush2.msra.mxu0 0.0
    %6351 = vmatprep.subr.mxu0 0.0
    %6352 = vmatpush2.msra.mxu0 0.0
    %6353 = vmatprep.subr.mxu0 0.0
    %6354 = vmatpush2.msra.mxu0 0.0
    %6355 = vmatprep.subr.mxu0 0.0
    %6356 = vmatpush2.msra.mxu0 0.0
    %6357 = vmatprep.subr.mxu0 0.0
    %6358 = vmatpush2.msra.mxu0 0.0
    %6359 = vmatprep.subr.mxu0 0.0
    %6360 = vmatpush2.msra.mxu0 0.0
    %6361 = vmatprep.subr.mxu0 0.0
    %6362 = vmatpush2.msra.mxu0 0.0
    %6363 = vmatprep.subr.mxu0 0.0
    %6364 = vmatpush2.msra.mxu0 0.0
    %6365 = vmatprep.subr.mxu0 0.0
    %6366 = vmatpush2.msra.mxu0 0.0
    %6367 = vmatprep.subr.mxu0 0.0
    %6368 = vmatpush2.msra.mxu0 0.0
    %6369 = vmatprep.subr.mxu0 0.0
    %6370 = vmatpush2.msra.mxu0 0.0
    %6371 = vmatprep.subr.mxu0 0.0
    %6372 = vmatpush2.msra.mxu0 0.0
    %6373 = vmatprep.subr.mxu0 0.0
    %6374 = vmatpush2.msra.mxu0 0.0
    %6375 = vmatprep.subr.mxu0 0.0
    %6376 = vmatpush2.msra.mxu0 0.0
    %6377 = vmatprep.subr.mxu0 0.0
    %6378 = vmatpush2.msra.mxu0 0.0
    %6379 = vmatprep.subr.mxu0 0.0
    %6380 = vmatpush2.msra.mxu0 0.0
    %6381 = vmatprep.mubr.f32.mxu0 0.0
    %v6382 = vand.u32 %v49, 4294901760
    %v6383 = vsub.f32 %v49, %v6382
    %6384 = vmatmul.mubr.f32.gmra.mxu0 %v6383
    %v6385 = vpop.f32.mrf.mxu0
    %v6386 = vadd.f32 %v6282, %v6385
    %v6387 = vpop.f32.mrf.mxu0
    %6388 = vdwg.mxu0
    %6389 = vmatprep.subr.mxu0 0.0
    %v6390 = vand.u32 %v29, 4294901760
    %6391 = vmatpush1.msra.mxu0 %v6390
    %6392 = vmatprep.subr.mxu0 0.0
    %v6393 = vand.u32 %v28, 4294901760
    %6394 = vmatpush1.msra.mxu0 %v6393
    %6395 = vmatprep.subr.mxu0 0.0
    %v6396 = vand.u32 %v27, 4294901760
    %6397 = vmatpush1.msra.mxu0 %v6396
    %6398 = vmatprep.subr.mxu0 0.0
    %v6399 = vand.u32 %v26, 4294901760
    %6400 = vmatpush1.msra.mxu0 %v6399
    %6401 = vmatprep.subr.mxu0 0.0
    %v6402 = vand.u32 %v25, 4294901760
    %6403 = vmatpush1.msra.mxu0 %v6402
    %6404 = vmatprep.subr.mxu0 0.0
    %v6405 = vand.u32 %v24, 4294901760
    %6406 = vmatpush1.msra.mxu0 %v6405
    %6407 = vmatprep.subr.mxu0 0.0
    %v6408 = vand.u32 %v23, 4294901760
    %6409 = vmatpush1.msra.mxu0 %v6408
    %6410 = vmatprep.subr.mxu0 0.0
    %v6411 = vand.u32 %v22, 4294901760
    %6412 = vmatpush1.msra.mxu0 %v6411
    %6413 = vmatprep.subr.mxu0 0.0
    %v6414 = vand.u32 %v21, 4294901760
    %6415 = vmatpush1.msra.mxu0 %v6414
    %6416 = vmatprep.subr.mxu0 0.0
    %v6417 = vand.u32 %v20, 4294901760
    %6418 = vmatpush1.msra.mxu0 %v6417
    %6419 = vmatprep.subr.mxu0 0.0
    %v6420 = vand.u32 %v19, 4294901760
    %6421 = vmatpush1.msra.mxu0 %v6420
    %6422 = vmatprep.subr.mxu0 0.0
    %v6423 = vand.u32 %v18, 4294901760
    %6424 = vmatpush1.msra.mxu0 %v6423
    %6425 = vmatprep.subr.mxu0 0.0
    %v6426 = vand.u32 %v17, 4294901760
    %6427 = vmatpush1.msra.mxu0 %v6426
    %6428 = vmatprep.subr.mxu0 0.0
    %v6429 = vand.u32 %v16, 4294901760
    %6430 = vmatpush1.msra.mxu0 %v6429
    %6431 = vmatprep.subr.mxu0 0.0
    %v6432 = vand.u32 %v15, 4294901760
    %6433 = vmatpush1.msra.mxu0 %v6432
    %6434 = vmatprep.subr.mxu0 0.0
    %v6435 = vand.u32 %v14, 4294901760
    %6436 = vmatpush1.msra.mxu0 %v6435
    %6437 = vmatprep.subr.mxu0 0.0
    %6438 = vmatpush2.msra.mxu0 0.0
    %6439 = vmatprep.subr.mxu0 0.0
    %6440 = vmatpush2.msra.mxu0 0.0
    %6441 = vmatprep.subr.mxu0 0.0
    %6442 = vmatpush2.msra.mxu0 0.0
    %6443 = vmatprep.subr.mxu0 0.0
    %6444 = vmatpush2.msra.mxu0 0.0
    %6445 = vmatprep.subr.mxu0 0.0
    %6446 = vmatpush2.msra.mxu0 0.0
    %6447 = vmatprep.subr.mxu0 0.0
    %6448 = vmatpush2.msra.mxu0 0.0
    %6449 = vmatprep.subr.mxu0 0.0
    %6450 = vmatpush2.msra.mxu0 0.0
    %6451 = vmatprep.subr.mxu0 0.0
    %6452 = vmatpush2.msra.mxu0 0.0
    %6453 = vmatprep.subr.mxu0 0.0
    %6454 = vmatpush2.msra.mxu0 0.0
    %6455 = vmatprep.subr.mxu0 0.0
    %6456 = vmatpush2.msra.mxu0 0.0
    %6457 = vmatprep.subr.mxu0 0.0
    %6458 = vmatpush2.msra.mxu0 0.0
    %6459 = vmatprep.subr.mxu0 0.0
    %6460 = vmatpush2.msra.mxu0 0.0
    %6461 = vmatprep.subr.mxu0 0.0
    %6462 = vmatpush2.msra.mxu0 0.0
    %6463 = vmatprep.subr.mxu0 0.0
    %6464 = vmatpush2.msra.mxu0 0.0
    %6465 = vmatprep.subr.mxu0 0.0
    %6466 = vmatpush2.msra.mxu0 0.0
    %6467 = vmatprep.subr.mxu0 0.0
    %6468 = vmatpush2.msra.mxu0 0.0
    %6469 = vmatprep.mubr.f32.mxu0 0.0
    %v6470 = vand.u32 %v49, 4294901760
    %v6471 = vsub.f32 %v49, %v6470
    %v6472 = vand.u32 %v6471, 4294901760
    %6473 = vmatmul.mubr.f32.gmra.mxu0 %v6472
    %v6474 = vpop.f32.mrf.mxu0
    %v6475 = vadd.f32 %v6386, %v6474
    %v6476 = vpop.f32.mrf.mxu0
    %6477 = vdwg.mxu0
    %6478 = vmatprep.subr.mxu0 0.0
    %v6479 = vand.u32 %v29, 4294901760
    %v6480 = vsub.f32 %v29, %v6479
    %v6481 = vand.u32 %v6480, 4294901760
    %6482 = vmatpush1.msra.mxu0 %v6481
    %6483 = vmatprep.subr.mxu0 0.0
    %v6484 = vand.u32 %v28, 4294901760
    %v6485 = vsub.f32 %v28, %v6484
    %v6486 = vand.u32 %v6485, 4294901760
    %6487 = vmatpush1.msra.mxu0 %v6486
    %6488 = vmatprep.subr.mxu0 0.0
    %v6489 = vand.u32 %v27, 4294901760
    %v6490 = vsub.f32 %v27, %v6489
    %v6491 = vand.u32 %v6490, 4294901760
    %6492 = vmatpush1.msra.mxu0 %v6491
    %6493 = vmatprep.subr.mxu0 0.0
    %v6494 = vand.u32 %v26, 4294901760
    %v6495 = vsub.f32 %v26, %v6494
    %v6496 = vand.u32 %v6495, 4294901760
    %6497 = vmatpush1.msra.mxu0 %v6496
    %6498 = vmatprep.subr.mxu0 0.0
    %v6499 = vand.u32 %v25, 4294901760
    %v6500 = vsub.f32 %v25, %v6499
    %v6501 = vand.u32 %v6500, 4294901760
    %6502 = vmatpush1.msra.mxu0 %v6501
    %6503 = vmatprep.subr.mxu0 0.0
    %v6504 = vand.u32 %v24, 4294901760
    %v6505 = vsub.f32 %v24, %v6504
    %v6506 = vand.u32 %v6505, 4294901760
    %6507 = vmatpush1.msra.mxu0 %v6506
    %6508 = vmatprep.subr.mxu0 0.0
    %v6509 = vand.u32 %v23, 4294901760
    %v6510 = vsub.f32 %v23, %v6509
    %v6511 = vand.u32 %v6510, 4294901760
    %6512 = vmatpush1.msra.mxu0 %v6511
    %6513 = vmatprep.subr.mxu0 0.0
    %v6514 = vand.u32 %v22, 4294901760
    %v6515 = vsub.f32 %v22, %v6514
    %v6516 = vand.u32 %v6515, 4294901760
    %6517 = vmatpush1.msra.mxu0 %v6516
    %6518 = vmatprep.subr.mxu0 0.0
    %v6519 = vand.u32 %v21, 4294901760
    %v6520 = vsub.f32 %v21, %v6519
    %v6521 = vand.u32 %v6520, 4294901760
    %6522 = vmatpush1.msra.mxu0 %v6521
    %6523 = vmatprep.subr.mxu0 0.0
    %v6524 = vand.u32 %v20, 4294901760
    %v6525 = vsub.f32 %v20, %v6524
    %v6526 = vand.u32 %v6525, 4294901760
    %6527 = vmatpush1.msra.mxu0 %v6526
    %6528 = vmatprep.subr.mxu0 0.0
    %v6529 = vand.u32 %v19, 4294901760
    %v6530 = vsub.f32 %v19, %v6529
    %v6531 = vand.u32 %v6530, 4294901760
    %6532 = vmatpush1.msra.mxu0 %v6531
    %6533 = vmatprep.subr.mxu0 0.0
    %v6534 = vand.u32 %v18, 4294901760
    %v6535 = vsub.f32 %v18, %v6534
    %v6536 = vand.u32 %v6535, 4294901760
    %6537 = vmatpush1.msra.mxu0 %v6536
    %6538 = vmatprep.subr.mxu0 0.0
    %v6539 = vand.u32 %v17, 4294901760
    %v6540 = vsub.f32 %v17, %v6539
    %v6541 = vand.u32 %v6540, 4294901760
    %6542 = vmatpush1.msra.mxu0 %v6541
    %6543 = vmatprep.subr.mxu0 0.0
    %v6544 = vand.u32 %v16, 4294901760
    %v6545 = vsub.f32 %v16, %v6544
    %v6546 = vand.u32 %v6545, 4294901760
    %6547 = vmatpush1.msra.mxu0 %v6546
    %6548 = vmatprep.subr.mxu0 0.0
    %v6549 = vand.u32 %v15, 4294901760
    %v6550 = vsub.f32 %v15, %v6549
    %v6551 = vand.u32 %v6550, 4294901760
    %6552 = vmatpush1.msra.mxu0 %v6551
    %6553 = vmatprep.subr.mxu0 0.0
    %v6554 = vand.u32 %v14, 4294901760
    %v6555 = vsub.f32 %v14, %v6554
    %v6556 = vand.u32 %v6555, 4294901760
    %6557 = vmatpush1.msra.mxu0 %v6556
    %6558 = vmatprep.subr.mxu0 0.0
    %6559 = vmatpush2.msra.mxu0 0.0
    %6560 = vmatprep.subr.mxu0 0.0
    %6561 = vmatpush2.msra.mxu0 0.0
    %6562 = vmatprep.subr.mxu0 0.0
    %6563 = vmatpush2.msra.mxu0 0.0
    %6564 = vmatprep.subr.mxu0 0.0
    %6565 = vmatpush2.msra.mxu0 0.0
    %6566 = vmatprep.subr.mxu0 0.0
    %6567 = vmatpush2.msra.mxu0 0.0
    %6568 = vmatprep.subr.mxu0 0.0
    %6569 = vmatpush2.msra.mxu0 0.0
    %6570 = vmatprep.subr.mxu0 0.0
    %6571 = vmatpush2.msra.mxu0 0.0
    %6572 = vmatprep.subr.mxu0 0.0
    %6573 = vmatpush2.msra.mxu0 0.0
    %6574 = vmatprep.subr.mxu0 0.0
    %6575 = vmatpush2.msra.mxu0 0.0
    %6576 = vmatprep.subr.mxu0 0.0
    %6577 = vmatpush2.msra.mxu0 0.0
    %6578 = vmatprep.subr.mxu0 0.0
    %6579 = vmatpush2.msra.mxu0 0.0
    %6580 = vmatprep.subr.mxu0 0.0
    %6581 = vmatpush2.msra.mxu0 0.0
    %6582 = vmatprep.subr.mxu0 0.0
    %6583 = vmatpush2.msra.mxu0 0.0
    %6584 = vmatprep.subr.mxu0 0.0
    %6585 = vmatpush2.msra.mxu0 0.0
    %6586 = vmatprep.subr.mxu0 0.0
    %6587 = vmatpush2.msra.mxu0 0.0
    %6588 = vmatprep.subr.mxu0 0.0
    %6589 = vmatpush2.msra.mxu0 0.0
    %6590 = vmatprep.mubr.f32.mxu0 0.0
    %v6591 = vand.u32 %v49, 4294901760
    %6592 = vmatmul.mubr.f32.gmra.mxu0 %v6591
    %v6593 = vpop.f32.mrf.mxu0
    %v6594 = vadd.f32 %v6475, %v6593
    %v6595 = vpop.f32.mrf.mxu0
    %6596 = vdwg.mxu0
    %6597 = vmatprep.subr.mxu0 0.0
    %v6598 = vand.u32 %v29, 4294901760
    %6599 = vmatpush1.msra.mxu0 %v6598
    %6600 = vmatprep.subr.mxu0 0.0
    %v6601 = vand.u32 %v28, 4294901760
    %6602 = vmatpush1.msra.mxu0 %v6601
    %6603 = vmatprep.subr.mxu0 0.0
    %v6604 = vand.u32 %v27, 4294901760
    %6605 = vmatpush1.msra.mxu0 %v6604
    %6606 = vmatprep.subr.mxu0 0.0
    %v6607 = vand.u32 %v26, 4294901760
    %6608 = vmatpush1.msra.mxu0 %v6607
    %6609 = vmatprep.subr.mxu0 0.0
    %v6610 = vand.u32 %v25, 4294901760
    %6611 = vmatpush1.msra.mxu0 %v6610
    %6612 = vmatprep.subr.mxu0 0.0
    %v6613 = vand.u32 %v24, 4294901760
    %6614 = vmatpush1.msra.mxu0 %v6613
    %6615 = vmatprep.subr.mxu0 0.0
    %v6616 = vand.u32 %v23, 4294901760
    %6617 = vmatpush1.msra.mxu0 %v6616
    %6618 = vmatprep.subr.mxu0 0.0
    %v6619 = vand.u32 %v22, 4294901760
    %6620 = vmatpush1.msra.mxu0 %v6619
    %6621 = vmatprep.subr.mxu0 0.0
    %v6622 = vand.u32 %v21, 4294901760
    %6623 = vmatpush1.msra.mxu0 %v6622
    %6624 = vmatprep.subr.mxu0 0.0
    %v6625 = vand.u32 %v20, 4294901760
    %6626 = vmatpush1.msra.mxu0 %v6625
    %6627 = vmatprep.subr.mxu0 0.0
    %v6628 = vand.u32 %v19, 4294901760
    %6629 = vmatpush1.msra.mxu0 %v6628
    %6630 = vmatprep.subr.mxu0 0.0
    %v6631 = vand.u32 %v18, 4294901760
    %6632 = vmatpush1.msra.mxu0 %v6631
    %6633 = vmatprep.subr.mxu0 0.0
    %v6634 = vand.u32 %v17, 4294901760
    %6635 = vmatpush1.msra.mxu0 %v6634
    %6636 = vmatprep.subr.mxu0 0.0
    %v6637 = vand.u32 %v16, 4294901760
    %6638 = vmatpush1.msra.mxu0 %v6637
    %6639 = vmatprep.subr.mxu0 0.0
    %v6640 = vand.u32 %v15, 4294901760
    %6641 = vmatpush1.msra.mxu0 %v6640
    %6642 = vmatprep.subr.mxu0 0.0
    %v6643 = vand.u32 %v14, 4294901760
    %6644 = vmatpush1.msra.mxu0 %v6643
    %6645 = vmatprep.subr.mxu0 0.0
    %6646 = vmatpush2.msra.mxu0 0.0
    %6647 = vmatprep.subr.mxu0 0.0
    %6648 = vmatpush2.msra.mxu0 0.0
    %6649 = vmatprep.subr.mxu0 0.0
    %6650 = vmatpush2.msra.mxu0 0.0
    %6651 = vmatprep.subr.mxu0 0.0
    %6652 = vmatpush2.msra.mxu0 0.0
    %6653 = vmatprep.subr.mxu0 0.0
    %6654 = vmatpush2.msra.mxu0 0.0
    %6655 = vmatprep.subr.mxu0 0.0
    %6656 = vmatpush2.msra.mxu0 0.0
    %6657 = vmatprep.subr.mxu0 0.0
    %6658 = vmatpush2.msra.mxu0 0.0
    %6659 = vmatprep.subr.mxu0 0.0
    %6660 = vmatpush2.msra.mxu0 0.0
    %6661 = vmatprep.subr.mxu0 0.0
    %6662 = vmatpush2.msra.mxu0 0.0
    %6663 = vmatprep.subr.mxu0 0.0
    %6664 = vmatpush2.msra.mxu0 0.0
    %6665 = vmatprep.subr.mxu0 0.0
    %6666 = vmatpush2.msra.mxu0 0.0
    %6667 = vmatprep.subr.mxu0 0.0
    %6668 = vmatpush2.msra.mxu0 0.0
    %6669 = vmatprep.subr.mxu0 0.0
    %6670 = vmatpush2.msra.mxu0 0.0
    %6671 = vmatprep.subr.mxu0 0.0
    %6672 = vmatpush2.msra.mxu0 0.0
    %6673 = vmatprep.subr.mxu0 0.0
    %6674 = vmatpush2.msra.mxu0 0.0
    %6675 = vmatprep.subr.mxu0 0.0
    %6676 = vmatpush2.msra.mxu0 0.0
    %6677 = vmatprep.mubr.f32.mxu0 0.0
    %v6678 = vand.u32 %v49, 4294901760
    %6679 = vmatmul.mubr.f32.gmra.mxu0 %v6678
    %v6680 = vpop.f32.mrf.mxu0
    %v6681 = vadd.f32 %v6594, %v6680
    %v6682 = vpop.f32.mrf.mxu0
    %6683 = vdwg.mxu0
    %v6684 = vand.u32 2147483647, %v6681
    %vm6685 = vcmp.le.f32.partialorder %v6684, 0.7853982
    %vm6686 = vcmp.lt.s32.totalorder %v6681, 0
    %v6687 = vand.u32 %v6681, 2139095040
    %v6688 = vshrl.u32 %v6687, 23
    %v6689 = vsub.s32 %v6688, 127
    %v6690 = vand.u32 2147483647, %v6681
    %v6691 = vand.u32 %v6690, 8388607
    %v6692 = vor.u32 %v6691, 8388608
    %v6693 = vsub.s32 0, %v6692
    %v6694 = vadd.s32 %v6689, 1
    %vm6695 = vcmp.gt.s32.totalorder %v6694, 0
    %v6696 = vsel %vm6695, %v6694, 0
    %v6697 = vshrl.u32 %v6696, 5
    %v6698 = vand.u32 %v6696, 31
    %v6699 = vsub.s32 32, %v6698
    %v6700 = vshrl.u32 683565275, %v6699
    %v6701 = vshll.u32 683565275, %v6698
    %v6702 = vshrl.u32 2475754826, %v6699
    %v6703 = vor.u32 %v6701, %v6702
    %v6704 = vshll.u32 2475754826, %v6698
    %v6705 = vshrl.u32 2131351028, %v6699
    %v6706 = vor.u32 %v6704, %v6705
    %v6707 = vshll.u32 2131351028, %v6698
    %v6708 = vshrl.u32 2102212464, %v6699
    %v6709 = vor.u32 %v6707, %v6708
    %v6710 = vshll.u32 2102212464, %v6698
    %v6711 = vshrl.u32 920167782, %v6699
    %v6712 = vor.u32 %v6710, %v6711
    %v6713 = vshll.u32 920167782, %v6698
    %v6714 = vshrl.u32 1326507024, %v6699
    %v6715 = vor.u32 %v6713, %v6714
    %vm6716 = vcmp.lt.s32.totalorder %v6697, 1
    %vm6717 = vcmp.lt.s32.totalorder %v6697, 2
    %vm6718 = vcmp.lt.s32.totalorder %v6697, 3
    %vm6719 = vcmp.lt.s32.totalorder %v6697, 4
    %v6720 = vsel %vm6716, %v6700, %v6703
    %v6721 = vsel %vm6719, %v6709, 2102212464
    %v6722 = vsel %vm6718, %v6706, %v6721
    %v6723 = vsel %vm6717, %v6720, %v6722
    %v6724 = vsel %vm6716, %v6703, %v6706
    %v6725 = vsel %vm6719, %v6712, 920167782
    %v6726 = vsel %vm6718, %v6709, %v6725
    %v6727 = vsel %vm6717, %v6724, %v6726
    %v6728 = vsel %vm6716, %v6706, %v6709
    %v6729 = vsel %vm6719, %v6715, 1326507024
    %v6730 = vsel %vm6718, %v6712, %v6729
    %v6731 = vsel %vm6717, %v6728, %v6730
    %v6732 = vshll.u32 %v6692, 8
    %v6733 = vmul.u32.u64.compose %v6732, %v6731
    %v6734 = vextract.low.u32 %v6733
    %v6735 = vextract.high.u32 %v6733
    %v6736 = vmul.u32.u64.compose %v6732, %v6727
    %v6737 = vextract.low.u32 %v6736
    %v6738 = vextract.high.u32 %v6736
    %v6739 = vmul.u32 %v6732, %v6723
    %v6740 = vadd.s32 %v6735, %v6737
    %vm6741 = vc.u32 %v6735, %v6737
    %v6742 = vadd.s32 %v6738, 1
    %v6743 = vsel %vm6741, %v6742, %v6738
    %v6744 = vadd.s32 %v6739, %v6743
    %v6745 = vadd.s32 %v6744, 536870912
    %v6746 = vshrl.u32 %v6745, 30
    %v6747 = vshll.u32 %v6746, 30
    %v6748 = vsub.s32 %v6744, %v6747
    %vm6749 = vcmp.lt.s32.totalorder %v6748, 0
    %v6750 = vsub.s32 0, %v6748
    %v6751 = vsel %vm6749, %v6750, %v6748
    %v6752 = vclz %v6751
    %v6753 = vsub.s32 %v6752, 2
    %vm6754 = vcmp.gt.s32.totalorder 0, %v6753
    %v6755 = vsel %vm6754, 0, %v6753
    %v6756 = vsub.s32 32, %v6755
    %v6757 = vshll.u32 %v6748, %v6755
    %v6758 = vshrl.u32 %v6740, %v6756
    %v6759 = vor.u32 %v6757, %v6758
    %v6760 = vsub.s32 4294967266, %v6755
    %v6761 = vadd.s32 %v6760, 127
    %v6762 = vshll.u32 %v6761, 23
    %v6763 = vor.u32 4788187, %v6762
    %v6764 = vand.u32 2147483647, %v6763
    %v6766 = vcvt.s32.f32 %v6759
    %v6767 = vmul.f32 %v6766, %v6764
    %v6768 = vxor.u32 %v6767, 2147483648
    %v6769 = vsel %vm6686, %v6768, %v6767
    %v6770 = vsub.s32 4, %v6746
    %v6771 = vsel %vm6686, %v6770, %v6746
    %v6772 = vsel %vm6685, %v6681, %v6769
    %v6773 = vsel %vm6685, 0, %v6771
    %v6774 = vcosq.f32.pop %v6772
    %v6775 = vsinq.f32.pop %v6772
    %vm6776 = vweird.f32 %v6681
    %v6777 = vadd.s32 %v6773, 3
    %v6778 = vand.u32 %v6777, 3
    %vm6779 = vcmp.lt.s32.totalorder %v6778, 2
    %vm6780 = vcmp.eq.s32.totalorder %v6778, 0
    %v6781 = vxor.u32 %v6775, 2147483648
    %v6782 = vsel %vm6780, %v6774, %v6781
    %vm6783 = vcmp.eq.s32.totalorder %v6778, 2
    %v6784 = vxor.u32 %v6774, 2147483648
    %v6785 = vsel %vm6783, %v6784, %v6775
    %v6786 = vsel %vm6779, %v6782, %v6785
    %v6787 = vsel %vm6776, nan, %v6786
    %v6788 = vmul.f32 %v6787, 0.016835017
    %v6789 = vadd.f32 %v49, %v6788
    %6790 = vmatprep.subr.mxu0 0.0
    %v6791 = vand.u32 %v29, 4294901760
    %6792 = vmatpush1.msra.mxu0 %v6791
    %6793 = vmatprep.subr.mxu0 0.0
    %v6794 = vand.u32 %v28, 4294901760
    %6795 = vmatpush1.msra.mxu0 %v6794
    %6796 = vmatprep.subr.mxu0 0.0
    %v6797 = vand.u32 %v27, 4294901760
    %6798 = vmatpush1.msra.mxu0 %v6797
    %6799 = vmatprep.subr.mxu0 0.0
    %v6800 = vand.u32 %v26, 4294901760
    %6801 = vmatpush1.msra.mxu0 %v6800
    %6802 = vmatprep.subr.mxu0 0.0
    %v6803 = vand.u32 %v25, 4294901760
    %6804 = vmatpush1.msra.mxu0 %v6803
    %6805 = vmatprep.subr.mxu0 0.0
    %v6806 = vand.u32 %v24, 4294901760
    %6807 = vmatpush1.msra.mxu0 %v6806
    %6808 = vmatprep.subr.mxu0 0.0
    %v6809 = vand.u32 %v23, 4294901760
    %6810 = vmatpush1.msra.mxu0 %v6809
    %6811 = vmatprep.subr.mxu0 0.0
    %v6812 = vand.u32 %v22, 4294901760
    %6813 = vmatpush1.msra.mxu0 %v6812
    %6814 = vmatprep.subr.mxu0 0.0
    %v6815 = vand.u32 %v21, 4294901760
    %6816 = vmatpush1.msra.mxu0 %v6815
    %6817 = vmatprep.subr.mxu0 0.0
    %v6818 = vand.u32 %v20, 4294901760
    %6819 = vmatpush1.msra.mxu0 %v6818
    %6820 = vmatprep.subr.mxu0 0.0
    %v6821 = vand.u32 %v19, 4294901760
    %6822 = vmatpush1.msra.mxu0 %v6821
    %6823 = vmatprep.subr.mxu0 0.0
    %v6824 = vand.u32 %v18, 4294901760
    %6825 = vmatpush1.msra.mxu0 %v6824
    %6826 = vmatprep.subr.mxu0 0.0
    %v6827 = vand.u32 %v17, 4294901760
    %6828 = vmatpush1.msra.mxu0 %v6827
    %6829 = vmatprep.subr.mxu0 0.0
    %v6830 = vand.u32 %v16, 4294901760
    %6831 = vmatpush1.msra.mxu0 %v6830
    %6832 = vmatprep.subr.mxu0 0.0
    %v6833 = vand.u32 %v15, 4294901760
    %6834 = vmatpush1.msra.mxu0 %v6833
    %6835 = vmatprep.subr.mxu0 0.0
    %v6836 = vand.u32 %v14, 4294901760
    %6837 = vmatpush1.msra.mxu0 %v6836
    %6838 = vmatprep.subr.mxu0 0.0
    %6839 = vmatpush2.msra.mxu0 0.0
    %6840 = vmatprep.subr.mxu0 0.0
    %6841 = vmatpush2.msra.mxu0 0.0
    %6842 = vmatprep.subr.mxu0 0.0
    %6843 = vmatpush2.msra.mxu0 0.0
    %6844 = vmatprep.subr.mxu0 0.0
    %6845 = vmatpush2.msra.mxu0 0.0
    %6846 = vmatprep.subr.mxu0 0.0
    %6847 = vmatpush2.msra.mxu0 0.0
    %6848 = vmatprep.subr.mxu0 0.0
    %6849 = vmatpush2.msra.mxu0 0.0
    %6850 = vmatprep.subr.mxu0 0.0
    %6851 = vmatpush2.msra.mxu0 0.0
    %6852 = vmatprep.subr.mxu0 0.0
    %6853 = vmatpush2.msra.mxu0 0.0
    %6854 = vmatprep.subr.mxu0 0.0
    %6855 = vmatpush2.msra.mxu0 0.0
    %6856 = vmatprep.subr.mxu0 0.0
    %6857 = vmatpush2.msra.mxu0 0.0
    %6858 = vmatprep.subr.mxu0 0.0
    %6859 = vmatpush2.msra.mxu0 0.0
    %6860 = vmatprep.subr.mxu0 0.0
    %6861 = vmatpush2.msra.mxu0 0.0
    %6862 = vmatprep.subr.mxu0 0.0
    %6863 = vmatpush2.msra.mxu0 0.0
    %6864 = vmatprep.subr.mxu0 0.0
    %6865 = vmatpush2.msra.mxu0 0.0
    %6866 = vmatprep.subr.mxu0 0.0
    %6867 = vmatpush2.msra.mxu0 0.0
    %6868 = vmatprep.subr.mxu0 0.0
    %6869 = vmatpush2.msra.mxu0 0.0
    %6870 = vmatprep.mubr.f32.mxu0 0.0
    %v6871 = vand.u32 %v6789, 4294901760
    %v6872 = vsub.f32 %v6789, %v6871
    %v6873 = vand.u32 %v6872, 4294901760
    %v6874 = vsub.f32 %v6872, %v6873
    %v6875 = vand.u32 %v6874, 4294901760
    %6876 = vmatmul.mubr.f32.gmra.mxu0 %v6875
    %v6877 = vpop.f32.mrf.mxu0
    %v6878 = vadd.f32 %v35, %v6877
    %v6879 = vpop.f32.mrf.mxu0
    %6880 = vdwg.mxu0
    %6881 = vmatprep.subr.mxu0 0.0
    %v6882 = vand.u32 %v29, 4294901760
    %v6883 = vsub.f32 %v29, %v6882
    %v6884 = vand.u32 %v6883, 4294901760
    %v6885 = vsub.f32 %v6883, %v6884
    %v6886 = vand.u32 %v6885, 4294901760
    %6887 = vmatpush1.msra.mxu0 %v6886
    %6888 = vmatprep.subr.mxu0 0.0
    %v6889 = vand.u32 %v28, 4294901760
    %v6890 = vsub.f32 %v28, %v6889
    %v6891 = vand.u32 %v6890, 4294901760
    %v6892 = vsub.f32 %v6890, %v6891
    %v6893 = vand.u32 %v6892, 4294901760
    %6894 = vmatpush1.msra.mxu0 %v6893
    %6895 = vmatprep.subr.mxu0 0.0
    %v6896 = vand.u32 %v27, 4294901760
    %v6897 = vsub.f32 %v27, %v6896
    %v6898 = vand.u32 %v6897, 4294901760
    %v6899 = vsub.f32 %v6897, %v6898
    %v6900 = vand.u32 %v6899, 4294901760
    %6901 = vmatpush1.msra.mxu0 %v6900
    %6902 = vmatprep.subr.mxu0 0.0
    %v6903 = vand.u32 %v26, 4294901760
    %v6904 = vsub.f32 %v26, %v6903
    %v6905 = vand.u32 %v6904, 4294901760
    %v6906 = vsub.f32 %v6904, %v6905
    %v6907 = vand.u32 %v6906, 4294901760
    %6908 = vmatpush1.msra.mxu0 %v6907
    %6909 = vmatprep.subr.mxu0 0.0
    %v6910 = vand.u32 %v25, 4294901760
    %v6911 = vsub.f32 %v25, %v6910
    %v6912 = vand.u32 %v6911, 4294901760
    %v6913 = vsub.f32 %v6911, %v6912
    %v6914 = vand.u32 %v6913, 4294901760
    %6915 = vmatpush1.msra.mxu0 %v6914
    %6916 = vmatprep.subr.mxu0 0.0
    %v6917 = vand.u32 %v24, 4294901760
    %v6918 = vsub.f32 %v24, %v6917
    %v6919 = vand.u32 %v6918, 4294901760
    %v6920 = vsub.f32 %v6918, %v6919
    %v6921 = vand.u32 %v6920, 4294901760
    %6922 = vmatpush1.msra.mxu0 %v6921
    %6923 = vmatprep.subr.mxu0 0.0
    %v6924 = vand.u32 %v23, 4294901760
    %v6925 = vsub.f32 %v23, %v6924
    %v6926 = vand.u32 %v6925, 4294901760
    %v6927 = vsub.f32 %v6925, %v6926
    %v6928 = vand.u32 %v6927, 4294901760
    %6929 = vmatpush1.msra.mxu0 %v6928
    %6930 = vmatprep.subr.mxu0 0.0
    %v6931 = vand.u32 %v22, 4294901760
    %v6932 = vsub.f32 %v22, %v6931
    %v6933 = vand.u32 %v6932, 4294901760
    %v6934 = vsub.f32 %v6932, %v6933
    %v6935 = vand.u32 %v6934, 4294901760
    %6936 = vmatpush1.msra.mxu0 %v6935
    %6937 = vmatprep.subr.mxu0 0.0
    %v6938 = vand.u32 %v21, 4294901760
    %v6939 = vsub.f32 %v21, %v6938
    %v6940 = vand.u32 %v6939, 4294901760
    %v6941 = vsub.f32 %v6939, %v6940
    %v6942 = vand.u32 %v6941, 4294901760
    %6943 = vmatpush1.msra.mxu0 %v6942
    %6944 = vmatprep.subr.mxu0 0.0
    %v6945 = vand.u32 %v20, 4294901760
    %v6946 = vsub.f32 %v20, %v6945
    %v6947 = vand.u32 %v6946, 4294901760
    %v6948 = vsub.f32 %v6946, %v6947
    %v6949 = vand.u32 %v6948, 4294901760
    %6950 = vmatpush1.msra.mxu0 %v6949
    %6951 = vmatprep.subr.mxu0 0.0
    %v6952 = vand.u32 %v19, 4294901760
    %v6953 = vsub.f32 %v19, %v6952
    %v6954 = vand.u32 %v6953, 4294901760
    %v6955 = vsub.f32 %v6953, %v6954
    %v6956 = vand.u32 %v6955, 4294901760
    %6957 = vmatpush1.msra.mxu0 %v6956
    %6958 = vmatprep.subr.mxu0 0.0
    %v6959 = vand.u32 %v18, 4294901760
    %v6960 = vsub.f32 %v18, %v6959
    %v6961 = vand.u32 %v6960, 4294901760
    %v6962 = vsub.f32 %v6960, %v6961
    %v6963 = vand.u32 %v6962, 4294901760
    %6964 = vmatpush1.msra.mxu0 %v6963
    %6965 = vmatprep.subr.mxu0 0.0
    %v6966 = vand.u32 %v17, 4294901760
    %v6967 = vsub.f32 %v17, %v6966
    %v6968 = vand.u32 %v6967, 4294901760
    %v6969 = vsub.f32 %v6967, %v6968
    %v6970 = vand.u32 %v6969, 4294901760
    %6971 = vmatpush1.msra.mxu0 %v6970
    %6972 = vmatprep.subr.mxu0 0.0
    %v6973 = vand.u32 %v16, 4294901760
    %v6974 = vsub.f32 %v16, %v6973
    %v6975 = vand.u32 %v6974, 4294901760
    %v6976 = vsub.f32 %v6974, %v6975
    %v6977 = vand.u32 %v6976, 4294901760
    %6978 = vmatpush1.msra.mxu0 %v6977
    %6979 = vmatprep.subr.mxu0 0.0
    %v6980 = vand.u32 %v15, 4294901760
    %v6981 = vsub.f32 %v15, %v6980
    %v6982 = vand.u32 %v6981, 4294901760
    %v6983 = vsub.f32 %v6981, %v6982
    %v6984 = vand.u32 %v6983, 4294901760
    %6985 = vmatpush1.msra.mxu0 %v6984
    %6986 = vmatprep.subr.mxu0 0.0
    %v6987 = vand.u32 %v14, 4294901760
    %v6988 = vsub.f32 %v14, %v6987
    %v6989 = vand.u32 %v6988, 4294901760
    %v6990 = vsub.f32 %v6988, %v6989
    %v6991 = vand.u32 %v6990, 4294901760
    %6992 = vmatpush1.msra.mxu0 %v6991
    %6993 = vmatprep.subr.mxu0 0.0
    %6994 = vmatpush2.msra.mxu0 0.0
    %6995 = vmatprep.subr.mxu0 0.0
    %6996 = vmatpush2.msra.mxu0 0.0
    %6997 = vmatprep.subr.mxu0 0.0
    %6998 = vmatpush2.msra.mxu0 0.0
    %6999 = vmatprep.subr.mxu0 0.0
    %7000 = vmatpush2.msra.mxu0 0.0
    %7001 = vmatprep.subr.mxu0 0.0
    %7002 = vmatpush2.msra.mxu0 0.0
    %7003 = vmatprep.subr.mxu0 0.0
    %7004 = vmatpush2.msra.mxu0 0.0
    %7005 = vmatprep.subr.mxu0 0.0
    %7006 = vmatpush2.msra.mxu0 0.0
    %7007 = vmatprep.subr.mxu0 0.0
    %7008 = vmatpush2.msra.mxu0 0.0
    %7009 = vmatprep.subr.mxu0 0.0
    %7010 = vmatpush2.msra.mxu0 0.0
    %7011 = vmatprep.subr.mxu0 0.0
    %7012 = vmatpush2.msra.mxu0 0.0
    %7013 = vmatprep.subr.mxu0 0.0
    %7014 = vmatpush2.msra.mxu0 0.0
    %7015 = vmatprep.subr.mxu0 0.0
    %7016 = vmatpush2.msra.mxu0 0.0
    %7017 = vmatprep.subr.mxu0 0.0
    %7018 = vmatpush2.msra.mxu0 0.0
    %7019 = vmatprep.subr.mxu0 0.0
    %7020 = vmatpush2.msra.mxu0 0.0
    %7021 = vmatprep.subr.mxu0 0.0
    %7022 = vmatpush2.msra.mxu0 0.0
    %7023 = vmatprep.subr.mxu0 0.0
    %7024 = vmatpush2.msra.mxu0 0.0
    %7025 = vmatprep.mubr.f32.mxu0 0.0
    %v7026 = vand.u32 %v6789, 4294901760
    %7027 = vmatmul.mubr.f32.gmra.mxu0 %v7026
    %v7028 = vpop.f32.mrf.mxu0
    %v7029 = vadd.f32 %v6878, %v7028
    %v7030 = vpop.f32.mrf.mxu0
    %7031 = vdwg.mxu0
    %7032 = vmatprep.subr.mxu0 0.0
    %v7033 = vand.u32 %v29, 4294901760
    %v7034 = vsub.f32 %v29, %v7033
    %7035 = vmatpush1.msra.mxu0 %v7034
    %7036 = vmatprep.subr.mxu0 0.0
    %v7037 = vand.u32 %v28, 4294901760
    %v7038 = vsub.f32 %v28, %v7037
    %7039 = vmatpush1.msra.mxu0 %v7038
    %7040 = vmatprep.subr.mxu0 0.0
    %v7041 = vand.u32 %v27, 4294901760
    %v7042 = vsub.f32 %v27, %v7041
    %7043 = vmatpush1.msra.mxu0 %v7042
    %7044 = vmatprep.subr.mxu0 0.0
    %v7045 = vand.u32 %v26, 4294901760
    %v7046 = vsub.f32 %v26, %v7045
    %7047 = vmatpush1.msra.mxu0 %v7046
    %7048 = vmatprep.subr.mxu0 0.0
    %v7049 = vand.u32 %v25, 4294901760
    %v7050 = vsub.f32 %v25, %v7049
    %7051 = vmatpush1.msra.mxu0 %v7050
    %7052 = vmatprep.subr.mxu0 0.0
    %v7053 = vand.u32 %v24, 4294901760
    %v7054 = vsub.f32 %v24, %v7053
    %7055 = vmatpush1.msra.mxu0 %v7054
    %7056 = vmatprep.subr.mxu0 0.0
    %v7057 = vand.u32 %v23, 4294901760
    %v7058 = vsub.f32 %v23, %v7057
    %7059 = vmatpush1.msra.mxu0 %v7058
    %7060 = vmatprep.subr.mxu0 0.0
    %v7061 = vand.u32 %v22, 4294901760
    %v7062 = vsub.f32 %v22, %v7061
    %7063 = vmatpush1.msra.mxu0 %v7062
    %7064 = vmatprep.subr.mxu0 0.0
    %v7065 = vand.u32 %v21, 4294901760
    %v7066 = vsub.f32 %v21, %v7065
    %7067 = vmatpush1.msra.mxu0 %v7066
    %7068 = vmatprep.subr.mxu0 0.0
    %v7069 = vand.u32 %v20, 4294901760
    %v7070 = vsub.f32 %v20, %v7069
    %7071 = vmatpush1.msra.mxu0 %v7070
    %7072 = vmatprep.subr.mxu0 0.0
    %v7073 = vand.u32 %v19, 4294901760
    %v7074 = vsub.f32 %v19, %v7073
    %7075 = vmatpush1.msra.mxu0 %v7074
    %7076 = vmatprep.subr.mxu0 0.0
    %v7077 = vand.u32 %v18, 4294901760
    %v7078 = vsub.f32 %v18, %v7077
    %7079 = vmatpush1.msra.mxu0 %v7078
    %7080 = vmatprep.subr.mxu0 0.0
    %v7081 = vand.u32 %v17, 4294901760
    %v7082 = vsub.f32 %v17, %v7081
    %7083 = vmatpush1.msra.mxu0 %v7082
    %7084 = vmatprep.subr.mxu0 0.0
    %v7085 = vand.u32 %v16, 4294901760
    %v7086 = vsub.f32 %v16, %v7085
    %7087 = vmatpush1.msra.mxu0 %v7086
    %7088 = vmatprep.subr.mxu0 0.0
    %v7089 = vand.u32 %v15, 4294901760
    %v7090 = vsub.f32 %v15, %v7089
    %7091 = vmatpush1.msra.mxu0 %v7090
    %7092 = vmatprep.subr.mxu0 0.0
    %v7093 = vand.u32 %v14, 4294901760
    %v7094 = vsub.f32 %v14, %v7093
    %7095 = vmatpush1.msra.mxu0 %v7094
    %7096 = vmatprep.subr.mxu0 0.0
    %7097 = vmatpush2.msra.mxu0 0.0
    %7098 = vmatprep.subr.mxu0 0.0
    %7099 = vmatpush2.msra.mxu0 0.0
    %7100 = vmatprep.subr.mxu0 0.0
    %7101 = vmatpush2.msra.mxu0 0.0
    %7102 = vmatprep.subr.mxu0 0.0
    %7103 = vmatpush2.msra.mxu0 0.0
    %7104 = vmatprep.subr.mxu0 0.0
    %7105 = vmatpush2.msra.mxu0 0.0
    %7106 = vmatprep.subr.mxu0 0.0
    %7107 = vmatpush2.msra.mxu0 0.0
    %7108 = vmatprep.subr.mxu0 0.0
    %7109 = vmatpush2.msra.mxu0 0.0
    %7110 = vmatprep.subr.mxu0 0.0
    %7111 = vmatpush2.msra.mxu0 0.0
    %7112 = vmatprep.subr.mxu0 0.0
    %7113 = vmatpush2.msra.mxu0 0.0
    %7114 = vmatprep.subr.mxu0 0.0
    %7115 = vmatpush2.msra.mxu0 0.0
    %7116 = vmatprep.subr.mxu0 0.0
    %7117 = vmatpush2.msra.mxu0 0.0
    %7118 = vmatprep.subr.mxu0 0.0
    %7119 = vmatpush2.msra.mxu0 0.0
    %7120 = vmatprep.subr.mxu0 0.0
    %7121 = vmatpush2.msra.mxu0 0.0
    %7122 = vmatprep.subr.mxu0 0.0
    %7123 = vmatpush2.msra.mxu0 0.0
    %7124 = vmatprep.subr.mxu0 0.0
    %7125 = vmatpush2.msra.mxu0 0.0
    %7126 = vmatprep.subr.mxu0 0.0
    %7127 = vmatpush2.msra.mxu0 0.0
    %7128 = vmatprep.mubr.f32.mxu0 0.0
    %v7129 = vand.u32 %v6789, 4294901760
    %v7130 = vsub.f32 %v6789, %v7129
    %7131 = vmatmul.mubr.f32.gmra.mxu0 %v7130
    %v7132 = vpop.f32.mrf.mxu0
    %v7133 = vadd.f32 %v7029, %v7132
    %v7134 = vpop.f32.mrf.mxu0
    %7135 = vdwg.mxu0
    %7136 = vmatprep.subr.mxu0 0.0
    %v7137 = vand.u32 %v29, 4294901760
    %7138 = vmatpush1.msra.mxu0 %v7137
    %7139 = vmatprep.subr.mxu0 0.0
    %v7140 = vand.u32 %v28, 4294901760
    %7141 = vmatpush1.msra.mxu0 %v7140
    %7142 = vmatprep.subr.mxu0 0.0
    %v7143 = vand.u32 %v27, 4294901760
    %7144 = vmatpush1.msra.mxu0 %v7143
    %7145 = vmatprep.subr.mxu0 0.0
    %v7146 = vand.u32 %v26, 4294901760
    %7147 = vmatpush1.msra.mxu0 %v7146
    %7148 = vmatprep.subr.mxu0 0.0
    %v7149 = vand.u32 %v25, 4294901760
    %7150 = vmatpush1.msra.mxu0 %v7149
    %7151 = vmatprep.subr.mxu0 0.0
    %v7152 = vand.u32 %v24, 4294901760
    %7153 = vmatpush1.msra.mxu0 %v7152
    %7154 = vmatprep.subr.mxu0 0.0
    %v7155 = vand.u32 %v23, 4294901760
    %7156 = vmatpush1.msra.mxu0 %v7155
    %7157 = vmatprep.subr.mxu0 0.0
    %v7158 = vand.u32 %v22, 4294901760
    %7159 = vmatpush1.msra.mxu0 %v7158
    %7160 = vmatprep.subr.mxu0 0.0
    %v7161 = vand.u32 %v21, 4294901760
    %7162 = vmatpush1.msra.mxu0 %v7161
    %7163 = vmatprep.subr.mxu0 0.0
    %v7164 = vand.u32 %v20, 4294901760
    %7165 = vmatpush1.msra.mxu0 %v7164
    %7166 = vmatprep.subr.mxu0 0.0
    %v7167 = vand.u32 %v19, 4294901760
    %7168 = vmatpush1.msra.mxu0 %v7167
    %7169 = vmatprep.subr.mxu0 0.0
    %v7170 = vand.u32 %v18, 4294901760
    %7171 = vmatpush1.msra.mxu0 %v7170
    %7172 = vmatprep.subr.mxu0 0.0
    %v7173 = vand.u32 %v17, 4294901760
    %7174 = vmatpush1.msra.mxu0 %v7173
    %7175 = vmatprep.subr.mxu0 0.0
    %v7176 = vand.u32 %v16, 4294901760
    %7177 = vmatpush1.msra.mxu0 %v7176
    %7178 = vmatprep.subr.mxu0 0.0
    %v7179 = vand.u32 %v15, 4294901760
    %7180 = vmatpush1.msra.mxu0 %v7179
    %7181 = vmatprep.subr.mxu0 0.0
    %v7182 = vand.u32 %v14, 4294901760
    %7183 = vmatpush1.msra.mxu0 %v7182
    %7184 = vmatprep.subr.mxu0 0.0
    %7185 = vmatpush2.msra.mxu0 0.0
    %7186 = vmatprep.subr.mxu0 0.0
    %7187 = vmatpush2.msra.mxu0 0.0
    %7188 = vmatprep.subr.mxu0 0.0
    %7189 = vmatpush2.msra.mxu0 0.0
    %7190 = vmatprep.subr.mxu0 0.0
    %7191 = vmatpush2.msra.mxu0 0.0
    %7192 = vmatprep.subr.mxu0 0.0
    %7193 = vmatpush2.msra.mxu0 0.0
    %7194 = vmatprep.subr.mxu0 0.0
    %7195 = vmatpush2.msra.mxu0 0.0
    %7196 = vmatprep.subr.mxu0 0.0
    %7197 = vmatpush2.msra.mxu0 0.0
    %7198 = vmatprep.subr.mxu0 0.0
    %7199 = vmatpush2.msra.mxu0 0.0
    %7200 = vmatprep.subr.mxu0 0.0
    %7201 = vmatpush2.msra.mxu0 0.0
    %7202 = vmatprep.subr.mxu0 0.0
    %7203 = vmatpush2.msra.mxu0 0.0
    %7204 = vmatprep.subr.mxu0 0.0
    %7205 = vmatpush2.msra.mxu0 0.0
    %7206 = vmatprep.subr.mxu0 0.0
    %7207 = vmatpush2.msra.mxu0 0.0
    %7208 = vmatprep.subr.mxu0 0.0
    %7209 = vmatpush2.msra.mxu0 0.0
    %7210 = vmatprep.subr.mxu0 0.0
    %7211 = vmatpush2.msra.mxu0 0.0
    %7212 = vmatprep.subr.mxu0 0.0
    %7213 = vmatpush2.msra.mxu0 0.0
    %7214 = vmatprep.subr.mxu0 0.0
    %7215 = vmatpush2.msra.mxu0 0.0
    %7216 = vmatprep.mubr.f32.mxu0 0.0
    %v7217 = vand.u32 %v6789, 4294901760
    %v7218 = vsub.f32 %v6789, %v7217
    %v7219 = vand.u32 %v7218, 4294901760
    %7220 = vmatmul.mubr.f32.gmra.mxu0 %v7219
    %v7221 = vpop.f32.mrf.mxu0
    %v7222 = vadd.f32 %v7133, %v7221
    %v7223 = vpop.f32.mrf.mxu0
    %7224 = vdwg.mxu0
    %7225 = vmatprep.subr.mxu0 0.0
    %v7226 = vand.u32 %v29, 4294901760
    %v7227 = vsub.f32 %v29, %v7226
    %v7228 = vand.u32 %v7227, 4294901760
    %7229 = vmatpush1.msra.mxu0 %v7228
    %7230 = vmatprep.subr.mxu0 0.0
    %v7231 = vand.u32 %v28, 4294901760
    %v7232 = vsub.f32 %v28, %v7231
    %v7233 = vand.u32 %v7232, 4294901760
    %7234 = vmatpush1.msra.mxu0 %v7233
    %7235 = vmatprep.subr.mxu0 0.0
    %v7236 = vand.u32 %v27, 4294901760
    %v7237 = vsub.f32 %v27, %v7236
    %v7238 = vand.u32 %v7237, 4294901760
    %7239 = vmatpush1.msra.mxu0 %v7238
    %7240 = vmatprep.subr.mxu0 0.0
    %v7241 = vand.u32 %v26, 4294901760
    %v7242 = vsub.f32 %v26, %v7241
    %v7243 = vand.u32 %v7242, 4294901760
    %7244 = vmatpush1.msra.mxu0 %v7243
    %7245 = vmatprep.subr.mxu0 0.0
    %v7246 = vand.u32 %v25, 4294901760
    %v7247 = vsub.f32 %v25, %v7246
    %v7248 = vand.u32 %v7247, 4294901760
    %7249 = vmatpush1.msra.mxu0 %v7248
    %7250 = vmatprep.subr.mxu0 0.0
    %v7251 = vand.u32 %v24, 4294901760
    %v7252 = vsub.f32 %v24, %v7251
    %v7253 = vand.u32 %v7252, 4294901760
    %7254 = vmatpush1.msra.mxu0 %v7253
    %7255 = vmatprep.subr.mxu0 0.0
    %v7256 = vand.u32 %v23, 4294901760
    %v7257 = vsub.f32 %v23, %v7256
    %v7258 = vand.u32 %v7257, 4294901760
    %7259 = vmatpush1.msra.mxu0 %v7258
    %7260 = vmatprep.subr.mxu0 0.0
    %v7261 = vand.u32 %v22, 4294901760
    %v7262 = vsub.f32 %v22, %v7261
    %v7263 = vand.u32 %v7262, 4294901760
    %7264 = vmatpush1.msra.mxu0 %v7263
    %7265 = vmatprep.subr.mxu0 0.0
    %v7266 = vand.u32 %v21, 4294901760
    %v7267 = vsub.f32 %v21, %v7266
    %v7268 = vand.u32 %v7267, 4294901760
    %7269 = vmatpush1.msra.mxu0 %v7268
    %7270 = vmatprep.subr.mxu0 0.0
    %v7271 = vand.u32 %v20, 4294901760
    %v7272 = vsub.f32 %v20, %v7271
    %v7273 = vand.u32 %v7272, 4294901760
    %7274 = vmatpush1.msra.mxu0 %v7273
    %7275 = vmatprep.subr.mxu0 0.0
    %v7276 = vand.u32 %v19, 4294901760
    %v7277 = vsub.f32 %v19, %v7276
    %v7278 = vand.u32 %v7277, 4294901760
    %7279 = vmatpush1.msra.mxu0 %v7278
    %7280 = vmatprep.subr.mxu0 0.0
    %v7281 = vand.u32 %v18, 4294901760
    %v7282 = vsub.f32 %v18, %v7281
    %v7283 = vand.u32 %v7282, 4294901760
    %7284 = vmatpush1.msra.mxu0 %v7283
    %7285 = vmatprep.subr.mxu0 0.0
    %v7286 = vand.u32 %v17, 4294901760
    %v7287 = vsub.f32 %v17, %v7286
    %v7288 = vand.u32 %v7287, 4294901760
    %7289 = vmatpush1.msra.mxu0 %v7288
    %7290 = vmatprep.subr.mxu0 0.0
    %v7291 = vand.u32 %v16, 4294901760
    %v7292 = vsub.f32 %v16, %v7291
    %v7293 = vand.u32 %v7292, 4294901760
    %7294 = vmatpush1.msra.mxu0 %v7293
    %7295 = vmatprep.subr.mxu0 0.0
    %v7296 = vand.u32 %v15, 4294901760
    %v7297 = vsub.f32 %v15, %v7296
    %v7298 = vand.u32 %v7297, 4294901760
    %7299 = vmatpush1.msra.mxu0 %v7298
    %7300 = vmatprep.subr.mxu0 0.0
    %v7301 = vand.u32 %v14, 4294901760
    %v7302 = vsub.f32 %v14, %v7301
    %v7303 = vand.u32 %v7302, 4294901760
    %7304 = vmatpush1.msra.mxu0 %v7303
    %7305 = vmatprep.subr.mxu0 0.0
    %7306 = vmatpush2.msra.mxu0 0.0
    %7307 = vmatprep.subr.mxu0 0.0
    %7308 = vmatpush2.msra.mxu0 0.0
    %7309 = vmatprep.subr.mxu0 0.0
    %7310 = vmatpush2.msra.mxu0 0.0
    %7311 = vmatprep.subr.mxu0 0.0
    %7312 = vmatpush2.msra.mxu0 0.0
    %7313 = vmatprep.subr.mxu0 0.0
    %7314 = vmatpush2.msra.mxu0 0.0
    %7315 = vmatprep.subr.mxu0 0.0
    %7316 = vmatpush2.msra.mxu0 0.0
    %7317 = vmatprep.subr.mxu0 0.0
    %7318 = vmatpush2.msra.mxu0 0.0
    %7319 = vmatprep.subr.mxu0 0.0
    %7320 = vmatpush2.msra.mxu0 0.0
    %7321 = vmatprep.subr.mxu0 0.0
    %7322 = vmatpush2.msra.mxu0 0.0
    %7323 = vmatprep.subr.mxu0 0.0
    %7324 = vmatpush2.msra.mxu0 0.0
    %7325 = vmatprep.subr.mxu0 0.0
    %7326 = vmatpush2.msra.mxu0 0.0
    %7327 = vmatprep.subr.mxu0 0.0
    %7328 = vmatpush2.msra.mxu0 0.0
    %7329 = vmatprep.subr.mxu0 0.0
    %7330 = vmatpush2.msra.mxu0 0.0
    %7331 = vmatprep.subr.mxu0 0.0
    %7332 = vmatpush2.msra.mxu0 0.0
    %7333 = vmatprep.subr.mxu0 0.0
    %7334 = vmatpush2.msra.mxu0 0.0
    %7335 = vmatprep.subr.mxu0 0.0
    %7336 = vmatpush2.msra.mxu0 0.0
    %7337 = vmatprep.mubr.f32.mxu0 0.0
    %v7338 = vand.u32 %v6789, 4294901760
    %7339 = vmatmul.mubr.f32.gmra.mxu0 %v7338
    %v7340 = vpop.f32.mrf.mxu0
    %v7341 = vadd.f32 %v7222, %v7340
    %v7342 = vpop.f32.mrf.mxu0
    %7343 = vdwg.mxu0
    %7344 = vmatprep.subr.mxu0 0.0
    %v7345 = vand.u32 %v29, 4294901760
    %7346 = vmatpush1.msra.mxu0 %v7345
    %7347 = vmatprep.subr.mxu0 0.0
    %v7348 = vand.u32 %v28, 4294901760
    %7349 = vmatpush1.msra.mxu0 %v7348
    %7350 = vmatprep.subr.mxu0 0.0
    %v7351 = vand.u32 %v27, 4294901760
    %7352 = vmatpush1.msra.mxu0 %v7351
    %7353 = vmatprep.subr.mxu0 0.0
    %v7354 = vand.u32 %v26, 4294901760
    %7355 = vmatpush1.msra.mxu0 %v7354
    %7356 = vmatprep.subr.mxu0 0.0
    %v7357 = vand.u32 %v25, 4294901760
    %7358 = vmatpush1.msra.mxu0 %v7357
    %7359 = vmatprep.subr.mxu0 0.0
    %v7360 = vand.u32 %v24, 4294901760
    %7361 = vmatpush1.msra.mxu0 %v7360
    %7362 = vmatprep.subr.mxu0 0.0
    %v7363 = vand.u32 %v23, 4294901760
    %7364 = vmatpush1.msra.mxu0 %v7363
    %7365 = vmatprep.subr.mxu0 0.0
    %v7366 = vand.u32 %v22, 4294901760
    %7367 = vmatpush1.msra.mxu0 %v7366
    %7368 = vmatprep.subr.mxu0 0.0
    %v7369 = vand.u32 %v21, 4294901760
    %7370 = vmatpush1.msra.mxu0 %v7369
    %7371 = vmatprep.subr.mxu0 0.0
    %v7372 = vand.u32 %v20, 4294901760
    %7373 = vmatpush1.msra.mxu0 %v7372
    %7374 = vmatprep.subr.mxu0 0.0
    %v7375 = vand.u32 %v19, 4294901760
    %7376 = vmatpush1.msra.mxu0 %v7375
    %7377 = vmatprep.subr.mxu0 0.0
    %v7378 = vand.u32 %v18, 4294901760
    %7379 = vmatpush1.msra.mxu0 %v7378
    %7380 = vmatprep.subr.mxu0 0.0
    %v7381 = vand.u32 %v17, 4294901760
    %7382 = vmatpush1.msra.mxu0 %v7381
    %7383 = vmatprep.subr.mxu0 0.0
    %v7384 = vand.u32 %v16, 4294901760
    %7385 = vmatpush1.msra.mxu0 %v7384
    %7386 = vmatprep.subr.mxu0 0.0
    %v7387 = vand.u32 %v15, 4294901760
    %7388 = vmatpush1.msra.mxu0 %v7387
    %7389 = vmatprep.subr.mxu0 0.0
    %v7390 = vand.u32 %v14, 4294901760
    %7391 = vmatpush1.msra.mxu0 %v7390
    %7392 = vmatprep.subr.mxu0 0.0
    %7393 = vmatpush2.msra.mxu0 0.0
    %7394 = vmatprep.subr.mxu0 0.0
    %7395 = vmatpush2.msra.mxu0 0.0
    %7396 = vmatprep.subr.mxu0 0.0
    %7397 = vmatpush2.msra.mxu0 0.0
    %7398 = vmatprep.subr.mxu0 0.0
    %7399 = vmatpush2.msra.mxu0 0.0
    %7400 = vmatprep.subr.mxu0 0.0
    %7401 = vmatpush2.msra.mxu0 0.0
    %7402 = vmatprep.subr.mxu0 0.0
    %7403 = vmatpush2.msra.mxu0 0.0
    %7404 = vmatprep.subr.mxu0 0.0
    %7405 = vmatpush2.msra.mxu0 0.0
    %7406 = vmatprep.subr.mxu0 0.0
    %7407 = vmatpush2.msra.mxu0 0.0
    %7408 = vmatprep.subr.mxu0 0.0
    %7409 = vmatpush2.msra.mxu0 0.0
    %7410 = vmatprep.subr.mxu0 0.0
    %7411 = vmatpush2.msra.mxu0 0.0
    %7412 = vmatprep.subr.mxu0 0.0
    %7413 = vmatpush2.msra.mxu0 0.0
    %7414 = vmatprep.subr.mxu0 0.0
    %7415 = vmatpush2.msra.mxu0 0.0
    %7416 = vmatprep.subr.mxu0 0.0
    %7417 = vmatpush2.msra.mxu0 0.0
    %7418 = vmatprep.subr.mxu0 0.0
    %7419 = vmatpush2.msra.mxu0 0.0
    %7420 = vmatprep.subr.mxu0 0.0
    %7421 = vmatpush2.msra.mxu0 0.0
    %7422 = vmatprep.subr.mxu0 0.0
    %7423 = vmatpush2.msra.mxu0 0.0
    %7424 = vmatprep.mubr.f32.mxu0 0.0
    %v7425 = vand.u32 %v6789, 4294901760
    %7426 = vmatmul.mubr.f32.gmra.mxu0 %v7425
    %v7427 = vpop.f32.mrf.mxu0
    %v7428 = vadd.f32 %v7341, %v7427
    %v7429 = vpop.f32.mrf.mxu0
    %7430 = vdwg.mxu0
    %v7431 = vand.u32 2147483647, %v7428
    %vm7432 = vcmp.le.f32.partialorder %v7431, 0.7853982
    %vm7433 = vcmp.lt.s32.totalorder %v7428, 0
    %v7434 = vand.u32 %v7428, 2139095040
    %v7435 = vshrl.u32 %v7434, 23
    %v7436 = vsub.s32 %v7435, 127
    %v7437 = vand.u32 2147483647, %v7428
    %v7438 = vand.u32 %v7437, 8388607
    %v7439 = vor.u32 %v7438, 8388608
    %v7440 = vsub.s32 0, %v7439
    %v7441 = vadd.s32 %v7436, 1
    %vm7442 = vcmp.gt.s32.totalorder %v7441, 0
    %v7443 = vsel %vm7442, %v7441, 0
    %v7444 = vshrl.u32 %v7443, 5
    %v7445 = vand.u32 %v7443, 31
    %v7446 = vsub.s32 32, %v7445
    %v7447 = vshrl.u32 683565275, %v7446
    %v7448 = vshll.u32 683565275, %v7445
    %v7449 = vshrl.u32 2475754826, %v7446
    %v7450 = vor.u32 %v7448, %v7449
    %v7451 = vshll.u32 2475754826, %v7445
    %v7452 = vshrl.u32 2131351028, %v7446
    %v7453 = vor.u32 %v7451, %v7452
    %v7454 = vshll.u32 2131351028, %v7445
    %v7455 = vshrl.u32 2102212464, %v7446
    %v7456 = vor.u32 %v7454, %v7455
    %v7457 = vshll.u32 2102212464, %v7445
    %v7458 = vshrl.u32 920167782, %v7446
    %v7459 = vor.u32 %v7457, %v7458
    %v7460 = vshll.u32 920167782, %v7445
    %v7461 = vshrl.u32 1326507024, %v7446
    %v7462 = vor.u32 %v7460, %v7461
    %vm7463 = vcmp.lt.s32.totalorder %v7444, 1
    %vm7464 = vcmp.lt.s32.totalorder %v7444, 2
    %vm7465 = vcmp.lt.s32.totalorder %v7444, 3
    %vm7466 = vcmp.lt.s32.totalorder %v7444, 4
    %v7467 = vsel %vm7463, %v7447, %v7450
    %v7468 = vsel %vm7466, %v7456, 2102212464
    %v7469 = vsel %vm7465, %v7453, %v7468
    %v7470 = vsel %vm7464, %v7467, %v7469
    %v7471 = vsel %vm7463, %v7450, %v7453
    %v7472 = vsel %vm7466, %v7459, 920167782
    %v7473 = vsel %vm7465, %v7456, %v7472
    %v7474 = vsel %vm7464, %v7471, %v7473
    %v7475 = vsel %vm7463, %v7453, %v7456
    %v7476 = vsel %vm7466, %v7462, 1326507024
    %v7477 = vsel %vm7465, %v7459, %v7476
    %v7478 = vsel %vm7464, %v7475, %v7477
    %v7479 = vshll.u32 %v7439, 8
    %v7480 = vmul.u32.u64.compose %v7479, %v7478
    %v7481 = vextract.low.u32 %v7480
    %v7482 = vextract.high.u32 %v7480
    %v7483 = vmul.u32.u64.compose %v7479, %v7474
    %v7484 = vextract.low.u32 %v7483
    %v7485 = vextract.high.u32 %v7483
    %v7486 = vmul.u32 %v7479, %v7470
    %v7487 = vadd.s32 %v7482, %v7484
    %vm7488 = vc.u32 %v7482, %v7484
    %v7489 = vadd.s32 %v7485, 1
    %v7490 = vsel %vm7488, %v7489, %v7485
    %v7491 = vadd.s32 %v7486, %v7490
    %v7492 = vadd.s32 %v7491, 536870912
    %v7493 = vshrl.u32 %v7492, 30
    %v7494 = vshll.u32 %v7493, 30
    %v7495 = vsub.s32 %v7491, %v7494
    %vm7496 = vcmp.lt.s32.totalorder %v7495, 0
    %v7497 = vsub.s32 0, %v7495
    %v7498 = vsel %vm7496, %v7497, %v7495
    %v7499 = vclz %v7498
    %v7500 = vsub.s32 %v7499, 2
    %vm7501 = vcmp.gt.s32.totalorder 0, %v7500
    %v7502 = vsel %vm7501, 0, %v7500
    %v7503 = vsub.s32 32, %v7502
    %v7504 = vshll.u32 %v7495, %v7502
    %v7505 = vshrl.u32 %v7487, %v7503
    %v7506 = vor.u32 %v7504, %v7505
    %v7507 = vsub.s32 4294967266, %v7502
    %v7508 = vadd.s32 %v7507, 127
    %v7509 = vshll.u32 %v7508, 23
    %v7510 = vor.u32 4788187, %v7509
    %v7511 = vand.u32 2147483647, %v7510
    %v7513 = vcvt.s32.f32 %v7506
    %v7514 = vmul.f32 %v7513, %v7511
    %v7515 = vxor.u32 %v7514, 2147483648
    %v7516 = vsel %vm7433, %v7515, %v7514
    %v7517 = vsub.s32 4, %v7493
    %v7518 = vsel %vm7433, %v7517, %v7493
    %v7519 = vsel %vm7432, %v7428, %v7516
    %v7520 = vsel %vm7432, 0, %v7518
    %v7521 = vcosq.f32.pop %v7519
    %v7522 = vsinq.f32.pop %v7519
    %vm7523 = vweird.f32 %v7428
    %v7524 = vadd.s32 %v7520, 3
    %v7525 = vand.u32 %v7524, 3
    %vm7526 = vcmp.lt.s32.totalorder %v7525, 2
    %vm7527 = vcmp.eq.s32.totalorder %v7525, 0
    %v7528 = vxor.u32 %v7522, 2147483648
    %v7529 = vsel %vm7527, %v7521, %v7528
    %vm7530 = vcmp.eq.s32.totalorder %v7525, 2
    %v7531 = vxor.u32 %v7521, 2147483648
    %v7532 = vsel %vm7530, %v7531, %v7522
    %v7533 = vsel %vm7526, %v7529, %v7532
    %v7534 = vsel %vm7523, nan, %v7533
    %v7535 = vmul.f32 %v6787, 0.33333334
    %v7536 = vsub.f32 %v7534, %v7535
    %v7537 = vmul.f32 %v7536, 0.05050505
    %v7538 = vadd.f32 %v49, %v7537
    %7539 = vmatprep.subr.mxu0 0.0
    %v7540 = vand.u32 %v29, 4294901760
    %7541 = vmatpush1.msra.mxu0 %v7540
    %7542 = vmatprep.subr.mxu0 0.0
    %v7543 = vand.u32 %v28, 4294901760
    %7544 = vmatpush1.msra.mxu0 %v7543
    %7545 = vmatprep.subr.mxu0 0.0
    %v7546 = vand.u32 %v27, 4294901760
    %7547 = vmatpush1.msra.mxu0 %v7546
    %7548 = vmatprep.subr.mxu0 0.0
    %v7549 = vand.u32 %v26, 4294901760
    %7550 = vmatpush1.msra.mxu0 %v7549
    %7551 = vmatprep.subr.mxu0 0.0
    %v7552 = vand.u32 %v25, 4294901760
    %7553 = vmatpush1.msra.mxu0 %v7552
    %7554 = vmatprep.subr.mxu0 0.0
    %v7555 = vand.u32 %v24, 4294901760
    %7556 = vmatpush1.msra.mxu0 %v7555
    %7557 = vmatprep.subr.mxu0 0.0
    %v7558 = vand.u32 %v23, 4294901760
    %7559 = vmatpush1.msra.mxu0 %v7558
    %7560 = vmatprep.subr.mxu0 0.0
    %v7561 = vand.u32 %v22, 4294901760
    %7562 = vmatpush1.msra.mxu0 %v7561
    %7563 = vmatprep.subr.mxu0 0.0
    %v7564 = vand.u32 %v21, 4294901760
    %7565 = vmatpush1.msra.mxu0 %v7564
    %7566 = vmatprep.subr.mxu0 0.0
    %v7567 = vand.u32 %v20, 4294901760
    %7568 = vmatpush1.msra.mxu0 %v7567
    %7569 = vmatprep.subr.mxu0 0.0
    %v7570 = vand.u32 %v19, 4294901760
    %7571 = vmatpush1.msra.mxu0 %v7570
    %7572 = vmatprep.subr.mxu0 0.0
    %v7573 = vand.u32 %v18, 4294901760
    %7574 = vmatpush1.msra.mxu0 %v7573
    %7575 = vmatprep.subr.mxu0 0.0
    %v7576 = vand.u32 %v17, 4294901760
    %7577 = vmatpush1.msra.mxu0 %v7576
    %7578 = vmatprep.subr.mxu0 0.0
    %v7579 = vand.u32 %v16, 4294901760
    %7580 = vmatpush1.msra.mxu0 %v7579
    %7581 = vmatprep.subr.mxu0 0.0
    %v7582 = vand.u32 %v15, 4294901760
    %7583 = vmatpush1.msra.mxu0 %v7582
    %7584 = vmatprep.subr.mxu0 0.0
    %v7585 = vand.u32 %v14, 4294901760
    %7586 = vmatpush1.msra.mxu0 %v7585
    %7587 = vmatprep.subr.mxu0 0.0
    %7588 = vmatpush2.msra.mxu0 0.0
    %7589 = vmatprep.subr.mxu0 0.0
    %7590 = vmatpush2.msra.mxu0 0.0
    %7591 = vmatprep.subr.mxu0 0.0
    %7592 = vmatpush2.msra.mxu0 0.0
    %7593 = vmatprep.subr.mxu0 0.0
    %7594 = vmatpush2.msra.mxu0 0.0
    %7595 = vmatprep.subr.mxu0 0.0
    %7596 = vmatpush2.msra.mxu0 0.0
    %7597 = vmatprep.subr.mxu0 0.0
    %7598 = vmatpush2.msra.mxu0 0.0
    %7599 = vmatprep.subr.mxu0 0.0
    %7600 = vmatpush2.msra.mxu0 0.0
    %7601 = vmatprep.subr.mxu0 0.0
    %7602 = vmatpush2.msra.mxu0 0.0
    %7603 = vmatprep.subr.mxu0 0.0
    %7604 = vmatpush2.msra.mxu0 0.0
    %7605 = vmatprep.subr.mxu0 0.0
    %7606 = vmatpush2.msra.mxu0 0.0
    %7607 = vmatprep.subr.mxu0 0.0
    %7608 = vmatpush2.msra.mxu0 0.0
    %7609 = vmatprep.subr.mxu0 0.0
    %7610 = vmatpush2.msra.mxu0 0.0
    %7611 = vmatprep.subr.mxu0 0.0
    %7612 = vmatpush2.msra.mxu0 0.0
    %7613 = vmatprep.subr.mxu0 0.0
    %7614 = vmatpush2.msra.mxu0 0.0
    %7615 = vmatprep.subr.mxu0 0.0
    %7616 = vmatpush2.msra.mxu0 0.0
    %7617 = vmatprep.subr.mxu0 0.0
    %7618 = vmatpush2.msra.mxu0 0.0
    %7619 = vmatprep.mubr.f32.mxu0 0.0
    %v7620 = vand.u32 %v7538, 4294901760
    %v7621 = vsub.f32 %v7538, %v7620
    %v7622 = vand.u32 %v7621, 4294901760
    %v7623 = vsub.f32 %v7621, %v7622
    %v7624 = vand.u32 %v7623, 4294901760
    %7625 = vmatmul.mubr.f32.gmra.mxu0 %v7624
    %v7626 = vpop.f32.mrf.mxu0
    %v7627 = vadd.f32 %v35, %v7626
    %v7628 = vpop.f32.mrf.mxu0
    %7629 = vdwg.mxu0
    %7630 = vmatprep.subr.mxu0 0.0
    %v7631 = vand.u32 %v29, 4294901760
    %v7632 = vsub.f32 %v29, %v7631
    %v7633 = vand.u32 %v7632, 4294901760
    %v7634 = vsub.f32 %v7632, %v7633
    %v7635 = vand.u32 %v7634, 4294901760
    %7636 = vmatpush1.msra.mxu0 %v7635
    %7637 = vmatprep.subr.mxu0 0.0
    %v7638 = vand.u32 %v28, 4294901760
    %v7639 = vsub.f32 %v28, %v7638
    %v7640 = vand.u32 %v7639, 4294901760
    %v7641 = vsub.f32 %v7639, %v7640
    %v7642 = vand.u32 %v7641, 4294901760
    %7643 = vmatpush1.msra.mxu0 %v7642
    %7644 = vmatprep.subr.mxu0 0.0
    %v7645 = vand.u32 %v27, 4294901760
    %v7646 = vsub.f32 %v27, %v7645
    %v7647 = vand.u32 %v7646, 4294901760
    %v7648 = vsub.f32 %v7646, %v7647
    %v7649 = vand.u32 %v7648, 4294901760
    %7650 = vmatpush1.msra.mxu0 %v7649
    %7651 = vmatprep.subr.mxu0 0.0
    %v7652 = vand.u32 %v26, 4294901760
    %v7653 = vsub.f32 %v26, %v7652
    %v7654 = vand.u32 %v7653, 4294901760
    %v7655 = vsub.f32 %v7653, %v7654
    %v7656 = vand.u32 %v7655, 4294901760
    %7657 = vmatpush1.msra.mxu0 %v7656
    %7658 = vmatprep.subr.mxu0 0.0
    %v7659 = vand.u32 %v25, 4294901760
    %v7660 = vsub.f32 %v25, %v7659
    %v7661 = vand.u32 %v7660, 4294901760
    %v7662 = vsub.f32 %v7660, %v7661
    %v7663 = vand.u32 %v7662, 4294901760
    %7664 = vmatpush1.msra.mxu0 %v7663
    %7665 = vmatprep.subr.mxu0 0.0
    %v7666 = vand.u32 %v24, 4294901760
    %v7667 = vsub.f32 %v24, %v7666
    %v7668 = vand.u32 %v7667, 4294901760
    %v7669 = vsub.f32 %v7667, %v7668
    %v7670 = vand.u32 %v7669, 4294901760
    %7671 = vmatpush1.msra.mxu0 %v7670
    %7672 = vmatprep.subr.mxu0 0.0
    %v7673 = vand.u32 %v23, 4294901760
    %v7674 = vsub.f32 %v23, %v7673
    %v7675 = vand.u32 %v7674, 4294901760
    %v7676 = vsub.f32 %v7674, %v7675
    %v7677 = vand.u32 %v7676, 4294901760
    %7678 = vmatpush1.msra.mxu0 %v7677
    %7679 = vmatprep.subr.mxu0 0.0
    %v7680 = vand.u32 %v22, 4294901760
    %v7681 = vsub.f32 %v22, %v7680
    %v7682 = vand.u32 %v7681, 4294901760
    %v7683 = vsub.f32 %v7681, %v7682
    %v7684 = vand.u32 %v7683, 4294901760
    %7685 = vmatpush1.msra.mxu0 %v7684
    %7686 = vmatprep.subr.mxu0 0.0
    %v7687 = vand.u32 %v21, 4294901760
    %v7688 = vsub.f32 %v21, %v7687
    %v7689 = vand.u32 %v7688, 4294901760
    %v7690 = vsub.f32 %v7688, %v7689
    %v7691 = vand.u32 %v7690, 4294901760
    %7692 = vmatpush1.msra.mxu0 %v7691
    %7693 = vmatprep.subr.mxu0 0.0
    %v7694 = vand.u32 %v20, 4294901760
    %v7695 = vsub.f32 %v20, %v7694
    %v7696 = vand.u32 %v7695, 4294901760
    %v7697 = vsub.f32 %v7695, %v7696
    %v7698 = vand.u32 %v7697, 4294901760
    %7699 = vmatpush1.msra.mxu0 %v7698
    %7700 = vmatprep.subr.mxu0 0.0
    %v7701 = vand.u32 %v19, 4294901760
    %v7702 = vsub.f32 %v19, %v7701
    %v7703 = vand.u32 %v7702, 4294901760
    %v7704 = vsub.f32 %v7702, %v7703
    %v7705 = vand.u32 %v7704, 4294901760
    %7706 = vmatpush1.msra.mxu0 %v7705
    %7707 = vmatprep.subr.mxu0 0.0
    %v7708 = vand.u32 %v18, 4294901760
    %v7709 = vsub.f32 %v18, %v7708
    %v7710 = vand.u32 %v7709, 4294901760
    %v7711 = vsub.f32 %v7709, %v7710
    %v7712 = vand.u32 %v7711, 4294901760
    %7713 = vmatpush1.msra.mxu0 %v7712
    %7714 = vmatprep.subr.mxu0 0.0
    %v7715 = vand.u32 %v17, 4294901760
    %v7716 = vsub.f32 %v17, %v7715
    %v7717 = vand.u32 %v7716, 4294901760
    %v7718 = vsub.f32 %v7716, %v7717
    %v7719 = vand.u32 %v7718, 4294901760
    %7720 = vmatpush1.msra.mxu0 %v7719
    %7721 = vmatprep.subr.mxu0 0.0
    %v7722 = vand.u32 %v16, 4294901760
    %v7723 = vsub.f32 %v16, %v7722
    %v7724 = vand.u32 %v7723, 4294901760
    %v7725 = vsub.f32 %v7723, %v7724
    %v7726 = vand.u32 %v7725, 4294901760
    %7727 = vmatpush1.msra.mxu0 %v7726
    %7728 = vmatprep.subr.mxu0 0.0
    %v7729 = vand.u32 %v15, 4294901760
    %v7730 = vsub.f32 %v15, %v7729
    %v7731 = vand.u32 %v7730, 4294901760
    %v7732 = vsub.f32 %v7730, %v7731
    %v7733 = vand.u32 %v7732, 4294901760
    %7734 = vmatpush1.msra.mxu0 %v7733
    %7735 = vmatprep.subr.mxu0 0.0
    %v7736 = vand.u32 %v14, 4294901760
    %v7737 = vsub.f32 %v14, %v7736
    %v7738 = vand.u32 %v7737, 4294901760
    %v7739 = vsub.f32 %v7737, %v7738
    %v7740 = vand.u32 %v7739, 4294901760
    %7741 = vmatpush1.msra.mxu0 %v7740
    %7742 = vmatprep.subr.mxu0 0.0
    %7743 = vmatpush2.msra.mxu0 0.0
    %7744 = vmatprep.subr.mxu0 0.0
    %7745 = vmatpush2.msra.mxu0 0.0
    %7746 = vmatprep.subr.mxu0 0.0
    %7747 = vmatpush2.msra.mxu0 0.0
    %7748 = vmatprep.subr.mxu0 0.0
    %7749 = vmatpush2.msra.mxu0 0.0
    %7750 = vmatprep.subr.mxu0 0.0
    %7751 = vmatpush2.msra.mxu0 0.0
    %7752 = vmatprep.subr.mxu0 0.0
    %7753 = vmatpush2.msra.mxu0 0.0
    %7754 = vmatprep.subr.mxu0 0.0
    %7755 = vmatpush2.msra.mxu0 0.0
    %7756 = vmatprep.subr.mxu0 0.0
    %7757 = vmatpush2.msra.mxu0 0.0
    %7758 = vmatprep.subr.mxu0 0.0
    %7759 = vmatpush2.msra.mxu0 0.0
    %7760 = vmatprep.subr.mxu0 0.0
    %7761 = vmatpush2.msra.mxu0 0.0
    %7762 = vmatprep.subr.mxu0 0.0
    %7763 = vmatpush2.msra.mxu0 0.0
    %7764 = vmatprep.subr.mxu0 0.0
    %7765 = vmatpush2.msra.mxu0 0.0
    %7766 = vmatprep.subr.mxu0 0.0
    %7767 = vmatpush2.msra.mxu0 0.0
    %7768 = vmatprep.subr.mxu0 0.0
    %7769 = vmatpush2.msra.mxu0 0.0
    %7770 = vmatprep.subr.mxu0 0.0
    %7771 = vmatpush2.msra.mxu0 0.0
    %7772 = vmatprep.subr.mxu0 0.0
    %7773 = vmatpush2.msra.mxu0 0.0
    %7774 = vmatprep.mubr.f32.mxu0 0.0
    %v7775 = vand.u32 %v7538, 4294901760
    %7776 = vmatmul.mubr.f32.gmra.mxu0 %v7775
    %v7777 = vpop.f32.mrf.mxu0
    %v7778 = vadd.f32 %v7627, %v7777
    %v7779 = vpop.f32.mrf.mxu0
    %7780 = vdwg.mxu0
    %7781 = vmatprep.subr.mxu0 0.0
    %v7782 = vand.u32 %v29, 4294901760
    %v7783 = vsub.f32 %v29, %v7782
    %7784 = vmatpush1.msra.mxu0 %v7783
    %7785 = vmatprep.subr.mxu0 0.0
    %v7786 = vand.u32 %v28, 4294901760
    %v7787 = vsub.f32 %v28, %v7786
    %7788 = vmatpush1.msra.mxu0 %v7787
    %7789 = vmatprep.subr.mxu0 0.0
    %v7790 = vand.u32 %v27, 4294901760
    %v7791 = vsub.f32 %v27, %v7790
    %7792 = vmatpush1.msra.mxu0 %v7791
    %7793 = vmatprep.subr.mxu0 0.0
    %v7794 = vand.u32 %v26, 4294901760
    %v7795 = vsub.f32 %v26, %v7794
    %7796 = vmatpush1.msra.mxu0 %v7795
    %7797 = vmatprep.subr.mxu0 0.0
    %v7798 = vand.u32 %v25, 4294901760
    %v7799 = vsub.f32 %v25, %v7798
    %7800 = vmatpush1.msra.mxu0 %v7799
    %7801 = vmatprep.subr.mxu0 0.0
    %v7802 = vand.u32 %v24, 4294901760
    %v7803 = vsub.f32 %v24, %v7802
    %7804 = vmatpush1.msra.mxu0 %v7803
    %7805 = vmatprep.subr.mxu0 0.0
    %v7806 = vand.u32 %v23, 4294901760
    %v7807 = vsub.f32 %v23, %v7806
    %7808 = vmatpush1.msra.mxu0 %v7807
    %7809 = vmatprep.subr.mxu0 0.0
    %v7810 = vand.u32 %v22, 4294901760
    %v7811 = vsub.f32 %v22, %v7810
    %7812 = vmatpush1.msra.mxu0 %v7811
    %7813 = vmatprep.subr.mxu0 0.0
    %v7814 = vand.u32 %v21, 4294901760
    %v7815 = vsub.f32 %v21, %v7814
    %7816 = vmatpush1.msra.mxu0 %v7815
    %7817 = vmatprep.subr.mxu0 0.0
    %v7818 = vand.u32 %v20, 4294901760
    %v7819 = vsub.f32 %v20, %v7818
    %7820 = vmatpush1.msra.mxu0 %v7819
    %7821 = vmatprep.subr.mxu0 0.0
    %v7822 = vand.u32 %v19, 4294901760
    %v7823 = vsub.f32 %v19, %v7822
    %7824 = vmatpush1.msra.mxu0 %v7823
    %7825 = vmatprep.subr.mxu0 0.0
    %v7826 = vand.u32 %v18, 4294901760
    %v7827 = vsub.f32 %v18, %v7826
    %7828 = vmatpush1.msra.mxu0 %v7827
    %7829 = vmatprep.subr.mxu0 0.0
    %v7830 = vand.u32 %v17, 4294901760
    %v7831 = vsub.f32 %v17, %v7830
    %7832 = vmatpush1.msra.mxu0 %v7831
    %7833 = vmatprep.subr.mxu0 0.0
    %v7834 = vand.u32 %v16, 4294901760
    %v7835 = vsub.f32 %v16, %v7834
    %7836 = vmatpush1.msra.mxu0 %v7835
    %7837 = vmatprep.subr.mxu0 0.0
    %v7838 = vand.u32 %v15, 4294901760
    %v7839 = vsub.f32 %v15, %v7838
    %7840 = vmatpush1.msra.mxu0 %v7839
    %7841 = vmatprep.subr.mxu0 0.0
    %v7842 = vand.u32 %v14, 4294901760
    %v7843 = vsub.f32 %v14, %v7842
    %7844 = vmatpush1.msra.mxu0 %v7843
    %7845 = vmatprep.subr.mxu0 0.0
    %7846 = vmatpush2.msra.mxu0 0.0
    %7847 = vmatprep.subr.mxu0 0.0
    %7848 = vmatpush2.msra.mxu0 0.0
    %7849 = vmatprep.subr.mxu0 0.0
    %7850 = vmatpush2.msra.mxu0 0.0
    %7851 = vmatprep.subr.mxu0 0.0
    %7852 = vmatpush2.msra.mxu0 0.0
    %7853 = vmatprep.subr.mxu0 0.0
    %7854 = vmatpush2.msra.mxu0 0.0
    %7855 = vmatprep.subr.mxu0 0.0
    %7856 = vmatpush2.msra.mxu0 0.0
    %7857 = vmatprep.subr.mxu0 0.0
    %7858 = vmatpush2.msra.mxu0 0.0
    %7859 = vmatprep.subr.mxu0 0.0
    %7860 = vmatpush2.msra.mxu0 0.0
    %7861 = vmatprep.subr.mxu0 0.0
    %7862 = vmatpush2.msra.mxu0 0.0
    %7863 = vmatprep.subr.mxu0 0.0
    %7864 = vmatpush2.msra.mxu0 0.0
    %7865 = vmatprep.subr.mxu0 0.0
    %7866 = vmatpush2.msra.mxu0 0.0
    %7867 = vmatprep.subr.mxu0 0.0
    %7868 = vmatpush2.msra.mxu0 0.0
    %7869 = vmatprep.subr.mxu0 0.0
    %7870 = vmatpush2.msra.mxu0 0.0
    %7871 = vmatprep.subr.mxu0 0.0
    %7872 = vmatpush2.msra.mxu0 0.0
    %7873 = vmatprep.subr.mxu0 0.0
    %7874 = vmatpush2.msra.mxu0 0.0
    %7875 = vmatprep.subr.mxu0 0.0
    %7876 = vmatpush2.msra.mxu0 0.0
    %7877 = vmatprep.mubr.f32.mxu0 0.0
    %v7878 = vand.u32 %v7538, 4294901760
    %v7879 = vsub.f32 %v7538, %v7878
    %7880 = vmatmul.mubr.f32.gmra.mxu0 %v7879
    %v7881 = vpop.f32.mrf.mxu0
    %v7882 = vadd.f32 %v7778, %v7881
    %v7883 = vpop.f32.mrf.mxu0
    %7884 = vdwg.mxu0
    %7885 = vmatprep.subr.mxu0 0.0
    %v7886 = vand.u32 %v29, 4294901760
    %7887 = vmatpush1.msra.mxu0 %v7886
    %7888 = vmatprep.subr.mxu0 0.0
    %v7889 = vand.u32 %v28, 4294901760
    %7890 = vmatpush1.msra.mxu0 %v7889
    %7891 = vmatprep.subr.mxu0 0.0
    %v7892 = vand.u32 %v27, 4294901760
    %7893 = vmatpush1.msra.mxu0 %v7892
    %7894 = vmatprep.subr.mxu0 0.0
    %v7895 = vand.u32 %v26, 4294901760
    %7896 = vmatpush1.msra.mxu0 %v7895
    %7897 = vmatprep.subr.mxu0 0.0
    %v7898 = vand.u32 %v25, 4294901760
    %7899 = vmatpush1.msra.mxu0 %v7898
    %7900 = vmatprep.subr.mxu0 0.0
    %v7901 = vand.u32 %v24, 4294901760
    %7902 = vmatpush1.msra.mxu0 %v7901
    %7903 = vmatprep.subr.mxu0 0.0
    %v7904 = vand.u32 %v23, 4294901760
    %7905 = vmatpush1.msra.mxu0 %v7904
    %7906 = vmatprep.subr.mxu0 0.0
    %v7907 = vand.u32 %v22, 4294901760
    %7908 = vmatpush1.msra.mxu0 %v7907
    %7909 = vmatprep.subr.mxu0 0.0
    %v7910 = vand.u32 %v21, 4294901760
    %7911 = vmatpush1.msra.mxu0 %v7910
    %7912 = vmatprep.subr.mxu0 0.0
    %v7913 = vand.u32 %v20, 4294901760
    %7914 = vmatpush1.msra.mxu0 %v7913
    %7915 = vmatprep.subr.mxu0 0.0
    %v7916 = vand.u32 %v19, 4294901760
    %7917 = vmatpush1.msra.mxu0 %v7916
    %7918 = vmatprep.subr.mxu0 0.0
    %v7919 = vand.u32 %v18, 4294901760
    %7920 = vmatpush1.msra.mxu0 %v7919
    %7921 = vmatprep.subr.mxu0 0.0
    %v7922 = vand.u32 %v17, 4294901760
    %7923 = vmatpush1.msra.mxu0 %v7922
    %7924 = vmatprep.subr.mxu0 0.0
    %v7925 = vand.u32 %v16, 4294901760
    %7926 = vmatpush1.msra.mxu0 %v7925
    %7927 = vmatprep.subr.mxu0 0.0
    %v7928 = vand.u32 %v15, 4294901760
    %7929 = vmatpush1.msra.mxu0 %v7928
    %7930 = vmatprep.subr.mxu0 0.0
    %v7931 = vand.u32 %v14, 4294901760
    %7932 = vmatpush1.msra.mxu0 %v7931
    %7933 = vmatprep.subr.mxu0 0.0
    %7934 = vmatpush2.msra.mxu0 0.0
    %7935 = vmatprep.subr.mxu0 0.0
    %7936 = vmatpush2.msra.mxu0 0.0
    %7937 = vmatprep.subr.mxu0 0.0
    %7938 = vmatpush2.msra.mxu0 0.0
    %7939 = vmatprep.subr.mxu0 0.0
    %7940 = vmatpush2.msra.mxu0 0.0
    %7941 = vmatprep.subr.mxu0 0.0
    %7942 = vmatpush2.msra.mxu0 0.0
    %7943 = vmatprep.subr.mxu0 0.0
    %7944 = vmatpush2.msra.mxu0 0.0
    %7945 = vmatprep.subr.mxu0 0.0
    %7946 = vmatpush2.msra.mxu0 0.0
    %7947 = vmatprep.subr.mxu0 0.0
    %7948 = vmatpush2.msra.mxu0 0.0
    %7949 = vmatprep.subr.mxu0 0.0
    %7950 = vmatpush2.msra.mxu0 0.0
    %7951 = vmatprep.subr.mxu0 0.0
    %7952 = vmatpush2.msra.mxu0 0.0
    %7953 = vmatprep.subr.mxu0 0.0
    %7954 = vmatpush2.msra.mxu0 0.0
    %7955 = vmatprep.subr.mxu0 0.0
    %7956 = vmatpush2.msra.mxu0 0.0
    %7957 = vmatprep.subr.mxu0 0.0
    %7958 = vmatpush2.msra.mxu0 0.0
    %7959 = vmatprep.subr.mxu0 0.0
    %7960 = vmatpush2.msra.mxu0 0.0
    %7961 = vmatprep.subr.mxu0 0.0
    %7962 = vmatpush2.msra.mxu0 0.0
    %7963 = vmatprep.subr.mxu0 0.0
    %7964 = vmatpush2.msra.mxu0 0.0
    %7965 = vmatprep.mubr.f32.mxu0 0.0
    %v7966 = vand.u32 %v7538, 4294901760
    %v7967 = vsub.f32 %v7538, %v7966
    %v7968 = vand.u32 %v7967, 4294901760
    %7969 = vmatmul.mubr.f32.gmra.mxu0 %v7968
    %v7970 = vpop.f32.mrf.mxu0
    %v7971 = vadd.f32 %v7882, %v7970
    %v7972 = vpop.f32.mrf.mxu0
    %7973 = vdwg.mxu0
    %7974 = vmatprep.subr.mxu0 0.0
    %v7975 = vand.u32 %v29, 4294901760
    %v7976 = vsub.f32 %v29, %v7975
    %v7977 = vand.u32 %v7976, 4294901760
    %7978 = vmatpush1.msra.mxu0 %v7977
    %7979 = vmatprep.subr.mxu0 0.0
    %v7980 = vand.u32 %v28, 4294901760
    %v7981 = vsub.f32 %v28, %v7980
    %v7982 = vand.u32 %v7981, 4294901760
    %7983 = vmatpush1.msra.mxu0 %v7982
    %7984 = vmatprep.subr.mxu0 0.0
    %v7985 = vand.u32 %v27, 4294901760
    %v7986 = vsub.f32 %v27, %v7985
    %v7987 = vand.u32 %v7986, 4294901760
    %7988 = vmatpush1.msra.mxu0 %v7987
    %7989 = vmatprep.subr.mxu0 0.0
    %v7990 = vand.u32 %v26, 4294901760
    %v7991 = vsub.f32 %v26, %v7990
    %v7992 = vand.u32 %v7991, 4294901760
    %7993 = vmatpush1.msra.mxu0 %v7992
    %7994 = vmatprep.subr.mxu0 0.0
    %v7995 = vand.u32 %v25, 4294901760
    %v7996 = vsub.f32 %v25, %v7995
    %v7997 = vand.u32 %v7996, 4294901760
    %7998 = vmatpush1.msra.mxu0 %v7997
    %7999 = vmatprep.subr.mxu0 0.0
    %v8000 = vand.u32 %v24, 4294901760
    %v8001 = vsub.f32 %v24, %v8000
    %v8002 = vand.u32 %v8001, 4294901760
    %8003 = vmatpush1.msra.mxu0 %v8002
    %8004 = vmatprep.subr.mxu0 0.0
    %v8005 = vand.u32 %v23, 4294901760
    %v8006 = vsub.f32 %v23, %v8005
    %v8007 = vand.u32 %v8006, 4294901760
    %8008 = vmatpush1.msra.mxu0 %v8007
    %8009 = vmatprep.subr.mxu0 0.0
    %v8010 = vand.u32 %v22, 4294901760
    %v8011 = vsub.f32 %v22, %v8010
    %v8012 = vand.u32 %v8011, 4294901760
    %8013 = vmatpush1.msra.mxu0 %v8012
    %8014 = vmatprep.subr.mxu0 0.0
    %v8015 = vand.u32 %v21, 4294901760
    %v8016 = vsub.f32 %v21, %v8015
    %v8017 = vand.u32 %v8016, 4294901760
    %8018 = vmatpush1.msra.mxu0 %v8017
    %8019 = vmatprep.subr.mxu0 0.0
    %v8020 = vand.u32 %v20, 4294901760
    %v8021 = vsub.f32 %v20, %v8020
    %v8022 = vand.u32 %v8021, 4294901760
    %8023 = vmatpush1.msra.mxu0 %v8022
    %8024 = vmatprep.subr.mxu0 0.0
    %v8025 = vand.u32 %v19, 4294901760
    %v8026 = vsub.f32 %v19, %v8025
    %v8027 = vand.u32 %v8026, 4294901760
    %8028 = vmatpush1.msra.mxu0 %v8027
    %8029 = vmatprep.subr.mxu0 0.0
    %v8030 = vand.u32 %v18, 4294901760
    %v8031 = vsub.f32 %v18, %v8030
    %v8032 = vand.u32 %v8031, 4294901760
    %8033 = vmatpush1.msra.mxu0 %v8032
    %8034 = vmatprep.subr.mxu0 0.0
    %v8035 = vand.u32 %v17, 4294901760
    %v8036 = vsub.f32 %v17, %v8035
    %v8037 = vand.u32 %v8036, 4294901760
    %8038 = vmatpush1.msra.mxu0 %v8037
    %8039 = vmatprep.subr.mxu0 0.0
    %v8040 = vand.u32 %v16, 4294901760
    %v8041 = vsub.f32 %v16, %v8040
    %v8042 = vand.u32 %v8041, 4294901760
    %8043 = vmatpush1.msra.mxu0 %v8042
    %8044 = vmatprep.subr.mxu0 0.0
    %v8045 = vand.u32 %v15, 4294901760
    %v8046 = vsub.f32 %v15, %v8045
    %v8047 = vand.u32 %v8046, 4294901760
    %8048 = vmatpush1.msra.mxu0 %v8047
    %8049 = vmatprep.subr.mxu0 0.0
    %v8050 = vand.u32 %v14, 4294901760
    %v8051 = vsub.f32 %v14, %v8050
    %v8052 = vand.u32 %v8051, 4294901760
    %8053 = vmatpush1.msra.mxu0 %v8052
    %8054 = vmatprep.subr.mxu0 0.0
    %8055 = vmatpush2.msra.mxu0 0.0
    %8056 = vmatprep.subr.mxu0 0.0
    %8057 = vmatpush2.msra.mxu0 0.0
    %8058 = vmatprep.subr.mxu0 0.0
    %8059 = vmatpush2.msra.mxu0 0.0
    %8060 = vmatprep.subr.mxu0 0.0
    %8061 = vmatpush2.msra.mxu0 0.0
    %8062 = vmatprep.subr.mxu0 0.0
    %8063 = vmatpush2.msra.mxu0 0.0
    %8064 = vmatprep.subr.mxu0 0.0
    %8065 = vmatpush2.msra.mxu0 0.0
    %8066 = vmatprep.subr.mxu0 0.0
    %8067 = vmatpush2.msra.mxu0 0.0
    %8068 = vmatprep.subr.mxu0 0.0
    %8069 = vmatpush2.msra.mxu0 0.0
    %8070 = vmatprep.subr.mxu0 0.0
    %8071 = vmatpush2.msra.mxu0 0.0
    %8072 = vmatprep.subr.mxu0 0.0
    %8073 = vmatpush2.msra.mxu0 0.0
    %8074 = vmatprep.subr.mxu0 0.0
    %8075 = vmatpush2.msra.mxu0 0.0
    %8076 = vmatprep.subr.mxu0 0.0
    %8077 = vmatpush2.msra.mxu0 0.0
    %8078 = vmatprep.subr.mxu0 0.0
    %8079 = vmatpush2.msra.mxu0 0.0
    %8080 = vmatprep.subr.mxu0 0.0
    %8081 = vmatpush2.msra.mxu0 0.0
    %8082 = vmatprep.subr.mxu0 0.0
    %8083 = vmatpush2.msra.mxu0 0.0
    %8084 = vmatprep.subr.mxu0 0.0
    %8085 = vmatpush2.msra.mxu0 0.0
    %8086 = vmatprep.mubr.f32.mxu0 0.0
    %v8087 = vand.u32 %v7538, 4294901760
    %8088 = vmatmul.mubr.f32.gmra.mxu0 %v8087
    %v8089 = vpop.f32.mrf.mxu0
    %v8090 = vadd.f32 %v7971, %v8089
    %v8091 = vpop.f32.mrf.mxu0
    %8092 = vdwg.mxu0
    %8093 = vmatprep.subr.mxu0 0.0
    %v8094 = vand.u32 %v29, 4294901760
    %8095 = vmatpush1.msra.mxu0 %v8094
    %8096 = vmatprep.subr.mxu0 0.0
    %v8097 = vand.u32 %v28, 4294901760
    %8098 = vmatpush1.msra.mxu0 %v8097
    %8099 = vmatprep.subr.mxu0 0.0
    %v8100 = vand.u32 %v27, 4294901760
    %8101 = vmatpush1.msra.mxu0 %v8100
    %8102 = vmatprep.subr.mxu0 0.0
    %v8103 = vand.u32 %v26, 4294901760
    %8104 = vmatpush1.msra.mxu0 %v8103
    %8105 = vmatprep.subr.mxu0 0.0
    %v8106 = vand.u32 %v25, 4294901760
    %8107 = vmatpush1.msra.mxu0 %v8106
    %8108 = vmatprep.subr.mxu0 0.0
    %v8109 = vand.u32 %v24, 4294901760
    %8110 = vmatpush1.msra.mxu0 %v8109
    %8111 = vmatprep.subr.mxu0 0.0
    %v8112 = vand.u32 %v23, 4294901760
    %8113 = vmatpush1.msra.mxu0 %v8112
    %8114 = vmatprep.subr.mxu0 0.0
    %v8115 = vand.u32 %v22, 4294901760
    %8116 = vmatpush1.msra.mxu0 %v8115
    %8117 = vmatprep.subr.mxu0 0.0
    %v8118 = vand.u32 %v21, 4294901760
    %8119 = vmatpush1.msra.mxu0 %v8118
    %8120 = vmatprep.subr.mxu0 0.0
    %v8121 = vand.u32 %v20, 4294901760
    %8122 = vmatpush1.msra.mxu0 %v8121
    %8123 = vmatprep.subr.mxu0 0.0
    %v8124 = vand.u32 %v19, 4294901760
    %8125 = vmatpush1.msra.mxu0 %v8124
    %8126 = vmatprep.subr.mxu0 0.0
    %v8127 = vand.u32 %v18, 4294901760
    %8128 = vmatpush1.msra.mxu0 %v8127
    %8129 = vmatprep.subr.mxu0 0.0
    %v8130 = vand.u32 %v17, 4294901760
    %8131 = vmatpush1.msra.mxu0 %v8130
    %8132 = vmatprep.subr.mxu0 0.0
    %v8133 = vand.u32 %v16, 4294901760
    %8134 = vmatpush1.msra.mxu0 %v8133
    %8135 = vmatprep.subr.mxu0 0.0
    %v8136 = vand.u32 %v15, 4294901760
    %8137 = vmatpush1.msra.mxu0 %v8136
    %8138 = vmatprep.subr.mxu0 0.0
    %v8139 = vand.u32 %v14, 4294901760
    %8140 = vmatpush1.msra.mxu0 %v8139
    %8141 = vmatprep.subr.mxu0 0.0
    %8142 = vmatpush2.msra.mxu0 0.0
    %8143 = vmatprep.subr.mxu0 0.0
    %8144 = vmatpush2.msra.mxu0 0.0
    %8145 = vmatprep.subr.mxu0 0.0
    %8146 = vmatpush2.msra.mxu0 0.0
    %8147 = vmatprep.subr.mxu0 0.0
    %8148 = vmatpush2.msra.mxu0 0.0
    %8149 = vmatprep.subr.mxu0 0.0
    %8150 = vmatpush2.msra.mxu0 0.0
    %8151 = vmatprep.subr.mxu0 0.0
    %8152 = vmatpush2.msra.mxu0 0.0
    %8153 = vmatprep.subr.mxu0 0.0
    %8154 = vmatpush2.msra.mxu0 0.0
    %8155 = vmatprep.subr.mxu0 0.0
    %8156 = vmatpush2.msra.mxu0 0.0
    %8157 = vmatprep.subr.mxu0 0.0
    %8158 = vmatpush2.msra.mxu0 0.0
    %8159 = vmatprep.subr.mxu0 0.0
    %8160 = vmatpush2.msra.mxu0 0.0
    %8161 = vmatprep.subr.mxu0 0.0
    %8162 = vmatpush2.msra.mxu0 0.0
    %8163 = vmatprep.subr.mxu0 0.0
    %8164 = vmatpush2.msra.mxu0 0.0
    %8165 = vmatprep.subr.mxu0 0.0
    %8166 = vmatpush2.msra.mxu0 0.0
    %8167 = vmatprep.subr.mxu0 0.0
    %8168 = vmatpush2.msra.mxu0 0.0
    %8169 = vmatprep.subr.mxu0 0.0
    %8170 = vmatpush2.msra.mxu0 0.0
    %8171 = vmatprep.subr.mxu0 0.0
    %8172 = vmatpush2.msra.mxu0 0.0
    %8173 = vmatprep.mubr.f32.mxu0 0.0
    %v8174 = vand.u32 %v7538, 4294901760
    %8175 = vmatmul.mubr.f32.gmra.mxu0 %v8174
    %v8176 = vpop.f32.mrf.mxu0
    %v8177 = vadd.f32 %v8090, %v8176
    %v8178 = vpop.f32.mrf.mxu0
    %8179 = vdwg.mxu0
    %v8180 = vand.u32 2147483647, %v8177
    %vm8181 = vcmp.le.f32.partialorder %v8180, 0.7853982
    %vm8182 = vcmp.lt.s32.totalorder %v8177, 0
    %v8183 = vand.u32 %v8177, 2139095040
    %v8184 = vshrl.u32 %v8183, 23
    %v8185 = vsub.s32 %v8184, 127
    %v8186 = vand.u32 2147483647, %v8177
    %v8187 = vand.u32 %v8186, 8388607
    %v8188 = vor.u32 %v8187, 8388608
    %v8189 = vsub.s32 0, %v8188
    %v8190 = vadd.s32 %v8185, 1
    %vm8191 = vcmp.gt.s32.totalorder %v8190, 0
    %v8192 = vsel %vm8191, %v8190, 0
    %v8193 = vshrl.u32 %v8192, 5
    %v8194 = vand.u32 %v8192, 31
    %v8195 = vsub.s32 32, %v8194
    %v8196 = vshrl.u32 683565275, %v8195
    %v8197 = vshll.u32 683565275, %v8194
    %v8198 = vshrl.u32 2475754826, %v8195
    %v8199 = vor.u32 %v8197, %v8198
    %v8200 = vshll.u32 2475754826, %v8194
    %v8201 = vshrl.u32 2131351028, %v8195
    %v8202 = vor.u32 %v8200, %v8201
    %v8203 = vshll.u32 2131351028, %v8194
    %v8204 = vshrl.u32 2102212464, %v8195
    %v8205 = vor.u32 %v8203, %v8204
    %v8206 = vshll.u32 2102212464, %v8194
    %v8207 = vshrl.u32 920167782, %v8195
    %v8208 = vor.u32 %v8206, %v8207
    %v8209 = vshll.u32 920167782, %v8194
    %v8210 = vshrl.u32 1326507024, %v8195
    %v8211 = vor.u32 %v8209, %v8210
    %vm8212 = vcmp.lt.s32.totalorder %v8193, 1
    %vm8213 = vcmp.lt.s32.totalorder %v8193, 2
    %vm8214 = vcmp.lt.s32.totalorder %v8193, 3
    %vm8215 = vcmp.lt.s32.totalorder %v8193, 4
    %v8216 = vsel %vm8212, %v8196, %v8199
    %v8217 = vsel %vm8215, %v8205, 2102212464
    %v8218 = vsel %vm8214, %v8202, %v8217
    %v8219 = vsel %vm8213, %v8216, %v8218
    %v8220 = vsel %vm8212, %v8199, %v8202
    %v8221 = vsel %vm8215, %v8208, 920167782
    %v8222 = vsel %vm8214, %v8205, %v8221
    %v8223 = vsel %vm8213, %v8220, %v8222
    %v8224 = vsel %vm8212, %v8202, %v8205
    %v8225 = vsel %vm8215, %v8211, 1326507024
    %v8226 = vsel %vm8214, %v8208, %v8225
    %v8227 = vsel %vm8213, %v8224, %v8226
    %v8228 = vshll.u32 %v8188, 8
    %v8229 = vmul.u32.u64.compose %v8228, %v8227
    %v8230 = vextract.low.u32 %v8229
    %v8231 = vextract.high.u32 %v8229
    %v8232 = vmul.u32.u64.compose %v8228, %v8223
    %v8233 = vextract.low.u32 %v8232
    %v8234 = vextract.high.u32 %v8232
    %v8235 = vmul.u32 %v8228, %v8219
    %v8236 = vadd.s32 %v8231, %v8233
    %vm8237 = vc.u32 %v8231, %v8233
    %v8238 = vadd.s32 %v8234, 1
    %v8239 = vsel %vm8237, %v8238, %v8234
    %v8240 = vadd.s32 %v8235, %v8239
    %v8241 = vadd.s32 %v8240, 536870912
    %v8242 = vshrl.u32 %v8241, 30
    %v8243 = vshll.u32 %v8242, 30
    %v8244 = vsub.s32 %v8240, %v8243
    %vm8245 = vcmp.lt.s32.totalorder %v8244, 0
    %v8246 = vsub.s32 0, %v8244
    %v8247 = vsel %vm8245, %v8246, %v8244
    %v8248 = vclz %v8247
    %v8249 = vsub.s32 %v8248, 2
    %vm8250 = vcmp.gt.s32.totalorder 0, %v8249
    %v8251 = vsel %vm8250, 0, %v8249
    %v8252 = vsub.s32 32, %v8251
    %v8253 = vshll.u32 %v8244, %v8251
    %v8254 = vshrl.u32 %v8236, %v8252
    %v8255 = vor.u32 %v8253, %v8254
    %v8256 = vsub.s32 4294967266, %v8251
    %v8257 = vadd.s32 %v8256, 127
    %v8258 = vshll.u32 %v8257, 23
    %v8259 = vor.u32 4788187, %v8258
    %v8260 = vand.u32 2147483647, %v8259
    %v8262 = vcvt.s32.f32 %v8255
    %v8263 = vmul.f32 %v8262, %v8260
    %v8264 = vxor.u32 %v8263, 2147483648
    %v8265 = vsel %vm8182, %v8264, %v8263
    %v8266 = vsub.s32 4, %v8242
    %v8267 = vsel %vm8182, %v8266, %v8242
    %v8268 = vsel %vm8181, %v8177, %v8265
    %v8269 = vsel %vm8181, 0, %v8267
    %v8270 = vcosq.f32.pop %v8268
    %v8271 = vsinq.f32.pop %v8268
    %vm8272 = vweird.f32 %v8177
    %v8273 = vadd.s32 %v8269, 3
    %v8274 = vand.u32 %v8273, 3
    %vm8275 = vcmp.lt.s32.totalorder %v8274, 2
    %vm8276 = vcmp.eq.s32.totalorder %v8274, 0
    %v8277 = vxor.u32 %v8271, 2147483648
    %v8278 = vsel %vm8276, %v8270, %v8277
    %vm8279 = vcmp.eq.s32.totalorder %v8274, 2
    %v8280 = vxor.u32 %v8270, 2147483648
    %v8281 = vsel %vm8279, %v8280, %v8271
    %v8282 = vsel %vm8275, %v8278, %v8281
    %v8283 = vsel %vm8272, nan, %v8282
    %v8284 = vsub.f32 %v6787, %v7534
    %v8285 = vadd.f32 %v8284, %v8283
    %v8286 = vmul.f32 %v8285, 0.05050505
    %v8287 = vadd.f32 %v49, %v8286
    %8288 = vmatprep.subr.mxu0 0.0
    %v8289 = vand.u32 %v29, 4294901760
    %8290 = vmatpush1.msra.mxu0 %v8289
    %8291 = vmatprep.subr.mxu0 0.0
    %v8292 = vand.u32 %v28, 4294901760
    %8293 = vmatpush1.msra.mxu0 %v8292
    %8294 = vmatprep.subr.mxu0 0.0
    %v8295 = vand.u32 %v27, 4294901760
    %8296 = vmatpush1.msra.mxu0 %v8295
    %8297 = vmatprep.subr.mxu0 0.0
    %v8298 = vand.u32 %v26, 4294901760
    %8299 = vmatpush1.msra.mxu0 %v8298
    %8300 = vmatprep.subr.mxu0 0.0
    %v8301 = vand.u32 %v25, 4294901760
    %8302 = vmatpush1.msra.mxu0 %v8301
    %8303 = vmatprep.subr.mxu0 0.0
    %v8304 = vand.u32 %v24, 4294901760
    %8305 = vmatpush1.msra.mxu0 %v8304
    %8306 = vmatprep.subr.mxu0 0.0
    %v8307 = vand.u32 %v23, 4294901760
    %8308 = vmatpush1.msra.mxu0 %v8307
    %8309 = vmatprep.subr.mxu0 0.0
    %v8310 = vand.u32 %v22, 4294901760
    %8311 = vmatpush1.msra.mxu0 %v8310
    %8312 = vmatprep.subr.mxu0 0.0
    %v8313 = vand.u32 %v21, 4294901760
    %8314 = vmatpush1.msra.mxu0 %v8313
    %8315 = vmatprep.subr.mxu0 0.0
    %v8316 = vand.u32 %v20, 4294901760
    %8317 = vmatpush1.msra.mxu0 %v8316
    %8318 = vmatprep.subr.mxu0 0.0
    %v8319 = vand.u32 %v19, 4294901760
    %8320 = vmatpush1.msra.mxu0 %v8319
    %8321 = vmatprep.subr.mxu0 0.0
    %v8322 = vand.u32 %v18, 4294901760
    %8323 = vmatpush1.msra.mxu0 %v8322
    %8324 = vmatprep.subr.mxu0 0.0
    %v8325 = vand.u32 %v17, 4294901760
    %8326 = vmatpush1.msra.mxu0 %v8325
    %8327 = vmatprep.subr.mxu0 0.0
    %v8328 = vand.u32 %v16, 4294901760
    %8329 = vmatpush1.msra.mxu0 %v8328
    %8330 = vmatprep.subr.mxu0 0.0
    %v8331 = vand.u32 %v15, 4294901760
    %8332 = vmatpush1.msra.mxu0 %v8331
    %8333 = vmatprep.subr.mxu0 0.0
    %v8334 = vand.u32 %v14, 4294901760
    %8335 = vmatpush1.msra.mxu0 %v8334
    %8336 = vmatprep.subr.mxu0 0.0
    %8337 = vmatpush2.msra.mxu0 0.0
    %8338 = vmatprep.subr.mxu0 0.0
    %8339 = vmatpush2.msra.mxu0 0.0
    %8340 = vmatprep.subr.mxu0 0.0
    %8341 = vmatpush2.msra.mxu0 0.0
    %8342 = vmatprep.subr.mxu0 0.0
    %8343 = vmatpush2.msra.mxu0 0.0
    %8344 = vmatprep.subr.mxu0 0.0
    %8345 = vmatpush2.msra.mxu0 0.0
    %8346 = vmatprep.subr.mxu0 0.0
    %8347 = vmatpush2.msra.mxu0 0.0
    %8348 = vmatprep.subr.mxu0 0.0
    %8349 = vmatpush2.msra.mxu0 0.0
    %8350 = vmatprep.subr.mxu0 0.0
    %8351 = vmatpush2.msra.mxu0 0.0
    %8352 = vmatprep.subr.mxu0 0.0
    %8353 = vmatpush2.msra.mxu0 0.0
    %8354 = vmatprep.subr.mxu0 0.0
    %8355 = vmatpush2.msra.mxu0 0.0
    %8356 = vmatprep.subr.mxu0 0.0
    %8357 = vmatpush2.msra.mxu0 0.0
    %8358 = vmatprep.subr.mxu0 0.0
    %8359 = vmatpush2.msra.mxu0 0.0
    %8360 = vmatprep.subr.mxu0 0.0
    %8361 = vmatpush2.msra.mxu0 0.0
    %8362 = vmatprep.subr.mxu0 0.0
    %8363 = vmatpush2.msra.mxu0 0.0
    %8364 = vmatprep.subr.mxu0 0.0
    %8365 = vmatpush2.msra.mxu0 0.0
    %8366 = vmatprep.subr.mxu0 0.0
    %8367 = vmatpush2.msra.mxu0 0.0
    %8368 = vmatprep.mubr.f32.mxu0 0.0
    %v8369 = vand.u32 %v8287, 4294901760
    %v8370 = vsub.f32 %v8287, %v8369
    %v8371 = vand.u32 %v8370, 4294901760
    %v8372 = vsub.f32 %v8370, %v8371
    %v8373 = vand.u32 %v8372, 4294901760
    %8374 = vmatmul.mubr.f32.gmra.mxu0 %v8373
    %v8375 = vpop.f32.mrf.mxu0
    %v8376 = vadd.f32 %v35, %v8375
    %v8377 = vpop.f32.mrf.mxu0
    %8378 = vdwg.mxu0
    %8379 = vmatprep.subr.mxu0 0.0
    %v8380 = vand.u32 %v29, 4294901760
    %v8381 = vsub.f32 %v29, %v8380
    %v8382 = vand.u32 %v8381, 4294901760
    %v8383 = vsub.f32 %v8381, %v8382
    %v8384 = vand.u32 %v8383, 4294901760
    %8385 = vmatpush1.msra.mxu0 %v8384
    %8386 = vmatprep.subr.mxu0 0.0
    %v8387 = vand.u32 %v28, 4294901760
    %v8388 = vsub.f32 %v28, %v8387
    %v8389 = vand.u32 %v8388, 4294901760
    %v8390 = vsub.f32 %v8388, %v8389
    %v8391 = vand.u32 %v8390, 4294901760
    %8392 = vmatpush1.msra.mxu0 %v8391
    %8393 = vmatprep.subr.mxu0 0.0
    %v8394 = vand.u32 %v27, 4294901760
    %v8395 = vsub.f32 %v27, %v8394
    %v8396 = vand.u32 %v8395, 4294901760
    %v8397 = vsub.f32 %v8395, %v8396
    %v8398 = vand.u32 %v8397, 4294901760
    %8399 = vmatpush1.msra.mxu0 %v8398
    %8400 = vmatprep.subr.mxu0 0.0
    %v8401 = vand.u32 %v26, 4294901760
    %v8402 = vsub.f32 %v26, %v8401
    %v8403 = vand.u32 %v8402, 4294901760
    %v8404 = vsub.f32 %v8402, %v8403
    %v8405 = vand.u32 %v8404, 4294901760
    %8406 = vmatpush1.msra.mxu0 %v8405
    %8407 = vmatprep.subr.mxu0 0.0
    %v8408 = vand.u32 %v25, 4294901760
    %v8409 = vsub.f32 %v25, %v8408
    %v8410 = vand.u32 %v8409, 4294901760
    %v8411 = vsub.f32 %v8409, %v8410
    %v8412 = vand.u32 %v8411, 4294901760
    %8413 = vmatpush1.msra.mxu0 %v8412
    %8414 = vmatprep.subr.mxu0 0.0
    %v8415 = vand.u32 %v24, 4294901760
    %v8416 = vsub.f32 %v24, %v8415
    %v8417 = vand.u32 %v8416, 4294901760
    %v8418 = vsub.f32 %v8416, %v8417
    %v8419 = vand.u32 %v8418, 4294901760
    %8420 = vmatpush1.msra.mxu0 %v8419
    %8421 = vmatprep.subr.mxu0 0.0
    %v8422 = vand.u32 %v23, 4294901760
    %v8423 = vsub.f32 %v23, %v8422
    %v8424 = vand.u32 %v8423, 4294901760
    %v8425 = vsub.f32 %v8423, %v8424
    %v8426 = vand.u32 %v8425, 4294901760
    %8427 = vmatpush1.msra.mxu0 %v8426
    %8428 = vmatprep.subr.mxu0 0.0
    %v8429 = vand.u32 %v22, 4294901760
    %v8430 = vsub.f32 %v22, %v8429
    %v8431 = vand.u32 %v8430, 4294901760
    %v8432 = vsub.f32 %v8430, %v8431
    %v8433 = vand.u32 %v8432, 4294901760
    %8434 = vmatpush1.msra.mxu0 %v8433
    %8435 = vmatprep.subr.mxu0 0.0
    %v8436 = vand.u32 %v21, 4294901760
    %v8437 = vsub.f32 %v21, %v8436
    %v8438 = vand.u32 %v8437, 4294901760
    %v8439 = vsub.f32 %v8437, %v8438
    %v8440 = vand.u32 %v8439, 4294901760
    %8441 = vmatpush1.msra.mxu0 %v8440
    %8442 = vmatprep.subr.mxu0 0.0
    %v8443 = vand.u32 %v20, 4294901760
    %v8444 = vsub.f32 %v20, %v8443
    %v8445 = vand.u32 %v8444, 4294901760
    %v8446 = vsub.f32 %v8444, %v8445
    %v8447 = vand.u32 %v8446, 4294901760
    %8448 = vmatpush1.msra.mxu0 %v8447
    %8449 = vmatprep.subr.mxu0 0.0
    %v8450 = vand.u32 %v19, 4294901760
    %v8451 = vsub.f32 %v19, %v8450
    %v8452 = vand.u32 %v8451, 4294901760
    %v8453 = vsub.f32 %v8451, %v8452
    %v8454 = vand.u32 %v8453, 4294901760
    %8455 = vmatpush1.msra.mxu0 %v8454
    %8456 = vmatprep.subr.mxu0 0.0
    %v8457 = vand.u32 %v18, 4294901760
    %v8458 = vsub.f32 %v18, %v8457
    %v8459 = vand.u32 %v8458, 4294901760
    %v8460 = vsub.f32 %v8458, %v8459
    %v8461 = vand.u32 %v8460, 4294901760
    %8462 = vmatpush1.msra.mxu0 %v8461
    %8463 = vmatprep.subr.mxu0 0.0
    %v8464 = vand.u32 %v17, 4294901760
    %v8465 = vsub.f32 %v17, %v8464
    %v8466 = vand.u32 %v8465, 4294901760
    %v8467 = vsub.f32 %v8465, %v8466
    %v8468 = vand.u32 %v8467, 4294901760
    %8469 = vmatpush1.msra.mxu0 %v8468
    %8470 = vmatprep.subr.mxu0 0.0
    %v8471 = vand.u32 %v16, 4294901760
    %v8472 = vsub.f32 %v16, %v8471
    %v8473 = vand.u32 %v8472, 4294901760
    %v8474 = vsub.f32 %v8472, %v8473
    %v8475 = vand.u32 %v8474, 4294901760
    %8476 = vmatpush1.msra.mxu0 %v8475
    %8477 = vmatprep.subr.mxu0 0.0
    %v8478 = vand.u32 %v15, 4294901760
    %v8479 = vsub.f32 %v15, %v8478
    %v8480 = vand.u32 %v8479, 4294901760
    %v8481 = vsub.f32 %v8479, %v8480
    %v8482 = vand.u32 %v8481, 4294901760
    %8483 = vmatpush1.msra.mxu0 %v8482
    %8484 = vmatprep.subr.mxu0 0.0
    %v8485 = vand.u32 %v14, 4294901760
    %v8486 = vsub.f32 %v14, %v8485
    %v8487 = vand.u32 %v8486, 4294901760
    %v8488 = vsub.f32 %v8486, %v8487
    %v8489 = vand.u32 %v8488, 4294901760
    %8490 = vmatpush1.msra.mxu0 %v8489
    %8491 = vmatprep.subr.mxu0 0.0
    %8492 = vmatpush2.msra.mxu0 0.0
    %8493 = vmatprep.subr.mxu0 0.0
    %8494 = vmatpush2.msra.mxu0 0.0
    %8495 = vmatprep.subr.mxu0 0.0
    %8496 = vmatpush2.msra.mxu0 0.0
    %8497 = vmatprep.subr.mxu0 0.0
    %8498 = vmatpush2.msra.mxu0 0.0
    %8499 = vmatprep.subr.mxu0 0.0
    %8500 = vmatpush2.msra.mxu0 0.0
    %8501 = vmatprep.subr.mxu0 0.0
    %8502 = vmatpush2.msra.mxu0 0.0
    %8503 = vmatprep.subr.mxu0 0.0
    %8504 = vmatpush2.msra.mxu0 0.0
    %8505 = vmatprep.subr.mxu0 0.0
    %8506 = vmatpush2.msra.mxu0 0.0
    %8507 = vmatprep.subr.mxu0 0.0
    %8508 = vmatpush2.msra.mxu0 0.0
    %8509 = vmatprep.subr.mxu0 0.0
    %8510 = vmatpush2.msra.mxu0 0.0
    %8511 = vmatprep.subr.mxu0 0.0
    %8512 = vmatpush2.msra.mxu0 0.0
    %8513 = vmatprep.subr.mxu0 0.0
    %8514 = vmatpush2.msra.mxu0 0.0
    %8515 = vmatprep.subr.mxu0 0.0
    %8516 = vmatpush2.msra.mxu0 0.0
    %8517 = vmatprep.subr.mxu0 0.0
    %8518 = vmatpush2.msra.mxu0 0.0
    %8519 = vmatprep.subr.mxu0 0.0
    %8520 = vmatpush2.msra.mxu0 0.0
    %8521 = vmatprep.subr.mxu0 0.0
    %8522 = vmatpush2.msra.mxu0 0.0
    %8523 = vmatprep.mubr.f32.mxu0 0.0
    %v8524 = vand.u32 %v8287, 4294901760
    %8525 = vmatmul.mubr.f32.gmra.mxu0 %v8524
    %v8526 = vpop.f32.mrf.mxu0
    %v8527 = vadd.f32 %v8376, %v8526
    %v8528 = vpop.f32.mrf.mxu0
    %8529 = vdwg.mxu0
    %8530 = vmatprep.subr.mxu0 0.0
    %v8531 = vand.u32 %v29, 4294901760
    %v8532 = vsub.f32 %v29, %v8531
    %8533 = vmatpush1.msra.mxu0 %v8532
    %8534 = vmatprep.subr.mxu0 0.0
    %v8535 = vand.u32 %v28, 4294901760
    %v8536 = vsub.f32 %v28, %v8535
    %8537 = vmatpush1.msra.mxu0 %v8536
    %8538 = vmatprep.subr.mxu0 0.0
    %v8539 = vand.u32 %v27, 4294901760
    %v8540 = vsub.f32 %v27, %v8539
    %8541 = vmatpush1.msra.mxu0 %v8540
    %8542 = vmatprep.subr.mxu0 0.0
    %v8543 = vand.u32 %v26, 4294901760
    %v8544 = vsub.f32 %v26, %v8543
    %8545 = vmatpush1.msra.mxu0 %v8544
    %8546 = vmatprep.subr.mxu0 0.0
    %v8547 = vand.u32 %v25, 4294901760
    %v8548 = vsub.f32 %v25, %v8547
    %8549 = vmatpush1.msra.mxu0 %v8548
    %8550 = vmatprep.subr.mxu0 0.0
    %v8551 = vand.u32 %v24, 4294901760
    %v8552 = vsub.f32 %v24, %v8551
    %8553 = vmatpush1.msra.mxu0 %v8552
    %8554 = vmatprep.subr.mxu0 0.0
    %v8555 = vand.u32 %v23, 4294901760
    %v8556 = vsub.f32 %v23, %v8555
    %8557 = vmatpush1.msra.mxu0 %v8556
    %8558 = vmatprep.subr.mxu0 0.0
    %v8559 = vand.u32 %v22, 4294901760
    %v8560 = vsub.f32 %v22, %v8559
    %8561 = vmatpush1.msra.mxu0 %v8560
    %8562 = vmatprep.subr.mxu0 0.0
    %v8563 = vand.u32 %v21, 4294901760
    %v8564 = vsub.f32 %v21, %v8563
    %8565 = vmatpush1.msra.mxu0 %v8564
    %8566 = vmatprep.subr.mxu0 0.0
    %v8567 = vand.u32 %v20, 4294901760
    %v8568 = vsub.f32 %v20, %v8567
    %8569 = vmatpush1.msra.mxu0 %v8568
    %8570 = vmatprep.subr.mxu0 0.0
    %v8571 = vand.u32 %v19, 4294901760
    %v8572 = vsub.f32 %v19, %v8571
    %8573 = vmatpush1.msra.mxu0 %v8572
    %8574 = vmatprep.subr.mxu0 0.0
    %v8575 = vand.u32 %v18, 4294901760
    %v8576 = vsub.f32 %v18, %v8575
    %8577 = vmatpush1.msra.mxu0 %v8576
    %8578 = vmatprep.subr.mxu0 0.0
    %v8579 = vand.u32 %v17, 4294901760
    %v8580 = vsub.f32 %v17, %v8579
    %8581 = vmatpush1.msra.mxu0 %v8580
    %8582 = vmatprep.subr.mxu0 0.0
    %v8583 = vand.u32 %v16, 4294901760
    %v8584 = vsub.f32 %v16, %v8583
    %8585 = vmatpush1.msra.mxu0 %v8584
    %8586 = vmatprep.subr.mxu0 0.0
    %v8587 = vand.u32 %v15, 4294901760
    %v8588 = vsub.f32 %v15, %v8587
    %8589 = vmatpush1.msra.mxu0 %v8588
    %8590 = vmatprep.subr.mxu0 0.0
    %v8591 = vand.u32 %v14, 4294901760
    %v8592 = vsub.f32 %v14, %v8591
    %8593 = vmatpush1.msra.mxu0 %v8592
    %8594 = vmatprep.subr.mxu0 0.0
    %8595 = vmatpush2.msra.mxu0 0.0
    %8596 = vmatprep.subr.mxu0 0.0
    %8597 = vmatpush2.msra.mxu0 0.0
    %8598 = vmatprep.subr.mxu0 0.0
    %8599 = vmatpush2.msra.mxu0 0.0
    %8600 = vmatprep.subr.mxu0 0.0
    %8601 = vmatpush2.msra.mxu0 0.0
    %8602 = vmatprep.subr.mxu0 0.0
    %8603 = vmatpush2.msra.mxu0 0.0
    %8604 = vmatprep.subr.mxu0 0.0
    %8605 = vmatpush2.msra.mxu0 0.0
    %8606 = vmatprep.subr.mxu0 0.0
    %8607 = vmatpush2.msra.mxu0 0.0
    %8608 = vmatprep.subr.mxu0 0.0
    %8609 = vmatpush2.msra.mxu0 0.0
    %8610 = vmatprep.subr.mxu0 0.0
    %8611 = vmatpush2.msra.mxu0 0.0
    %8612 = vmatprep.subr.mxu0 0.0
    %8613 = vmatpush2.msra.mxu0 0.0
    %8614 = vmatprep.subr.mxu0 0.0
    %8615 = vmatpush2.msra.mxu0 0.0
    %8616 = vmatprep.subr.mxu0 0.0
    %8617 = vmatpush2.msra.mxu0 0.0
    %8618 = vmatprep.subr.mxu0 0.0
    %8619 = vmatpush2.msra.mxu0 0.0
    %8620 = vmatprep.subr.mxu0 0.0
    %8621 = vmatpush2.msra.mxu0 0.0
    %8622 = vmatprep.subr.mxu0 0.0
    %8623 = vmatpush2.msra.mxu0 0.0
    %8624 = vmatprep.subr.mxu0 0.0
    %8625 = vmatpush2.msra.mxu0 0.0
    %8626 = vmatprep.mubr.f32.mxu0 0.0
    %v8627 = vand.u32 %v8287, 4294901760
    %v8628 = vsub.f32 %v8287, %v8627
    %8629 = vmatmul.mubr.f32.gmra.mxu0 %v8628
    %v8630 = vpop.f32.mrf.mxu0
    %v8631 = vadd.f32 %v8527, %v8630
    %v8632 = vpop.f32.mrf.mxu0
    %8633 = vdwg.mxu0
    %8634 = vmatprep.subr.mxu0 0.0
    %v8635 = vand.u32 %v29, 4294901760
    %8636 = vmatpush1.msra.mxu0 %v8635
    %8637 = vmatprep.subr.mxu0 0.0
    %v8638 = vand.u32 %v28, 4294901760
    %8639 = vmatpush1.msra.mxu0 %v8638
    %8640 = vmatprep.subr.mxu0 0.0
    %v8641 = vand.u32 %v27, 4294901760
    %8642 = vmatpush1.msra.mxu0 %v8641
    %8643 = vmatprep.subr.mxu0 0.0
    %v8644 = vand.u32 %v26, 4294901760
    %8645 = vmatpush1.msra.mxu0 %v8644
    %8646 = vmatprep.subr.mxu0 0.0
    %v8647 = vand.u32 %v25, 4294901760
    %8648 = vmatpush1.msra.mxu0 %v8647
    %8649 = vmatprep.subr.mxu0 0.0
    %v8650 = vand.u32 %v24, 4294901760
    %8651 = vmatpush1.msra.mxu0 %v8650
    %8652 = vmatprep.subr.mxu0 0.0
    %v8653 = vand.u32 %v23, 4294901760
    %8654 = vmatpush1.msra.mxu0 %v8653
    %8655 = vmatprep.subr.mxu0 0.0
    %v8656 = vand.u32 %v22, 4294901760
    %8657 = vmatpush1.msra.mxu0 %v8656
    %8658 = vmatprep.subr.mxu0 0.0
    %v8659 = vand.u32 %v21, 4294901760
    %8660 = vmatpush1.msra.mxu0 %v8659
    %8661 = vmatprep.subr.mxu0 0.0
    %v8662 = vand.u32 %v20, 4294901760
    %8663 = vmatpush1.msra.mxu0 %v8662
    %8664 = vmatprep.subr.mxu0 0.0
    %v8665 = vand.u32 %v19, 4294901760
    %8666 = vmatpush1.msra.mxu0 %v8665
    %8667 = vmatprep.subr.mxu0 0.0
    %v8668 = vand.u32 %v18, 4294901760
    %8669 = vmatpush1.msra.mxu0 %v8668
    %8670 = vmatprep.subr.mxu0 0.0
    %v8671 = vand.u32 %v17, 4294901760
    %8672 = vmatpush1.msra.mxu0 %v8671
    %8673 = vmatprep.subr.mxu0 0.0
    %v8674 = vand.u32 %v16, 4294901760
    %8675 = vmatpush1.msra.mxu0 %v8674
    %8676 = vmatprep.subr.mxu0 0.0
    %v8677 = vand.u32 %v15, 4294901760
    %8678 = vmatpush1.msra.mxu0 %v8677
    %8679 = vmatprep.subr.mxu0 0.0
    %v8680 = vand.u32 %v14, 4294901760
    %8681 = vmatpush1.msra.mxu0 %v8680
    %8682 = vmatprep.subr.mxu0 0.0
    %8683 = vmatpush2.msra.mxu0 0.0
    %8684 = vmatprep.subr.mxu0 0.0
    %8685 = vmatpush2.msra.mxu0 0.0
    %8686 = vmatprep.subr.mxu0 0.0
    %8687 = vmatpush2.msra.mxu0 0.0
    %8688 = vmatprep.subr.mxu0 0.0
    %8689 = vmatpush2.msra.mxu0 0.0
    %8690 = vmatprep.subr.mxu0 0.0
    %8691 = vmatpush2.msra.mxu0 0.0
    %8692 = vmatprep.subr.mxu0 0.0
    %8693 = vmatpush2.msra.mxu0 0.0
    %8694 = vmatprep.subr.mxu0 0.0
    %8695 = vmatpush2.msra.mxu0 0.0
    %8696 = vmatprep.subr.mxu0 0.0
    %8697 = vmatpush2.msra.mxu0 0.0
    %8698 = vmatprep.subr.mxu0 0.0
    %8699 = vmatpush2.msra.mxu0 0.0
    %8700 = vmatprep.subr.mxu0 0.0
    %8701 = vmatpush2.msra.mxu0 0.0
    %8702 = vmatprep.subr.mxu0 0.0
    %8703 = vmatpush2.msra.mxu0 0.0
    %8704 = vmatprep.subr.mxu0 0.0
    %8705 = vmatpush2.msra.mxu0 0.0
    %8706 = vmatprep.subr.mxu0 0.0
    %8707 = vmatpush2.msra.mxu0 0.0
    %8708 = vmatprep.subr.mxu0 0.0
    %8709 = vmatpush2.msra.mxu0 0.0
    %8710 = vmatprep.subr.mxu0 0.0
    %8711 = vmatpush2.msra.mxu0 0.0
    %8712 = vmatprep.subr.mxu0 0.0
    %8713 = vmatpush2.msra.mxu0 0.0
    %8714 = vmatprep.mubr.f32.mxu0 0.0
    %v8715 = vand.u32 %v8287, 4294901760
    %v8716 = vsub.f32 %v8287, %v8715
    %v8717 = vand.u32 %v8716, 4294901760
    %8718 = vmatmul.mubr.f32.gmra.mxu0 %v8717
    %v8719 = vpop.f32.mrf.mxu0
    %v8720 = vadd.f32 %v8631, %v8719
    %v8721 = vpop.f32.mrf.mxu0
    %8722 = vdwg.mxu0
    %8723 = vmatprep.subr.mxu0 0.0
    %v8724 = vand.u32 %v29, 4294901760
    %v8725 = vsub.f32 %v29, %v8724
    %v8726 = vand.u32 %v8725, 4294901760
    %8727 = vmatpush1.msra.mxu0 %v8726
    %8728 = vmatprep.subr.mxu0 0.0
    %v8729 = vand.u32 %v28, 4294901760
    %v8730 = vsub.f32 %v28, %v8729
    %v8731 = vand.u32 %v8730, 4294901760
    %8732 = vmatpush1.msra.mxu0 %v8731
    %8733 = vmatprep.subr.mxu0 0.0
    %v8734 = vand.u32 %v27, 4294901760
    %v8735 = vsub.f32 %v27, %v8734
    %v8736 = vand.u32 %v8735, 4294901760
    %8737 = vmatpush1.msra.mxu0 %v8736
    %8738 = vmatprep.subr.mxu0 0.0
    %v8739 = vand.u32 %v26, 4294901760
    %v8740 = vsub.f32 %v26, %v8739
    %v8741 = vand.u32 %v8740, 4294901760
    %8742 = vmatpush1.msra.mxu0 %v8741
    %8743 = vmatprep.subr.mxu0 0.0
    %v8744 = vand.u32 %v25, 4294901760
    %v8745 = vsub.f32 %v25, %v8744
    %v8746 = vand.u32 %v8745, 4294901760
    %8747 = vmatpush1.msra.mxu0 %v8746
    %8748 = vmatprep.subr.mxu0 0.0
    %v8749 = vand.u32 %v24, 4294901760
    %v8750 = vsub.f32 %v24, %v8749
    %v8751 = vand.u32 %v8750, 4294901760
    %8752 = vmatpush1.msra.mxu0 %v8751
    %8753 = vmatprep.subr.mxu0 0.0
    %v8754 = vand.u32 %v23, 4294901760
    %v8755 = vsub.f32 %v23, %v8754
    %v8756 = vand.u32 %v8755, 4294901760
    %8757 = vmatpush1.msra.mxu0 %v8756
    %8758 = vmatprep.subr.mxu0 0.0
    %v8759 = vand.u32 %v22, 4294901760
    %v8760 = vsub.f32 %v22, %v8759
    %v8761 = vand.u32 %v8760, 4294901760
    %8762 = vmatpush1.msra.mxu0 %v8761
    %8763 = vmatprep.subr.mxu0 0.0
    %v8764 = vand.u32 %v21, 4294901760
    %v8765 = vsub.f32 %v21, %v8764
    %v8766 = vand.u32 %v8765, 4294901760
    %8767 = vmatpush1.msra.mxu0 %v8766
    %8768 = vmatprep.subr.mxu0 0.0
    %v8769 = vand.u32 %v20, 4294901760
    %v8770 = vsub.f32 %v20, %v8769
    %v8771 = vand.u32 %v8770, 4294901760
    %8772 = vmatpush1.msra.mxu0 %v8771
    %8773 = vmatprep.subr.mxu0 0.0
    %v8774 = vand.u32 %v19, 4294901760
    %v8775 = vsub.f32 %v19, %v8774
    %v8776 = vand.u32 %v8775, 4294901760
    %8777 = vmatpush1.msra.mxu0 %v8776
    %8778 = vmatprep.subr.mxu0 0.0
    %v8779 = vand.u32 %v18, 4294901760
    %v8780 = vsub.f32 %v18, %v8779
    %v8781 = vand.u32 %v8780, 4294901760
    %8782 = vmatpush1.msra.mxu0 %v8781
    %8783 = vmatprep.subr.mxu0 0.0
    %v8784 = vand.u32 %v17, 4294901760
    %v8785 = vsub.f32 %v17, %v8784
    %v8786 = vand.u32 %v8785, 4294901760
    %8787 = vmatpush1.msra.mxu0 %v8786
    %8788 = vmatprep.subr.mxu0 0.0
    %v8789 = vand.u32 %v16, 4294901760
    %v8790 = vsub.f32 %v16, %v8789
    %v8791 = vand.u32 %v8790, 4294901760
    %8792 = vmatpush1.msra.mxu0 %v8791
    %8793 = vmatprep.subr.mxu0 0.0
    %v8794 = vand.u32 %v15, 4294901760
    %v8795 = vsub.f32 %v15, %v8794
    %v8796 = vand.u32 %v8795, 4294901760
    %8797 = vmatpush1.msra.mxu0 %v8796
    %8798 = vmatprep.subr.mxu0 0.0
    %v8799 = vand.u32 %v14, 4294901760
    %v8800 = vsub.f32 %v14, %v8799
    %v8801 = vand.u32 %v8800, 4294901760
    %8802 = vmatpush1.msra.mxu0 %v8801
    %8803 = vmatprep.subr.mxu0 0.0
    %8804 = vmatpush2.msra.mxu0 0.0
    %8805 = vmatprep.subr.mxu0 0.0
    %8806 = vmatpush2.msra.mxu0 0.0
    %8807 = vmatprep.subr.mxu0 0.0
    %8808 = vmatpush2.msra.mxu0 0.0
    %8809 = vmatprep.subr.mxu0 0.0
    %8810 = vmatpush2.msra.mxu0 0.0
    %8811 = vmatprep.subr.mxu0 0.0
    %8812 = vmatpush2.msra.mxu0 0.0
    %8813 = vmatprep.subr.mxu0 0.0
    %8814 = vmatpush2.msra.mxu0 0.0
    %8815 = vmatprep.subr.mxu0 0.0
    %8816 = vmatpush2.msra.mxu0 0.0
    %8817 = vmatprep.subr.mxu0 0.0
    %8818 = vmatpush2.msra.mxu0 0.0
    %8819 = vmatprep.subr.mxu0 0.0
    %8820 = vmatpush2.msra.mxu0 0.0
    %8821 = vmatprep.subr.mxu0 0.0
    %8822 = vmatpush2.msra.mxu0 0.0
    %8823 = vmatprep.subr.mxu0 0.0
    %8824 = vmatpush2.msra.mxu0 0.0
    %8825 = vmatprep.subr.mxu0 0.0
    %8826 = vmatpush2.msra.mxu0 0.0
    %8827 = vmatprep.subr.mxu0 0.0
    %8828 = vmatpush2.msra.mxu0 0.0
    %8829 = vmatprep.subr.mxu0 0.0
    %8830 = vmatpush2.msra.mxu0 0.0
    %8831 = vmatprep.subr.mxu0 0.0
    %8832 = vmatpush2.msra.mxu0 0.0
    %8833 = vmatprep.subr.mxu0 0.0
    %8834 = vmatpush2.msra.mxu0 0.0
    %8835 = vmatprep.mubr.f32.mxu0 0.0
    %v8836 = vand.u32 %v8287, 4294901760
    %8837 = vmatmul.mubr.f32.gmra.mxu0 %v8836
    %v8838 = vpop.f32.mrf.mxu0
    %v8839 = vadd.f32 %v8720, %v8838
    %v8840 = vpop.f32.mrf.mxu0
    %8841 = vdwg.mxu0
    %8842 = vmatprep.subr.mxu0 0.0
    %v8843 = vand.u32 %v29, 4294901760
    %8844 = vmatpush1.msra.mxu0 %v8843
    %8845 = vmatprep.subr.mxu0 0.0
    %v8846 = vand.u32 %v28, 4294901760
    %8847 = vmatpush1.msra.mxu0 %v8846
    %8848 = vmatprep.subr.mxu0 0.0
    %v8849 = vand.u32 %v27, 4294901760
    %8850 = vmatpush1.msra.mxu0 %v8849
    %8851 = vmatprep.subr.mxu0 0.0
    %v8852 = vand.u32 %v26, 4294901760
    %8853 = vmatpush1.msra.mxu0 %v8852
    %8854 = vmatprep.subr.mxu0 0.0
    %v8855 = vand.u32 %v25, 4294901760
    %8856 = vmatpush1.msra.mxu0 %v8855
    %8857 = vmatprep.subr.mxu0 0.0
    %v8858 = vand.u32 %v24, 4294901760
    %8859 = vmatpush1.msra.mxu0 %v8858
    %8860 = vmatprep.subr.mxu0 0.0
    %v8861 = vand.u32 %v23, 4294901760
    %8862 = vmatpush1.msra.mxu0 %v8861
    %8863 = vmatprep.subr.mxu0 0.0
    %v8864 = vand.u32 %v22, 4294901760
    %8865 = vmatpush1.msra.mxu0 %v8864
    %8866 = vmatprep.subr.mxu0 0.0
    %v8867 = vand.u32 %v21, 4294901760
    %8868 = vmatpush1.msra.mxu0 %v8867
    %8869 = vmatprep.subr.mxu0 0.0
    %v8870 = vand.u32 %v20, 4294901760
    %8871 = vmatpush1.msra.mxu0 %v8870
    %8872 = vmatprep.subr.mxu0 0.0
    %v8873 = vand.u32 %v19, 4294901760
    %8874 = vmatpush1.msra.mxu0 %v8873
    %8875 = vmatprep.subr.mxu0 0.0
    %v8876 = vand.u32 %v18, 4294901760
    %8877 = vmatpush1.msra.mxu0 %v8876
    %8878 = vmatprep.subr.mxu0 0.0
    %v8879 = vand.u32 %v17, 4294901760
    %8880 = vmatpush1.msra.mxu0 %v8879
    %8881 = vmatprep.subr.mxu0 0.0
    %v8882 = vand.u32 %v16, 4294901760
    %8883 = vmatpush1.msra.mxu0 %v8882
    %8884 = vmatprep.subr.mxu0 0.0
    %v8885 = vand.u32 %v15, 4294901760
    %8886 = vmatpush1.msra.mxu0 %v8885
    %8887 = vmatprep.subr.mxu0 0.0
    %v8888 = vand.u32 %v14, 4294901760
    %8889 = vmatpush1.msra.mxu0 %v8888
    %8890 = vmatprep.subr.mxu0 0.0
    %8891 = vmatpush2.msra.mxu0 0.0
    %8892 = vmatprep.subr.mxu0 0.0
    %8893 = vmatpush2.msra.mxu0 0.0
    %8894 = vmatprep.subr.mxu0 0.0
    %8895 = vmatpush2.msra.mxu0 0.0
    %8896 = vmatprep.subr.mxu0 0.0
    %8897 = vmatpush2.msra.mxu0 0.0
    %8898 = vmatprep.subr.mxu0 0.0
    %8899 = vmatpush2.msra.mxu0 0.0
    %8900 = vmatprep.subr.mxu0 0.0
    %8901 = vmatpush2.msra.mxu0 0.0
    %8902 = vmatprep.subr.mxu0 0.0
    %8903 = vmatpush2.msra.mxu0 0.0
    %8904 = vmatprep.subr.mxu0 0.0
    %8905 = vmatpush2.msra.mxu0 0.0
    %8906 = vmatprep.subr.mxu0 0.0
    %8907 = vmatpush2.msra.mxu0 0.0
    %8908 = vmatprep.subr.mxu0 0.0
    %8909 = vmatpush2.msra.mxu0 0.0
    %8910 = vmatprep.subr.mxu0 0.0
    %8911 = vmatpush2.msra.mxu0 0.0
    %8912 = vmatprep.subr.mxu0 0.0
    %8913 = vmatpush2.msra.mxu0 0.0
    %8914 = vmatprep.subr.mxu0 0.0
    %8915 = vmatpush2.msra.mxu0 0.0
    %8916 = vmatprep.subr.mxu0 0.0
    %8917 = vmatpush2.msra.mxu0 0.0
    %8918 = vmatprep.subr.mxu0 0.0
    %8919 = vmatpush2.msra.mxu0 0.0
    %8920 = vmatprep.subr.mxu0 0.0
    %8921 = vmatpush2.msra.mxu0 0.0
    %8922 = vmatprep.mubr.f32.mxu0 0.0
    %v8923 = vand.u32 %v8287, 4294901760
    %8924 = vmatmul.mubr.f32.gmra.mxu0 %v8923
    %v8925 = vpop.f32.mrf.mxu0
    %v8926 = vadd.f32 %v8839, %v8925
    %v8927 = vpop.f32.mrf.mxu0
    %8928 = vdwg.mxu0
    %v8929 = vand.u32 2147483647, %v8926
    %vm8930 = vcmp.le.f32.partialorder %v8929, 0.7853982
    %vm8931 = vcmp.lt.s32.totalorder %v8926, 0
    %v8932 = vand.u32 %v8926, 2139095040
    %v8933 = vshrl.u32 %v8932, 23
    %v8934 = vsub.s32 %v8933, 127
    %v8935 = vand.u32 2147483647, %v8926
    %v8936 = vand.u32 %v8935, 8388607
    %v8937 = vor.u32 %v8936, 8388608
    %v8938 = vsub.s32 0, %v8937
    %v8939 = vadd.s32 %v8934, 1
    %vm8940 = vcmp.gt.s32.totalorder %v8939, 0
    %v8941 = vsel %vm8940, %v8939, 0
    %v8942 = vshrl.u32 %v8941, 5
    %v8943 = vand.u32 %v8941, 31
    %v8944 = vsub.s32 32, %v8943
    %v8945 = vshrl.u32 683565275, %v8944
    %v8946 = vshll.u32 683565275, %v8943
    %v8947 = vshrl.u32 2475754826, %v8944
    %v8948 = vor.u32 %v8946, %v8947
    %v8949 = vshll.u32 2475754826, %v8943
    %v8950 = vshrl.u32 2131351028, %v8944
    %v8951 = vor.u32 %v8949, %v8950
    %v8952 = vshll.u32 2131351028, %v8943
    %v8953 = vshrl.u32 2102212464, %v8944
    %v8954 = vor.u32 %v8952, %v8953
    %v8955 = vshll.u32 2102212464, %v8943
    %v8956 = vshrl.u32 920167782, %v8944
    %v8957 = vor.u32 %v8955, %v8956
    %v8958 = vshll.u32 920167782, %v8943
    %v8959 = vshrl.u32 1326507024, %v8944
    %v8960 = vor.u32 %v8958, %v8959
    %vm8961 = vcmp.lt.s32.totalorder %v8942, 1
    %vm8962 = vcmp.lt.s32.totalorder %v8942, 2
    %vm8963 = vcmp.lt.s32.totalorder %v8942, 3
    %vm8964 = vcmp.lt.s32.totalorder %v8942, 4
    %v8965 = vsel %vm8961, %v8945, %v8948
    %v8966 = vsel %vm8964, %v8954, 2102212464
    %v8967 = vsel %vm8963, %v8951, %v8966
    %v8968 = vsel %vm8962, %v8965, %v8967
    %v8969 = vsel %vm8961, %v8948, %v8951
    %v8970 = vsel %vm8964, %v8957, 920167782
    %v8971 = vsel %vm8963, %v8954, %v8970
    %v8972 = vsel %vm8962, %v8969, %v8971
    %v8973 = vsel %vm8961, %v8951, %v8954
    %v8974 = vsel %vm8964, %v8960, 1326507024
    %v8975 = vsel %vm8963, %v8957, %v8974
    %v8976 = vsel %vm8962, %v8973, %v8975
    %v8977 = vshll.u32 %v8937, 8
    %v8978 = vmul.u32.u64.compose %v8977, %v8976
    %v8979 = vextract.low.u32 %v8978
    %v8980 = vextract.high.u32 %v8978
    %v8981 = vmul.u32.u64.compose %v8977, %v8972
    %v8982 = vextract.low.u32 %v8981
    %v8983 = vextract.high.u32 %v8981
    %v8984 = vmul.u32 %v8977, %v8968
    %v8985 = vadd.s32 %v8980, %v8982
    %vm8986 = vc.u32 %v8980, %v8982
    %v8987 = vadd.s32 %v8983, 1
    %v8988 = vsel %vm8986, %v8987, %v8983
    %v8989 = vadd.s32 %v8984, %v8988
    %v8990 = vadd.s32 %v8989, 536870912
    %v8991 = vshrl.u32 %v8990, 30
    %v8992 = vshll.u32 %v8991, 30
    %v8993 = vsub.s32 %v8989, %v8992
    %vm8994 = vcmp.lt.s32.totalorder %v8993, 0
    %v8995 = vsub.s32 0, %v8993
    %v8996 = vsel %vm8994, %v8995, %v8993
    %v8997 = vclz %v8996
    %v8998 = vsub.s32 %v8997, 2
    %vm8999 = vcmp.gt.s32.totalorder 0, %v8998
    %v9000 = vsel %vm8999, 0, %v8998
    %v9001 = vsub.s32 32, %v9000
    %v9002 = vshll.u32 %v8993, %v9000
    %v9003 = vshrl.u32 %v8985, %v9001
    %v9004 = vor.u32 %v9002, %v9003
    %v9005 = vsub.s32 4294967266, %v9000
    %v9006 = vadd.s32 %v9005, 127
    %v9007 = vshll.u32 %v9006, 23
    %v9008 = vor.u32 4788187, %v9007
    %v9009 = vand.u32 2147483647, %v9008
    %v9011 = vcvt.s32.f32 %v9004
    %v9012 = vmul.f32 %v9011, %v9009
    %v9013 = vxor.u32 %v9012, 2147483648
    %v9014 = vsel %vm8931, %v9013, %v9012
    %v9015 = vsub.s32 4, %v8991
    %v9016 = vsel %vm8931, %v9015, %v8991
    %v9017 = vsel %vm8930, %v8926, %v9014
    %v9018 = vsel %vm8930, 0, %v9016
    %v9019 = vcosq.f32.pop %v9017
    %v9020 = vsinq.f32.pop %v9017
    %vm9021 = vweird.f32 %v8926
    %v9022 = vadd.s32 %v9018, 3
    %v9023 = vand.u32 %v9022, 3
    %vm9024 = vcmp.lt.s32.totalorder %v9023, 2
    %vm9025 = vcmp.eq.s32.totalorder %v9023, 0
    %v9026 = vxor.u32 %v9020, 2147483648
    %v9027 = vsel %vm9025, %v9019, %v9026
    %vm9028 = vcmp.eq.s32.totalorder %v9023, 2
    %v9029 = vxor.u32 %v9019, 2147483648
    %v9030 = vsel %vm9028, %v9029, %v9020
    %v9031 = vsel %vm9024, %v9027, %v9030
    %v9032 = vsel %vm9021, nan, %v9031
    %v9033 = vadd.f32 %v7534, %v8283
    %v9034 = vmul.f32 %v9033, 3.0
    %v9035 = vadd.f32 %v6787, %v9034
    %v9036 = vadd.f32 %v9035, %v9032
    %v9037 = vmul.f32 %v9036, 0.006313131
    %v9038 = vadd.f32 %v49, %v9037
    %9039 = vmatprep.subr.mxu0 0.0
    %v9040 = vand.u32 %v29, 4294901760
    %9041 = vmatpush1.msra.mxu0 %v9040
    %9042 = vmatprep.subr.mxu0 0.0
    %v9043 = vand.u32 %v28, 4294901760
    %9044 = vmatpush1.msra.mxu0 %v9043
    %9045 = vmatprep.subr.mxu0 0.0
    %v9046 = vand.u32 %v27, 4294901760
    %9047 = vmatpush1.msra.mxu0 %v9046
    %9048 = vmatprep.subr.mxu0 0.0
    %v9049 = vand.u32 %v26, 4294901760
    %9050 = vmatpush1.msra.mxu0 %v9049
    %9051 = vmatprep.subr.mxu0 0.0
    %v9052 = vand.u32 %v25, 4294901760
    %9053 = vmatpush1.msra.mxu0 %v9052
    %9054 = vmatprep.subr.mxu0 0.0
    %v9055 = vand.u32 %v24, 4294901760
    %9056 = vmatpush1.msra.mxu0 %v9055
    %9057 = vmatprep.subr.mxu0 0.0
    %v9058 = vand.u32 %v23, 4294901760
    %9059 = vmatpush1.msra.mxu0 %v9058
    %9060 = vmatprep.subr.mxu0 0.0
    %v9061 = vand.u32 %v22, 4294901760
    %9062 = vmatpush1.msra.mxu0 %v9061
    %9063 = vmatprep.subr.mxu0 0.0
    %v9064 = vand.u32 %v21, 4294901760
    %9065 = vmatpush1.msra.mxu0 %v9064
    %9066 = vmatprep.subr.mxu0 0.0
    %v9067 = vand.u32 %v20, 4294901760
    %9068 = vmatpush1.msra.mxu0 %v9067
    %9069 = vmatprep.subr.mxu0 0.0
    %v9070 = vand.u32 %v19, 4294901760
    %9071 = vmatpush1.msra.mxu0 %v9070
    %9072 = vmatprep.subr.mxu0 0.0
    %v9073 = vand.u32 %v18, 4294901760
    %9074 = vmatpush1.msra.mxu0 %v9073
    %9075 = vmatprep.subr.mxu0 0.0
    %v9076 = vand.u32 %v17, 4294901760
    %9077 = vmatpush1.msra.mxu0 %v9076
    %9078 = vmatprep.subr.mxu0 0.0
    %v9079 = vand.u32 %v16, 4294901760
    %9080 = vmatpush1.msra.mxu0 %v9079
    %9081 = vmatprep.subr.mxu0 0.0
    %v9082 = vand.u32 %v15, 4294901760
    %9083 = vmatpush1.msra.mxu0 %v9082
    %9084 = vmatprep.subr.mxu0 0.0
    %v9085 = vand.u32 %v14, 4294901760
    %9086 = vmatpush1.msra.mxu0 %v9085
    %9087 = vmatprep.subr.mxu0 0.0
    %9088 = vmatpush2.msra.mxu0 0.0
    %9089 = vmatprep.subr.mxu0 0.0
    %9090 = vmatpush2.msra.mxu0 0.0
    %9091 = vmatprep.subr.mxu0 0.0
    %9092 = vmatpush2.msra.mxu0 0.0
    %9093 = vmatprep.subr.mxu0 0.0
    %9094 = vmatpush2.msra.mxu0 0.0
    %9095 = vmatprep.subr.mxu0 0.0
    %9096 = vmatpush2.msra.mxu0 0.0
    %9097 = vmatprep.subr.mxu0 0.0
    %9098 = vmatpush2.msra.mxu0 0.0
    %9099 = vmatprep.subr.mxu0 0.0
    %9100 = vmatpush2.msra.mxu0 0.0
    %9101 = vmatprep.subr.mxu0 0.0
    %9102 = vmatpush2.msra.mxu0 0.0
    %9103 = vmatprep.subr.mxu0 0.0
    %9104 = vmatpush2.msra.mxu0 0.0
    %9105 = vmatprep.subr.mxu0 0.0
    %9106 = vmatpush2.msra.mxu0 0.0
    %9107 = vmatprep.subr.mxu0 0.0
    %9108 = vmatpush2.msra.mxu0 0.0
    %9109 = vmatprep.subr.mxu0 0.0
    %9110 = vmatpush2.msra.mxu0 0.0
    %9111 = vmatprep.subr.mxu0 0.0
    %9112 = vmatpush2.msra.mxu0 0.0
    %9113 = vmatprep.subr.mxu0 0.0
    %9114 = vmatpush2.msra.mxu0 0.0
    %9115 = vmatprep.subr.mxu0 0.0
    %9116 = vmatpush2.msra.mxu0 0.0
    %9117 = vmatprep.subr.mxu0 0.0
    %9118 = vmatpush2.msra.mxu0 0.0
    %9119 = vmatprep.mubr.f32.mxu0 0.0
    %v9120 = vand.u32 %v50, 4294901760
    %v9121 = vsub.f32 %v50, %v9120
    %v9122 = vand.u32 %v9121, 4294901760
    %v9123 = vsub.f32 %v9121, %v9122
    %v9124 = vand.u32 %v9123, 4294901760
    %9125 = vmatmul.mubr.f32.gmra.mxu0 %v9124
    %v9126 = vpop.f32.mrf.mxu0
    %v9127 = vadd.f32 %v35, %v9126
    %v9128 = vpop.f32.mrf.mxu0
    %9129 = vdwg.mxu0
    %9130 = vmatprep.subr.mxu0 0.0
    %v9131 = vand.u32 %v29, 4294901760
    %v9132 = vsub.f32 %v29, %v9131
    %v9133 = vand.u32 %v9132, 4294901760
    %v9134 = vsub.f32 %v9132, %v9133
    %v9135 = vand.u32 %v9134, 4294901760
    %9136 = vmatpush1.msra.mxu0 %v9135
    %9137 = vmatprep.subr.mxu0 0.0
    %v9138 = vand.u32 %v28, 4294901760
    %v9139 = vsub.f32 %v28, %v9138
    %v9140 = vand.u32 %v9139, 4294901760
    %v9141 = vsub.f32 %v9139, %v9140
    %v9142 = vand.u32 %v9141, 4294901760
    %9143 = vmatpush1.msra.mxu0 %v9142
    %9144 = vmatprep.subr.mxu0 0.0
    %v9145 = vand.u32 %v27, 4294901760
    %v9146 = vsub.f32 %v27, %v9145
    %v9147 = vand.u32 %v9146, 4294901760
    %v9148 = vsub.f32 %v9146, %v9147
    %v9149 = vand.u32 %v9148, 4294901760
    %9150 = vmatpush1.msra.mxu0 %v9149
    %9151 = vmatprep.subr.mxu0 0.0
    %v9152 = vand.u32 %v26, 4294901760
    %v9153 = vsub.f32 %v26, %v9152
    %v9154 = vand.u32 %v9153, 4294901760
    %v9155 = vsub.f32 %v9153, %v9154
    %v9156 = vand.u32 %v9155, 4294901760
    %9157 = vmatpush1.msra.mxu0 %v9156
    %9158 = vmatprep.subr.mxu0 0.0
    %v9159 = vand.u32 %v25, 4294901760
    %v9160 = vsub.f32 %v25, %v9159
    %v9161 = vand.u32 %v9160, 4294901760
    %v9162 = vsub.f32 %v9160, %v9161
    %v9163 = vand.u32 %v9162, 4294901760
    %9164 = vmatpush1.msra.mxu0 %v9163
    %9165 = vmatprep.subr.mxu0 0.0
    %v9166 = vand.u32 %v24, 4294901760
    %v9167 = vsub.f32 %v24, %v9166
    %v9168 = vand.u32 %v9167, 4294901760
    %v9169 = vsub.f32 %v9167, %v9168
    %v9170 = vand.u32 %v9169, 4294901760
    %9171 = vmatpush1.msra.mxu0 %v9170
    %9172 = vmatprep.subr.mxu0 0.0
    %v9173 = vand.u32 %v23, 4294901760
    %v9174 = vsub.f32 %v23, %v9173
    %v9175 = vand.u32 %v9174, 4294901760
    %v9176 = vsub.f32 %v9174, %v9175
    %v9177 = vand.u32 %v9176, 4294901760
    %9178 = vmatpush1.msra.mxu0 %v9177
    %9179 = vmatprep.subr.mxu0 0.0
    %v9180 = vand.u32 %v22, 4294901760
    %v9181 = vsub.f32 %v22, %v9180
    %v9182 = vand.u32 %v9181, 4294901760
    %v9183 = vsub.f32 %v9181, %v9182
    %v9184 = vand.u32 %v9183, 4294901760
    %9185 = vmatpush1.msra.mxu0 %v9184
    %9186 = vmatprep.subr.mxu0 0.0
    %v9187 = vand.u32 %v21, 4294901760
    %v9188 = vsub.f32 %v21, %v9187
    %v9189 = vand.u32 %v9188, 4294901760
    %v9190 = vsub.f32 %v9188, %v9189
    %v9191 = vand.u32 %v9190, 4294901760
    %9192 = vmatpush1.msra.mxu0 %v9191
    %9193 = vmatprep.subr.mxu0 0.0
    %v9194 = vand.u32 %v20, 4294901760
    %v9195 = vsub.f32 %v20, %v9194
    %v9196 = vand.u32 %v9195, 4294901760
    %v9197 = vsub.f32 %v9195, %v9196
    %v9198 = vand.u32 %v9197, 4294901760
    %9199 = vmatpush1.msra.mxu0 %v9198
    %9200 = vmatprep.subr.mxu0 0.0
    %v9201 = vand.u32 %v19, 4294901760
    %v9202 = vsub.f32 %v19, %v9201
    %v9203 = vand.u32 %v9202, 4294901760
    %v9204 = vsub.f32 %v9202, %v9203
    %v9205 = vand.u32 %v9204, 4294901760
    %9206 = vmatpush1.msra.mxu0 %v9205
    %9207 = vmatprep.subr.mxu0 0.0
    %v9208 = vand.u32 %v18, 4294901760
    %v9209 = vsub.f32 %v18, %v9208
    %v9210 = vand.u32 %v9209, 4294901760
    %v9211 = vsub.f32 %v9209, %v9210
    %v9212 = vand.u32 %v9211, 4294901760
    %9213 = vmatpush1.msra.mxu0 %v9212
    %9214 = vmatprep.subr.mxu0 0.0
    %v9215 = vand.u32 %v17, 4294901760
    %v9216 = vsub.f32 %v17, %v9215
    %v9217 = vand.u32 %v9216, 4294901760
    %v9218 = vsub.f32 %v9216, %v9217
    %v9219 = vand.u32 %v9218, 4294901760
    %9220 = vmatpush1.msra.mxu0 %v9219
    %9221 = vmatprep.subr.mxu0 0.0
    %v9222 = vand.u32 %v16, 4294901760
    %v9223 = vsub.f32 %v16, %v9222
    %v9224 = vand.u32 %v9223, 4294901760
    %v9225 = vsub.f32 %v9223, %v9224
    %v9226 = vand.u32 %v9225, 4294901760
    %9227 = vmatpush1.msra.mxu0 %v9226
    %9228 = vmatprep.subr.mxu0 0.0
    %v9229 = vand.u32 %v15, 4294901760
    %v9230 = vsub.f32 %v15, %v9229
    %v9231 = vand.u32 %v9230, 4294901760
    %v9232 = vsub.f32 %v9230, %v9231
    %v9233 = vand.u32 %v9232, 4294901760
    %9234 = vmatpush1.msra.mxu0 %v9233
    %9235 = vmatprep.subr.mxu0 0.0
    %v9236 = vand.u32 %v14, 4294901760
    %v9237 = vsub.f32 %v14, %v9236
    %v9238 = vand.u32 %v9237, 4294901760
    %v9239 = vsub.f32 %v9237, %v9238
    %v9240 = vand.u32 %v9239, 4294901760
    %9241 = vmatpush1.msra.mxu0 %v9240
    %9242 = vmatprep.subr.mxu0 0.0
    %9243 = vmatpush2.msra.mxu0 0.0
    %9244 = vmatprep.subr.mxu0 0.0
    %9245 = vmatpush2.msra.mxu0 0.0
    %9246 = vmatprep.subr.mxu0 0.0
    %9247 = vmatpush2.msra.mxu0 0.0
    %9248 = vmatprep.subr.mxu0 0.0
    %9249 = vmatpush2.msra.mxu0 0.0
    %9250 = vmatprep.subr.mxu0 0.0
    %9251 = vmatpush2.msra.mxu0 0.0
    %9252 = vmatprep.subr.mxu0 0.0
    %9253 = vmatpush2.msra.mxu0 0.0
    %9254 = vmatprep.subr.mxu0 0.0
    %9255 = vmatpush2.msra.mxu0 0.0
    %9256 = vmatprep.subr.mxu0 0.0
    %9257 = vmatpush2.msra.mxu0 0.0
    %9258 = vmatprep.subr.mxu0 0.0
    %9259 = vmatpush2.msra.mxu0 0.0
    %9260 = vmatprep.subr.mxu0 0.0
    %9261 = vmatpush2.msra.mxu0 0.0
    %9262 = vmatprep.subr.mxu0 0.0
    %9263 = vmatpush2.msra.mxu0 0.0
    %9264 = vmatprep.subr.mxu0 0.0
    %9265 = vmatpush2.msra.mxu0 0.0
    %9266 = vmatprep.subr.mxu0 0.0
    %9267 = vmatpush2.msra.mxu0 0.0
    %9268 = vmatprep.subr.mxu0 0.0
    %9269 = vmatpush2.msra.mxu0 0.0
    %9270 = vmatprep.subr.mxu0 0.0
    %9271 = vmatpush2.msra.mxu0 0.0
    %9272 = vmatprep.subr.mxu0 0.0
    %9273 = vmatpush2.msra.mxu0 0.0
    %9274 = vmatprep.mubr.f32.mxu0 0.0
    %v9275 = vand.u32 %v50, 4294901760
    %9276 = vmatmul.mubr.f32.gmra.mxu0 %v9275
    %v9277 = vpop.f32.mrf.mxu0
    %v9278 = vadd.f32 %v9127, %v9277
    %v9279 = vpop.f32.mrf.mxu0
    %9280 = vdwg.mxu0
    %9281 = vmatprep.subr.mxu0 0.0
    %v9282 = vand.u32 %v29, 4294901760
    %v9283 = vsub.f32 %v29, %v9282
    %9284 = vmatpush1.msra.mxu0 %v9283
    %9285 = vmatprep.subr.mxu0 0.0
    %v9286 = vand.u32 %v28, 4294901760
    %v9287 = vsub.f32 %v28, %v9286
    %9288 = vmatpush1.msra.mxu0 %v9287
    %9289 = vmatprep.subr.mxu0 0.0
    %v9290 = vand.u32 %v27, 4294901760
    %v9291 = vsub.f32 %v27, %v9290
    %9292 = vmatpush1.msra.mxu0 %v9291
    %9293 = vmatprep.subr.mxu0 0.0
    %v9294 = vand.u32 %v26, 4294901760
    %v9295 = vsub.f32 %v26, %v9294
    %9296 = vmatpush1.msra.mxu0 %v9295
    %9297 = vmatprep.subr.mxu0 0.0
    %v9298 = vand.u32 %v25, 4294901760
    %v9299 = vsub.f32 %v25, %v9298
    %9300 = vmatpush1.msra.mxu0 %v9299
    %9301 = vmatprep.subr.mxu0 0.0
    %v9302 = vand.u32 %v24, 4294901760
    %v9303 = vsub.f32 %v24, %v9302
    %9304 = vmatpush1.msra.mxu0 %v9303
    %9305 = vmatprep.subr.mxu0 0.0
    %v9306 = vand.u32 %v23, 4294901760
    %v9307 = vsub.f32 %v23, %v9306
    %9308 = vmatpush1.msra.mxu0 %v9307
    %9309 = vmatprep.subr.mxu0 0.0
    %v9310 = vand.u32 %v22, 4294901760
    %v9311 = vsub.f32 %v22, %v9310
    %9312 = vmatpush1.msra.mxu0 %v9311
    %9313 = vmatprep.subr.mxu0 0.0
    %v9314 = vand.u32 %v21, 4294901760
    %v9315 = vsub.f32 %v21, %v9314
    %9316 = vmatpush1.msra.mxu0 %v9315
    %9317 = vmatprep.subr.mxu0 0.0
    %v9318 = vand.u32 %v20, 4294901760
    %v9319 = vsub.f32 %v20, %v9318
    %9320 = vmatpush1.msra.mxu0 %v9319
    %9321 = vmatprep.subr.mxu0 0.0
    %v9322 = vand.u32 %v19, 4294901760
    %v9323 = vsub.f32 %v19, %v9322
    %9324 = vmatpush1.msra.mxu0 %v9323
    %9325 = vmatprep.subr.mxu0 0.0
    %v9326 = vand.u32 %v18, 4294901760
    %v9327 = vsub.f32 %v18, %v9326
    %9328 = vmatpush1.msra.mxu0 %v9327
    %9329 = vmatprep.subr.mxu0 0.0
    %v9330 = vand.u32 %v17, 4294901760
    %v9331 = vsub.f32 %v17, %v9330
    %9332 = vmatpush1.msra.mxu0 %v9331
    %9333 = vmatprep.subr.mxu0 0.0
    %v9334 = vand.u32 %v16, 4294901760
    %v9335 = vsub.f32 %v16, %v9334
    %9336 = vmatpush1.msra.mxu0 %v9335
    %9337 = vmatprep.subr.mxu0 0.0
    %v9338 = vand.u32 %v15, 4294901760
    %v9339 = vsub.f32 %v15, %v9338
    %9340 = vmatpush1.msra.mxu0 %v9339
    %9341 = vmatprep.subr.mxu0 0.0
    %v9342 = vand.u32 %v14, 4294901760
    %v9343 = vsub.f32 %v14, %v9342
    %9344 = vmatpush1.msra.mxu0 %v9343
    %9345 = vmatprep.subr.mxu0 0.0
    %9346 = vmatpush2.msra.mxu0 0.0
    %9347 = vmatprep.subr.mxu0 0.0
    %9348 = vmatpush2.msra.mxu0 0.0
    %9349 = vmatprep.subr.mxu0 0.0
    %9350 = vmatpush2.msra.mxu0 0.0
    %9351 = vmatprep.subr.mxu0 0.0
    %9352 = vmatpush2.msra.mxu0 0.0
    %9353 = vmatprep.subr.mxu0 0.0
    %9354 = vmatpush2.msra.mxu0 0.0
    %9355 = vmatprep.subr.mxu0 0.0
    %9356 = vmatpush2.msra.mxu0 0.0
    %9357 = vmatprep.subr.mxu0 0.0
    %9358 = vmatpush2.msra.mxu0 0.0
    %9359 = vmatprep.subr.mxu0 0.0
    %9360 = vmatpush2.msra.mxu0 0.0
    %9361 = vmatprep.subr.mxu0 0.0
    %9362 = vmatpush2.msra.mxu0 0.0
    %9363 = vmatprep.subr.mxu0 0.0
    %9364 = vmatpush2.msra.mxu0 0.0
    %9365 = vmatprep.subr.mxu0 0.0
    %9366 = vmatpush2.msra.mxu0 0.0
    %9367 = vmatprep.subr.mxu0 0.0
    %9368 = vmatpush2.msra.mxu0 0.0
    %9369 = vmatprep.subr.mxu0 0.0
    %9370 = vmatpush2.msra.mxu0 0.0
    %9371 = vmatprep.subr.mxu0 0.0
    %9372 = vmatpush2.msra.mxu0 0.0
    %9373 = vmatprep.subr.mxu0 0.0
    %9374 = vmatpush2.msra.mxu0 0.0
    %9375 = vmatprep.subr.mxu0 0.0
    %9376 = vmatpush2.msra.mxu0 0.0
    %9377 = vmatprep.mubr.f32.mxu0 0.0
    %v9378 = vand.u32 %v50, 4294901760
    %v9379 = vsub.f32 %v50, %v9378
    %9380 = vmatmul.mubr.f32.gmra.mxu0 %v9379
    %v9381 = vpop.f32.mrf.mxu0
    %v9382 = vadd.f32 %v9278, %v9381
    %v9383 = vpop.f32.mrf.mxu0
    %9384 = vdwg.mxu0
    %9385 = vmatprep.subr.mxu0 0.0
    %v9386 = vand.u32 %v29, 4294901760
    %9387 = vmatpush1.msra.mxu0 %v9386
    %9388 = vmatprep.subr.mxu0 0.0
    %v9389 = vand.u32 %v28, 4294901760
    %9390 = vmatpush1.msra.mxu0 %v9389
    %9391 = vmatprep.subr.mxu0 0.0
    %v9392 = vand.u32 %v27, 4294901760
    %9393 = vmatpush1.msra.mxu0 %v9392
    %9394 = vmatprep.subr.mxu0 0.0
    %v9395 = vand.u32 %v26, 4294901760
    %9396 = vmatpush1.msra.mxu0 %v9395
    %9397 = vmatprep.subr.mxu0 0.0
    %v9398 = vand.u32 %v25, 4294901760
    %9399 = vmatpush1.msra.mxu0 %v9398
    %9400 = vmatprep.subr.mxu0 0.0
    %v9401 = vand.u32 %v24, 4294901760
    %9402 = vmatpush1.msra.mxu0 %v9401
    %9403 = vmatprep.subr.mxu0 0.0
    %v9404 = vand.u32 %v23, 4294901760
    %9405 = vmatpush1.msra.mxu0 %v9404
    %9406 = vmatprep.subr.mxu0 0.0
    %v9407 = vand.u32 %v22, 4294901760
    %9408 = vmatpush1.msra.mxu0 %v9407
    %9409 = vmatprep.subr.mxu0 0.0
    %v9410 = vand.u32 %v21, 4294901760
    %9411 = vmatpush1.msra.mxu0 %v9410
    %9412 = vmatprep.subr.mxu0 0.0
    %v9413 = vand.u32 %v20, 4294901760
    %9414 = vmatpush1.msra.mxu0 %v9413
    %9415 = vmatprep.subr.mxu0 0.0
    %v9416 = vand.u32 %v19, 4294901760
    %9417 = vmatpush1.msra.mxu0 %v9416
    %9418 = vmatprep.subr.mxu0 0.0
    %v9419 = vand.u32 %v18, 4294901760
    %9420 = vmatpush1.msra.mxu0 %v9419
    %9421 = vmatprep.subr.mxu0 0.0
    %v9422 = vand.u32 %v17, 4294901760
    %9423 = vmatpush1.msra.mxu0 %v9422
    %9424 = vmatprep.subr.mxu0 0.0
    %v9425 = vand.u32 %v16, 4294901760
    %9426 = vmatpush1.msra.mxu0 %v9425
    %9427 = vmatprep.subr.mxu0 0.0
    %v9428 = vand.u32 %v15, 4294901760
    %9429 = vmatpush1.msra.mxu0 %v9428
    %9430 = vmatprep.subr.mxu0 0.0
    %v9431 = vand.u32 %v14, 4294901760
    %9432 = vmatpush1.msra.mxu0 %v9431
    %9433 = vmatprep.subr.mxu0 0.0
    %9434 = vmatpush2.msra.mxu0 0.0
    %9435 = vmatprep.subr.mxu0 0.0
    %9436 = vmatpush2.msra.mxu0 0.0
    %9437 = vmatprep.subr.mxu0 0.0
    %9438 = vmatpush2.msra.mxu0 0.0
    %9439 = vmatprep.subr.mxu0 0.0
    %9440 = vmatpush2.msra.mxu0 0.0
    %9441 = vmatprep.subr.mxu0 0.0
    %9442 = vmatpush2.msra.mxu0 0.0
    %9443 = vmatprep.subr.mxu0 0.0
    %9444 = vmatpush2.msra.mxu0 0.0
    %9445 = vmatprep.subr.mxu0 0.0
    %9446 = vmatpush2.msra.mxu0 0.0
    %9447 = vmatprep.subr.mxu0 0.0
    %9448 = vmatpush2.msra.mxu0 0.0
    %9449 = vmatprep.subr.mxu0 0.0
    %9450 = vmatpush2.msra.mxu0 0.0
    %9451 = vmatprep.subr.mxu0 0.0
    %9452 = vmatpush2.msra.mxu0 0.0
    %9453 = vmatprep.subr.mxu0 0.0
    %9454 = vmatpush2.msra.mxu0 0.0
    %9455 = vmatprep.subr.mxu0 0.0
    %9456 = vmatpush2.msra.mxu0 0.0
    %9457 = vmatprep.subr.mxu0 0.0
    %9458 = vmatpush2.msra.mxu0 0.0
    %9459 = vmatprep.subr.mxu0 0.0
    %9460 = vmatpush2.msra.mxu0 0.0
    %9461 = vmatprep.subr.mxu0 0.0
    %9462 = vmatpush2.msra.mxu0 0.0
    %9463 = vmatprep.subr.mxu0 0.0
    %9464 = vmatpush2.msra.mxu0 0.0
    %9465 = vmatprep.mubr.f32.mxu0 0.0
    %v9466 = vand.u32 %v50, 4294901760
    %v9467 = vsub.f32 %v50, %v9466
    %v9468 = vand.u32 %v9467, 4294901760
    %9469 = vmatmul.mubr.f32.gmra.mxu0 %v9468
    %v9470 = vpop.f32.mrf.mxu0
    %v9471 = vadd.f32 %v9382, %v9470
    %v9472 = vpop.f32.mrf.mxu0
    %9473 = vdwg.mxu0
    %9474 = vmatprep.subr.mxu0 0.0
    %v9475 = vand.u32 %v29, 4294901760
    %v9476 = vsub.f32 %v29, %v9475
    %v9477 = vand.u32 %v9476, 4294901760
    %9478 = vmatpush1.msra.mxu0 %v9477
    %9479 = vmatprep.subr.mxu0 0.0
    %v9480 = vand.u32 %v28, 4294901760
    %v9481 = vsub.f32 %v28, %v9480
    %v9482 = vand.u32 %v9481, 4294901760
    %9483 = vmatpush1.msra.mxu0 %v9482
    %9484 = vmatprep.subr.mxu0 0.0
    %v9485 = vand.u32 %v27, 4294901760
    %v9486 = vsub.f32 %v27, %v9485
    %v9487 = vand.u32 %v9486, 4294901760
    %9488 = vmatpush1.msra.mxu0 %v9487
    %9489 = vmatprep.subr.mxu0 0.0
    %v9490 = vand.u32 %v26, 4294901760
    %v9491 = vsub.f32 %v26, %v9490
    %v9492 = vand.u32 %v9491, 4294901760
    %9493 = vmatpush1.msra.mxu0 %v9492
    %9494 = vmatprep.subr.mxu0 0.0
    %v9495 = vand.u32 %v25, 4294901760
    %v9496 = vsub.f32 %v25, %v9495
    %v9497 = vand.u32 %v9496, 4294901760
    %9498 = vmatpush1.msra.mxu0 %v9497
    %9499 = vmatprep.subr.mxu0 0.0
    %v9500 = vand.u32 %v24, 4294901760
    %v9501 = vsub.f32 %v24, %v9500
    %v9502 = vand.u32 %v9501, 4294901760
    %9503 = vmatpush1.msra.mxu0 %v9502
    %9504 = vmatprep.subr.mxu0 0.0
    %v9505 = vand.u32 %v23, 4294901760
    %v9506 = vsub.f32 %v23, %v9505
    %v9507 = vand.u32 %v9506, 4294901760
    %9508 = vmatpush1.msra.mxu0 %v9507
    %9509 = vmatprep.subr.mxu0 0.0
    %v9510 = vand.u32 %v22, 4294901760
    %v9511 = vsub.f32 %v22, %v9510
    %v9512 = vand.u32 %v9511, 4294901760
    %9513 = vmatpush1.msra.mxu0 %v9512
    %9514 = vmatprep.subr.mxu0 0.0
    %v9515 = vand.u32 %v21, 4294901760
    %v9516 = vsub.f32 %v21, %v9515
    %v9517 = vand.u32 %v9516, 4294901760
    %9518 = vmatpush1.msra.mxu0 %v9517
    %9519 = vmatprep.subr.mxu0 0.0
    %v9520 = vand.u32 %v20, 4294901760
    %v9521 = vsub.f32 %v20, %v9520
    %v9522 = vand.u32 %v9521, 4294901760
    %9523 = vmatpush1.msra.mxu0 %v9522
    %9524 = vmatprep.subr.mxu0 0.0
    %v9525 = vand.u32 %v19, 4294901760
    %v9526 = vsub.f32 %v19, %v9525
    %v9527 = vand.u32 %v9526, 4294901760
    %9528 = vmatpush1.msra.mxu0 %v9527
    %9529 = vmatprep.subr.mxu0 0.0
    %v9530 = vand.u32 %v18, 4294901760
    %v9531 = vsub.f32 %v18, %v9530
    %v9532 = vand.u32 %v9531, 4294901760
    %9533 = vmatpush1.msra.mxu0 %v9532
    %9534 = vmatprep.subr.mxu0 0.0
    %v9535 = vand.u32 %v17, 4294901760
    %v9536 = vsub.f32 %v17, %v9535
    %v9537 = vand.u32 %v9536, 4294901760
    %9538 = vmatpush1.msra.mxu0 %v9537
    %9539 = vmatprep.subr.mxu0 0.0
    %v9540 = vand.u32 %v16, 4294901760
    %v9541 = vsub.f32 %v16, %v9540
    %v9542 = vand.u32 %v9541, 4294901760
    %9543 = vmatpush1.msra.mxu0 %v9542
    %9544 = vmatprep.subr.mxu0 0.0
    %v9545 = vand.u32 %v15, 4294901760
    %v9546 = vsub.f32 %v15, %v9545
    %v9547 = vand.u32 %v9546, 4294901760
    %9548 = vmatpush1.msra.mxu0 %v9547
    %9549 = vmatprep.subr.mxu0 0.0
    %v9550 = vand.u32 %v14, 4294901760
    %v9551 = vsub.f32 %v14, %v9550
    %v9552 = vand.u32 %v9551, 4294901760
    %9553 = vmatpush1.msra.mxu0 %v9552
    %9554 = vmatprep.subr.mxu0 0.0
    %9555 = vmatpush2.msra.mxu0 0.0
    %9556 = vmatprep.subr.mxu0 0.0
    %9557 = vmatpush2.msra.mxu0 0.0
    %9558 = vmatprep.subr.mxu0 0.0
    %9559 = vmatpush2.msra.mxu0 0.0
    %9560 = vmatprep.subr.mxu0 0.0
    %9561 = vmatpush2.msra.mxu0 0.0
    %9562 = vmatprep.subr.mxu0 0.0
    %9563 = vmatpush2.msra.mxu0 0.0
    %9564 = vmatprep.subr.mxu0 0.0
    %9565 = vmatpush2.msra.mxu0 0.0
    %9566 = vmatprep.subr.mxu0 0.0
    %9567 = vmatpush2.msra.mxu0 0.0
    %9568 = vmatprep.subr.mxu0 0.0
    %9569 = vmatpush2.msra.mxu0 0.0
    %9570 = vmatprep.subr.mxu0 0.0
    %9571 = vmatpush2.msra.mxu0 0.0
    %9572 = vmatprep.subr.mxu0 0.0
    %9573 = vmatpush2.msra.mxu0 0.0
    %9574 = vmatprep.subr.mxu0 0.0
    %9575 = vmatpush2.msra.mxu0 0.0
    %9576 = vmatprep.subr.mxu0 0.0
    %9577 = vmatpush2.msra.mxu0 0.0
    %9578 = vmatprep.subr.mxu0 0.0
    %9579 = vmatpush2.msra.mxu0 0.0
    %9580 = vmatprep.subr.mxu0 0.0
    %9581 = vmatpush2.msra.mxu0 0.0
    %9582 = vmatprep.subr.mxu0 0.0
    %9583 = vmatpush2.msra.mxu0 0.0
    %9584 = vmatprep.subr.mxu0 0.0
    %9585 = vmatpush2.msra.mxu0 0.0
    %9586 = vmatprep.mubr.f32.mxu0 0.0
    %v9587 = vand.u32 %v50, 4294901760
    %9588 = vmatmul.mubr.f32.gmra.mxu0 %v9587
    %v9589 = vpop.f32.mrf.mxu0
    %v9590 = vadd.f32 %v9471, %v9589
    %v9591 = vpop.f32.mrf.mxu0
    %9592 = vdwg.mxu0
    %9593 = vmatprep.subr.mxu0 0.0
    %v9594 = vand.u32 %v29, 4294901760
    %9595 = vmatpush1.msra.mxu0 %v9594
    %9596 = vmatprep.subr.mxu0 0.0
    %v9597 = vand.u32 %v28, 4294901760
    %9598 = vmatpush1.msra.mxu0 %v9597
    %9599 = vmatprep.subr.mxu0 0.0
    %v9600 = vand.u32 %v27, 4294901760
    %9601 = vmatpush1.msra.mxu0 %v9600
    %9602 = vmatprep.subr.mxu0 0.0
    %v9603 = vand.u32 %v26, 4294901760
    %9604 = vmatpush1.msra.mxu0 %v9603
    %9605 = vmatprep.subr.mxu0 0.0
    %v9606 = vand.u32 %v25, 4294901760
    %9607 = vmatpush1.msra.mxu0 %v9606
    %9608 = vmatprep.subr.mxu0 0.0
    %v9609 = vand.u32 %v24, 4294901760
    %9610 = vmatpush1.msra.mxu0 %v9609
    %9611 = vmatprep.subr.mxu0 0.0
    %v9612 = vand.u32 %v23, 4294901760
    %9613 = vmatpush1.msra.mxu0 %v9612
    %9614 = vmatprep.subr.mxu0 0.0
    %v9615 = vand.u32 %v22, 4294901760
    %9616 = vmatpush1.msra.mxu0 %v9615
    %9617 = vmatprep.subr.mxu0 0.0
    %v9618 = vand.u32 %v21, 4294901760
    %9619 = vmatpush1.msra.mxu0 %v9618
    %9620 = vmatprep.subr.mxu0 0.0
    %v9621 = vand.u32 %v20, 4294901760
    %9622 = vmatpush1.msra.mxu0 %v9621
    %9623 = vmatprep.subr.mxu0 0.0
    %v9624 = vand.u32 %v19, 4294901760
    %9625 = vmatpush1.msra.mxu0 %v9624
    %9626 = vmatprep.subr.mxu0 0.0
    %v9627 = vand.u32 %v18, 4294901760
    %9628 = vmatpush1.msra.mxu0 %v9627
    %9629 = vmatprep.subr.mxu0 0.0
    %v9630 = vand.u32 %v17, 4294901760
    %9631 = vmatpush1.msra.mxu0 %v9630
    %9632 = vmatprep.subr.mxu0 0.0
    %v9633 = vand.u32 %v16, 4294901760
    %9634 = vmatpush1.msra.mxu0 %v9633
    %9635 = vmatprep.subr.mxu0 0.0
    %v9636 = vand.u32 %v15, 4294901760
    %9637 = vmatpush1.msra.mxu0 %v9636
    %9638 = vmatprep.subr.mxu0 0.0
    %v9639 = vand.u32 %v14, 4294901760
    %9640 = vmatpush1.msra.mxu0 %v9639
    %9641 = vmatprep.subr.mxu0 0.0
    %9642 = vmatpush2.msra.mxu0 0.0
    %9643 = vmatprep.subr.mxu0 0.0
    %9644 = vmatpush2.msra.mxu0 0.0
    %9645 = vmatprep.subr.mxu0 0.0
    %9646 = vmatpush2.msra.mxu0 0.0
    %9647 = vmatprep.subr.mxu0 0.0
    %9648 = vmatpush2.msra.mxu0 0.0
    %9649 = vmatprep.subr.mxu0 0.0
    %9650 = vmatpush2.msra.mxu0 0.0
    %9651 = vmatprep.subr.mxu0 0.0
    %9652 = vmatpush2.msra.mxu0 0.0
    %9653 = vmatprep.subr.mxu0 0.0
    %9654 = vmatpush2.msra.mxu0 0.0
    %9655 = vmatprep.subr.mxu0 0.0
    %9656 = vmatpush2.msra.mxu0 0.0
    %9657 = vmatprep.subr.mxu0 0.0
    %9658 = vmatpush2.msra.mxu0 0.0
    %9659 = vmatprep.subr.mxu0 0.0
    %9660 = vmatpush2.msra.mxu0 0.0
    %9661 = vmatprep.subr.mxu0 0.0
    %9662 = vmatpush2.msra.mxu0 0.0
    %9663 = vmatprep.subr.mxu0 0.0
    %9664 = vmatpush2.msra.mxu0 0.0
    %9665 = vmatprep.subr.mxu0 0.0
    %9666 = vmatpush2.msra.mxu0 0.0
    %9667 = vmatprep.subr.mxu0 0.0
    %9668 = vmatpush2.msra.mxu0 0.0
    %9669 = vmatprep.subr.mxu0 0.0
    %9670 = vmatpush2.msra.mxu0 0.0
    %9671 = vmatprep.subr.mxu0 0.0
    %9672 = vmatpush2.msra.mxu0 0.0
    %9673 = vmatprep.mubr.f32.mxu0 0.0
    %v9674 = vand.u32 %v50, 4294901760
    %9675 = vmatmul.mubr.f32.gmra.mxu0 %v9674
    %v9676 = vpop.f32.mrf.mxu0
    %v9677 = vadd.f32 %v9590, %v9676
    %v9678 = vpop.f32.mrf.mxu0
    %9679 = vdwg.mxu0
    %v9680 = vand.u32 2147483647, %v9677
    %vm9681 = vcmp.le.f32.partialorder %v9680, 0.7853982
    %vm9682 = vcmp.lt.s32.totalorder %v9677, 0
    %v9683 = vand.u32 %v9677, 2139095040
    %v9684 = vshrl.u32 %v9683, 23
    %v9685 = vsub.s32 %v9684, 127
    %v9686 = vand.u32 2147483647, %v9677
    %v9687 = vand.u32 %v9686, 8388607
    %v9688 = vor.u32 %v9687, 8388608
    %v9689 = vsub.s32 0, %v9688
    %v9690 = vadd.s32 %v9685, 1
    %vm9691 = vcmp.gt.s32.totalorder %v9690, 0
    %v9692 = vsel %vm9691, %v9690, 0
    %v9693 = vshrl.u32 %v9692, 5
    %v9694 = vand.u32 %v9692, 31
    %v9695 = vsub.s32 32, %v9694
    %v9696 = vshrl.u32 683565275, %v9695
    %v9697 = vshll.u32 683565275, %v9694
    %v9698 = vshrl.u32 2475754826, %v9695
    %v9699 = vor.u32 %v9697, %v9698
    %v9700 = vshll.u32 2475754826, %v9694
    %v9701 = vshrl.u32 2131351028, %v9695
    %v9702 = vor.u32 %v9700, %v9701
    %v9703 = vshll.u32 2131351028, %v9694
    %v9704 = vshrl.u32 2102212464, %v9695
    %v9705 = vor.u32 %v9703, %v9704
    %v9706 = vshll.u32 2102212464, %v9694
    %v9707 = vshrl.u32 920167782, %v9695
    %v9708 = vor.u32 %v9706, %v9707
    %v9709 = vshll.u32 920167782, %v9694
    %v9710 = vshrl.u32 1326507024, %v9695
    %v9711 = vor.u32 %v9709, %v9710
    %vm9712 = vcmp.lt.s32.totalorder %v9693, 1
    %vm9713 = vcmp.lt.s32.totalorder %v9693, 2
    %vm9714 = vcmp.lt.s32.totalorder %v9693, 3
    %vm9715 = vcmp.lt.s32.totalorder %v9693, 4
    %v9716 = vsel %vm9712, %v9696, %v9699
    %v9717 = vsel %vm9715, %v9705, 2102212464
    %v9718 = vsel %vm9714, %v9702, %v9717
    %v9719 = vsel %vm9713, %v9716, %v9718
    %v9720 = vsel %vm9712, %v9699, %v9702
    %v9721 = vsel %vm9715, %v9708, 920167782
    %v9722 = vsel %vm9714, %v9705, %v9721
    %v9723 = vsel %vm9713, %v9720, %v9722
    %v9724 = vsel %vm9712, %v9702, %v9705
    %v9725 = vsel %vm9715, %v9711, 1326507024
    %v9726 = vsel %vm9714, %v9708, %v9725
    %v9727 = vsel %vm9713, %v9724, %v9726
    %v9728 = vshll.u32 %v9688, 8
    %v9729 = vmul.u32.u64.compose %v9728, %v9727
    %v9730 = vextract.low.u32 %v9729
    %v9731 = vextract.high.u32 %v9729
    %v9732 = vmul.u32.u64.compose %v9728, %v9723
    %v9733 = vextract.low.u32 %v9732
    %v9734 = vextract.high.u32 %v9732
    %v9735 = vmul.u32 %v9728, %v9719
    %v9736 = vadd.s32 %v9731, %v9733
    %vm9737 = vc.u32 %v9731, %v9733
    %v9738 = vadd.s32 %v9734, 1
    %v9739 = vsel %vm9737, %v9738, %v9734
    %v9740 = vadd.s32 %v9735, %v9739
    %v9741 = vadd.s32 %v9740, 536870912
    %v9742 = vshrl.u32 %v9741, 30
    %v9743 = vshll.u32 %v9742, 30
    %v9744 = vsub.s32 %v9740, %v9743
    %vm9745 = vcmp.lt.s32.totalorder %v9744, 0
    %v9746 = vsub.s32 0, %v9744
    %v9747 = vsel %vm9745, %v9746, %v9744
    %v9748 = vclz %v9747
    %v9749 = vsub.s32 %v9748, 2
    %vm9750 = vcmp.gt.s32.totalorder 0, %v9749
    %v9751 = vsel %vm9750, 0, %v9749
    %v9752 = vsub.s32 32, %v9751
    %v9753 = vshll.u32 %v9744, %v9751
    %v9754 = vshrl.u32 %v9736, %v9752
    %v9755 = vor.u32 %v9753, %v9754
    %v9756 = vsub.s32 4294967266, %v9751
    %v9757 = vadd.s32 %v9756, 127
    %v9758 = vshll.u32 %v9757, 23
    %v9759 = vor.u32 4788187, %v9758
    %v9760 = vand.u32 2147483647, %v9759
    %v9762 = vcvt.s32.f32 %v9755
    %v9763 = vmul.f32 %v9762, %v9760
    %v9764 = vxor.u32 %v9763, 2147483648
    %v9765 = vsel %vm9682, %v9764, %v9763
    %v9766 = vsub.s32 4, %v9742
    %v9767 = vsel %vm9682, %v9766, %v9742
    %v9768 = vsel %vm9681, %v9677, %v9765
    %v9769 = vsel %vm9681, 0, %v9767
    %v9770 = vcosq.f32.pop %v9768
    %v9771 = vsinq.f32.pop %v9768
    %vm9772 = vweird.f32 %v9677
    %v9773 = vadd.s32 %v9769, 3
    %v9774 = vand.u32 %v9773, 3
    %vm9775 = vcmp.lt.s32.totalorder %v9774, 2
    %vm9776 = vcmp.eq.s32.totalorder %v9774, 0
    %v9777 = vxor.u32 %v9771, 2147483648
    %v9778 = vsel %vm9776, %v9770, %v9777
    %vm9779 = vcmp.eq.s32.totalorder %v9774, 2
    %v9780 = vxor.u32 %v9770, 2147483648
    %v9781 = vsel %vm9779, %v9780, %v9771
    %v9782 = vsel %vm9775, %v9778, %v9781
    %v9783 = vsel %vm9772, nan, %v9782
    %v9784 = vmul.f32 %v9783, 0.016835017
    %v9785 = vadd.f32 %v50, %v9784
    %9786 = vmatprep.subr.mxu0 0.0
    %v9787 = vand.u32 %v29, 4294901760
    %9788 = vmatpush1.msra.mxu0 %v9787
    %9789 = vmatprep.subr.mxu0 0.0
    %v9790 = vand.u32 %v28, 4294901760
    %9791 = vmatpush1.msra.mxu0 %v9790
    %9792 = vmatprep.subr.mxu0 0.0
    %v9793 = vand.u32 %v27, 4294901760
    %9794 = vmatpush1.msra.mxu0 %v9793
    %9795 = vmatprep.subr.mxu0 0.0
    %v9796 = vand.u32 %v26, 4294901760
    %9797 = vmatpush1.msra.mxu0 %v9796
    %9798 = vmatprep.subr.mxu0 0.0
    %v9799 = vand.u32 %v25, 4294901760
    %9800 = vmatpush1.msra.mxu0 %v9799
    %9801 = vmatprep.subr.mxu0 0.0
    %v9802 = vand.u32 %v24, 4294901760
    %9803 = vmatpush1.msra.mxu0 %v9802
    %9804 = vmatprep.subr.mxu0 0.0
    %v9805 = vand.u32 %v23, 4294901760
    %9806 = vmatpush1.msra.mxu0 %v9805
    %9807 = vmatprep.subr.mxu0 0.0
    %v9808 = vand.u32 %v22, 4294901760
    %9809 = vmatpush1.msra.mxu0 %v9808
    %9810 = vmatprep.subr.mxu0 0.0
    %v9811 = vand.u32 %v21, 4294901760
    %9812 = vmatpush1.msra.mxu0 %v9811
    %9813 = vmatprep.subr.mxu0 0.0
    %v9814 = vand.u32 %v20, 4294901760
    %9815 = vmatpush1.msra.mxu0 %v9814
    %9816 = vmatprep.subr.mxu0 0.0
    %v9817 = vand.u32 %v19, 4294901760
    %9818 = vmatpush1.msra.mxu0 %v9817
    %9819 = vmatprep.subr.mxu0 0.0
    %v9820 = vand.u32 %v18, 4294901760
    %9821 = vmatpush1.msra.mxu0 %v9820
    %9822 = vmatprep.subr.mxu0 0.0
    %v9823 = vand.u32 %v17, 4294901760
    %9824 = vmatpush1.msra.mxu0 %v9823
    %9825 = vmatprep.subr.mxu0 0.0
    %v9826 = vand.u32 %v16, 4294901760
    %9827 = vmatpush1.msra.mxu0 %v9826
    %9828 = vmatprep.subr.mxu0 0.0
    %v9829 = vand.u32 %v15, 4294901760
    %9830 = vmatpush1.msra.mxu0 %v9829
    %9831 = vmatprep.subr.mxu0 0.0
    %v9832 = vand.u32 %v14, 4294901760
    %9833 = vmatpush1.msra.mxu0 %v9832
    %9834 = vmatprep.subr.mxu0 0.0
    %9835 = vmatpush2.msra.mxu0 0.0
    %9836 = vmatprep.subr.mxu0 0.0
    %9837 = vmatpush2.msra.mxu0 0.0
    %9838 = vmatprep.subr.mxu0 0.0
    %9839 = vmatpush2.msra.mxu0 0.0
    %9840 = vmatprep.subr.mxu0 0.0
    %9841 = vmatpush2.msra.mxu0 0.0
    %9842 = vmatprep.subr.mxu0 0.0
    %9843 = vmatpush2.msra.mxu0 0.0
    %9844 = vmatprep.subr.mxu0 0.0
    %9845 = vmatpush2.msra.mxu0 0.0
    %9846 = vmatprep.subr.mxu0 0.0
    %9847 = vmatpush2.msra.mxu0 0.0
    %9848 = vmatprep.subr.mxu0 0.0
    %9849 = vmatpush2.msra.mxu0 0.0
    %9850 = vmatprep.subr.mxu0 0.0
    %9851 = vmatpush2.msra.mxu0 0.0
    %9852 = vmatprep.subr.mxu0 0.0
    %9853 = vmatpush2.msra.mxu0 0.0
    %9854 = vmatprep.subr.mxu0 0.0
    %9855 = vmatpush2.msra.mxu0 0.0
    %9856 = vmatprep.subr.mxu0 0.0
    %9857 = vmatpush2.msra.mxu0 0.0
    %9858 = vmatprep.subr.mxu0 0.0
    %9859 = vmatpush2.msra.mxu0 0.0
    %9860 = vmatprep.subr.mxu0 0.0
    %9861 = vmatpush2.msra.mxu0 0.0
    %9862 = vmatprep.subr.mxu0 0.0
    %9863 = vmatpush2.msra.mxu0 0.0
    %9864 = vmatprep.subr.mxu0 0.0
    %9865 = vmatpush2.msra.mxu0 0.0
    %9866 = vmatprep.mubr.f32.mxu0 0.0
    %v9867 = vand.u32 %v9785, 4294901760
    %v9868 = vsub.f32 %v9785, %v9867
    %v9869 = vand.u32 %v9868, 4294901760
    %v9870 = vsub.f32 %v9868, %v9869
    %v9871 = vand.u32 %v9870, 4294901760
    %9872 = vmatmul.mubr.f32.gmra.mxu0 %v9871
    %v9873 = vpop.f32.mrf.mxu0
    %v9874 = vadd.f32 %v35, %v9873
    %v9875 = vpop.f32.mrf.mxu0
    %9876 = vdwg.mxu0
    %9877 = vmatprep.subr.mxu0 0.0
    %v9878 = vand.u32 %v29, 4294901760
    %v9879 = vsub.f32 %v29, %v9878
    %v9880 = vand.u32 %v9879, 4294901760
    %v9881 = vsub.f32 %v9879, %v9880
    %v9882 = vand.u32 %v9881, 4294901760
    %9883 = vmatpush1.msra.mxu0 %v9882
    %9884 = vmatprep.subr.mxu0 0.0
    %v9885 = vand.u32 %v28, 4294901760
    %v9886 = vsub.f32 %v28, %v9885
    %v9887 = vand.u32 %v9886, 4294901760
    %v9888 = vsub.f32 %v9886, %v9887
    %v9889 = vand.u32 %v9888, 4294901760
    %9890 = vmatpush1.msra.mxu0 %v9889
    %9891 = vmatprep.subr.mxu0 0.0
    %v9892 = vand.u32 %v27, 4294901760
    %v9893 = vsub.f32 %v27, %v9892
    %v9894 = vand.u32 %v9893, 4294901760
    %v9895 = vsub.f32 %v9893, %v9894
    %v9896 = vand.u32 %v9895, 4294901760
    %9897 = vmatpush1.msra.mxu0 %v9896
    %9898 = vmatprep.subr.mxu0 0.0
    %v9899 = vand.u32 %v26, 4294901760
    %v9900 = vsub.f32 %v26, %v9899
    %v9901 = vand.u32 %v9900, 4294901760
    %v9902 = vsub.f32 %v9900, %v9901
    %v9903 = vand.u32 %v9902, 4294901760
    %9904 = vmatpush1.msra.mxu0 %v9903
    %9905 = vmatprep.subr.mxu0 0.0
    %v9906 = vand.u32 %v25, 4294901760
    %v9907 = vsub.f32 %v25, %v9906
    %v9908 = vand.u32 %v9907, 4294901760
    %v9909 = vsub.f32 %v9907, %v9908
    %v9910 = vand.u32 %v9909, 4294901760
    %9911 = vmatpush1.msra.mxu0 %v9910
    %9912 = vmatprep.subr.mxu0 0.0
    %v9913 = vand.u32 %v24, 4294901760
    %v9914 = vsub.f32 %v24, %v9913
    %v9915 = vand.u32 %v9914, 4294901760
    %v9916 = vsub.f32 %v9914, %v9915
    %v9917 = vand.u32 %v9916, 4294901760
    %9918 = vmatpush1.msra.mxu0 %v9917
    %9919 = vmatprep.subr.mxu0 0.0
    %v9920 = vand.u32 %v23, 4294901760
    %v9921 = vsub.f32 %v23, %v9920
    %v9922 = vand.u32 %v9921, 4294901760
    %v9923 = vsub.f32 %v9921, %v9922
    %v9924 = vand.u32 %v9923, 4294901760
    %9925 = vmatpush1.msra.mxu0 %v9924
    %9926 = vmatprep.subr.mxu0 0.0
    %v9927 = vand.u32 %v22, 4294901760
    %v9928 = vsub.f32 %v22, %v9927
    %v9929 = vand.u32 %v9928, 4294901760
    %v9930 = vsub.f32 %v9928, %v9929
    %v9931 = vand.u32 %v9930, 4294901760
    %9932 = vmatpush1.msra.mxu0 %v9931
    %9933 = vmatprep.subr.mxu0 0.0
    %v9934 = vand.u32 %v21, 4294901760
    %v9935 = vsub.f32 %v21, %v9934
    %v9936 = vand.u32 %v9935, 4294901760
    %v9937 = vsub.f32 %v9935, %v9936
    %v9938 = vand.u32 %v9937, 4294901760
    %9939 = vmatpush1.msra.mxu0 %v9938
    %9940 = vmatprep.subr.mxu0 0.0
    %v9941 = vand.u32 %v20, 4294901760
    %v9942 = vsub.f32 %v20, %v9941
    %v9943 = vand.u32 %v9942, 4294901760
    %v9944 = vsub.f32 %v9942, %v9943
    %v9945 = vand.u32 %v9944, 4294901760
    %9946 = vmatpush1.msra.mxu0 %v9945
    %9947 = vmatprep.subr.mxu0 0.0
    %v9948 = vand.u32 %v19, 4294901760
    %v9949 = vsub.f32 %v19, %v9948
    %v9950 = vand.u32 %v9949, 4294901760
    %v9951 = vsub.f32 %v9949, %v9950
    %v9952 = vand.u32 %v9951, 4294901760
    %9953 = vmatpush1.msra.mxu0 %v9952
    %9954 = vmatprep.subr.mxu0 0.0
    %v9955 = vand.u32 %v18, 4294901760
    %v9956 = vsub.f32 %v18, %v9955
    %v9957 = vand.u32 %v9956, 4294901760
    %v9958 = vsub.f32 %v9956, %v9957
    %v9959 = vand.u32 %v9958, 4294901760
    %9960 = vmatpush1.msra.mxu0 %v9959
    %9961 = vmatprep.subr.mxu0 0.0
    %v9962 = vand.u32 %v17, 4294901760
    %v9963 = vsub.f32 %v17, %v9962
    %v9964 = vand.u32 %v9963, 4294901760
    %v9965 = vsub.f32 %v9963, %v9964
    %v9966 = vand.u32 %v9965, 4294901760
    %9967 = vmatpush1.msra.mxu0 %v9966
    %9968 = vmatprep.subr.mxu0 0.0
    %v9969 = vand.u32 %v16, 4294901760
    %v9970 = vsub.f32 %v16, %v9969
    %v9971 = vand.u32 %v9970, 4294901760
    %v9972 = vsub.f32 %v9970, %v9971
    %v9973 = vand.u32 %v9972, 4294901760
    %9974 = vmatpush1.msra.mxu0 %v9973
    %9975 = vmatprep.subr.mxu0 0.0
    %v9976 = vand.u32 %v15, 4294901760
    %v9977 = vsub.f32 %v15, %v9976
    %v9978 = vand.u32 %v9977, 4294901760
    %v9979 = vsub.f32 %v9977, %v9978
    %v9980 = vand.u32 %v9979, 4294901760
    %9981 = vmatpush1.msra.mxu0 %v9980
    %9982 = vmatprep.subr.mxu0 0.0
    %v9983 = vand.u32 %v14, 4294901760
    %v9984 = vsub.f32 %v14, %v9983
    %v9985 = vand.u32 %v9984, 4294901760
    %v9986 = vsub.f32 %v9984, %v9985
    %v9987 = vand.u32 %v9986, 4294901760
    %9988 = vmatpush1.msra.mxu0 %v9987
    %9989 = vmatprep.subr.mxu0 0.0
    %9990 = vmatpush2.msra.mxu0 0.0
    %9991 = vmatprep.subr.mxu0 0.0
    %9992 = vmatpush2.msra.mxu0 0.0
    %9993 = vmatprep.subr.mxu0 0.0
    %9994 = vmatpush2.msra.mxu0 0.0
    %9995 = vmatprep.subr.mxu0 0.0
    %9996 = vmatpush2.msra.mxu0 0.0
    %9997 = vmatprep.subr.mxu0 0.0
    %9998 = vmatpush2.msra.mxu0 0.0
    %9999 = vmatprep.subr.mxu0 0.0
    %10000 = vmatpush2.msra.mxu0 0.0
    %10001 = vmatprep.subr.mxu0 0.0
    %10002 = vmatpush2.msra.mxu0 0.0
    %10003 = vmatprep.subr.mxu0 0.0
    %10004 = vmatpush2.msra.mxu0 0.0
    %10005 = vmatprep.subr.mxu0 0.0
    %10006 = vmatpush2.msra.mxu0 0.0
    %10007 = vmatprep.subr.mxu0 0.0
    %10008 = vmatpush2.msra.mxu0 0.0
    %10009 = vmatprep.subr.mxu0 0.0
    %10010 = vmatpush2.msra.mxu0 0.0
    %10011 = vmatprep.subr.mxu0 0.0
    %10012 = vmatpush2.msra.mxu0 0.0
    %10013 = vmatprep.subr.mxu0 0.0
    %10014 = vmatpush2.msra.mxu0 0.0
    %10015 = vmatprep.subr.mxu0 0.0
    %10016 = vmatpush2.msra.mxu0 0.0
    %10017 = vmatprep.subr.mxu0 0.0
    %10018 = vmatpush2.msra.mxu0 0.0
    %10019 = vmatprep.subr.mxu0 0.0
    %10020 = vmatpush2.msra.mxu0 0.0
    %10021 = vmatprep.mubr.f32.mxu0 0.0
    %v10022 = vand.u32 %v9785, 4294901760
    %10023 = vmatmul.mubr.f32.gmra.mxu0 %v10022
    %v10024 = vpop.f32.mrf.mxu0
    %v10025 = vadd.f32 %v9874, %v10024
    %v10026 = vpop.f32.mrf.mxu0
    %10027 = vdwg.mxu0
    %10028 = vmatprep.subr.mxu0 0.0
    %v10029 = vand.u32 %v29, 4294901760
    %v10030 = vsub.f32 %v29, %v10029
    %10031 = vmatpush1.msra.mxu0 %v10030
    %10032 = vmatprep.subr.mxu0 0.0
    %v10033 = vand.u32 %v28, 4294901760
    %v10034 = vsub.f32 %v28, %v10033
    %10035 = vmatpush1.msra.mxu0 %v10034
    %10036 = vmatprep.subr.mxu0 0.0
    %v10037 = vand.u32 %v27, 4294901760
    %v10038 = vsub.f32 %v27, %v10037
    %10039 = vmatpush1.msra.mxu0 %v10038
    %10040 = vmatprep.subr.mxu0 0.0
    %v10041 = vand.u32 %v26, 4294901760
    %v10042 = vsub.f32 %v26, %v10041
    %10043 = vmatpush1.msra.mxu0 %v10042
    %10044 = vmatprep.subr.mxu0 0.0
    %v10045 = vand.u32 %v25, 4294901760
    %v10046 = vsub.f32 %v25, %v10045
    %10047 = vmatpush1.msra.mxu0 %v10046
    %10048 = vmatprep.subr.mxu0 0.0
    %v10049 = vand.u32 %v24, 4294901760
    %v10050 = vsub.f32 %v24, %v10049
    %10051 = vmatpush1.msra.mxu0 %v10050
    %10052 = vmatprep.subr.mxu0 0.0
    %v10053 = vand.u32 %v23, 4294901760
    %v10054 = vsub.f32 %v23, %v10053
    %10055 = vmatpush1.msra.mxu0 %v10054
    %10056 = vmatprep.subr.mxu0 0.0
    %v10057 = vand.u32 %v22, 4294901760
    %v10058 = vsub.f32 %v22, %v10057
    %10059 = vmatpush1.msra.mxu0 %v10058
    %10060 = vmatprep.subr.mxu0 0.0
    %v10061 = vand.u32 %v21, 4294901760
    %v10062 = vsub.f32 %v21, %v10061
    %10063 = vmatpush1.msra.mxu0 %v10062
    %10064 = vmatprep.subr.mxu0 0.0
    %v10065 = vand.u32 %v20, 4294901760
    %v10066 = vsub.f32 %v20, %v10065
    %10067 = vmatpush1.msra.mxu0 %v10066
    %10068 = vmatprep.subr.mxu0 0.0
    %v10069 = vand.u32 %v19, 4294901760
    %v10070 = vsub.f32 %v19, %v10069
    %10071 = vmatpush1.msra.mxu0 %v10070
    %10072 = vmatprep.subr.mxu0 0.0
    %v10073 = vand.u32 %v18, 4294901760
    %v10074 = vsub.f32 %v18, %v10073
    %10075 = vmatpush1.msra.mxu0 %v10074
    %10076 = vmatprep.subr.mxu0 0.0
    %v10077 = vand.u32 %v17, 4294901760
    %v10078 = vsub.f32 %v17, %v10077
    %10079 = vmatpush1.msra.mxu0 %v10078
    %10080 = vmatprep.subr.mxu0 0.0
    %v10081 = vand.u32 %v16, 4294901760
    %v10082 = vsub.f32 %v16, %v10081
    %10083 = vmatpush1.msra.mxu0 %v10082
    %10084 = vmatprep.subr.mxu0 0.0
    %v10085 = vand.u32 %v15, 4294901760
    %v10086 = vsub.f32 %v15, %v10085
    %10087 = vmatpush1.msra.mxu0 %v10086
    %10088 = vmatprep.subr.mxu0 0.0
    %v10089 = vand.u32 %v14, 4294901760
    %v10090 = vsub.f32 %v14, %v10089
    %10091 = vmatpush1.msra.mxu0 %v10090
    %10092 = vmatprep.subr.mxu0 0.0
    %10093 = vmatpush2.msra.mxu0 0.0
    %10094 = vmatprep.subr.mxu0 0.0
    %10095 = vmatpush2.msra.mxu0 0.0
    %10096 = vmatprep.subr.mxu0 0.0
    %10097 = vmatpush2.msra.mxu0 0.0
    %10098 = vmatprep.subr.mxu0 0.0
    %10099 = vmatpush2.msra.mxu0 0.0
    %10100 = vmatprep.subr.mxu0 0.0
    %10101 = vmatpush2.msra.mxu0 0.0
    %10102 = vmatprep.subr.mxu0 0.0
    %10103 = vmatpush2.msra.mxu0 0.0
    %10104 = vmatprep.subr.mxu0 0.0
    %10105 = vmatpush2.msra.mxu0 0.0
    %10106 = vmatprep.subr.mxu0 0.0
    %10107 = vmatpush2.msra.mxu0 0.0
    %10108 = vmatprep.subr.mxu0 0.0
    %10109 = vmatpush2.msra.mxu0 0.0
    %10110 = vmatprep.subr.mxu0 0.0
    %10111 = vmatpush2.msra.mxu0 0.0
    %10112 = vmatprep.subr.mxu0 0.0
    %10113 = vmatpush2.msra.mxu0 0.0
    %10114 = vmatprep.subr.mxu0 0.0
    %10115 = vmatpush2.msra.mxu0 0.0
    %10116 = vmatprep.subr.mxu0 0.0
    %10117 = vmatpush2.msra.mxu0 0.0
    %10118 = vmatprep.subr.mxu0 0.0
    %10119 = vmatpush2.msra.mxu0 0.0
    %10120 = vmatprep.subr.mxu0 0.0
    %10121 = vmatpush2.msra.mxu0 0.0
    %10122 = vmatprep.subr.mxu0 0.0
    %10123 = vmatpush2.msra.mxu0 0.0
    %10124 = vmatprep.mubr.f32.mxu0 0.0
    %v10125 = vand.u32 %v9785, 4294901760
    %v10126 = vsub.f32 %v9785, %v10125
    %10127 = vmatmul.mubr.f32.gmra.mxu0 %v10126
    %v10128 = vpop.f32.mrf.mxu0
    %v10129 = vadd.f32 %v10025, %v10128
    %v10130 = vpop.f32.mrf.mxu0
    %10131 = vdwg.mxu0
    %10132 = vmatprep.subr.mxu0 0.0
    %v10133 = vand.u32 %v29, 4294901760
    %10134 = vmatpush1.msra.mxu0 %v10133
    %10135 = vmatprep.subr.mxu0 0.0
    %v10136 = vand.u32 %v28, 4294901760
    %10137 = vmatpush1.msra.mxu0 %v10136
    %10138 = vmatprep.subr.mxu0 0.0
    %v10139 = vand.u32 %v27, 4294901760
    %10140 = vmatpush1.msra.mxu0 %v10139
    %10141 = vmatprep.subr.mxu0 0.0
    %v10142 = vand.u32 %v26, 4294901760
    %10143 = vmatpush1.msra.mxu0 %v10142
    %10144 = vmatprep.subr.mxu0 0.0
    %v10145 = vand.u32 %v25, 4294901760
    %10146 = vmatpush1.msra.mxu0 %v10145
    %10147 = vmatprep.subr.mxu0 0.0
    %v10148 = vand.u32 %v24, 4294901760
    %10149 = vmatpush1.msra.mxu0 %v10148
    %10150 = vmatprep.subr.mxu0 0.0
    %v10151 = vand.u32 %v23, 4294901760
    %10152 = vmatpush1.msra.mxu0 %v10151
    %10153 = vmatprep.subr.mxu0 0.0
    %v10154 = vand.u32 %v22, 4294901760
    %10155 = vmatpush1.msra.mxu0 %v10154
    %10156 = vmatprep.subr.mxu0 0.0
    %v10157 = vand.u32 %v21, 4294901760
    %10158 = vmatpush1.msra.mxu0 %v10157
    %10159 = vmatprep.subr.mxu0 0.0
    %v10160 = vand.u32 %v20, 4294901760
    %10161 = vmatpush1.msra.mxu0 %v10160
    %10162 = vmatprep.subr.mxu0 0.0
    %v10163 = vand.u32 %v19, 4294901760
    %10164 = vmatpush1.msra.mxu0 %v10163
    %10165 = vmatprep.subr.mxu0 0.0
    %v10166 = vand.u32 %v18, 4294901760
    %10167 = vmatpush1.msra.mxu0 %v10166
    %10168 = vmatprep.subr.mxu0 0.0
    %v10169 = vand.u32 %v17, 4294901760
    %10170 = vmatpush1.msra.mxu0 %v10169
    %10171 = vmatprep.subr.mxu0 0.0
    %v10172 = vand.u32 %v16, 4294901760
    %10173 = vmatpush1.msra.mxu0 %v10172
    %10174 = vmatprep.subr.mxu0 0.0
    %v10175 = vand.u32 %v15, 4294901760
    %10176 = vmatpush1.msra.mxu0 %v10175
    %10177 = vmatprep.subr.mxu0 0.0
    %v10178 = vand.u32 %v14, 4294901760
    %10179 = vmatpush1.msra.mxu0 %v10178
    %10180 = vmatprep.subr.mxu0 0.0
    %10181 = vmatpush2.msra.mxu0 0.0
    %10182 = vmatprep.subr.mxu0 0.0
    %10183 = vmatpush2.msra.mxu0 0.0
    %10184 = vmatprep.subr.mxu0 0.0
    %10185 = vmatpush2.msra.mxu0 0.0
    %10186 = vmatprep.subr.mxu0 0.0
    %10187 = vmatpush2.msra.mxu0 0.0
    %10188 = vmatprep.subr.mxu0 0.0
    %10189 = vmatpush2.msra.mxu0 0.0
    %10190 = vmatprep.subr.mxu0 0.0
    %10191 = vmatpush2.msra.mxu0 0.0
    %10192 = vmatprep.subr.mxu0 0.0
    %10193 = vmatpush2.msra.mxu0 0.0
    %10194 = vmatprep.subr.mxu0 0.0
    %10195 = vmatpush2.msra.mxu0 0.0
    %10196 = vmatprep.subr.mxu0 0.0
    %10197 = vmatpush2.msra.mxu0 0.0
    %10198 = vmatprep.subr.mxu0 0.0
    %10199 = vmatpush2.msra.mxu0 0.0
    %10200 = vmatprep.subr.mxu0 0.0
    %10201 = vmatpush2.msra.mxu0 0.0
    %10202 = vmatprep.subr.mxu0 0.0
    %10203 = vmatpush2.msra.mxu0 0.0
    %10204 = vmatprep.subr.mxu0 0.0
    %10205 = vmatpush2.msra.mxu0 0.0
    %10206 = vmatprep.subr.mxu0 0.0
    %10207 = vmatpush2.msra.mxu0 0.0
    %10208 = vmatprep.subr.mxu0 0.0
    %10209 = vmatpush2.msra.mxu0 0.0
    %10210 = vmatprep.subr.mxu0 0.0
    %10211 = vmatpush2.msra.mxu0 0.0
    %10212 = vmatprep.mubr.f32.mxu0 0.0
    %v10213 = vand.u32 %v9785, 4294901760
    %v10214 = vsub.f32 %v9785, %v10213
    %v10215 = vand.u32 %v10214, 4294901760
    %10216 = vmatmul.mubr.f32.gmra.mxu0 %v10215
    %v10217 = vpop.f32.mrf.mxu0
    %v10218 = vadd.f32 %v10129, %v10217
    %v10219 = vpop.f32.mrf.mxu0
    %10220 = vdwg.mxu0
    %10221 = vmatprep.subr.mxu0 0.0
    %v10222 = vand.u32 %v29, 4294901760
    %v10223 = vsub.f32 %v29, %v10222
    %v10224 = vand.u32 %v10223, 4294901760
    %10225 = vmatpush1.msra.mxu0 %v10224
    %10226 = vmatprep.subr.mxu0 0.0
    %v10227 = vand.u32 %v28, 4294901760
    %v10228 = vsub.f32 %v28, %v10227
    %v10229 = vand.u32 %v10228, 4294901760
    %10230 = vmatpush1.msra.mxu0 %v10229
    %10231 = vmatprep.subr.mxu0 0.0
    %v10232 = vand.u32 %v27, 4294901760
    %v10233 = vsub.f32 %v27, %v10232
    %v10234 = vand.u32 %v10233, 4294901760
    %10235 = vmatpush1.msra.mxu0 %v10234
    %10236 = vmatprep.subr.mxu0 0.0
    %v10237 = vand.u32 %v26, 4294901760
    %v10238 = vsub.f32 %v26, %v10237
    %v10239 = vand.u32 %v10238, 4294901760
    %10240 = vmatpush1.msra.mxu0 %v10239
    %10241 = vmatprep.subr.mxu0 0.0
    %v10242 = vand.u32 %v25, 4294901760
    %v10243 = vsub.f32 %v25, %v10242
    %v10244 = vand.u32 %v10243, 4294901760
    %10245 = vmatpush1.msra.mxu0 %v10244
    %10246 = vmatprep.subr.mxu0 0.0
    %v10247 = vand.u32 %v24, 4294901760
    %v10248 = vsub.f32 %v24, %v10247
    %v10249 = vand.u32 %v10248, 4294901760
    %10250 = vmatpush1.msra.mxu0 %v10249
    %10251 = vmatprep.subr.mxu0 0.0
    %v10252 = vand.u32 %v23, 4294901760
    %v10253 = vsub.f32 %v23, %v10252
    %v10254 = vand.u32 %v10253, 4294901760
    %10255 = vmatpush1.msra.mxu0 %v10254
    %10256 = vmatprep.subr.mxu0 0.0
    %v10257 = vand.u32 %v22, 4294901760
    %v10258 = vsub.f32 %v22, %v10257
    %v10259 = vand.u32 %v10258, 4294901760
    %10260 = vmatpush1.msra.mxu0 %v10259
    %10261 = vmatprep.subr.mxu0 0.0
    %v10262 = vand.u32 %v21, 4294901760
    %v10263 = vsub.f32 %v21, %v10262
    %v10264 = vand.u32 %v10263, 4294901760
    %10265 = vmatpush1.msra.mxu0 %v10264
    %10266 = vmatprep.subr.mxu0 0.0
    %v10267 = vand.u32 %v20, 4294901760
    %v10268 = vsub.f32 %v20, %v10267
    %v10269 = vand.u32 %v10268, 4294901760
    %10270 = vmatpush1.msra.mxu0 %v10269
    %10271 = vmatprep.subr.mxu0 0.0
    %v10272 = vand.u32 %v19, 4294901760
    %v10273 = vsub.f32 %v19, %v10272
    %v10274 = vand.u32 %v10273, 4294901760
    %10275 = vmatpush1.msra.mxu0 %v10274
    %10276 = vmatprep.subr.mxu0 0.0
    %v10277 = vand.u32 %v18, 4294901760
    %v10278 = vsub.f32 %v18, %v10277
    %v10279 = vand.u32 %v10278, 4294901760
    %10280 = vmatpush1.msra.mxu0 %v10279
    %10281 = vmatprep.subr.mxu0 0.0
    %v10282 = vand.u32 %v17, 4294901760
    %v10283 = vsub.f32 %v17, %v10282
    %v10284 = vand.u32 %v10283, 4294901760
    %10285 = vmatpush1.msra.mxu0 %v10284
    %10286 = vmatprep.subr.mxu0 0.0
    %v10287 = vand.u32 %v16, 4294901760
    %v10288 = vsub.f32 %v16, %v10287
    %v10289 = vand.u32 %v10288, 4294901760
    %10290 = vmatpush1.msra.mxu0 %v10289
    %10291 = vmatprep.subr.mxu0 0.0
    %v10292 = vand.u32 %v15, 4294901760
    %v10293 = vsub.f32 %v15, %v10292
    %v10294 = vand.u32 %v10293, 4294901760
    %10295 = vmatpush1.msra.mxu0 %v10294
    %10296 = vmatprep.subr.mxu0 0.0
    %v10297 = vand.u32 %v14, 4294901760
    %v10298 = vsub.f32 %v14, %v10297
    %v10299 = vand.u32 %v10298, 4294901760
    %10300 = vmatpush1.msra.mxu0 %v10299
    %10301 = vmatprep.subr.mxu0 0.0
    %10302 = vmatpush2.msra.mxu0 0.0
    %10303 = vmatprep.subr.mxu0 0.0
    %10304 = vmatpush2.msra.mxu0 0.0
    %10305 = vmatprep.subr.mxu0 0.0
    %10306 = vmatpush2.msra.mxu0 0.0
    %10307 = vmatprep.subr.mxu0 0.0
    %10308 = vmatpush2.msra.mxu0 0.0
    %10309 = vmatprep.subr.mxu0 0.0
    %10310 = vmatpush2.msra.mxu0 0.0
    %10311 = vmatprep.subr.mxu0 0.0
    %10312 = vmatpush2.msra.mxu0 0.0
    %10313 = vmatprep.subr.mxu0 0.0
    %10314 = vmatpush2.msra.mxu0 0.0
    %10315 = vmatprep.subr.mxu0 0.0
    %10316 = vmatpush2.msra.mxu0 0.0
    %10317 = vmatprep.subr.mxu0 0.0
    %10318 = vmatpush2.msra.mxu0 0.0
    %10319 = vmatprep.subr.mxu0 0.0
    %10320 = vmatpush2.msra.mxu0 0.0
    %10321 = vmatprep.subr.mxu0 0.0
    %10322 = vmatpush2.msra.mxu0 0.0
    %10323 = vmatprep.subr.mxu0 0.0
    %10324 = vmatpush2.msra.mxu0 0.0
    %10325 = vmatprep.subr.mxu0 0.0
    %10326 = vmatpush2.msra.mxu0 0.0
    %10327 = vmatprep.subr.mxu0 0.0
    %10328 = vmatpush2.msra.mxu0 0.0
    %10329 = vmatprep.subr.mxu0 0.0
    %10330 = vmatpush2.msra.mxu0 0.0
    %10331 = vmatprep.subr.mxu0 0.0
    %10332 = vmatpush2.msra.mxu0 0.0
    %10333 = vmatprep.mubr.f32.mxu0 0.0
    %v10334 = vand.u32 %v9785, 4294901760
    %10335 = vmatmul.mubr.f32.gmra.mxu0 %v10334
    %v10336 = vpop.f32.mrf.mxu0
    %v10337 = vadd.f32 %v10218, %v10336
    %v10338 = vpop.f32.mrf.mxu0
    %10339 = vdwg.mxu0
    %10340 = vmatprep.subr.mxu0 0.0
    %v10341 = vand.u32 %v29, 4294901760
    %10342 = vmatpush1.msra.mxu0 %v10341
    %10343 = vmatprep.subr.mxu0 0.0
    %v10344 = vand.u32 %v28, 4294901760
    %10345 = vmatpush1.msra.mxu0 %v10344
    %10346 = vmatprep.subr.mxu0 0.0
    %v10347 = vand.u32 %v27, 4294901760
    %10348 = vmatpush1.msra.mxu0 %v10347
    %10349 = vmatprep.subr.mxu0 0.0
    %v10350 = vand.u32 %v26, 4294901760
    %10351 = vmatpush1.msra.mxu0 %v10350
    %10352 = vmatprep.subr.mxu0 0.0
    %v10353 = vand.u32 %v25, 4294901760
    %10354 = vmatpush1.msra.mxu0 %v10353
    %10355 = vmatprep.subr.mxu0 0.0
    %v10356 = vand.u32 %v24, 4294901760
    %10357 = vmatpush1.msra.mxu0 %v10356
    %10358 = vmatprep.subr.mxu0 0.0
    %v10359 = vand.u32 %v23, 4294901760
    %10360 = vmatpush1.msra.mxu0 %v10359
    %10361 = vmatprep.subr.mxu0 0.0
    %v10362 = vand.u32 %v22, 4294901760
    %10363 = vmatpush1.msra.mxu0 %v10362
    %10364 = vmatprep.subr.mxu0 0.0
    %v10365 = vand.u32 %v21, 4294901760
    %10366 = vmatpush1.msra.mxu0 %v10365
    %10367 = vmatprep.subr.mxu0 0.0
    %v10368 = vand.u32 %v20, 4294901760
    %10369 = vmatpush1.msra.mxu0 %v10368
    %10370 = vmatprep.subr.mxu0 0.0
    %v10371 = vand.u32 %v19, 4294901760
    %10372 = vmatpush1.msra.mxu0 %v10371
    %10373 = vmatprep.subr.mxu0 0.0
    %v10374 = vand.u32 %v18, 4294901760
    %10375 = vmatpush1.msra.mxu0 %v10374
    %10376 = vmatprep.subr.mxu0 0.0
    %v10377 = vand.u32 %v17, 4294901760
    %10378 = vmatpush1.msra.mxu0 %v10377
    %10379 = vmatprep.subr.mxu0 0.0
    %v10380 = vand.u32 %v16, 4294901760
    %10381 = vmatpush1.msra.mxu0 %v10380
    %10382 = vmatprep.subr.mxu0 0.0
    %v10383 = vand.u32 %v15, 4294901760
    %10384 = vmatpush1.msra.mxu0 %v10383
    %10385 = vmatprep.subr.mxu0 0.0
    %v10386 = vand.u32 %v14, 4294901760
    %10387 = vmatpush1.msra.mxu0 %v10386
    %10388 = vmatprep.subr.mxu0 0.0
    %10389 = vmatpush2.msra.mxu0 0.0
    %10390 = vmatprep.subr.mxu0 0.0
    %10391 = vmatpush2.msra.mxu0 0.0
    %10392 = vmatprep.subr.mxu0 0.0
    %10393 = vmatpush2.msra.mxu0 0.0
    %10394 = vmatprep.subr.mxu0 0.0
    %10395 = vmatpush2.msra.mxu0 0.0
    %10396 = vmatprep.subr.mxu0 0.0
    %10397 = vmatpush2.msra.mxu0 0.0
    %10398 = vmatprep.subr.mxu0 0.0
    %10399 = vmatpush2.msra.mxu0 0.0
    %10400 = vmatprep.subr.mxu0 0.0
    %10401 = vmatpush2.msra.mxu0 0.0
    %10402 = vmatprep.subr.mxu0 0.0
    %10403 = vmatpush2.msra.mxu0 0.0
    %10404 = vmatprep.subr.mxu0 0.0
    %10405 = vmatpush2.msra.mxu0 0.0
    %10406 = vmatprep.subr.mxu0 0.0
    %10407 = vmatpush2.msra.mxu0 0.0
    %10408 = vmatprep.subr.mxu0 0.0
    %10409 = vmatpush2.msra.mxu0 0.0
    %10410 = vmatprep.subr.mxu0 0.0
    %10411 = vmatpush2.msra.mxu0 0.0
    %10412 = vmatprep.subr.mxu0 0.0
    %10413 = vmatpush2.msra.mxu0 0.0
    %10414 = vmatprep.subr.mxu0 0.0
    %10415 = vmatpush2.msra.mxu0 0.0
    %10416 = vmatprep.subr.mxu0 0.0
    %10417 = vmatpush2.msra.mxu0 0.0
    %10418 = vmatprep.subr.mxu0 0.0
    %10419 = vmatpush2.msra.mxu0 0.0
    %10420 = vmatprep.mubr.f32.mxu0 0.0
    %v10421 = vand.u32 %v9785, 4294901760
    %10422 = vmatmul.mubr.f32.gmra.mxu0 %v10421
    %v10423 = vpop.f32.mrf.mxu0
    %v10424 = vadd.f32 %v10337, %v10423
    %v10425 = vpop.f32.mrf.mxu0
    %10426 = vdwg.mxu0
    %v10427 = vand.u32 2147483647, %v10424
    %vm10428 = vcmp.le.f32.partialorder %v10427, 0.7853982
    %vm10429 = vcmp.lt.s32.totalorder %v10424, 0
    %v10430 = vand.u32 %v10424, 2139095040
    %v10431 = vshrl.u32 %v10430, 23
    %v10432 = vsub.s32 %v10431, 127
    %v10433 = vand.u32 2147483647, %v10424
    %v10434 = vand.u32 %v10433, 8388607
    %v10435 = vor.u32 %v10434, 8388608
    %v10436 = vsub.s32 0, %v10435
    %v10437 = vadd.s32 %v10432, 1
    %vm10438 = vcmp.gt.s32.totalorder %v10437, 0
    %v10439 = vsel %vm10438, %v10437, 0
    %v10440 = vshrl.u32 %v10439, 5
    %v10441 = vand.u32 %v10439, 31
    %v10442 = vsub.s32 32, %v10441
    %v10443 = vshrl.u32 683565275, %v10442
    %v10444 = vshll.u32 683565275, %v10441
    %v10445 = vshrl.u32 2475754826, %v10442
    %v10446 = vor.u32 %v10444, %v10445
    %v10447 = vshll.u32 2475754826, %v10441
    %v10448 = vshrl.u32 2131351028, %v10442
    %v10449 = vor.u32 %v10447, %v10448
    %v10450 = vshll.u32 2131351028, %v10441
    %v10451 = vshrl.u32 2102212464, %v10442
    %v10452 = vor.u32 %v10450, %v10451
    %v10453 = vshll.u32 2102212464, %v10441
    %v10454 = vshrl.u32 920167782, %v10442
    %v10455 = vor.u32 %v10453, %v10454
    %v10456 = vshll.u32 920167782, %v10441
    %v10457 = vshrl.u32 1326507024, %v10442
    %v10458 = vor.u32 %v10456, %v10457
    %vm10459 = vcmp.lt.s32.totalorder %v10440, 1
    %vm10460 = vcmp.lt.s32.totalorder %v10440, 2
    %vm10461 = vcmp.lt.s32.totalorder %v10440, 3
    %vm10462 = vcmp.lt.s32.totalorder %v10440, 4
    %v10463 = vsel %vm10459, %v10443, %v10446
    %v10464 = vsel %vm10462, %v10452, 2102212464
    %v10465 = vsel %vm10461, %v10449, %v10464
    %v10466 = vsel %vm10460, %v10463, %v10465
    %v10467 = vsel %vm10459, %v10446, %v10449
    %v10468 = vsel %vm10462, %v10455, 920167782
    %v10469 = vsel %vm10461, %v10452, %v10468
    %v10470 = vsel %vm10460, %v10467, %v10469
    %v10471 = vsel %vm10459, %v10449, %v10452
    %v10472 = vsel %vm10462, %v10458, 1326507024
    %v10473 = vsel %vm10461, %v10455, %v10472
    %v10474 = vsel %vm10460, %v10471, %v10473
    %v10475 = vshll.u32 %v10435, 8
    %v10476 = vmul.u32.u64.compose %v10475, %v10474
    %v10477 = vextract.low.u32 %v10476
    %v10478 = vextract.high.u32 %v10476
    %v10479 = vmul.u32.u64.compose %v10475, %v10470
    %v10480 = vextract.low.u32 %v10479
    %v10481 = vextract.high.u32 %v10479
    %v10482 = vmul.u32 %v10475, %v10466
    %v10483 = vadd.s32 %v10478, %v10480
    %vm10484 = vc.u32 %v10478, %v10480
    %v10485 = vadd.s32 %v10481, 1
    %v10486 = vsel %vm10484, %v10485, %v10481
    %v10487 = vadd.s32 %v10482, %v10486
    %v10488 = vadd.s32 %v10487, 536870912
    %v10489 = vshrl.u32 %v10488, 30
    %v10490 = vshll.u32 %v10489, 30
    %v10491 = vsub.s32 %v10487, %v10490
    %vm10492 = vcmp.lt.s32.totalorder %v10491, 0
    %v10493 = vsub.s32 0, %v10491
    %v10494 = vsel %vm10492, %v10493, %v10491
    %v10495 = vclz %v10494
    %v10496 = vsub.s32 %v10495, 2
    %vm10497 = vcmp.gt.s32.totalorder 0, %v10496
    %v10498 = vsel %vm10497, 0, %v10496
    %v10499 = vsub.s32 32, %v10498
    %v10500 = vshll.u32 %v10491, %v10498
    %v10501 = vshrl.u32 %v10483, %v10499
    %v10502 = vor.u32 %v10500, %v10501
    %v10503 = vsub.s32 4294967266, %v10498
    %v10504 = vadd.s32 %v10503, 127
    %v10505 = vshll.u32 %v10504, 23
    %v10506 = vor.u32 4788187, %v10505
    %v10507 = vand.u32 2147483647, %v10506
    %v10509 = vcvt.s32.f32 %v10502
    %v10510 = vmul.f32 %v10509, %v10507
    %v10511 = vxor.u32 %v10510, 2147483648
    %v10512 = vsel %vm10429, %v10511, %v10510
    %v10513 = vsub.s32 4, %v10489
    %v10514 = vsel %vm10429, %v10513, %v10489
    %v10515 = vsel %vm10428, %v10424, %v10512
    %v10516 = vsel %vm10428, 0, %v10514
    %v10517 = vcosq.f32.pop %v10515
    %v10518 = vsinq.f32.pop %v10515
    %vm10519 = vweird.f32 %v10424
    %v10520 = vadd.s32 %v10516, 3
    %v10521 = vand.u32 %v10520, 3
    %vm10522 = vcmp.lt.s32.totalorder %v10521, 2
    %vm10523 = vcmp.eq.s32.totalorder %v10521, 0
    %v10524 = vxor.u32 %v10518, 2147483648
    %v10525 = vsel %vm10523, %v10517, %v10524
    %vm10526 = vcmp.eq.s32.totalorder %v10521, 2
    %v10527 = vxor.u32 %v10517, 2147483648
    %v10528 = vsel %vm10526, %v10527, %v10518
    %v10529 = vsel %vm10522, %v10525, %v10528
    %v10530 = vsel %vm10519, nan, %v10529
    %v10531 = vmul.f32 %v9783, 0.33333334
    %v10532 = vsub.f32 %v10530, %v10531
    %v10533 = vmul.f32 %v10532, 0.05050505
    %v10534 = vadd.f32 %v50, %v10533
    %10535 = vmatprep.subr.mxu0 0.0
    %v10536 = vand.u32 %v29, 4294901760
    %10537 = vmatpush1.msra.mxu0 %v10536
    %10538 = vmatprep.subr.mxu0 0.0
    %v10539 = vand.u32 %v28, 4294901760
    %10540 = vmatpush1.msra.mxu0 %v10539
    %10541 = vmatprep.subr.mxu0 0.0
    %v10542 = vand.u32 %v27, 4294901760
    %10543 = vmatpush1.msra.mxu0 %v10542
    %10544 = vmatprep.subr.mxu0 0.0
    %v10545 = vand.u32 %v26, 4294901760
    %10546 = vmatpush1.msra.mxu0 %v10545
    %10547 = vmatprep.subr.mxu0 0.0
    %v10548 = vand.u32 %v25, 4294901760
    %10549 = vmatpush1.msra.mxu0 %v10548
    %10550 = vmatprep.subr.mxu0 0.0
    %v10551 = vand.u32 %v24, 4294901760
    %10552 = vmatpush1.msra.mxu0 %v10551
    %10553 = vmatprep.subr.mxu0 0.0
    %v10554 = vand.u32 %v23, 4294901760
    %10555 = vmatpush1.msra.mxu0 %v10554
    %10556 = vmatprep.subr.mxu0 0.0
    %v10557 = vand.u32 %v22, 4294901760
    %10558 = vmatpush1.msra.mxu0 %v10557
    %10559 = vmatprep.subr.mxu0 0.0
    %v10560 = vand.u32 %v21, 4294901760
    %10561 = vmatpush1.msra.mxu0 %v10560
    %10562 = vmatprep.subr.mxu0 0.0
    %v10563 = vand.u32 %v20, 4294901760
    %10564 = vmatpush1.msra.mxu0 %v10563
    %10565 = vmatprep.subr.mxu0 0.0
    %v10566 = vand.u32 %v19, 4294901760
    %10567 = vmatpush1.msra.mxu0 %v10566
    %10568 = vmatprep.subr.mxu0 0.0
    %v10569 = vand.u32 %v18, 4294901760
    %10570 = vmatpush1.msra.mxu0 %v10569
    %10571 = vmatprep.subr.mxu0 0.0
    %v10572 = vand.u32 %v17, 4294901760
    %10573 = vmatpush1.msra.mxu0 %v10572
    %10574 = vmatprep.subr.mxu0 0.0
    %v10575 = vand.u32 %v16, 4294901760
    %10576 = vmatpush1.msra.mxu0 %v10575
    %10577 = vmatprep.subr.mxu0 0.0
    %v10578 = vand.u32 %v15, 4294901760
    %10579 = vmatpush1.msra.mxu0 %v10578
    %10580 = vmatprep.subr.mxu0 0.0
    %v10581 = vand.u32 %v14, 4294901760
    %10582 = vmatpush1.msra.mxu0 %v10581
    %10583 = vmatprep.subr.mxu0 0.0
    %10584 = vmatpush2.msra.mxu0 0.0
    %10585 = vmatprep.subr.mxu0 0.0
    %10586 = vmatpush2.msra.mxu0 0.0
    %10587 = vmatprep.subr.mxu0 0.0
    %10588 = vmatpush2.msra.mxu0 0.0
    %10589 = vmatprep.subr.mxu0 0.0
    %10590 = vmatpush2.msra.mxu0 0.0
    %10591 = vmatprep.subr.mxu0 0.0
    %10592 = vmatpush2.msra.mxu0 0.0
    %10593 = vmatprep.subr.mxu0 0.0
    %10594 = vmatpush2.msra.mxu0 0.0
    %10595 = vmatprep.subr.mxu0 0.0
    %10596 = vmatpush2.msra.mxu0 0.0
    %10597 = vmatprep.subr.mxu0 0.0
    %10598 = vmatpush2.msra.mxu0 0.0
    %10599 = vmatprep.subr.mxu0 0.0
    %10600 = vmatpush2.msra.mxu0 0.0
    %10601 = vmatprep.subr.mxu0 0.0
    %10602 = vmatpush2.msra.mxu0 0.0
    %10603 = vmatprep.subr.mxu0 0.0
    %10604 = vmatpush2.msra.mxu0 0.0
    %10605 = vmatprep.subr.mxu0 0.0
    %10606 = vmatpush2.msra.mxu0 0.0
    %10607 = vmatprep.subr.mxu0 0.0
    %10608 = vmatpush2.msra.mxu0 0.0
    %10609 = vmatprep.subr.mxu0 0.0
    %10610 = vmatpush2.msra.mxu0 0.0
    %10611 = vmatprep.subr.mxu0 0.0
    %10612 = vmatpush2.msra.mxu0 0.0
    %10613 = vmatprep.subr.mxu0 0.0
    %10614 = vmatpush2.msra.mxu0 0.0
    %10615 = vmatprep.mubr.f32.mxu0 0.0
    %v10616 = vand.u32 %v10534, 4294901760
    %v10617 = vsub.f32 %v10534, %v10616
    %v10618 = vand.u32 %v10617, 4294901760
    %v10619 = vsub.f32 %v10617, %v10618
    %v10620 = vand.u32 %v10619, 4294901760
    %10621 = vmatmul.mubr.f32.gmra.mxu0 %v10620
    %v10622 = vpop.f32.mrf.mxu0
    %v10623 = vadd.f32 %v35, %v10622
    %v10624 = vpop.f32.mrf.mxu0
    %10625 = vdwg.mxu0
    %10626 = vmatprep.subr.mxu0 0.0
    %v10627 = vand.u32 %v29, 4294901760
    %v10628 = vsub.f32 %v29, %v10627
    %v10629 = vand.u32 %v10628, 4294901760
    %v10630 = vsub.f32 %v10628, %v10629
    %v10631 = vand.u32 %v10630, 4294901760
    %10632 = vmatpush1.msra.mxu0 %v10631
    %10633 = vmatprep.subr.mxu0 0.0
    %v10634 = vand.u32 %v28, 4294901760
    %v10635 = vsub.f32 %v28, %v10634
    %v10636 = vand.u32 %v10635, 4294901760
    %v10637 = vsub.f32 %v10635, %v10636
    %v10638 = vand.u32 %v10637, 4294901760
    %10639 = vmatpush1.msra.mxu0 %v10638
    %10640 = vmatprep.subr.mxu0 0.0
    %v10641 = vand.u32 %v27, 4294901760
    %v10642 = vsub.f32 %v27, %v10641
    %v10643 = vand.u32 %v10642, 4294901760
    %v10644 = vsub.f32 %v10642, %v10643
    %v10645 = vand.u32 %v10644, 4294901760
    %10646 = vmatpush1.msra.mxu0 %v10645
    %10647 = vmatprep.subr.mxu0 0.0
    %v10648 = vand.u32 %v26, 4294901760
    %v10649 = vsub.f32 %v26, %v10648
    %v10650 = vand.u32 %v10649, 4294901760
    %v10651 = vsub.f32 %v10649, %v10650
    %v10652 = vand.u32 %v10651, 4294901760
    %10653 = vmatpush1.msra.mxu0 %v10652
    %10654 = vmatprep.subr.mxu0 0.0
    %v10655 = vand.u32 %v25, 4294901760
    %v10656 = vsub.f32 %v25, %v10655
    %v10657 = vand.u32 %v10656, 4294901760
    %v10658 = vsub.f32 %v10656, %v10657
    %v10659 = vand.u32 %v10658, 4294901760
    %10660 = vmatpush1.msra.mxu0 %v10659
    %10661 = vmatprep.subr.mxu0 0.0
    %v10662 = vand.u32 %v24, 4294901760
    %v10663 = vsub.f32 %v24, %v10662
    %v10664 = vand.u32 %v10663, 4294901760
    %v10665 = vsub.f32 %v10663, %v10664
    %v10666 = vand.u32 %v10665, 4294901760
    %10667 = vmatpush1.msra.mxu0 %v10666
    %10668 = vmatprep.subr.mxu0 0.0
    %v10669 = vand.u32 %v23, 4294901760
    %v10670 = vsub.f32 %v23, %v10669
    %v10671 = vand.u32 %v10670, 4294901760
    %v10672 = vsub.f32 %v10670, %v10671
    %v10673 = vand.u32 %v10672, 4294901760
    %10674 = vmatpush1.msra.mxu0 %v10673
    %10675 = vmatprep.subr.mxu0 0.0
    %v10676 = vand.u32 %v22, 4294901760
    %v10677 = vsub.f32 %v22, %v10676
    %v10678 = vand.u32 %v10677, 4294901760
    %v10679 = vsub.f32 %v10677, %v10678
    %v10680 = vand.u32 %v10679, 4294901760
    %10681 = vmatpush1.msra.mxu0 %v10680
    %10682 = vmatprep.subr.mxu0 0.0
    %v10683 = vand.u32 %v21, 4294901760
    %v10684 = vsub.f32 %v21, %v10683
    %v10685 = vand.u32 %v10684, 4294901760
    %v10686 = vsub.f32 %v10684, %v10685
    %v10687 = vand.u32 %v10686, 4294901760
    %10688 = vmatpush1.msra.mxu0 %v10687
    %10689 = vmatprep.subr.mxu0 0.0
    %v10690 = vand.u32 %v20, 4294901760
    %v10691 = vsub.f32 %v20, %v10690
    %v10692 = vand.u32 %v10691, 4294901760
    %v10693 = vsub.f32 %v10691, %v10692
    %v10694 = vand.u32 %v10693, 4294901760
    %10695 = vmatpush1.msra.mxu0 %v10694
    %10696 = vmatprep.subr.mxu0 0.0
    %v10697 = vand.u32 %v19, 4294901760
    %v10698 = vsub.f32 %v19, %v10697
    %v10699 = vand.u32 %v10698, 4294901760
    %v10700 = vsub.f32 %v10698, %v10699
    %v10701 = vand.u32 %v10700, 4294901760
    %10702 = vmatpush1.msra.mxu0 %v10701
    %10703 = vmatprep.subr.mxu0 0.0
    %v10704 = vand.u32 %v18, 4294901760
    %v10705 = vsub.f32 %v18, %v10704
    %v10706 = vand.u32 %v10705, 4294901760
    %v10707 = vsub.f32 %v10705, %v10706
    %v10708 = vand.u32 %v10707, 4294901760
    %10709 = vmatpush1.msra.mxu0 %v10708
    %10710 = vmatprep.subr.mxu0 0.0
    %v10711 = vand.u32 %v17, 4294901760
    %v10712 = vsub.f32 %v17, %v10711
    %v10713 = vand.u32 %v10712, 4294901760
    %v10714 = vsub.f32 %v10712, %v10713
    %v10715 = vand.u32 %v10714, 4294901760
    %10716 = vmatpush1.msra.mxu0 %v10715
    %10717 = vmatprep.subr.mxu0 0.0
    %v10718 = vand.u32 %v16, 4294901760
    %v10719 = vsub.f32 %v16, %v10718
    %v10720 = vand.u32 %v10719, 4294901760
    %v10721 = vsub.f32 %v10719, %v10720
    %v10722 = vand.u32 %v10721, 4294901760
    %10723 = vmatpush1.msra.mxu0 %v10722
    %10724 = vmatprep.subr.mxu0 0.0
    %v10725 = vand.u32 %v15, 4294901760
    %v10726 = vsub.f32 %v15, %v10725
    %v10727 = vand.u32 %v10726, 4294901760
    %v10728 = vsub.f32 %v10726, %v10727
    %v10729 = vand.u32 %v10728, 4294901760
    %10730 = vmatpush1.msra.mxu0 %v10729
    %10731 = vmatprep.subr.mxu0 0.0
    %v10732 = vand.u32 %v14, 4294901760
    %v10733 = vsub.f32 %v14, %v10732
    %v10734 = vand.u32 %v10733, 4294901760
    %v10735 = vsub.f32 %v10733, %v10734
    %v10736 = vand.u32 %v10735, 4294901760
    %10737 = vmatpush1.msra.mxu0 %v10736
    %10738 = vmatprep.subr.mxu0 0.0
    %10739 = vmatpush2.msra.mxu0 0.0
    %10740 = vmatprep.subr.mxu0 0.0
    %10741 = vmatpush2.msra.mxu0 0.0
    %10742 = vmatprep.subr.mxu0 0.0
    %10743 = vmatpush2.msra.mxu0 0.0
    %10744 = vmatprep.subr.mxu0 0.0
    %10745 = vmatpush2.msra.mxu0 0.0
    %10746 = vmatprep.subr.mxu0 0.0
    %10747 = vmatpush2.msra.mxu0 0.0
    %10748 = vmatprep.subr.mxu0 0.0
    %10749 = vmatpush2.msra.mxu0 0.0
    %10750 = vmatprep.subr.mxu0 0.0
    %10751 = vmatpush2.msra.mxu0 0.0
    %10752 = vmatprep.subr.mxu0 0.0
    %10753 = vmatpush2.msra.mxu0 0.0
    %10754 = vmatprep.subr.mxu0 0.0
    %10755 = vmatpush2.msra.mxu0 0.0
    %10756 = vmatprep.subr.mxu0 0.0
    %10757 = vmatpush2.msra.mxu0 0.0
    %10758 = vmatprep.subr.mxu0 0.0
    %10759 = vmatpush2.msra.mxu0 0.0
    %10760 = vmatprep.subr.mxu0 0.0
    %10761 = vmatpush2.msra.mxu0 0.0
    %10762 = vmatprep.subr.mxu0 0.0
    %10763 = vmatpush2.msra.mxu0 0.0
    %10764 = vmatprep.subr.mxu0 0.0
    %10765 = vmatpush2.msra.mxu0 0.0
    %10766 = vmatprep.subr.mxu0 0.0
    %10767 = vmatpush2.msra.mxu0 0.0
    %10768 = vmatprep.subr.mxu0 0.0
    %10769 = vmatpush2.msra.mxu0 0.0
    %10770 = vmatprep.mubr.f32.mxu0 0.0
    %v10771 = vand.u32 %v10534, 4294901760
    %10772 = vmatmul.mubr.f32.gmra.mxu0 %v10771
    %v10773 = vpop.f32.mrf.mxu0
    %v10774 = vadd.f32 %v10623, %v10773
    %v10775 = vpop.f32.mrf.mxu0
    %10776 = vdwg.mxu0
    %10777 = vmatprep.subr.mxu0 0.0
    %v10778 = vand.u32 %v29, 4294901760
    %v10779 = vsub.f32 %v29, %v10778
    %10780 = vmatpush1.msra.mxu0 %v10779
    %10781 = vmatprep.subr.mxu0 0.0
    %v10782 = vand.u32 %v28, 4294901760
    %v10783 = vsub.f32 %v28, %v10782
    %10784 = vmatpush1.msra.mxu0 %v10783
    %10785 = vmatprep.subr.mxu0 0.0
    %v10786 = vand.u32 %v27, 4294901760
    %v10787 = vsub.f32 %v27, %v10786
    %10788 = vmatpush1.msra.mxu0 %v10787
    %10789 = vmatprep.subr.mxu0 0.0
    %v10790 = vand.u32 %v26, 4294901760
    %v10791 = vsub.f32 %v26, %v10790
    %10792 = vmatpush1.msra.mxu0 %v10791
    %10793 = vmatprep.subr.mxu0 0.0
    %v10794 = vand.u32 %v25, 4294901760
    %v10795 = vsub.f32 %v25, %v10794
    %10796 = vmatpush1.msra.mxu0 %v10795
    %10797 = vmatprep.subr.mxu0 0.0
    %v10798 = vand.u32 %v24, 4294901760
    %v10799 = vsub.f32 %v24, %v10798
    %10800 = vmatpush1.msra.mxu0 %v10799
    %10801 = vmatprep.subr.mxu0 0.0
    %v10802 = vand.u32 %v23, 4294901760
    %v10803 = vsub.f32 %v23, %v10802
    %10804 = vmatpush1.msra.mxu0 %v10803
    %10805 = vmatprep.subr.mxu0 0.0
    %v10806 = vand.u32 %v22, 4294901760
    %v10807 = vsub.f32 %v22, %v10806
    %10808 = vmatpush1.msra.mxu0 %v10807
    %10809 = vmatprep.subr.mxu0 0.0
    %v10810 = vand.u32 %v21, 4294901760
    %v10811 = vsub.f32 %v21, %v10810
    %10812 = vmatpush1.msra.mxu0 %v10811
    %10813 = vmatprep.subr.mxu0 0.0
    %v10814 = vand.u32 %v20, 4294901760
    %v10815 = vsub.f32 %v20, %v10814
    %10816 = vmatpush1.msra.mxu0 %v10815
    %10817 = vmatprep.subr.mxu0 0.0
    %v10818 = vand.u32 %v19, 4294901760
    %v10819 = vsub.f32 %v19, %v10818
    %10820 = vmatpush1.msra.mxu0 %v10819
    %10821 = vmatprep.subr.mxu0 0.0
    %v10822 = vand.u32 %v18, 4294901760
    %v10823 = vsub.f32 %v18, %v10822
    %10824 = vmatpush1.msra.mxu0 %v10823
    %10825 = vmatprep.subr.mxu0 0.0
    %v10826 = vand.u32 %v17, 4294901760
    %v10827 = vsub.f32 %v17, %v10826
    %10828 = vmatpush1.msra.mxu0 %v10827
    %10829 = vmatprep.subr.mxu0 0.0
    %v10830 = vand.u32 %v16, 4294901760
    %v10831 = vsub.f32 %v16, %v10830
    %10832 = vmatpush1.msra.mxu0 %v10831
    %10833 = vmatprep.subr.mxu0 0.0
    %v10834 = vand.u32 %v15, 4294901760
    %v10835 = vsub.f32 %v15, %v10834
    %10836 = vmatpush1.msra.mxu0 %v10835
    %10837 = vmatprep.subr.mxu0 0.0
    %v10838 = vand.u32 %v14, 4294901760
    %v10839 = vsub.f32 %v14, %v10838
    %10840 = vmatpush1.msra.mxu0 %v10839
    %10841 = vmatprep.subr.mxu0 0.0
    %10842 = vmatpush2.msra.mxu0 0.0
    %10843 = vmatprep.subr.mxu0 0.0
    %10844 = vmatpush2.msra.mxu0 0.0
    %10845 = vmatprep.subr.mxu0 0.0
    %10846 = vmatpush2.msra.mxu0 0.0
    %10847 = vmatprep.subr.mxu0 0.0
    %10848 = vmatpush2.msra.mxu0 0.0
    %10849 = vmatprep.subr.mxu0 0.0
    %10850 = vmatpush2.msra.mxu0 0.0
    %10851 = vmatprep.subr.mxu0 0.0
    %10852 = vmatpush2.msra.mxu0 0.0
    %10853 = vmatprep.subr.mxu0 0.0
    %10854 = vmatpush2.msra.mxu0 0.0
    %10855 = vmatprep.subr.mxu0 0.0
    %10856 = vmatpush2.msra.mxu0 0.0
    %10857 = vmatprep.subr.mxu0 0.0
    %10858 = vmatpush2.msra.mxu0 0.0
    %10859 = vmatprep.subr.mxu0 0.0
    %10860 = vmatpush2.msra.mxu0 0.0
    %10861 = vmatprep.subr.mxu0 0.0
    %10862 = vmatpush2.msra.mxu0 0.0
    %10863 = vmatprep.subr.mxu0 0.0
    %10864 = vmatpush2.msra.mxu0 0.0
    %10865 = vmatprep.subr.mxu0 0.0
    %10866 = vmatpush2.msra.mxu0 0.0
    %10867 = vmatprep.subr.mxu0 0.0
    %10868 = vmatpush2.msra.mxu0 0.0
    %10869 = vmatprep.subr.mxu0 0.0
    %10870 = vmatpush2.msra.mxu0 0.0
    %10871 = vmatprep.subr.mxu0 0.0
    %10872 = vmatpush2.msra.mxu0 0.0
    %10873 = vmatprep.mubr.f32.mxu0 0.0
    %v10874 = vand.u32 %v10534, 4294901760
    %v10875 = vsub.f32 %v10534, %v10874
    %10876 = vmatmul.mubr.f32.gmra.mxu0 %v10875
    %v10877 = vpop.f32.mrf.mxu0
    %v10878 = vadd.f32 %v10774, %v10877
    %v10879 = vpop.f32.mrf.mxu0
    %10880 = vdwg.mxu0
    %10881 = vmatprep.subr.mxu0 0.0
    %v10882 = vand.u32 %v29, 4294901760
    %10883 = vmatpush1.msra.mxu0 %v10882
    %10884 = vmatprep.subr.mxu0 0.0
    %v10885 = vand.u32 %v28, 4294901760
    %10886 = vmatpush1.msra.mxu0 %v10885
    %10887 = vmatprep.subr.mxu0 0.0
    %v10888 = vand.u32 %v27, 4294901760
    %10889 = vmatpush1.msra.mxu0 %v10888
    %10890 = vmatprep.subr.mxu0 0.0
    %v10891 = vand.u32 %v26, 4294901760
    %10892 = vmatpush1.msra.mxu0 %v10891
    %10893 = vmatprep.subr.mxu0 0.0
    %v10894 = vand.u32 %v25, 4294901760
    %10895 = vmatpush1.msra.mxu0 %v10894
    %10896 = vmatprep.subr.mxu0 0.0
    %v10897 = vand.u32 %v24, 4294901760
    %10898 = vmatpush1.msra.mxu0 %v10897
    %10899 = vmatprep.subr.mxu0 0.0
    %v10900 = vand.u32 %v23, 4294901760
    %10901 = vmatpush1.msra.mxu0 %v10900
    %10902 = vmatprep.subr.mxu0 0.0
    %v10903 = vand.u32 %v22, 4294901760
    %10904 = vmatpush1.msra.mxu0 %v10903
    %10905 = vmatprep.subr.mxu0 0.0
    %v10906 = vand.u32 %v21, 4294901760
    %10907 = vmatpush1.msra.mxu0 %v10906
    %10908 = vmatprep.subr.mxu0 0.0
    %v10909 = vand.u32 %v20, 4294901760
    %10910 = vmatpush1.msra.mxu0 %v10909
    %10911 = vmatprep.subr.mxu0 0.0
    %v10912 = vand.u32 %v19, 4294901760
    %10913 = vmatpush1.msra.mxu0 %v10912
    %10914 = vmatprep.subr.mxu0 0.0
    %v10915 = vand.u32 %v18, 4294901760
    %10916 = vmatpush1.msra.mxu0 %v10915
    %10917 = vmatprep.subr.mxu0 0.0
    %v10918 = vand.u32 %v17, 4294901760
    %10919 = vmatpush1.msra.mxu0 %v10918
    %10920 = vmatprep.subr.mxu0 0.0
    %v10921 = vand.u32 %v16, 4294901760
    %10922 = vmatpush1.msra.mxu0 %v10921
    %10923 = vmatprep.subr.mxu0 0.0
    %v10924 = vand.u32 %v15, 4294901760
    %10925 = vmatpush1.msra.mxu0 %v10924
    %10926 = vmatprep.subr.mxu0 0.0
    %v10927 = vand.u32 %v14, 4294901760
    %10928 = vmatpush1.msra.mxu0 %v10927
    %10929 = vmatprep.subr.mxu0 0.0
    %10930 = vmatpush2.msra.mxu0 0.0
    %10931 = vmatprep.subr.mxu0 0.0
    %10932 = vmatpush2.msra.mxu0 0.0
    %10933 = vmatprep.subr.mxu0 0.0
    %10934 = vmatpush2.msra.mxu0 0.0
    %10935 = vmatprep.subr.mxu0 0.0
    %10936 = vmatpush2.msra.mxu0 0.0
    %10937 = vmatprep.subr.mxu0 0.0
    %10938 = vmatpush2.msra.mxu0 0.0
    %10939 = vmatprep.subr.mxu0 0.0
    %10940 = vmatpush2.msra.mxu0 0.0
    %10941 = vmatprep.subr.mxu0 0.0
    %10942 = vmatpush2.msra.mxu0 0.0
    %10943 = vmatprep.subr.mxu0 0.0
    %10944 = vmatpush2.msra.mxu0 0.0
    %10945 = vmatprep.subr.mxu0 0.0
    %10946 = vmatpush2.msra.mxu0 0.0
    %10947 = vmatprep.subr.mxu0 0.0
    %10948 = vmatpush2.msra.mxu0 0.0
    %10949 = vmatprep.subr.mxu0 0.0
    %10950 = vmatpush2.msra.mxu0 0.0
    %10951 = vmatprep.subr.mxu0 0.0
    %10952 = vmatpush2.msra.mxu0 0.0
    %10953 = vmatprep.subr.mxu0 0.0
    %10954 = vmatpush2.msra.mxu0 0.0
    %10955 = vmatprep.subr.mxu0 0.0
    %10956 = vmatpush2.msra.mxu0 0.0
    %10957 = vmatprep.subr.mxu0 0.0
    %10958 = vmatpush2.msra.mxu0 0.0
    %10959 = vmatprep.subr.mxu0 0.0
    %10960 = vmatpush2.msra.mxu0 0.0
    %10961 = vmatprep.mubr.f32.mxu0 0.0
    %v10962 = vand.u32 %v10534, 4294901760
    %v10963 = vsub.f32 %v10534, %v10962
    %v10964 = vand.u32 %v10963, 4294901760
    %10965 = vmatmul.mubr.f32.gmra.mxu0 %v10964
    %v10966 = vpop.f32.mrf.mxu0
    %v10967 = vadd.f32 %v10878, %v10966
    %v10968 = vpop.f32.mrf.mxu0
    %10969 = vdwg.mxu0
    %10970 = vmatprep.subr.mxu0 0.0
    %v10971 = vand.u32 %v29, 4294901760
    %v10972 = vsub.f32 %v29, %v10971
    %v10973 = vand.u32 %v10972, 4294901760
    %10974 = vmatpush1.msra.mxu0 %v10973
    %10975 = vmatprep.subr.mxu0 0.0
    %v10976 = vand.u32 %v28, 4294901760
    %v10977 = vsub.f32 %v28, %v10976
    %v10978 = vand.u32 %v10977, 4294901760
    %10979 = vmatpush1.msra.mxu0 %v10978
    %10980 = vmatprep.subr.mxu0 0.0
    %v10981 = vand.u32 %v27, 4294901760
    %v10982 = vsub.f32 %v27, %v10981
    %v10983 = vand.u32 %v10982, 4294901760
    %10984 = vmatpush1.msra.mxu0 %v10983
    %10985 = vmatprep.subr.mxu0 0.0
    %v10986 = vand.u32 %v26, 4294901760
    %v10987 = vsub.f32 %v26, %v10986
    %v10988 = vand.u32 %v10987, 4294901760
    %10989 = vmatpush1.msra.mxu0 %v10988
    %10990 = vmatprep.subr.mxu0 0.0
    %v10991 = vand.u32 %v25, 4294901760
    %v10992 = vsub.f32 %v25, %v10991
    %v10993 = vand.u32 %v10992, 4294901760
    %10994 = vmatpush1.msra.mxu0 %v10993
    %10995 = vmatprep.subr.mxu0 0.0
    %v10996 = vand.u32 %v24, 4294901760
    %v10997 = vsub.f32 %v24, %v10996
    %v10998 = vand.u32 %v10997, 4294901760
    %10999 = vmatpush1.msra.mxu0 %v10998
    %11000 = vmatprep.subr.mxu0 0.0
    %v11001 = vand.u32 %v23, 4294901760
    %v11002 = vsub.f32 %v23, %v11001
    %v11003 = vand.u32 %v11002, 4294901760
    %11004 = vmatpush1.msra.mxu0 %v11003
    %11005 = vmatprep.subr.mxu0 0.0
    %v11006 = vand.u32 %v22, 4294901760
    %v11007 = vsub.f32 %v22, %v11006
    %v11008 = vand.u32 %v11007, 4294901760
    %11009 = vmatpush1.msra.mxu0 %v11008
    %11010 = vmatprep.subr.mxu0 0.0
    %v11011 = vand.u32 %v21, 4294901760
    %v11012 = vsub.f32 %v21, %v11011
    %v11013 = vand.u32 %v11012, 4294901760
    %11014 = vmatpush1.msra.mxu0 %v11013
    %11015 = vmatprep.subr.mxu0 0.0
    %v11016 = vand.u32 %v20, 4294901760
    %v11017 = vsub.f32 %v20, %v11016
    %v11018 = vand.u32 %v11017, 4294901760
    %11019 = vmatpush1.msra.mxu0 %v11018
    %11020 = vmatprep.subr.mxu0 0.0
    %v11021 = vand.u32 %v19, 4294901760
    %v11022 = vsub.f32 %v19, %v11021
    %v11023 = vand.u32 %v11022, 4294901760
    %11024 = vmatpush1.msra.mxu0 %v11023
    %11025 = vmatprep.subr.mxu0 0.0
    %v11026 = vand.u32 %v18, 4294901760
    %v11027 = vsub.f32 %v18, %v11026
    %v11028 = vand.u32 %v11027, 4294901760
    %11029 = vmatpush1.msra.mxu0 %v11028
    %11030 = vmatprep.subr.mxu0 0.0
    %v11031 = vand.u32 %v17, 4294901760
    %v11032 = vsub.f32 %v17, %v11031
    %v11033 = vand.u32 %v11032, 4294901760
    %11034 = vmatpush1.msra.mxu0 %v11033
    %11035 = vmatprep.subr.mxu0 0.0
    %v11036 = vand.u32 %v16, 4294901760
    %v11037 = vsub.f32 %v16, %v11036
    %v11038 = vand.u32 %v11037, 4294901760
    %11039 = vmatpush1.msra.mxu0 %v11038
    %11040 = vmatprep.subr.mxu0 0.0
    %v11041 = vand.u32 %v15, 4294901760
    %v11042 = vsub.f32 %v15, %v11041
    %v11043 = vand.u32 %v11042, 4294901760
    %11044 = vmatpush1.msra.mxu0 %v11043
    %11045 = vmatprep.subr.mxu0 0.0
    %v11046 = vand.u32 %v14, 4294901760
    %v11047 = vsub.f32 %v14, %v11046
    %v11048 = vand.u32 %v11047, 4294901760
    %11049 = vmatpush1.msra.mxu0 %v11048
    %11050 = vmatprep.subr.mxu0 0.0
    %11051 = vmatpush2.msra.mxu0 0.0
    %11052 = vmatprep.subr.mxu0 0.0
    %11053 = vmatpush2.msra.mxu0 0.0
    %11054 = vmatprep.subr.mxu0 0.0
    %11055 = vmatpush2.msra.mxu0 0.0
    %11056 = vmatprep.subr.mxu0 0.0
    %11057 = vmatpush2.msra.mxu0 0.0
    %11058 = vmatprep.subr.mxu0 0.0
    %11059 = vmatpush2.msra.mxu0 0.0
    %11060 = vmatprep.subr.mxu0 0.0
    %11061 = vmatpush2.msra.mxu0 0.0
    %11062 = vmatprep.subr.mxu0 0.0
    %11063 = vmatpush2.msra.mxu0 0.0
    %11064 = vmatprep.subr.mxu0 0.0
    %11065 = vmatpush2.msra.mxu0 0.0
    %11066 = vmatprep.subr.mxu0 0.0
    %11067 = vmatpush2.msra.mxu0 0.0
    %11068 = vmatprep.subr.mxu0 0.0
    %11069 = vmatpush2.msra.mxu0 0.0
    %11070 = vmatprep.subr.mxu0 0.0
    %11071 = vmatpush2.msra.mxu0 0.0
    %11072 = vmatprep.subr.mxu0 0.0
    %11073 = vmatpush2.msra.mxu0 0.0
    %11074 = vmatprep.subr.mxu0 0.0
    %11075 = vmatpush2.msra.mxu0 0.0
    %11076 = vmatprep.subr.mxu0 0.0
    %11077 = vmatpush2.msra.mxu0 0.0
    %11078 = vmatprep.subr.mxu0 0.0
    %11079 = vmatpush2.msra.mxu0 0.0
    %11080 = vmatprep.subr.mxu0 0.0
    %11081 = vmatpush2.msra.mxu0 0.0
    %11082 = vmatprep.mubr.f32.mxu0 0.0
    %v11083 = vand.u32 %v10534, 4294901760
    %11084 = vmatmul.mubr.f32.gmra.mxu0 %v11083
    %v11085 = vpop.f32.mrf.mxu0
    %v11086 = vadd.f32 %v10967, %v11085
    %v11087 = vpop.f32.mrf.mxu0
    %11088 = vdwg.mxu0
    %11089 = vmatprep.subr.mxu0 0.0
    %v11090 = vand.u32 %v29, 4294901760
    %11091 = vmatpush1.msra.mxu0 %v11090
    %11092 = vmatprep.subr.mxu0 0.0
    %v11093 = vand.u32 %v28, 4294901760
    %11094 = vmatpush1.msra.mxu0 %v11093
    %11095 = vmatprep.subr.mxu0 0.0
    %v11096 = vand.u32 %v27, 4294901760
    %11097 = vmatpush1.msra.mxu0 %v11096
    %11098 = vmatprep.subr.mxu0 0.0
    %v11099 = vand.u32 %v26, 4294901760
    %11100 = vmatpush1.msra.mxu0 %v11099
    %11101 = vmatprep.subr.mxu0 0.0
    %v11102 = vand.u32 %v25, 4294901760
    %11103 = vmatpush1.msra.mxu0 %v11102
    %11104 = vmatprep.subr.mxu0 0.0
    %v11105 = vand.u32 %v24, 4294901760
    %11106 = vmatpush1.msra.mxu0 %v11105
    %11107 = vmatprep.subr.mxu0 0.0
    %v11108 = vand.u32 %v23, 4294901760
    %11109 = vmatpush1.msra.mxu0 %v11108
    %11110 = vmatprep.subr.mxu0 0.0
    %v11111 = vand.u32 %v22, 4294901760
    %11112 = vmatpush1.msra.mxu0 %v11111
    %11113 = vmatprep.subr.mxu0 0.0
    %v11114 = vand.u32 %v21, 4294901760
    %11115 = vmatpush1.msra.mxu0 %v11114
    %11116 = vmatprep.subr.mxu0 0.0
    %v11117 = vand.u32 %v20, 4294901760
    %11118 = vmatpush1.msra.mxu0 %v11117
    %11119 = vmatprep.subr.mxu0 0.0
    %v11120 = vand.u32 %v19, 4294901760
    %11121 = vmatpush1.msra.mxu0 %v11120
    %11122 = vmatprep.subr.mxu0 0.0
    %v11123 = vand.u32 %v18, 4294901760
    %11124 = vmatpush1.msra.mxu0 %v11123
    %11125 = vmatprep.subr.mxu0 0.0
    %v11126 = vand.u32 %v17, 4294901760
    %11127 = vmatpush1.msra.mxu0 %v11126
    %11128 = vmatprep.subr.mxu0 0.0
    %v11129 = vand.u32 %v16, 4294901760
    %11130 = vmatpush1.msra.mxu0 %v11129
    %11131 = vmatprep.subr.mxu0 0.0
    %v11132 = vand.u32 %v15, 4294901760
    %11133 = vmatpush1.msra.mxu0 %v11132
    %11134 = vmatprep.subr.mxu0 0.0
    %v11135 = vand.u32 %v14, 4294901760
    %11136 = vmatpush1.msra.mxu0 %v11135
    %11137 = vmatprep.subr.mxu0 0.0
    %11138 = vmatpush2.msra.mxu0 0.0
    %11139 = vmatprep.subr.mxu0 0.0
    %11140 = vmatpush2.msra.mxu0 0.0
    %11141 = vmatprep.subr.mxu0 0.0
    %11142 = vmatpush2.msra.mxu0 0.0
    %11143 = vmatprep.subr.mxu0 0.0
    %11144 = vmatpush2.msra.mxu0 0.0
    %11145 = vmatprep.subr.mxu0 0.0
    %11146 = vmatpush2.msra.mxu0 0.0
    %11147 = vmatprep.subr.mxu0 0.0
    %11148 = vmatpush2.msra.mxu0 0.0
    %11149 = vmatprep.subr.mxu0 0.0
    %11150 = vmatpush2.msra.mxu0 0.0
    %11151 = vmatprep.subr.mxu0 0.0
    %11152 = vmatpush2.msra.mxu0 0.0
    %11153 = vmatprep.subr.mxu0 0.0
    %11154 = vmatpush2.msra.mxu0 0.0
    %11155 = vmatprep.subr.mxu0 0.0
    %11156 = vmatpush2.msra.mxu0 0.0
    %11157 = vmatprep.subr.mxu0 0.0
    %11158 = vmatpush2.msra.mxu0 0.0
    %11159 = vmatprep.subr.mxu0 0.0
    %11160 = vmatpush2.msra.mxu0 0.0
    %11161 = vmatprep.subr.mxu0 0.0
    %11162 = vmatpush2.msra.mxu0 0.0
    %11163 = vmatprep.subr.mxu0 0.0
    %11164 = vmatpush2.msra.mxu0 0.0
    %11165 = vmatprep.subr.mxu0 0.0
    %11166 = vmatpush2.msra.mxu0 0.0
    %11167 = vmatprep.subr.mxu0 0.0
    %11168 = vmatpush2.msra.mxu0 0.0
    %11169 = vmatprep.mubr.f32.mxu0 0.0
    %v11170 = vand.u32 %v10534, 4294901760
    %11171 = vmatmul.mubr.f32.gmra.mxu0 %v11170
    %v11172 = vpop.f32.mrf.mxu0
    %v11173 = vadd.f32 %v11086, %v11172
    %v11174 = vpop.f32.mrf.mxu0
    %11175 = vdwg.mxu0
    %v11176 = vand.u32 2147483647, %v11173
    %vm11177 = vcmp.le.f32.partialorder %v11176, 0.7853982
    %vm11178 = vcmp.lt.s32.totalorder %v11173, 0
    %v11179 = vand.u32 %v11173, 2139095040
    %v11180 = vshrl.u32 %v11179, 23
    %v11181 = vsub.s32 %v11180, 127
    %v11182 = vand.u32 2147483647, %v11173
    %v11183 = vand.u32 %v11182, 8388607
    %v11184 = vor.u32 %v11183, 8388608
    %v11185 = vsub.s32 0, %v11184
    %v11186 = vadd.s32 %v11181, 1
    %vm11187 = vcmp.gt.s32.totalorder %v11186, 0
    %v11188 = vsel %vm11187, %v11186, 0
    %v11189 = vshrl.u32 %v11188, 5
    %v11190 = vand.u32 %v11188, 31
    %v11191 = vsub.s32 32, %v11190
    %v11192 = vshrl.u32 683565275, %v11191
    %v11193 = vshll.u32 683565275, %v11190
    %v11194 = vshrl.u32 2475754826, %v11191
    %v11195 = vor.u32 %v11193, %v11194
    %v11196 = vshll.u32 2475754826, %v11190
    %v11197 = vshrl.u32 2131351028, %v11191
    %v11198 = vor.u32 %v11196, %v11197
    %v11199 = vshll.u32 2131351028, %v11190
    %v11200 = vshrl.u32 2102212464, %v11191
    %v11201 = vor.u32 %v11199, %v11200
    %v11202 = vshll.u32 2102212464, %v11190
    %v11203 = vshrl.u32 920167782, %v11191
    %v11204 = vor.u32 %v11202, %v11203
    %v11205 = vshll.u32 920167782, %v11190
    %v11206 = vshrl.u32 1326507024, %v11191
    %v11207 = vor.u32 %v11205, %v11206
    %vm11208 = vcmp.lt.s32.totalorder %v11189, 1
    %vm11209 = vcmp.lt.s32.totalorder %v11189, 2
    %vm11210 = vcmp.lt.s32.totalorder %v11189, 3
    %vm11211 = vcmp.lt.s32.totalorder %v11189, 4
    %v11212 = vsel %vm11208, %v11192, %v11195
    %v11213 = vsel %vm11211, %v11201, 2102212464
    %v11214 = vsel %vm11210, %v11198, %v11213
    %v11215 = vsel %vm11209, %v11212, %v11214
    %v11216 = vsel %vm11208, %v11195, %v11198
    %v11217 = vsel %vm11211, %v11204, 920167782
    %v11218 = vsel %vm11210, %v11201, %v11217
    %v11219 = vsel %vm11209, %v11216, %v11218
    %v11220 = vsel %vm11208, %v11198, %v11201
    %v11221 = vsel %vm11211, %v11207, 1326507024
    %v11222 = vsel %vm11210, %v11204, %v11221
    %v11223 = vsel %vm11209, %v11220, %v11222
    %v11224 = vshll.u32 %v11184, 8
    %v11225 = vmul.u32.u64.compose %v11224, %v11223
    %v11226 = vextract.low.u32 %v11225
    %v11227 = vextract.high.u32 %v11225
    %v11228 = vmul.u32.u64.compose %v11224, %v11219
    %v11229 = vextract.low.u32 %v11228
    %v11230 = vextract.high.u32 %v11228
    %v11231 = vmul.u32 %v11224, %v11215
    %v11232 = vadd.s32 %v11227, %v11229
    %vm11233 = vc.u32 %v11227, %v11229
    %v11234 = vadd.s32 %v11230, 1
    %v11235 = vsel %vm11233, %v11234, %v11230
    %v11236 = vadd.s32 %v11231, %v11235
    %v11237 = vadd.s32 %v11236, 536870912
    %v11238 = vshrl.u32 %v11237, 30
    %v11239 = vshll.u32 %v11238, 30
    %v11240 = vsub.s32 %v11236, %v11239
    %vm11241 = vcmp.lt.s32.totalorder %v11240, 0
    %v11242 = vsub.s32 0, %v11240
    %v11243 = vsel %vm11241, %v11242, %v11240
    %v11244 = vclz %v11243
    %v11245 = vsub.s32 %v11244, 2
    %vm11246 = vcmp.gt.s32.totalorder 0, %v11245
    %v11247 = vsel %vm11246, 0, %v11245
    %v11248 = vsub.s32 32, %v11247
    %v11249 = vshll.u32 %v11240, %v11247
    %v11250 = vshrl.u32 %v11232, %v11248
    %v11251 = vor.u32 %v11249, %v11250
    %v11252 = vsub.s32 4294967266, %v11247
    %v11253 = vadd.s32 %v11252, 127
    %v11254 = vshll.u32 %v11253, 23
    %v11255 = vor.u32 4788187, %v11254
    %v11256 = vand.u32 2147483647, %v11255
    %v11258 = vcvt.s32.f32 %v11251
    %v11259 = vmul.f32 %v11258, %v11256
    %v11260 = vxor.u32 %v11259, 2147483648
    %v11261 = vsel %vm11178, %v11260, %v11259
    %v11262 = vsub.s32 4, %v11238
    %v11263 = vsel %vm11178, %v11262, %v11238
    %v11264 = vsel %vm11177, %v11173, %v11261
    %v11265 = vsel %vm11177, 0, %v11263
    %v11266 = vcosq.f32.pop %v11264
    %v11267 = vsinq.f32.pop %v11264
    %vm11268 = vweird.f32 %v11173
    %v11269 = vadd.s32 %v11265, 3
    %v11270 = vand.u32 %v11269, 3
    %vm11271 = vcmp.lt.s32.totalorder %v11270, 2
    %vm11272 = vcmp.eq.s32.totalorder %v11270, 0
    %v11273 = vxor.u32 %v11267, 2147483648
    %v11274 = vsel %vm11272, %v11266, %v11273
    %vm11275 = vcmp.eq.s32.totalorder %v11270, 2
    %v11276 = vxor.u32 %v11266, 2147483648
    %v11277 = vsel %vm11275, %v11276, %v11267
    %v11278 = vsel %vm11271, %v11274, %v11277
    %v11279 = vsel %vm11268, nan, %v11278
    %v11280 = vsub.f32 %v9783, %v10530
    %v11281 = vadd.f32 %v11280, %v11279
    %v11282 = vmul.f32 %v11281, 0.05050505
    %v11283 = vadd.f32 %v50, %v11282
    %11284 = vmatprep.subr.mxu0 0.0
    %v11285 = vand.u32 %v29, 4294901760
    %11286 = vmatpush1.msra.mxu0 %v11285
    %11287 = vmatprep.subr.mxu0 0.0
    %v11288 = vand.u32 %v28, 4294901760
    %11289 = vmatpush1.msra.mxu0 %v11288
    %11290 = vmatprep.subr.mxu0 0.0
    %v11291 = vand.u32 %v27, 4294901760
    %11292 = vmatpush1.msra.mxu0 %v11291
    %11293 = vmatprep.subr.mxu0 0.0
    %v11294 = vand.u32 %v26, 4294901760
    %11295 = vmatpush1.msra.mxu0 %v11294
    %11296 = vmatprep.subr.mxu0 0.0
    %v11297 = vand.u32 %v25, 4294901760
    %11298 = vmatpush1.msra.mxu0 %v11297
    %11299 = vmatprep.subr.mxu0 0.0
    %v11300 = vand.u32 %v24, 4294901760
    %11301 = vmatpush1.msra.mxu0 %v11300
    %11302 = vmatprep.subr.mxu0 0.0
    %v11303 = vand.u32 %v23, 4294901760
    %11304 = vmatpush1.msra.mxu0 %v11303
    %11305 = vmatprep.subr.mxu0 0.0
    %v11306 = vand.u32 %v22, 4294901760
    %11307 = vmatpush1.msra.mxu0 %v11306
    %11308 = vmatprep.subr.mxu0 0.0
    %v11309 = vand.u32 %v21, 4294901760
    %11310 = vmatpush1.msra.mxu0 %v11309
    %11311 = vmatprep.subr.mxu0 0.0
    %v11312 = vand.u32 %v20, 4294901760
    %11313 = vmatpush1.msra.mxu0 %v11312
    %11314 = vmatprep.subr.mxu0 0.0
    %v11315 = vand.u32 %v19, 4294901760
    %11316 = vmatpush1.msra.mxu0 %v11315
    %11317 = vmatprep.subr.mxu0 0.0
    %v11318 = vand.u32 %v18, 4294901760
    %11319 = vmatpush1.msra.mxu0 %v11318
    %11320 = vmatprep.subr.mxu0 0.0
    %v11321 = vand.u32 %v17, 4294901760
    %11322 = vmatpush1.msra.mxu0 %v11321
    %11323 = vmatprep.subr.mxu0 0.0
    %v11324 = vand.u32 %v16, 4294901760
    %11325 = vmatpush1.msra.mxu0 %v11324
    %11326 = vmatprep.subr.mxu0 0.0
    %v11327 = vand.u32 %v15, 4294901760
    %11328 = vmatpush1.msra.mxu0 %v11327
    %11329 = vmatprep.subr.mxu0 0.0
    %v11330 = vand.u32 %v14, 4294901760
    %11331 = vmatpush1.msra.mxu0 %v11330
    %11332 = vmatprep.subr.mxu0 0.0
    %11333 = vmatpush2.msra.mxu0 0.0
    %11334 = vmatprep.subr.mxu0 0.0
    %11335 = vmatpush2.msra.mxu0 0.0
    %11336 = vmatprep.subr.mxu0 0.0
    %11337 = vmatpush2.msra.mxu0 0.0
    %11338 = vmatprep.subr.mxu0 0.0
    %11339 = vmatpush2.msra.mxu0 0.0
    %11340 = vmatprep.subr.mxu0 0.0
    %11341 = vmatpush2.msra.mxu0 0.0
    %11342 = vmatprep.subr.mxu0 0.0
    %11343 = vmatpush2.msra.mxu0 0.0
    %11344 = vmatprep.subr.mxu0 0.0
    %11345 = vmatpush2.msra.mxu0 0.0
    %11346 = vmatprep.subr.mxu0 0.0
    %11347 = vmatpush2.msra.mxu0 0.0
    %11348 = vmatprep.subr.mxu0 0.0
    %11349 = vmatpush2.msra.mxu0 0.0
    %11350 = vmatprep.subr.mxu0 0.0
    %11351 = vmatpush2.msra.mxu0 0.0
    %11352 = vmatprep.subr.mxu0 0.0
    %11353 = vmatpush2.msra.mxu0 0.0
    %11354 = vmatprep.subr.mxu0 0.0
    %11355 = vmatpush2.msra.mxu0 0.0
    %11356 = vmatprep.subr.mxu0 0.0
    %11357 = vmatpush2.msra.mxu0 0.0
    %11358 = vmatprep.subr.mxu0 0.0
    %11359 = vmatpush2.msra.mxu0 0.0
    %11360 = vmatprep.subr.mxu0 0.0
    %11361 = vmatpush2.msra.mxu0 0.0
    %11362 = vmatprep.subr.mxu0 0.0
    %11363 = vmatpush2.msra.mxu0 0.0
    %11364 = vmatprep.mubr.f32.mxu0 0.0
    %v11365 = vand.u32 %v11283, 4294901760
    %v11366 = vsub.f32 %v11283, %v11365
    %v11367 = vand.u32 %v11366, 4294901760
    %v11368 = vsub.f32 %v11366, %v11367
    %v11369 = vand.u32 %v11368, 4294901760
    %11370 = vmatmul.mubr.f32.gmra.mxu0 %v11369
    %v11371 = vpop.f32.mrf.mxu0
    %v11372 = vadd.f32 %v35, %v11371
    %v11373 = vpop.f32.mrf.mxu0
    %11374 = vdwg.mxu0
    %11375 = vmatprep.subr.mxu0 0.0
    %v11376 = vand.u32 %v29, 4294901760
    %v11377 = vsub.f32 %v29, %v11376
    %v11378 = vand.u32 %v11377, 4294901760
    %v11379 = vsub.f32 %v11377, %v11378
    %v11380 = vand.u32 %v11379, 4294901760
    %11381 = vmatpush1.msra.mxu0 %v11380
    %11382 = vmatprep.subr.mxu0 0.0
    %v11383 = vand.u32 %v28, 4294901760
    %v11384 = vsub.f32 %v28, %v11383
    %v11385 = vand.u32 %v11384, 4294901760
    %v11386 = vsub.f32 %v11384, %v11385
    %v11387 = vand.u32 %v11386, 4294901760
    %11388 = vmatpush1.msra.mxu0 %v11387
    %11389 = vmatprep.subr.mxu0 0.0
    %v11390 = vand.u32 %v27, 4294901760
    %v11391 = vsub.f32 %v27, %v11390
    %v11392 = vand.u32 %v11391, 4294901760
    %v11393 = vsub.f32 %v11391, %v11392
    %v11394 = vand.u32 %v11393, 4294901760
    %11395 = vmatpush1.msra.mxu0 %v11394
    %11396 = vmatprep.subr.mxu0 0.0
    %v11397 = vand.u32 %v26, 4294901760
    %v11398 = vsub.f32 %v26, %v11397
    %v11399 = vand.u32 %v11398, 4294901760
    %v11400 = vsub.f32 %v11398, %v11399
    %v11401 = vand.u32 %v11400, 4294901760
    %11402 = vmatpush1.msra.mxu0 %v11401
    %11403 = vmatprep.subr.mxu0 0.0
    %v11404 = vand.u32 %v25, 4294901760
    %v11405 = vsub.f32 %v25, %v11404
    %v11406 = vand.u32 %v11405, 4294901760
    %v11407 = vsub.f32 %v11405, %v11406
    %v11408 = vand.u32 %v11407, 4294901760
    %11409 = vmatpush1.msra.mxu0 %v11408
    %11410 = vmatprep.subr.mxu0 0.0
    %v11411 = vand.u32 %v24, 4294901760
    %v11412 = vsub.f32 %v24, %v11411
    %v11413 = vand.u32 %v11412, 4294901760
    %v11414 = vsub.f32 %v11412, %v11413
    %v11415 = vand.u32 %v11414, 4294901760
    %11416 = vmatpush1.msra.mxu0 %v11415
    %11417 = vmatprep.subr.mxu0 0.0
    %v11418 = vand.u32 %v23, 4294901760
    %v11419 = vsub.f32 %v23, %v11418
    %v11420 = vand.u32 %v11419, 4294901760
    %v11421 = vsub.f32 %v11419, %v11420
    %v11422 = vand.u32 %v11421, 4294901760
    %11423 = vmatpush1.msra.mxu0 %v11422
    %11424 = vmatprep.subr.mxu0 0.0
    %v11425 = vand.u32 %v22, 4294901760
    %v11426 = vsub.f32 %v22, %v11425
    %v11427 = vand.u32 %v11426, 4294901760
    %v11428 = vsub.f32 %v11426, %v11427
    %v11429 = vand.u32 %v11428, 4294901760
    %11430 = vmatpush1.msra.mxu0 %v11429
    %11431 = vmatprep.subr.mxu0 0.0
    %v11432 = vand.u32 %v21, 4294901760
    %v11433 = vsub.f32 %v21, %v11432
    %v11434 = vand.u32 %v11433, 4294901760
    %v11435 = vsub.f32 %v11433, %v11434
    %v11436 = vand.u32 %v11435, 4294901760
    %11437 = vmatpush1.msra.mxu0 %v11436
    %11438 = vmatprep.subr.mxu0 0.0
    %v11439 = vand.u32 %v20, 4294901760
    %v11440 = vsub.f32 %v20, %v11439
    %v11441 = vand.u32 %v11440, 4294901760
    %v11442 = vsub.f32 %v11440, %v11441
    %v11443 = vand.u32 %v11442, 4294901760
    %11444 = vmatpush1.msra.mxu0 %v11443
    %11445 = vmatprep.subr.mxu0 0.0
    %v11446 = vand.u32 %v19, 4294901760
    %v11447 = vsub.f32 %v19, %v11446
    %v11448 = vand.u32 %v11447, 4294901760
    %v11449 = vsub.f32 %v11447, %v11448
    %v11450 = vand.u32 %v11449, 4294901760
    %11451 = vmatpush1.msra.mxu0 %v11450
    %11452 = vmatprep.subr.mxu0 0.0
    %v11453 = vand.u32 %v18, 4294901760
    %v11454 = vsub.f32 %v18, %v11453
    %v11455 = vand.u32 %v11454, 4294901760
    %v11456 = vsub.f32 %v11454, %v11455
    %v11457 = vand.u32 %v11456, 4294901760
    %11458 = vmatpush1.msra.mxu0 %v11457
    %11459 = vmatprep.subr.mxu0 0.0
    %v11460 = vand.u32 %v17, 4294901760
    %v11461 = vsub.f32 %v17, %v11460
    %v11462 = vand.u32 %v11461, 4294901760
    %v11463 = vsub.f32 %v11461, %v11462
    %v11464 = vand.u32 %v11463, 4294901760
    %11465 = vmatpush1.msra.mxu0 %v11464
    %11466 = vmatprep.subr.mxu0 0.0
    %v11467 = vand.u32 %v16, 4294901760
    %v11468 = vsub.f32 %v16, %v11467
    %v11469 = vand.u32 %v11468, 4294901760
    %v11470 = vsub.f32 %v11468, %v11469
    %v11471 = vand.u32 %v11470, 4294901760
    %11472 = vmatpush1.msra.mxu0 %v11471
    %11473 = vmatprep.subr.mxu0 0.0
    %v11474 = vand.u32 %v15, 4294901760
    %v11475 = vsub.f32 %v15, %v11474
    %v11476 = vand.u32 %v11475, 4294901760
    %v11477 = vsub.f32 %v11475, %v11476
    %v11478 = vand.u32 %v11477, 4294901760
    %11479 = vmatpush1.msra.mxu0 %v11478
    %11480 = vmatprep.subr.mxu0 0.0
    %v11481 = vand.u32 %v14, 4294901760
    %v11482 = vsub.f32 %v14, %v11481
    %v11483 = vand.u32 %v11482, 4294901760
    %v11484 = vsub.f32 %v11482, %v11483
    %v11485 = vand.u32 %v11484, 4294901760
    %11486 = vmatpush1.msra.mxu0 %v11485
    %11487 = vmatprep.subr.mxu0 0.0
    %11488 = vmatpush2.msra.mxu0 0.0
    %11489 = vmatprep.subr.mxu0 0.0
    %11490 = vmatpush2.msra.mxu0 0.0
    %11491 = vmatprep.subr.mxu0 0.0
    %11492 = vmatpush2.msra.mxu0 0.0
    %11493 = vmatprep.subr.mxu0 0.0
    %11494 = vmatpush2.msra.mxu0 0.0
    %11495 = vmatprep.subr.mxu0 0.0
    %11496 = vmatpush2.msra.mxu0 0.0
    %11497 = vmatprep.subr.mxu0 0.0
    %11498 = vmatpush2.msra.mxu0 0.0
    %11499 = vmatprep.subr.mxu0 0.0
    %11500 = vmatpush2.msra.mxu0 0.0
    %11501 = vmatprep.subr.mxu0 0.0
    %11502 = vmatpush2.msra.mxu0 0.0
    %11503 = vmatprep.subr.mxu0 0.0
    %11504 = vmatpush2.msra.mxu0 0.0
    %11505 = vmatprep.subr.mxu0 0.0
    %11506 = vmatpush2.msra.mxu0 0.0
    %11507 = vmatprep.subr.mxu0 0.0
    %11508 = vmatpush2.msra.mxu0 0.0
    %11509 = vmatprep.subr.mxu0 0.0
    %11510 = vmatpush2.msra.mxu0 0.0
    %11511 = vmatprep.subr.mxu0 0.0
    %11512 = vmatpush2.msra.mxu0 0.0
    %11513 = vmatprep.subr.mxu0 0.0
    %11514 = vmatpush2.msra.mxu0 0.0
    %11515 = vmatprep.subr.mxu0 0.0
    %11516 = vmatpush2.msra.mxu0 0.0
    %11517 = vmatprep.subr.mxu0 0.0
    %11518 = vmatpush2.msra.mxu0 0.0
    %11519 = vmatprep.mubr.f32.mxu0 0.0
    %v11520 = vand.u32 %v11283, 4294901760
    %11521 = vmatmul.mubr.f32.gmra.mxu0 %v11520
    %v11522 = vpop.f32.mrf.mxu0
    %v11523 = vadd.f32 %v11372, %v11522
    %v11524 = vpop.f32.mrf.mxu0
    %11525 = vdwg.mxu0
    %11526 = vmatprep.subr.mxu0 0.0
    %v11527 = vand.u32 %v29, 4294901760
    %v11528 = vsub.f32 %v29, %v11527
    %11529 = vmatpush1.msra.mxu0 %v11528
    %11530 = vmatprep.subr.mxu0 0.0
    %v11531 = vand.u32 %v28, 4294901760
    %v11532 = vsub.f32 %v28, %v11531
    %11533 = vmatpush1.msra.mxu0 %v11532
    %11534 = vmatprep.subr.mxu0 0.0
    %v11535 = vand.u32 %v27, 4294901760
    %v11536 = vsub.f32 %v27, %v11535
    %11537 = vmatpush1.msra.mxu0 %v11536
    %11538 = vmatprep.subr.mxu0 0.0
    %v11539 = vand.u32 %v26, 4294901760
    %v11540 = vsub.f32 %v26, %v11539
    %11541 = vmatpush1.msra.mxu0 %v11540
    %11542 = vmatprep.subr.mxu0 0.0
    %v11543 = vand.u32 %v25, 4294901760
    %v11544 = vsub.f32 %v25, %v11543
    %11545 = vmatpush1.msra.mxu0 %v11544
    %11546 = vmatprep.subr.mxu0 0.0
    %v11547 = vand.u32 %v24, 4294901760
    %v11548 = vsub.f32 %v24, %v11547
    %11549 = vmatpush1.msra.mxu0 %v11548
    %11550 = vmatprep.subr.mxu0 0.0
    %v11551 = vand.u32 %v23, 4294901760
    %v11552 = vsub.f32 %v23, %v11551
    %11553 = vmatpush1.msra.mxu0 %v11552
    %11554 = vmatprep.subr.mxu0 0.0
    %v11555 = vand.u32 %v22, 4294901760
    %v11556 = vsub.f32 %v22, %v11555
    %11557 = vmatpush1.msra.mxu0 %v11556
    %11558 = vmatprep.subr.mxu0 0.0
    %v11559 = vand.u32 %v21, 4294901760
    %v11560 = vsub.f32 %v21, %v11559
    %11561 = vmatpush1.msra.mxu0 %v11560
    %11562 = vmatprep.subr.mxu0 0.0
    %v11563 = vand.u32 %v20, 4294901760
    %v11564 = vsub.f32 %v20, %v11563
    %11565 = vmatpush1.msra.mxu0 %v11564
    %11566 = vmatprep.subr.mxu0 0.0
    %v11567 = vand.u32 %v19, 4294901760
    %v11568 = vsub.f32 %v19, %v11567
    %11569 = vmatpush1.msra.mxu0 %v11568
    %11570 = vmatprep.subr.mxu0 0.0
    %v11571 = vand.u32 %v18, 4294901760
    %v11572 = vsub.f32 %v18, %v11571
    %11573 = vmatpush1.msra.mxu0 %v11572
    %11574 = vmatprep.subr.mxu0 0.0
    %v11575 = vand.u32 %v17, 4294901760
    %v11576 = vsub.f32 %v17, %v11575
    %11577 = vmatpush1.msra.mxu0 %v11576
    %11578 = vmatprep.subr.mxu0 0.0
    %v11579 = vand.u32 %v16, 4294901760
    %v11580 = vsub.f32 %v16, %v11579
    %11581 = vmatpush1.msra.mxu0 %v11580
    %11582 = vmatprep.subr.mxu0 0.0
    %v11583 = vand.u32 %v15, 4294901760
    %v11584 = vsub.f32 %v15, %v11583
    %11585 = vmatpush1.msra.mxu0 %v11584
    %11586 = vmatprep.subr.mxu0 0.0
    %v11587 = vand.u32 %v14, 4294901760
    %v11588 = vsub.f32 %v14, %v11587
    %11589 = vmatpush1.msra.mxu0 %v11588
    %11590 = vmatprep.subr.mxu0 0.0
    %11591 = vmatpush2.msra.mxu0 0.0
    %11592 = vmatprep.subr.mxu0 0.0
    %11593 = vmatpush2.msra.mxu0 0.0
    %11594 = vmatprep.subr.mxu0 0.0
    %11595 = vmatpush2.msra.mxu0 0.0
    %11596 = vmatprep.subr.mxu0 0.0
    %11597 = vmatpush2.msra.mxu0 0.0
    %11598 = vmatprep.subr.mxu0 0.0
    %11599 = vmatpush2.msra.mxu0 0.0
    %11600 = vmatprep.subr.mxu0 0.0
    %11601 = vmatpush2.msra.mxu0 0.0
    %11602 = vmatprep.subr.mxu0 0.0
    %11603 = vmatpush2.msra.mxu0 0.0
    %11604 = vmatprep.subr.mxu0 0.0
    %11605 = vmatpush2.msra.mxu0 0.0
    %11606 = vmatprep.subr.mxu0 0.0
    %11607 = vmatpush2.msra.mxu0 0.0
    %11608 = vmatprep.subr.mxu0 0.0
    %11609 = vmatpush2.msra.mxu0 0.0
    %11610 = vmatprep.subr.mxu0 0.0
    %11611 = vmatpush2.msra.mxu0 0.0
    %11612 = vmatprep.subr.mxu0 0.0
    %11613 = vmatpush2.msra.mxu0 0.0
    %11614 = vmatprep.subr.mxu0 0.0
    %11615 = vmatpush2.msra.mxu0 0.0
    %11616 = vmatprep.subr.mxu0 0.0
    %11617 = vmatpush2.msra.mxu0 0.0
    %11618 = vmatprep.subr.mxu0 0.0
    %11619 = vmatpush2.msra.mxu0 0.0
    %11620 = vmatprep.subr.mxu0 0.0
    %11621 = vmatpush2.msra.mxu0 0.0
    %11622 = vmatprep.mubr.f32.mxu0 0.0
    %v11623 = vand.u32 %v11283, 4294901760
    %v11624 = vsub.f32 %v11283, %v11623
    %11625 = vmatmul.mubr.f32.gmra.mxu0 %v11624
    %v11626 = vpop.f32.mrf.mxu0
    %v11627 = vadd.f32 %v11523, %v11626
    %v11628 = vpop.f32.mrf.mxu0
    %11629 = vdwg.mxu0
    %11630 = vmatprep.subr.mxu0 0.0
    %v11631 = vand.u32 %v29, 4294901760
    %11632 = vmatpush1.msra.mxu0 %v11631
    %11633 = vmatprep.subr.mxu0 0.0
    %v11634 = vand.u32 %v28, 4294901760
    %11635 = vmatpush1.msra.mxu0 %v11634
    %11636 = vmatprep.subr.mxu0 0.0
    %v11637 = vand.u32 %v27, 4294901760
    %11638 = vmatpush1.msra.mxu0 %v11637
    %11639 = vmatprep.subr.mxu0 0.0
    %v11640 = vand.u32 %v26, 4294901760
    %11641 = vmatpush1.msra.mxu0 %v11640
    %11642 = vmatprep.subr.mxu0 0.0
    %v11643 = vand.u32 %v25, 4294901760
    %11644 = vmatpush1.msra.mxu0 %v11643
    %11645 = vmatprep.subr.mxu0 0.0
    %v11646 = vand.u32 %v24, 4294901760
    %11647 = vmatpush1.msra.mxu0 %v11646
    %11648 = vmatprep.subr.mxu0 0.0
    %v11649 = vand.u32 %v23, 4294901760
    %11650 = vmatpush1.msra.mxu0 %v11649
    %11651 = vmatprep.subr.mxu0 0.0
    %v11652 = vand.u32 %v22, 4294901760
    %11653 = vmatpush1.msra.mxu0 %v11652
    %11654 = vmatprep.subr.mxu0 0.0
    %v11655 = vand.u32 %v21, 4294901760
    %11656 = vmatpush1.msra.mxu0 %v11655
    %11657 = vmatprep.subr.mxu0 0.0
    %v11658 = vand.u32 %v20, 4294901760
    %11659 = vmatpush1.msra.mxu0 %v11658
    %11660 = vmatprep.subr.mxu0 0.0
    %v11661 = vand.u32 %v19, 4294901760
    %11662 = vmatpush1.msra.mxu0 %v11661
    %11663 = vmatprep.subr.mxu0 0.0
    %v11664 = vand.u32 %v18, 4294901760
    %11665 = vmatpush1.msra.mxu0 %v11664
    %11666 = vmatprep.subr.mxu0 0.0
    %v11667 = vand.u32 %v17, 4294901760
    %11668 = vmatpush1.msra.mxu0 %v11667
    %11669 = vmatprep.subr.mxu0 0.0
    %v11670 = vand.u32 %v16, 4294901760
    %11671 = vmatpush1.msra.mxu0 %v11670
    %11672 = vmatprep.subr.mxu0 0.0
    %v11673 = vand.u32 %v15, 4294901760
    %11674 = vmatpush1.msra.mxu0 %v11673
    %11675 = vmatprep.subr.mxu0 0.0
    %v11676 = vand.u32 %v14, 4294901760
    %11677 = vmatpush1.msra.mxu0 %v11676
    %11678 = vmatprep.subr.mxu0 0.0
    %11679 = vmatpush2.msra.mxu0 0.0
    %11680 = vmatprep.subr.mxu0 0.0
    %11681 = vmatpush2.msra.mxu0 0.0
    %11682 = vmatprep.subr.mxu0 0.0
    %11683 = vmatpush2.msra.mxu0 0.0
    %11684 = vmatprep.subr.mxu0 0.0
    %11685 = vmatpush2.msra.mxu0 0.0
    %11686 = vmatprep.subr.mxu0 0.0
    %11687 = vmatpush2.msra.mxu0 0.0
    %11688 = vmatprep.subr.mxu0 0.0
    %11689 = vmatpush2.msra.mxu0 0.0
    %11690 = vmatprep.subr.mxu0 0.0
    %11691 = vmatpush2.msra.mxu0 0.0
    %11692 = vmatprep.subr.mxu0 0.0
    %11693 = vmatpush2.msra.mxu0 0.0
    %11694 = vmatprep.subr.mxu0 0.0
    %11695 = vmatpush2.msra.mxu0 0.0
    %11696 = vmatprep.subr.mxu0 0.0
    %11697 = vmatpush2.msra.mxu0 0.0
    %11698 = vmatprep.subr.mxu0 0.0
    %11699 = vmatpush2.msra.mxu0 0.0
    %11700 = vmatprep.subr.mxu0 0.0
    %11701 = vmatpush2.msra.mxu0 0.0
    %11702 = vmatprep.subr.mxu0 0.0
    %11703 = vmatpush2.msra.mxu0 0.0
    %11704 = vmatprep.subr.mxu0 0.0
    %11705 = vmatpush2.msra.mxu0 0.0
    %11706 = vmatprep.subr.mxu0 0.0
    %11707 = vmatpush2.msra.mxu0 0.0
    %11708 = vmatprep.subr.mxu0 0.0
    %11709 = vmatpush2.msra.mxu0 0.0
    %11710 = vmatprep.mubr.f32.mxu0 0.0
    %v11711 = vand.u32 %v11283, 4294901760
    %v11712 = vsub.f32 %v11283, %v11711
    %v11713 = vand.u32 %v11712, 4294901760
    %11714 = vmatmul.mubr.f32.gmra.mxu0 %v11713
    %v11715 = vpop.f32.mrf.mxu0
    %v11716 = vadd.f32 %v11627, %v11715
    %v11717 = vpop.f32.mrf.mxu0
    %11718 = vdwg.mxu0
    %11719 = vmatprep.subr.mxu0 0.0
    %v11720 = vand.u32 %v29, 4294901760
    %v11721 = vsub.f32 %v29, %v11720
    %v11722 = vand.u32 %v11721, 4294901760
    %11723 = vmatpush1.msra.mxu0 %v11722
    %11724 = vmatprep.subr.mxu0 0.0
    %v11725 = vand.u32 %v28, 4294901760
    %v11726 = vsub.f32 %v28, %v11725
    %v11727 = vand.u32 %v11726, 4294901760
    %11728 = vmatpush1.msra.mxu0 %v11727
    %11729 = vmatprep.subr.mxu0 0.0
    %v11730 = vand.u32 %v27, 4294901760
    %v11731 = vsub.f32 %v27, %v11730
    %v11732 = vand.u32 %v11731, 4294901760
    %11733 = vmatpush1.msra.mxu0 %v11732
    %11734 = vmatprep.subr.mxu0 0.0
    %v11735 = vand.u32 %v26, 4294901760
    %v11736 = vsub.f32 %v26, %v11735
    %v11737 = vand.u32 %v11736, 4294901760
    %11738 = vmatpush1.msra.mxu0 %v11737
    %11739 = vmatprep.subr.mxu0 0.0
    %v11740 = vand.u32 %v25, 4294901760
    %v11741 = vsub.f32 %v25, %v11740
    %v11742 = vand.u32 %v11741, 4294901760
    %11743 = vmatpush1.msra.mxu0 %v11742
    %11744 = vmatprep.subr.mxu0 0.0
    %v11745 = vand.u32 %v24, 4294901760
    %v11746 = vsub.f32 %v24, %v11745
    %v11747 = vand.u32 %v11746, 4294901760
    %11748 = vmatpush1.msra.mxu0 %v11747
    %11749 = vmatprep.subr.mxu0 0.0
    %v11750 = vand.u32 %v23, 4294901760
    %v11751 = vsub.f32 %v23, %v11750
    %v11752 = vand.u32 %v11751, 4294901760
    %11753 = vmatpush1.msra.mxu0 %v11752
    %11754 = vmatprep.subr.mxu0 0.0
    %v11755 = vand.u32 %v22, 4294901760
    %v11756 = vsub.f32 %v22, %v11755
    %v11757 = vand.u32 %v11756, 4294901760
    %11758 = vmatpush1.msra.mxu0 %v11757
    %11759 = vmatprep.subr.mxu0 0.0
    %v11760 = vand.u32 %v21, 4294901760
    %v11761 = vsub.f32 %v21, %v11760
    %v11762 = vand.u32 %v11761, 4294901760
    %11763 = vmatpush1.msra.mxu0 %v11762
    %11764 = vmatprep.subr.mxu0 0.0
    %v11765 = vand.u32 %v20, 4294901760
    %v11766 = vsub.f32 %v20, %v11765
    %v11767 = vand.u32 %v11766, 4294901760
    %11768 = vmatpush1.msra.mxu0 %v11767
    %11769 = vmatprep.subr.mxu0 0.0
    %v11770 = vand.u32 %v19, 4294901760
    %v11771 = vsub.f32 %v19, %v11770
    %v11772 = vand.u32 %v11771, 4294901760
    %11773 = vmatpush1.msra.mxu0 %v11772
    %11774 = vmatprep.subr.mxu0 0.0
    %v11775 = vand.u32 %v18, 4294901760
    %v11776 = vsub.f32 %v18, %v11775
    %v11777 = vand.u32 %v11776, 4294901760
    %11778 = vmatpush1.msra.mxu0 %v11777
    %11779 = vmatprep.subr.mxu0 0.0
    %v11780 = vand.u32 %v17, 4294901760
    %v11781 = vsub.f32 %v17, %v11780
    %v11782 = vand.u32 %v11781, 4294901760
    %11783 = vmatpush1.msra.mxu0 %v11782
    %11784 = vmatprep.subr.mxu0 0.0
    %v11785 = vand.u32 %v16, 4294901760
    %v11786 = vsub.f32 %v16, %v11785
    %v11787 = vand.u32 %v11786, 4294901760
    %11788 = vmatpush1.msra.mxu0 %v11787
    %11789 = vmatprep.subr.mxu0 0.0
    %v11790 = vand.u32 %v15, 4294901760
    %v11791 = vsub.f32 %v15, %v11790
    %v11792 = vand.u32 %v11791, 4294901760
    %11793 = vmatpush1.msra.mxu0 %v11792
    %11794 = vmatprep.subr.mxu0 0.0
    %v11795 = vand.u32 %v14, 4294901760
    %v11796 = vsub.f32 %v14, %v11795
    %v11797 = vand.u32 %v11796, 4294901760
    %11798 = vmatpush1.msra.mxu0 %v11797
    %11799 = vmatprep.subr.mxu0 0.0
    %11800 = vmatpush2.msra.mxu0 0.0
    %11801 = vmatprep.subr.mxu0 0.0
    %11802 = vmatpush2.msra.mxu0 0.0
    %11803 = vmatprep.subr.mxu0 0.0
    %11804 = vmatpush2.msra.mxu0 0.0
    %11805 = vmatprep.subr.mxu0 0.0
    %11806 = vmatpush2.msra.mxu0 0.0
    %11807 = vmatprep.subr.mxu0 0.0
    %11808 = vmatpush2.msra.mxu0 0.0
    %11809 = vmatprep.subr.mxu0 0.0
    %11810 = vmatpush2.msra.mxu0 0.0
    %11811 = vmatprep.subr.mxu0 0.0
    %11812 = vmatpush2.msra.mxu0 0.0
    %11813 = vmatprep.subr.mxu0 0.0
    %11814 = vmatpush2.msra.mxu0 0.0
    %11815 = vmatprep.subr.mxu0 0.0
    %11816 = vmatpush2.msra.mxu0 0.0
    %11817 = vmatprep.subr.mxu0 0.0
    %11818 = vmatpush2.msra.mxu0 0.0
    %11819 = vmatprep.subr.mxu0 0.0
    %11820 = vmatpush2.msra.mxu0 0.0
    %11821 = vmatprep.subr.mxu0 0.0
    %11822 = vmatpush2.msra.mxu0 0.0
    %11823 = vmatprep.subr.mxu0 0.0
    %11824 = vmatpush2.msra.mxu0 0.0
    %11825 = vmatprep.subr.mxu0 0.0
    %11826 = vmatpush2.msra.mxu0 0.0
    %11827 = vmatprep.subr.mxu0 0.0
    %11828 = vmatpush2.msra.mxu0 0.0
    %11829 = vmatprep.subr.mxu0 0.0
    %11830 = vmatpush2.msra.mxu0 0.0
    %11831 = vmatprep.mubr.f32.mxu0 0.0
    %v11832 = vand.u32 %v11283, 4294901760
    %11833 = vmatmul.mubr.f32.gmra.mxu0 %v11832
    %v11834 = vpop.f32.mrf.mxu0
    %v11835 = vadd.f32 %v11716, %v11834
    %v11836 = vpop.f32.mrf.mxu0
    %11837 = vdwg.mxu0
    %11838 = vmatprep.subr.mxu0 0.0
    %v11839 = vand.u32 %v29, 4294901760
    %11840 = vmatpush1.msra.mxu0 %v11839
    %11841 = vmatprep.subr.mxu0 0.0
    %v11842 = vand.u32 %v28, 4294901760
    %11843 = vmatpush1.msra.mxu0 %v11842
    %11844 = vmatprep.subr.mxu0 0.0
    %v11845 = vand.u32 %v27, 4294901760
    %11846 = vmatpush1.msra.mxu0 %v11845
    %11847 = vmatprep.subr.mxu0 0.0
    %v11848 = vand.u32 %v26, 4294901760
    %11849 = vmatpush1.msra.mxu0 %v11848
    %11850 = vmatprep.subr.mxu0 0.0
    %v11851 = vand.u32 %v25, 4294901760
    %11852 = vmatpush1.msra.mxu0 %v11851
    %11853 = vmatprep.subr.mxu0 0.0
    %v11854 = vand.u32 %v24, 4294901760
    %11855 = vmatpush1.msra.mxu0 %v11854
    %11856 = vmatprep.subr.mxu0 0.0
    %v11857 = vand.u32 %v23, 4294901760
    %11858 = vmatpush1.msra.mxu0 %v11857
    %11859 = vmatprep.subr.mxu0 0.0
    %v11860 = vand.u32 %v22, 4294901760
    %11861 = vmatpush1.msra.mxu0 %v11860
    %11862 = vmatprep.subr.mxu0 0.0
    %v11863 = vand.u32 %v21, 4294901760
    %11864 = vmatpush1.msra.mxu0 %v11863
    %11865 = vmatprep.subr.mxu0 0.0
    %v11866 = vand.u32 %v20, 4294901760
    %11867 = vmatpush1.msra.mxu0 %v11866
    %11868 = vmatprep.subr.mxu0 0.0
    %v11869 = vand.u32 %v19, 4294901760
    %11870 = vmatpush1.msra.mxu0 %v11869
    %11871 = vmatprep.subr.mxu0 0.0
    %v11872 = vand.u32 %v18, 4294901760
    %11873 = vmatpush1.msra.mxu0 %v11872
    %11874 = vmatprep.subr.mxu0 0.0
    %v11875 = vand.u32 %v17, 4294901760
    %11876 = vmatpush1.msra.mxu0 %v11875
    %11877 = vmatprep.subr.mxu0 0.0
    %v11878 = vand.u32 %v16, 4294901760
    %11879 = vmatpush1.msra.mxu0 %v11878
    %11880 = vmatprep.subr.mxu0 0.0
    %v11881 = vand.u32 %v15, 4294901760
    %11882 = vmatpush1.msra.mxu0 %v11881
    %11883 = vmatprep.subr.mxu0 0.0
    %v11884 = vand.u32 %v14, 4294901760
    %11885 = vmatpush1.msra.mxu0 %v11884
    %11886 = vmatprep.subr.mxu0 0.0
    %11887 = vmatpush2.msra.mxu0 0.0
    %11888 = vmatprep.subr.mxu0 0.0
    %11889 = vmatpush2.msra.mxu0 0.0
    %11890 = vmatprep.subr.mxu0 0.0
    %11891 = vmatpush2.msra.mxu0 0.0
    %11892 = vmatprep.subr.mxu0 0.0
    %11893 = vmatpush2.msra.mxu0 0.0
    %11894 = vmatprep.subr.mxu0 0.0
    %11895 = vmatpush2.msra.mxu0 0.0
    %11896 = vmatprep.subr.mxu0 0.0
    %11897 = vmatpush2.msra.mxu0 0.0
    %11898 = vmatprep.subr.mxu0 0.0
    %11899 = vmatpush2.msra.mxu0 0.0
    %11900 = vmatprep.subr.mxu0 0.0
    %11901 = vmatpush2.msra.mxu0 0.0
    %11902 = vmatprep.subr.mxu0 0.0
    %11903 = vmatpush2.msra.mxu0 0.0
    %11904 = vmatprep.subr.mxu0 0.0
    %11905 = vmatpush2.msra.mxu0 0.0
    %11906 = vmatprep.subr.mxu0 0.0
    %11907 = vmatpush2.msra.mxu0 0.0
    %11908 = vmatprep.subr.mxu0 0.0
    %11909 = vmatpush2.msra.mxu0 0.0
    %11910 = vmatprep.subr.mxu0 0.0
    %11911 = vmatpush2.msra.mxu0 0.0
    %11912 = vmatprep.subr.mxu0 0.0
    %11913 = vmatpush2.msra.mxu0 0.0
    %11914 = vmatprep.subr.mxu0 0.0
    %11915 = vmatpush2.msra.mxu0 0.0
    %11916 = vmatprep.subr.mxu0 0.0
    %11917 = vmatpush2.msra.mxu0 0.0
    %11918 = vmatprep.mubr.f32.mxu0 0.0
    %v11919 = vand.u32 %v11283, 4294901760
    %11920 = vmatmul.mubr.f32.gmra.mxu0 %v11919
    %v11921 = vpop.f32.mrf.mxu0
    %v11922 = vadd.f32 %v11835, %v11921
    %v11923 = vpop.f32.mrf.mxu0
    %11924 = vdwg.mxu0
    %v11925 = vand.u32 2147483647, %v11922
    %vm11926 = vcmp.le.f32.partialorder %v11925, 0.7853982
    %vm11927 = vcmp.lt.s32.totalorder %v11922, 0
    %v11928 = vand.u32 %v11922, 2139095040
    %v11929 = vshrl.u32 %v11928, 23
    %v11930 = vsub.s32 %v11929, 127
    %v11931 = vand.u32 2147483647, %v11922
    %v11932 = vand.u32 %v11931, 8388607
    %v11933 = vor.u32 %v11932, 8388608
    %v11934 = vsub.s32 0, %v11933
    %v11935 = vadd.s32 %v11930, 1
    %vm11936 = vcmp.gt.s32.totalorder %v11935, 0
    %v11937 = vsel %vm11936, %v11935, 0
    %v11938 = vshrl.u32 %v11937, 5
    %v11939 = vand.u32 %v11937, 31
    %v11940 = vsub.s32 32, %v11939
    %v11941 = vshrl.u32 683565275, %v11940
    %v11942 = vshll.u32 683565275, %v11939
    %v11943 = vshrl.u32 2475754826, %v11940
    %v11944 = vor.u32 %v11942, %v11943
    %v11945 = vshll.u32 2475754826, %v11939
    %v11946 = vshrl.u32 2131351028, %v11940
    %v11947 = vor.u32 %v11945, %v11946
    %v11948 = vshll.u32 2131351028, %v11939
    %v11949 = vshrl.u32 2102212464, %v11940
    %v11950 = vor.u32 %v11948, %v11949
    %v11951 = vshll.u32 2102212464, %v11939
    %v11952 = vshrl.u32 920167782, %v11940
    %v11953 = vor.u32 %v11951, %v11952
    %v11954 = vshll.u32 920167782, %v11939
    %v11955 = vshrl.u32 1326507024, %v11940
    %v11956 = vor.u32 %v11954, %v11955
    %vm11957 = vcmp.lt.s32.totalorder %v11938, 1
    %vm11958 = vcmp.lt.s32.totalorder %v11938, 2
    %vm11959 = vcmp.lt.s32.totalorder %v11938, 3
    %vm11960 = vcmp.lt.s32.totalorder %v11938, 4
    %v11961 = vsel %vm11957, %v11941, %v11944
    %v11962 = vsel %vm11960, %v11950, 2102212464
    %v11963 = vsel %vm11959, %v11947, %v11962
    %v11964 = vsel %vm11958, %v11961, %v11963
    %v11965 = vsel %vm11957, %v11944, %v11947
    %v11966 = vsel %vm11960, %v11953, 920167782
    %v11967 = vsel %vm11959, %v11950, %v11966
    %v11968 = vsel %vm11958, %v11965, %v11967
    %v11969 = vsel %vm11957, %v11947, %v11950
    %v11970 = vsel %vm11960, %v11956, 1326507024
    %v11971 = vsel %vm11959, %v11953, %v11970
    %v11972 = vsel %vm11958, %v11969, %v11971
    %v11973 = vshll.u32 %v11933, 8
    %v11974 = vmul.u32.u64.compose %v11973, %v11972
    %v11975 = vextract.low.u32 %v11974
    %v11976 = vextract.high.u32 %v11974
    %v11977 = vmul.u32.u64.compose %v11973, %v11968
    %v11978 = vextract.low.u32 %v11977
    %v11979 = vextract.high.u32 %v11977
    %v11980 = vmul.u32 %v11973, %v11964
    %v11981 = vadd.s32 %v11976, %v11978
    %vm11982 = vc.u32 %v11976, %v11978
    %v11983 = vadd.s32 %v11979, 1
    %v11984 = vsel %vm11982, %v11983, %v11979
    %v11985 = vadd.s32 %v11980, %v11984
    %v11986 = vadd.s32 %v11985, 536870912
    %v11987 = vshrl.u32 %v11986, 30
    %v11988 = vshll.u32 %v11987, 30
    %v11989 = vsub.s32 %v11985, %v11988
    %vm11990 = vcmp.lt.s32.totalorder %v11989, 0
    %v11991 = vsub.s32 0, %v11989
    %v11992 = vsel %vm11990, %v11991, %v11989
    %v11993 = vclz %v11992
    %v11994 = vsub.s32 %v11993, 2
    %vm11995 = vcmp.gt.s32.totalorder 0, %v11994
    %v11996 = vsel %vm11995, 0, %v11994
    %v11997 = vsub.s32 32, %v11996
    %v11998 = vshll.u32 %v11989, %v11996
    %v11999 = vshrl.u32 %v11981, %v11997
    %v12000 = vor.u32 %v11998, %v11999
    %v12001 = vsub.s32 4294967266, %v11996
    %v12002 = vadd.s32 %v12001, 127
    %v12003 = vshll.u32 %v12002, 23
    %v12004 = vor.u32 4788187, %v12003
    %v12005 = vand.u32 2147483647, %v12004
    %v12007 = vcvt.s32.f32 %v12000
    %v12008 = vmul.f32 %v12007, %v12005
    %v12009 = vxor.u32 %v12008, 2147483648
    %v12010 = vsel %vm11927, %v12009, %v12008
    %v12011 = vsub.s32 4, %v11987
    %v12012 = vsel %vm11927, %v12011, %v11987
    %v12013 = vsel %vm11926, %v11922, %v12010
    %v12014 = vsel %vm11926, 0, %v12012
    %v12015 = vcosq.f32.pop %v12013
    %v12016 = vsinq.f32.pop %v12013
    %vm12017 = vweird.f32 %v11922
    %v12018 = vadd.s32 %v12014, 3
    %v12019 = vand.u32 %v12018, 3
    %vm12020 = vcmp.lt.s32.totalorder %v12019, 2
    %vm12021 = vcmp.eq.s32.totalorder %v12019, 0
    %v12022 = vxor.u32 %v12016, 2147483648
    %v12023 = vsel %vm12021, %v12015, %v12022
    %vm12024 = vcmp.eq.s32.totalorder %v12019, 2
    %v12025 = vxor.u32 %v12015, 2147483648
    %v12026 = vsel %vm12024, %v12025, %v12016
    %v12027 = vsel %vm12020, %v12023, %v12026
    %v12028 = vsel %vm12017, nan, %v12027
    %v12029 = vadd.f32 %v10530, %v11279
    %v12030 = vmul.f32 %v12029, 3.0
    %v12031 = vadd.f32 %v9783, %v12030
    %v12032 = vadd.f32 %v12031, %v12028
    %v12033 = vmul.f32 %v12032, 0.006313131
    %v12034 = vadd.f32 %v50, %v12033
  $region18: #{odeblock2_forward.1} parent=0 // loop_footer
    %s46 = sadd.s32 1, %s42
  $region19: #{odeblock2_forward.1} parent=0 // loop_footer_branch
    %41 = sbr.rel target = $region15
  $region20: #{odeblock2_forward.1} parent=0 // loop_exit
    _
  %12035 = vst [vmem:[%s3] sm:$0xff] %v47
  %12036 = vst [vmem:[%s3 + $0x8] sm:$0xff] %v48
  %12037 = vst [vmem:[%s3 + $0x10] sm:$0xff] %v49
  %12038 = vst [vmem:[%s3 + $0x18] sm:$0xff] %v50
  // Predicated region
  $region21: #{odeblock2_forward.1} parent=0 // pred_check
    _
  $region22: #{odeblock2_forward.1} parent=0 // pred_check_branch
    %12040 = sbr.rel (0) target = $region24
  $region23: #{odeblock2_forward.1} parent=0 // pred_region
    _
  $region24: #{odeblock2_forward.1} parent=0 // pred_fallthru
    _
  // Predicated region
  $region25: #{odeblock2_forward.1} parent=0 // pred_check
    _
  $region26: #{odeblock2_forward.1} parent=0 // pred_check_branch
    %12042 = sbr.rel (0) target = $region28
  $region27: #{odeblock2_forward.1} parent=0 // pred_region
    _
  $region28: #{odeblock2_forward.1} parent=0 // pred_fallthru
    _

</llo_original>
